<compile_context>
chip_gen: v5e
topology: v5e:2x2
jax: 0.10.0
libtpu: 0.0.40
codegen_flags: <defaults>
</compile_context>

<pallas_src>
import math

import jax
import jax.numpy as jnp
from jax.experimental import pallas as pl
from jax.experimental.pallas import tpu as pltpu

_LANES = 128      # slab lane width (one full 128-lane tile)
_SUBLANES = 8     # row alignment for every slab entry


# --------------------------------------------------------------------------
# Fused whole-forward kernel (one batch element per grid step)
# --------------------------------------------------------------------------

def _make_kernel(*, S, T, E, H, F, L, N, off, eps=1e-5):
    Dh = E // H
    scale = 1.0 / math.sqrt(Dh)
    NEG = -1e30                      # finite "masked" value (robust vs -inf)
    P = max(S, T)

    def kernel(src_ref, tgt_ref, w_ref, out_ref):
        n = pl.program_id(0)

        # ---- static slab slicing (all offsets are Python ints) -----------
        def blk(name, rows, cols, row_off=0):
            o = off[name] + row_off
            return w_ref[o:o + rows, 0:cols]

        def layer_norm(z, pref):
            g = blk(pref + "g", 1, E)
            b = blk(pref + "b", 1, E)
            mu = jnp.mean(z, axis=-1, keepdims=True)
            d = z - mu
            var = jnp.mean(d * d, axis=-1, keepdims=True)
            return d * jax.lax.rsqrt(var + eps) * g + b

        def mha(x_q, x_kv, pfx, mask, self_attn):
            """Multi-head attention; activations kept feature-major (E, L) so
            every per-head slice is an aligned 8-sublane slice."""
            Lq, Lk = x_q.shape[0], x_kv.shape[0]
            if self_attn:
                # fused QKV: (3E,E) . (Lq,E)^T -> (3E, Lq)
                qkv = jax.lax.dot_general(
                    blk(pfx + "wT", 3 * E, E), x_q,
                    (((1,), (1,)), ((), ())),
                    preferred_element_type=jnp.float32)
                qkv = qkv + blk(pfx + "b", 3 * E, Lq)          # lane-replicated bias
                q_t, k_t, v_t = qkv[0:E], qkv[E:2 * E], qkv[2 * E:3 * E]
            else:
                q_t = jax.lax.dot_general(
                    blk(pfx + "wT", E, E), x_q,
                    (((1,), (1,)), ((), ())),
                    preferred_element_type=jnp.float32) + blk(pfx + "b", E, Lq)
                kv = jax.lax.dot_general(
                    blk(pfx + "wT", 2 * E, E, row_off=E), x_kv,
                    (((1,), (1,)), ((), ())),
                    preferred_element_type=jnp.float32) + blk(pfx + "b", 2 * E, Lk,
                                                              row_off=E)
                k_t, v_t = kv[0:E], kv[E:2 * E]

            o_parts = []
            for h in range(H):
                lo, hi = h * Dh, (h + 1) * Dh
                # scores: (Dh,Lq)^T . (Dh,Lk) -> (Lq, Lk)
                s = jax.lax.dot_general(
                    q_t[lo:hi], k_t[lo:hi], (((0,), (0,)), ((), ())),
                    preferred_element_type=jnp.float32) * scale
                if mask is not None:
                    s = s + mask
                s = s - jnp.max(s, axis=-1, keepdims=True)
                p = jnp.exp(s)
                p = p / jnp.sum(p, axis=-1, keepdims=True)      # exact softmax
                # per-head output, feature-major: (Dh,Lk) . (Lq,Lk)^T -> (Dh,Lq)
                o_parts.append(jax.lax.dot_general(
                    v_t[lo:hi], p, (((1,), (1,)), ((), ())),
                    preferred_element_type=jnp.float32))
            o_t = jnp.concatenate(o_parts, axis=0)              # (E, Lq)
            # single output projection: (E,Lq)^T . (E,E) -> (Lq, E)
            out = jax.lax.dot_general(
                o_t, blk(pfx + "woT", E, E), (((0,), (0,)), ((), ())),
                preferred_element_type=jnp.float32)
            return out + blk(pfx + "bo", 1, E)

        def ffn(z, pfx):
            h1 = jnp.dot(z, blk(pfx + "w1", E, F),
                         preferred_element_type=jnp.float32) + blk(pfx + "b1", 1, F)
            h1 = jnp.maximum(h1, 0.0)                           # ReLU
            return jnp.dot(h1, blk(pfx + "w2", F, E),
                           preferred_element_type=jnp.float32) + blk(pfx + "b2", 1, E)

        # ---- fused batch selection + positional encoding ------------------
        # src/tgt arrive in native PyTorch (seq, batch, E) layout; pick batch
        # `n` with a masked sublane reduction (no host-side transpose).
        sel = jax.lax.broadcasted_iota(jnp.int32, (1, N, 1), 1) == n
        pe = blk("pe", P, E)
        x = jnp.sum(jnp.where(sel, src_ref[...], 0.0), axis=1) + pe[0:S]   # (S, E)
        y = jnp.sum(jnp.where(sel, tgt_ref[...], 0.0), axis=1) + pe[0:T]   # (T, E)

        # ---- causal mask: built once, reused by every decoder layer -------
        r_idx = jax.lax.broadcasted_iota(jnp.int32, (T, T), 0)
        c_idx = jax.lax.broadcasted_iota(jnp.int32, (T, T), 1)
        causal = jnp.where(c_idx > r_idx, NEG, 0.0)

        # ------------------------------ encoder -----------------------------
        for li in range(L):
            pref = f"enc{li}_"
            x = layer_norm(x + mha(x, x, pref + "attn_", None, True), pref + "ln1_")
            x = layer_norm(x + ffn(x, pref), pref + "ln2_")
        memory = x

        # ------------------------------ decoder -----------------------------
        for li in range(L):
            pref = f"dec{li}_"
            y = layer_norm(y + mha(y, y, pref + "sa_", causal, True), pref + "ln1_")
            y = layer_norm(y + mha(y, memory, pref + "ca_", None, False),
                           pref + "ln2_")
            y = layer_norm(y + ffn(y, pref), pref + "ln3_")

        # TODO(synk): quaternions=True branch (L2-normalize reshaped (-1,4))
        # omitted; module default is quaternions=False.
        out_ref[0] = y.astype(out_ref.dtype)

    return kernel


# --------------------------------------------------------------------------
# Wrapper
# --------------------------------------------------------------------------

def build_forward(offsets, total_rows, *, S, T, N, E, H, F, L):
    kernel = _make_kernel(S=S, T=T, E=E, H=H, F=F, L=L, N=N, off=offsets)

    # Advisory cost so XLA can schedule around the custom call.
    def mm(m, k, n):
        return 2 * m * k * n

    def attn_flops(lq, lk):
        return mm(lq, E, 3 * E) + 2 * (2 * lq * E * lk) + mm(lq, E, E)

    flops = N * (L * (attn_flops(S, S) + mm(S, E, F) + mm(S, F, E))
                 + L * (attn_flops(T, T) + attn_flops(T, S)
                        + mm(T, E, F) + mm(T, F, E)))
    transcendentals = N * L * H * (S * S + T * T + T * S)
    bytes_accessed = 4 * (S * N * E + 2 * T * N * E + total_rows * _LANES)
    cost = pl.CostEstimate(flops=flops, transcendentals=transcendentals,
                           bytes_accessed=bytes_accessed)

    call = pl.pallas_call(
        kernel,
        out_shape=jax.ShapeDtypeStruct((N, T, E), jnp.float32),
        grid=(N,),
        in_specs=[
            pl.BlockSpec((S, N, E), lambda n: (0, 0, 0)),   # src, native layout
            pl.BlockSpec((T, N, E), lambda n: (0, 0, 0)),   # target, native layout
            # Single packed parameter slab: one DMA, grid-invariant block.
            # (pipeline_mode=pl.Buffered(1) would drop the redundant second
            #  buffer; left at default since the whole slab is only ~1 MiB.)
            pl.BlockSpec((total_rows, _LANES), lambda n: (0, 0)),
        ],
        out_specs=pl.BlockSpec((1, T, E), lambda n: (n, 0, 0)),
        compiler_params=pltpu.CompilerParams(
            dimension_semantics=("parallel",)),   # batch -> both TCs on v7x
        cost_estimate=cost,
    )

    def forward(slab, src, tgt):
        out_b = call(src, tgt, slab)               # (N, T, E)
        return jnp.transpose(out_b, (1, 0, 2))     # -> (T, N, E), PyTorch layout

    return forward


# --------------------------------------------------------------------------
# Deterministic parameters + host-side packing (runs once, outside jit)
# --------------------------------------------------------------------------

def positional_encoding(max_len, d_model):
    position = jnp.arange(max_len, dtype=jnp.float32)[:, None]
    div_term = jnp.exp(jnp.arange(0, d_model, 2, dtype=jnp.float32)
                       * (-math.log(10000.0) / d_model))
    pe = jnp.zeros((max_len, d_model), jnp.float32)
    pe = pe.at[:, 0::2].set(jnp.sin(position * div_term))
    pe = pe.at[:, 1::2].set(jnp.cos(position * div_term)[:, : d_model // 2])
    return pe                                       # (max_len, d_model)


def _attn_params(key, E):
    k1, k2 = jax.random.split(key)
    s = 1.0 / math.sqrt(E)
    return {
        "w_inT": jax.random.normal(k1, (3 * E, E), jnp.float32) * s,  # in_proj_weight
        "b_in": jnp.zeros((3 * E,), jnp.float32),
        "w_outT": jax.random.normal(k2, (E, E), jnp.float32) * s,     # out_proj.weight.T
        "b_out": jnp.zeros((E,), jnp.float32),
    }


def _ln_params(E):
    return jnp.ones((E,), jnp.float32), jnp.zeros((E,), jnp.float32)


def _encoder_layer_params(key, E, F):
    ks = jax.random.split(key, 3)
    g1, b1 = _ln_params(E)
    g2, b2 = _ln_params(E)
    return {
        "attn": _attn_params(ks[0], E),
        "w1": jax.random.normal(ks[1], (E, F), jnp.float32) / math.sqrt(E),
        "b1": jnp.zeros((F,), jnp.float32),
        "w2": jax.random.normal(ks[2], (F, E), jnp.float32) / math.sqrt(F),
        "b2": jnp.zeros((E,), jnp.float32),
        "ln1_g": g1, "ln1_b": b1, "ln2_g": g2, "ln2_b": b2,
    }


def _decoder_layer_params(key, E, F):
    ks = jax.random.split(key, 4)
    g1, b1 = _ln_params(E)
    g2, b2 = _ln_params(E)
    g3, b3 = _ln_params(E)
    return {
        "self_attn": _attn_params(ks[0], E),
        "cross_attn": _attn_params(ks[1], E),
        "w1": jax.random.normal(ks[2], (E, F), jnp.float32) / math.sqrt(E),
        "b1": jnp.zeros((F,), jnp.float32),
        "w2": jax.random.normal(ks[3], (F, E), jnp.float32) / math.sqrt(F),
        "b2": jnp.zeros((E,), jnp.float32),
        "ln1_g": g1, "ln1_b": b1, "ln2_g": g2, "ln2_b": b2,
        "ln3_g": g3, "ln3_b": b3,
    }


def make_params(key, num_features, dim_feedforward, num_layers, max_len=5000):
    keys = jax.random.split(key, 2 * num_layers)
    return {
        "pe": positional_encoding(max_len, num_features),
        "encoder": [_encoder_layer_params(keys[i], num_features, dim_feedforward)
                    for i in range(num_layers)],
        "decoder": [_decoder_layer_params(keys[num_layers + i], num_features,
                                          dim_feedforward)
                    for i in range(num_layers)],
    }


def pack_params(params, S, T):
    """Pack every parameter into one (R, 128) f32 slab.

    Each entry is padded to a multiple of 8 rows so all in-kernel slices are
    sublane-aligned; QKV biases are stored lane-replicated in the feature-major
    orientation used by the kernel.  Returns (slab, {name: row_offset}).
    """
    entries = []

    def add(name, arr):
        arr = jnp.asarray(arr, jnp.float32)
        if arr.ndim == 1:
            arr = arr[None, :]
        entries.append((name, arr))

    def add_attn(prefix, a):
        three_e = a["b_in"].shape[0]
        add(prefix + "wT", a["w_inT"])
        add(prefix + "b", jnp.broadcast_to(a["b_in"][:, None], (three_e, _LANES)))
        add(prefix + "woT", a["w_outT"])
        add(prefix + "bo", a["b_out"])

    add("pe", params["pe"][: max(S, T)])
    for li, lp in enumerate(params["encoder"]):
        pref = f"enc{li}_"
        add_attn(pref + "attn_", lp["attn"])
        add(pref + "ln1_g", lp["ln1_g"]); add(pref + "ln1_b", lp["ln1_b"])
        add(pref + "w1", lp["w1"]); add(pref + "b1", lp["b1"])
        add(pref + "w2", lp["w2"]); add(pref + "b2", lp["b2"])
        add(pref + "ln2_g", lp["ln2_g"]); add(pref + "ln2_b", lp["ln2_b"])
    for li, lp in enumerate(params["decoder"]):
        pref = f"dec{li}_"
        add_attn(pref + "sa_", lp["self_attn"])
        add(pref + "ln1_g", lp["ln1_g"]); add(pref + "ln1_b", lp["ln1_b"])
        add_attn(pref + "ca_", lp["cross_attn"])
        add(pref + "ln2_g", lp["ln2_g"]); add(pref + "ln2_b", lp["ln2_b"])
        add(pref + "w1", lp["w1"]); add(pref + "b1", lp["b1"])
        add(pref + "w2", lp["w2"]); add(pref + "b2", lp["b2"])
        add(pref + "ln3_g", lp["ln3_g"]); add(pref + "ln3_b", lp["ln3_b"])

    blocks, offsets, cursor = [], {}, 0
    for name, arr in entries:
        r, c = arr.shape
        assert c <= _LANES, f"{name}: {c} lanes > {_LANES}"
        rp = ((r + _SUBLANES - 1) // _SUBLANES) * _SUBLANES
        block = jnp.zeros((rp, _LANES), jnp.float32).at[:r, :c].set(arr)
        blocks.append(block)
        offsets[name] = cursor
        cursor += rp
    return jnp.concatenate(blocks, axis=0), offsets


# --------------------------------------------------------------------------
# Main
# --------------------------------------------------------------------------

if __name__ == "__main__":
    # Module config: num_features=32, num_heads=4, dim_feedforward=64,
    #                dropout=0.0 (eval-mode identity), num_layers=2,
    #                quaternions=False
    NUM_FEATURES, NUM_HEADS, DIM_FF, NUM_LAYERS = 32, 4, 64, 2
    SEQ, BATCH = 8, 2

    root = jax.random.PRNGKey(0)
    k_params, k_src, k_tgt = jax.random.split(root, 3)

    params = make_params(k_params, NUM_FEATURES, DIM_FF, NUM_LAYERS, max_len=64)
    slab, offsets = pack_params(params, SEQ, SEQ)      # host side, once

    # (seq, batch, d_model) — PyTorch nn.Transformer default layout
    src = jax.random.normal(k_src, (SEQ, BATCH, NUM_FEATURES), jnp.float32)
    tgt = jax.random.normal(k_tgt, (SEQ, BATCH, NUM_FEATURES), jnp.float32)

    fwd = jax.jit(build_forward(offsets, slab.shape[0],
                                S=SEQ, T=SEQ, N=BATCH, E=NUM_FEATURES,
                                H=NUM_HEADS, F=DIM_FF, L=NUM_LAYERS))
    out = jax.block_until_ready(fwd(slab, src, tgt))

    assert out.shape == (SEQ, BATCH, NUM_FEATURES)
    assert bool(jnp.all(jnp.isfinite(out)))
    print("KERNEL_OK")
</pallas_src>

<mosaic_0001>
module attributes {stable_mosaic.version = 11 : i64} {
  func.func @kernel(%arg0: i32, %arg1: memref<8x2x32xf32, #tpu.memory_space<vmem>>, %arg2: memref<8x2x32xf32, #tpu.memory_space<vmem>>, %arg3: memref<2008x128xf32, #tpu.memory_space<vmem>>, %arg4: memref<1x8x32xf32, #tpu.memory_space<vmem>>) attributes {dimension_semantics = [#tpu.dimension_semantics<parallel>], iteration_bounds = array<i64: 2>, scalar_prefetch = 0 : i64, scratch_operands = 0 : i64, tpu.core_type = #tpu.core_type<tc>, window_params = [{pipeline_mode = #tpu.pipeline_mode<synchronous>, transform_indices = @transform_0, window_bounds = array<i64: 8, 2, 32>}, {pipeline_mode = #tpu.pipeline_mode<synchronous>, transform_indices = @transform_1, window_bounds = array<i64: 8, 2, 32>}, {pipeline_mode = #tpu.pipeline_mode<synchronous>, transform_indices = @transform_2, window_bounds = array<i64: 2008, 128>}, {transform_indices = @transform_3, window_bounds = array<i64: 1, 8, 32>}]} {
    %0 = tpu.iota {dimensions = array<i32: 1>} : vector<1x2x1xi32>
    %1 = vector.broadcast %arg0 : i32 to vector<1x2x1xi32>
    %2 = arith.cmpi eq, %0, %1 : vector<1x2x1xi32>
    %c0 = arith.constant 0 : index
    %c0_0 = arith.constant 0 : index
    %3 = vector.load %arg3[%c0, %c0_0] : memref<2008x128xf32, #tpu.memory_space<vmem>>, vector<8x32xf32>
    %c0_1 = arith.constant 0 : index
    %c0_2 = arith.constant 0 : index
    %c0_3 = arith.constant 0 : index
    %4 = vector.load %arg1[%c0_1, %c0_2, %c0_3] : memref<8x2x32xf32, #tpu.memory_space<vmem>>, vector<8x2x32xf32>
    %cst = arith.constant 0.000000e+00 : f32
    %5 = vector.shape_cast %2 : vector<1x2x1xi1> to vector<1x2x1xi1>
    %6 = vector.broadcast %5 : vector<1x2x1xi1> to vector<8x2x32xi1>
    %7 = vector.broadcast %cst : f32 to vector<8x2x32xf32>
    %8 = arith.select %6, %4, %7 : vector<8x2x32xi1>, vector<8x2x32xf32>
    %cst_4 = arith.constant dense<0.000000e+00> : vector<8x32xf32>
    %9 = vector.multi_reduction <add>, %8, %cst_4 [1] : vector<8x2x32xf32> to vector<8x32xf32>
    %10 = arith.addf %9, %3 : vector<8x32xf32>
    %c0_5 = arith.constant 0 : index
    %c0_6 = arith.constant 0 : index
    %c0_7 = arith.constant 0 : index
    %11 = vector.load %arg2[%c0_5, %c0_6, %c0_7] : memref<8x2x32xf32, #tpu.memory_space<vmem>>, vector<8x2x32xf32>
    %cst_8 = arith.constant 0.000000e+00 : f32
    %12 = vector.shape_cast %2 : vector<1x2x1xi1> to vector<1x2x1xi1>
    %13 = vector.broadcast %12 : vector<1x2x1xi1> to vector<8x2x32xi1>
    %14 = vector.broadcast %cst_8 : f32 to vector<8x2x32xf32>
    %15 = arith.select %13, %11, %14 : vector<8x2x32xi1>, vector<8x2x32xf32>
    %cst_9 = arith.constant dense<0.000000e+00> : vector<8x32xf32>
    %16 = vector.multi_reduction <add>, %15, %cst_9 [1] : vector<8x2x32xf32> to vector<8x32xf32>
    %17 = arith.addf %16, %3 : vector<8x32xf32>
    %18 = tpu.iota {dimensions = array<i32: 0>} : vector<8x8xi32>
    %19 = tpu.iota {dimensions = array<i32: 1>} : vector<8x8xi32>
    %20 = arith.cmpi sgt, %19, %18 : vector<8x8xi32>
    %cst_10 = arith.constant -1.000000e+30 : f32
    %cst_11 = arith.constant 0.000000e+00 : f32
    %21 = vector.broadcast %cst_10 : f32 to vector<8x8xf32>
    %22 = vector.broadcast %cst_11 : f32 to vector<8x8xf32>
    %23 = arith.select %20, %21, %22 : vector<8x8xi1>, vector<8x8xf32>
    %c8 = arith.constant 8 : index
    %c0_12 = arith.constant 0 : index
    %24 = vector.load %arg3[%c8, %c0_12] : memref<2008x128xf32, #tpu.memory_space<vmem>>, vector<96x32xf32>
    %cst_13 = arith.constant dense<0.000000e+00> : vector<96x8xf32>
    %25 = tpu.matmul %24, %10, %cst_13 {dimension_numbers = #tpu.dot_dimension_numbers<[1], [1], [0], [0], [0, 0, 1, 0], [], []>} : vector<96x32xf32>, vector<8x32xf32>, vector<96x8xf32> -> vector<96x8xf32>
    %c104 = arith.constant 104 : index
    %c0_14 = arith.constant 0 : index
    %26 = vector.load %arg3[%c104, %c0_14] : memref<2008x128xf32, #tpu.memory_space<vmem>>, vector<96x8xf32>
    %27 = arith.addf %25, %26 : vector<96x8xf32>
    %28 = vector.extract_strided_slice %27 {offsets = [0, 0], sizes = [32, 8], strides = [1, 1]} : vector<96x8xf32> to vector<32x8xf32>
    %29 = vector.extract_strided_slice %27 {offsets = [32, 0], sizes = [32, 8], strides = [1, 1]} : vector<96x8xf32> to vector<32x8xf32>
    %30 = vector.extract_strided_slice %27 {offsets = [64, 0], sizes = [32, 8], strides = [1, 1]} : vector<96x8xf32> to vector<32x8xf32>
    %31 = vector.extract_strided_slice %28 {offsets = [0, 0], sizes = [8, 8], strides = [1, 1]} : vector<32x8xf32> to vector<8x8xf32>
    %32 = vector.extract_strided_slice %29 {offsets = [0, 0], sizes = [8, 8], strides = [1, 1]} : vector<32x8xf32> to vector<8x8xf32>
    %cst_15 = arith.constant dense<0.000000e+00> : vector<8x8xf32>
    %33 = tpu.matmul %31, %32, %cst_15 {dimension_numbers = #tpu.dot_dimension_numbers<[0], [0], [1], [1], [0, 1, 1, 1], [], []>} : vector<8x8xf32>, vector<8x8xf32>, vector<8x8xf32> -> vector<8x8xf32>
    %cst_16 = arith.constant 0.353553385 : f32
    %34 = vector.broadcast %cst_16 : f32 to vector<8x8xf32>
    %35 = arith.mulf %33, %34 : vector<8x8xf32>
    %cst_17 = arith.constant dense<0xFF800000> : vector<8xf32>
    %36 = vector.multi_reduction <maximumf>, %35, %cst_17 [1] : vector<8x8xf32> to vector<8xf32>
    %37 = vector.shape_cast %36 : vector<8xf32> to vector<8x1xf32>
    %38 = vector.broadcast %37 : vector<8x1xf32> to vector<8x8xf32>
    %39 = arith.subf %35, %38 : vector<8x8xf32>
    %40 = math.exp %39 : vector<8x8xf32>
    %cst_18 = arith.constant dense<0.000000e+00> : vector<8xf32>
    %41 = vector.multi_reduction <add>, %40, %cst_18 [1] : vector<8x8xf32> to vector<8xf32>
    %42 = vector.shape_cast %41 : vector<8xf32> to vector<8x1xf32>
    %43 = vector.broadcast %42 : vector<8x1xf32> to vector<8x8xf32>
    %44 = arith.divf %40, %43 : vector<8x8xf32>
    %45 = vector.extract_strided_slice %30 {offsets = [0, 0], sizes = [8, 8], strides = [1, 1]} : vector<32x8xf32> to vector<8x8xf32>
    %cst_19 = arith.constant dense<0.000000e+00> : vector<8x8xf32>
    %46 = tpu.matmul %45, %44, %cst_19 {dimension_numbers = #tpu.dot_dimension_numbers<[1], [1], [0], [0], [0, 0, 1, 0], [], []>} : vector<8x8xf32>, vector<8x8xf32>, vector<8x8xf32> -> vector<8x8xf32>
    %47 = vector.extract_strided_slice %28 {offsets = [8, 0], sizes = [8, 8], strides = [1, 1]} : vector<32x8xf32> to vector<8x8xf32>
    %48 = vector.extract_strided_slice %29 {offsets = [8, 0], sizes = [8, 8], strides = [1, 1]} : vector<32x8xf32> to vector<8x8xf32>
    %cst_20 = arith.constant dense<0.000000e+00> : vector<8x8xf32>
    %49 = tpu.matmul %47, %48, %cst_20 {dimension_numbers = #tpu.dot_dimension_numbers<[0], [0], [1], [1], [0, 1, 1, 1], [], []>} : vector<8x8xf32>, vector<8x8xf32>, vector<8x8xf32> -> vector<8x8xf32>
    %cst_21 = arith.constant 0.353553385 : f32
    %50 = vector.broadcast %cst_21 : f32 to vector<8x8xf32>
    %51 = arith.mulf %49, %50 : vector<8x8xf32>
    %cst_22 = arith.constant dense<0xFF800000> : vector<8xf32>
    %52 = vector.multi_reduction <maximumf>, %51, %cst_22 [1] : vector<8x8xf32> to vector<8xf32>
    %53 = vector.shape_cast %52 : vector<8xf32> to vector<8x1xf32>
    %54 = vector.broadcast %53 : vector<8x1xf32> to vector<8x8xf32>
    %55 = arith.subf %51, %54 : vector<8x8xf32>
    %56 = math.exp %55 : vector<8x8xf32>
    %cst_23 = arith.constant dense<0.000000e+00> : vector<8xf32>
    %57 = vector.multi_reduction <add>, %56, %cst_23 [1] : vector<8x8xf32> to vector<8xf32>
    %58 = vector.shape_cast %57 : vector<8xf32> to vector<8x1xf32>
    %59 = vector.broadcast %58 : vector<8x1xf32> to vector<8x8xf32>
    %60 = arith.divf %56, %59 : vector<8x8xf32>
    %61 = vector.extract_strided_slice %30 {offsets = [8, 0], sizes = [8, 8], strides = [1, 1]} : vector<32x8xf32> to vector<8x8xf32>
    %cst_24 = arith.constant dense<0.000000e+00> : vector<8x8xf32>
    %62 = tpu.matmul %61, %60, %cst_24 {dimension_numbers = #tpu.dot_dimension_numbers<[1], [1], [0], [0], [0, 0, 1, 0], [], []>} : vector<8x8xf32>, vector<8x8xf32>, vector<8x8xf32> -> vector<8x8xf32>
    %63 = vector.extract_strided_slice %28 {offsets = [16, 0], sizes = [8, 8], strides = [1, 1]} : vector<32x8xf32> to vector<8x8xf32>
    %64 = vector.extract_strided_slice %29 {offsets = [16, 0], sizes = [8, 8], strides = [1, 1]} : vector<32x8xf32> to vector<8x8xf32>
    %cst_25 = arith.constant dense<0.000000e+00> : vector<8x8xf32>
    %65 = tpu.matmul %63, %64, %cst_25 {dimension_numbers = #tpu.dot_dimension_numbers<[0], [0], [1], [1], [0, 1, 1, 1], [], []>} : vector<8x8xf32>, vector<8x8xf32>, vector<8x8xf32> -> vector<8x8xf32>
    %cst_26 = arith.constant 0.353553385 : f32
    %66 = vector.broadcast %cst_26 : f32 to vector<8x8xf32>
    %67 = arith.mulf %65, %66 : vector<8x8xf32>
    %cst_27 = arith.constant dense<0xFF800000> : vector<8xf32>
    %68 = vector.multi_reduction <maximumf>, %67, %cst_27 [1] : vector<8x8xf32> to vector<8xf32>
    %69 = vector.shape_cast %68 : vector<8xf32> to vector<8x1xf32>
    %70 = vector.broadcast %69 : vector<8x1xf32> to vector<8x8xf32>
    %71 = arith.subf %67, %70 : vector<8x8xf32>
    %72 = math.exp %71 : vector<8x8xf32>
    %cst_28 = arith.constant dense<0.000000e+00> : vector<8xf32>
    %73 = vector.multi_reduction <add>, %72, %cst_28 [1] : vector<8x8xf32> to vector<8xf32>
    %74 = vector.shape_cast %73 : vector<8xf32> to vector<8x1xf32>
    %75 = vector.broadcast %74 : vector<8x1xf32> to vector<8x8xf32>
    %76 = arith.divf %72, %75 : vector<8x8xf32>
    %77 = vector.extract_strided_slice %30 {offsets = [16, 0], sizes = [8, 8], strides = [1, 1]} : vector<32x8xf32> to vector<8x8xf32>
    %cst_29 = arith.constant dense<0.000000e+00> : vector<8x8xf32>
    %78 = tpu.matmul %77, %76, %cst_29 {dimension_numbers = #tpu.dot_dimension_numbers<[1], [1], [0], [0], [0, 0, 1, 0], [], []>} : vector<8x8xf32>, vector<8x8xf32>, vector<8x8xf32> -> vector<8x8xf32>
    %79 = vector.extract_strided_slice %28 {offsets = [24, 0], sizes = [8, 8], strides = [1, 1]} : vector<32x8xf32> to vector<8x8xf32>
    %80 = vector.extract_strided_slice %29 {offsets = [24, 0], sizes = [8, 8], strides = [1, 1]} : vector<32x8xf32> to vector<8x8xf32>
    %cst_30 = arith.constant dense<0.000000e+00> : vector<8x8xf32>
    %81 = tpu.matmul %79, %80, %cst_30 {dimension_numbers = #tpu.dot_dimension_numbers<[0], [0], [1], [1], [0, 1, 1, 1], [], []>} : vector<8x8xf32>, vector<8x8xf32>, vector<8x8xf32> -> vector<8x8xf32>
    %cst_31 = arith.constant 0.353553385 : f32
    %82 = vector.broadcast %cst_31 : f32 to vector<8x8xf32>
    %83 = arith.mulf %81, %82 : vector<8x8xf32>
    %cst_32 = arith.constant dense<0xFF800000> : vector<8xf32>
    %84 = vector.multi_reduction <maximumf>, %83, %cst_32 [1] : vector<8x8xf32> to vector<8xf32>
    %85 = vector.shape_cast %84 : vector<8xf32> to vector<8x1xf32>
    %86 = vector.broadcast %85 : vector<8x1xf32> to vector<8x8xf32>
    %87 = arith.subf %83, %86 : vector<8x8xf32>
    %88 = math.exp %87 : vector<8x8xf32>
    %cst_33 = arith.constant dense<0.000000e+00> : vector<8xf32>
    %89 = vector.multi_reduction <add>, %88, %cst_33 [1] : vector<8x8xf32> to vector<8xf32>
    %90 = vector.shape_cast %89 : vector<8xf32> to vector<8x1xf32>
    %91 = vector.broadcast %90 : vector<8x1xf32> to vector<8x8xf32>
    %92 = arith.divf %88, %91 : vector<8x8xf32>
    %93 = vector.extract_strided_slice %30 {offsets = [24, 0], sizes = [8, 8], strides = [1, 1]} : vector<32x8xf32> to vector<8x8xf32>
    %cst_34 = arith.constant dense<0.000000e+00> : vector<8x8xf32>
    %94 = tpu.matmul %93, %92, %cst_34 {dimension_numbers = #tpu.dot_dimension_numbers<[1], [1], [0], [0], [0, 0, 1, 0], [], []>} : vector<8x8xf32>, vector<8x8xf32>, vector<8x8xf32> -> vector<8x8xf32>
    %95 = tpu.concatenate %46, %62, %78, %94 in 0 : vector<8x8xf32>, vector<8x8xf32>, vector<8x8xf32>, vector<8x8xf32> -> vector<32x8xf32>
    %c200 = arith.constant 200 : index
    %c0_35 = arith.constant 0 : index
    %96 = vector.load %arg3[%c200, %c0_35] : memref<2008x128xf32, #tpu.memory_space<vmem>>, vector<32x32xf32>
    %cst_36 = arith.constant dense<0.000000e+00> : vector<8x32xf32>
    %97 = tpu.matmul %95, %96, %cst_36 {dimension_numbers = #tpu.dot_dimension_numbers<[0], [0], [1], [1], [0, 1, 1, 1], [], []>} : vector<32x8xf32>, vector<32x32xf32>, vector<8x32xf32> -> vector<8x32xf32>
    %c232 = arith.constant 232 : index
    %c0_37 = arith.constant 0 : index
    %98 = vector.load %arg3[%c232, %c0_37] : memref<2008x128xf32, #tpu.memory_space<vmem>>, vector<1x32xf32>
    %99 = vector.broadcast %98 : vector<1x32xf32> to vector<8x32xf32>
    %100 = arith.addf %97, %99 : vector<8x32xf32>
    %101 = arith.addf %10, %100 : vector<8x32xf32>
    %c240 = arith.constant 240 : index
    %c0_38 = arith.constant 0 : index
    %102 = vector.load %arg3[%c240, %c0_38] : memref<2008x128xf32, #tpu.memory_space<vmem>>, vector<1x32xf32>
    %c248 = arith.constant 248 : index
    %c0_39 = arith.constant 0 : index
    %103 = vector.load %arg3[%c248, %c0_39] : memref<2008x128xf32, #tpu.memory_space<vmem>>, vector<1x32xf32>
    %cst_40 = arith.constant dense<0.000000e+00> : vector<8xf32>
    %104 = vector.multi_reduction <add>, %101, %cst_40 [1] : vector<8x32xf32> to vector<8xf32>
    %105 = vector.shape_cast %104 : vector<8xf32> to vector<8x1xf32>
    %cst_41 = arith.constant 3.200000e+01 : f32
    %106 = vector.broadcast %cst_41 : f32 to vector<8x1xf32>
    %107 = arith.divf %105, %106 : vector<8x1xf32>
    %108 = vector.broadcast %107 : vector<8x1xf32> to vector<8x32xf32>
    %109 = arith.subf %101, %108 : vector<8x32xf32>
    %110 = arith.mulf %109, %109 : vector<8x32xf32>
    %cst_42 = arith.constant dense<0.000000e+00> : vector<8xf32>
    %111 = vector.multi_reduction <add>, %110, %cst_42 [1] : vector<8x32xf32> to vector<8xf32>
    %112 = vector.shape_cast %111 : vector<8xf32> to vector<8x1xf32>
    %cst_43 = arith.constant 3.200000e+01 : f32
    %113 = vector.broadcast %cst_43 : f32 to vector<8x1xf32>
    %114 = arith.divf %112, %113 : vector<8x1xf32>
    %cst_44 = arith.constant 9.99999974E-6 : f32
    %115 = vector.broadcast %cst_44 : f32 to vector<8x1xf32>
    %116 = arith.addf %114, %115 : vector<8x1xf32>
    %117 = math.rsqrt %116 : vector<8x1xf32>
    %118 = vector.broadcast %117 : vector<8x1xf32> to vector<8x32xf32>
    %119 = arith.mulf %109, %118 : vector<8x32xf32>
    %120 = vector.broadcast %102 : vector<1x32xf32> to vector<8x32xf32>
    %121 = arith.mulf %119, %120 : vector<8x32xf32>
    %122 = vector.broadcast %103 : vector<1x32xf32> to vector<8x32xf32>
    %123 = arith.addf %121, %122 : vector<8x32xf32>
    %c256 = arith.constant 256 : index
    %c0_45 = arith.constant 0 : index
    %124 = vector.load %arg3[%c256, %c0_45] : memref<2008x128xf32, #tpu.memory_space<vmem>>, vector<32x64xf32>
    %cst_46 = arith.constant dense<0.000000e+00> : vector<8x64xf32>
    %125 = tpu.matmul %123, %124, %cst_46 {dimension_numbers = #tpu.dot_dimension_numbers<[1], [0], [0], [1], [0, 0, 1, 1], [], []>} : vector<8x32xf32>, vector<32x64xf32>, vector<8x64xf32> -> vector<8x64xf32>
    %c288 = arith.constant 288 : index
    %c0_47 = arith.constant 0 : index
    %126 = vector.load %arg3[%c288, %c0_47] : memref<2008x128xf32, #tpu.memory_space<vmem>>, vector<1x64xf32>
    %127 = vector.broadcast %126 : vector<1x64xf32> to vector<8x64xf32>
    %128 = arith.addf %125, %127 : vector<8x64xf32>
    %cst_48 = arith.constant 0.000000e+00 : f32
    %129 = vector.broadcast %cst_48 : f32 to vector<8x64xf32>
    %130 = arith.maximumf %128, %129 : vector<8x64xf32>
    %c296 = arith.constant 296 : index
    %c0_49 = arith.constant 0 : index
    %131 = vector.load %arg3[%c296, %c0_49] : memref<2008x128xf32, #tpu.memory_space<vmem>>, vector<64x32xf32>
    %cst_50 = arith.constant dense<0.000000e+00> : vector<8x32xf32>
    %132 = tpu.matmul %130, %131, %cst_50 {dimension_numbers = #tpu.dot_dimension_numbers<[1], [0], [0], [1], [0, 0, 1, 1], [], []>} : vector<8x64xf32>, vector<64x32xf32>, vector<8x32xf32> -> vector<8x32xf32>
    %c360 = arith.constant 360 : index
    %c0_51 = arith.constant 0 : index
    %133 = vector.load %arg3[%c360, %c0_51] : memref<2008x128xf32, #tpu.memory_space<vmem>>, vector<1x32xf32>
    %134 = vector.broadcast %133 : vector<1x32xf32> to vector<8x32xf32>
    %135 = arith.addf %132, %134 : vector<8x32xf32>
    %136 = arith.addf %123, %135 : vector<8x32xf32>
    %c368 = arith.constant 368 : index
    %c0_52 = arith.constant 0 : index
    %137 = vector.load %arg3[%c368, %c0_52] : memref<2008x128xf32, #tpu.memory_space<vmem>>, vector<1x32xf32>
    %c376 = arith.constant 376 : index
    %c0_53 = arith.constant 0 : index
    %138 = vector.load %arg3[%c376, %c0_53] : memref<2008x128xf32, #tpu.memory_space<vmem>>, vector<1x32xf32>
    %cst_54 = arith.constant dense<0.000000e+00> : vector<8xf32>
    %139 = vector.multi_reduction <add>, %136, %cst_54 [1] : vector<8x32xf32> to vector<8xf32>
    %140 = vector.shape_cast %139 : vector<8xf32> to vector<8x1xf32>
    %cst_55 = arith.constant 3.200000e+01 : f32
    %141 = vector.broadcast %cst_55 : f32 to vector<8x1xf32>
    %142 = arith.divf %140, %141 : vector<8x1xf32>
    %143 = vector.broadcast %142 : vector<8x1xf32> to vector<8x32xf32>
    %144 = arith.subf %136, %143 : vector<8x32xf32>
    %145 = arith.mulf %144, %144 : vector<8x32xf32>
    %cst_56 = arith.constant dense<0.000000e+00> : vector<8xf32>
    %146 = vector.multi_reduction <add>, %145, %cst_56 [1] : vector<8x32xf32> to vector<8xf32>
    %147 = vector.shape_cast %146 : vector<8xf32> to vector<8x1xf32>
    %cst_57 = arith.constant 3.200000e+01 : f32
    %148 = vector.broadcast %cst_57 : f32 to vector<8x1xf32>
    %149 = arith.divf %147, %148 : vector<8x1xf32>
    %cst_58 = arith.constant 9.99999974E-6 : f32
    %150 = vector.broadcast %cst_58 : f32 to vector<8x1xf32>
    %151 = arith.addf %149, %150 : vector<8x1xf32>
    %152 = math.rsqrt %151 : vector<8x1xf32>
    %153 = vector.broadcast %152 : vector<8x1xf32> to vector<8x32xf32>
    %154 = arith.mulf %144, %153 : vector<8x32xf32>
    %155 = vector.broadcast %137 : vector<1x32xf32> to vector<8x32xf32>
    %156 = arith.mulf %154, %155 : vector<8x32xf32>
    %157 = vector.broadcast %138 : vector<1x32xf32> to vector<8x32xf32>
    %158 = arith.addf %156, %157 : vector<8x32xf32>
    %c384 = arith.constant 384 : index
    %c0_59 = arith.constant 0 : index
    %159 = vector.load %arg3[%c384, %c0_59] : memref<2008x128xf32, #tpu.memory_space<vmem>>, vector<96x32xf32>
    %cst_60 = arith.constant dense<0.000000e+00> : vector<96x8xf32>
    %160 = tpu.matmul %159, %158, %cst_60 {dimension_numbers = #tpu.dot_dimension_numbers<[1], [1], [0], [0], [0, 0, 1, 0], [], []>} : vector<96x32xf32>, vector<8x32xf32>, vector<96x8xf32> -> vector<96x8xf32>
    %c480 = arith.constant 480 : index
    %c0_61 = arith.constant 0 : index
    %161 = vector.load %arg3[%c480, %c0_61] : memref<2008x128xf32, #tpu.memory_space<vmem>>, vector<96x8xf32>
    %162 = arith.addf %160, %161 : vector<96x8xf32>
    %163 = vector.extract_strided_slice %162 {offsets = [0, 0], sizes = [32, 8], strides = [1, 1]} : vector<96x8xf32> to vector<32x8xf32>
    %164 = vector.extract_strided_slice %162 {offsets = [32, 0], sizes = [32, 8], strides = [1, 1]} : vector<96x8xf32> to vector<32x8xf32>
    %165 = vector.extract_strided_slice %162 {offsets = [64, 0], sizes = [32, 8], strides = [1, 1]} : vector<96x8xf32> to vector<32x8xf32>
    %166 = vector.extract_strided_slice %163 {offsets = [0, 0], sizes = [8, 8], strides = [1, 1]} : vector<32x8xf32> to vector<8x8xf32>
    %167 = vector.extract_strided_slice %164 {offsets = [0, 0], sizes = [8, 8], strides = [1, 1]} : vector<32x8xf32> to vector<8x8xf32>
    %cst_62 = arith.constant dense<0.000000e+00> : vector<8x8xf32>
    %168 = tpu.matmul %166, %167, %cst_62 {dimension_numbers = #tpu.dot_dimension_numbers<[0], [0], [1], [1], [0, 1, 1, 1], [], []>} : vector<8x8xf32>, vector<8x8xf32>, vector<8x8xf32> -> vector<8x8xf32>
    %cst_63 = arith.constant 0.353553385 : f32
    %169 = vector.broadcast %cst_63 : f32 to vector<8x8xf32>
    %170 = arith.mulf %168, %169 : vector<8x8xf32>
    %cst_64 = arith.constant dense<0xFF800000> : vector<8xf32>
    %171 = vector.multi_reduction <maximumf>, %170, %cst_64 [1] : vector<8x8xf32> to vector<8xf32>
    %172 = vector.shape_cast %171 : vector<8xf32> to vector<8x1xf32>
    %173 = vector.broadcast %172 : vector<8x1xf32> to vector<8x8xf32>
    %174 = arith.subf %170, %173 : vector<8x8xf32>
    %175 = math.exp %174 : vector<8x8xf32>
    %cst_65 = arith.constant dense<0.000000e+00> : vector<8xf32>
    %176 = vector.multi_reduction <add>, %175, %cst_65 [1] : vector<8x8xf32> to vector<8xf32>
    %177 = vector.shape_cast %176 : vector<8xf32> to vector<8x1xf32>
    %178 = vector.broadcast %177 : vector<8x1xf32> to vector<8x8xf32>
    %179 = arith.divf %175, %178 : vector<8x8xf32>
    %180 = vector.extract_strided_slice %165 {offsets = [0, 0], sizes = [8, 8], strides = [1, 1]} : vector<32x8xf32> to vector<8x8xf32>
    %cst_66 = arith.constant dense<0.000000e+00> : vector<8x8xf32>
    %181 = tpu.matmul %180, %179, %cst_66 {dimension_numbers = #tpu.dot_dimension_numbers<[1], [1], [0], [0], [0, 0, 1, 0], [], []>} : vector<8x8xf32>, vector<8x8xf32>, vector<8x8xf32> -> vector<8x8xf32>
    %182 = vector.extract_strided_slice %163 {offsets = [8, 0], sizes = [8, 8], strides = [1, 1]} : vector<32x8xf32> to vector<8x8xf32>
    %183 = vector.extract_strided_slice %164 {offsets = [8, 0], sizes = [8, 8], strides = [1, 1]} : vector<32x8xf32> to vector<8x8xf32>
    %cst_67 = arith.constant dense<0.000000e+00> : vector<8x8xf32>
    %184 = tpu.matmul %182, %183, %cst_67 {dimension_numbers = #tpu.dot_dimension_numbers<[0], [0], [1], [1], [0, 1, 1, 1], [], []>} : vector<8x8xf32>, vector<8x8xf32>, vector<8x8xf32> -> vector<8x8xf32>
    %cst_68 = arith.constant 0.353553385 : f32
    %185 = vector.broadcast %cst_68 : f32 to vector<8x8xf32>
    %186 = arith.mulf %184, %185 : vector<8x8xf32>
    %cst_69 = arith.constant dense<0xFF800000> : vector<8xf32>
    %187 = vector.multi_reduction <maximumf>, %186, %cst_69 [1] : vector<8x8xf32> to vector<8xf32>
    %188 = vector.shape_cast %187 : vector<8xf32> to vector<8x1xf32>
    %189 = vector.broadcast %188 : vector<8x1xf32> to vector<8x8xf32>
    %190 = arith.subf %186, %189 : vector<8x8xf32>
    %191 = math.exp %190 : vector<8x8xf32>
    %cst_70 = arith.constant dense<0.000000e+00> : vector<8xf32>
    %192 = vector.multi_reduction <add>, %191, %cst_70 [1] : vector<8x8xf32> to vector<8xf32>
    %193 = vector.shape_cast %192 : vector<8xf32> to vector<8x1xf32>
    %194 = vector.broadcast %193 : vector<8x1xf32> to vector<8x8xf32>
    %195 = arith.divf %191, %194 : vector<8x8xf32>
    %196 = vector.extract_strided_slice %165 {offsets = [8, 0], sizes = [8, 8], strides = [1, 1]} : vector<32x8xf32> to vector<8x8xf32>
    %cst_71 = arith.constant dense<0.000000e+00> : vector<8x8xf32>
    %197 = tpu.matmul %196, %195, %cst_71 {dimension_numbers = #tpu.dot_dimension_numbers<[1], [1], [0], [0], [0, 0, 1, 0], [], []>} : vector<8x8xf32>, vector<8x8xf32>, vector<8x8xf32> -> vector<8x8xf32>
    %198 = vector.extract_strided_slice %163 {offsets = [16, 0], sizes = [8, 8], strides = [1, 1]} : vector<32x8xf32> to vector<8x8xf32>
    %199 = vector.extract_strided_slice %164 {offsets = [16, 0], sizes = [8, 8], strides = [1, 1]} : vector<32x8xf32> to vector<8x8xf32>
    %cst_72 = arith.constant dense<0.000000e+00> : vector<8x8xf32>
    %200 = tpu.matmul %198, %199, %cst_72 {dimension_numbers = #tpu.dot_dimension_numbers<[0], [0], [1], [1], [0, 1, 1, 1], [], []>} : vector<8x8xf32>, vector<8x8xf32>, vector<8x8xf32> -> vector<8x8xf32>
    %cst_73 = arith.constant 0.353553385 : f32
    %201 = vector.broadcast %cst_73 : f32 to vector<8x8xf32>
    %202 = arith.mulf %200, %201 : vector<8x8xf32>
    %cst_74 = arith.constant dense<0xFF800000> : vector<8xf32>
    %203 = vector.multi_reduction <maximumf>, %202, %cst_74 [1] : vector<8x8xf32> to vector<8xf32>
    %204 = vector.shape_cast %203 : vector<8xf32> to vector<8x1xf32>
    %205 = vector.broadcast %204 : vector<8x1xf32> to vector<8x8xf32>
    %206 = arith.subf %202, %205 : vector<8x8xf32>
    %207 = math.exp %206 : vector<8x8xf32>
    %cst_75 = arith.constant dense<0.000000e+00> : vector<8xf32>
    %208 = vector.multi_reduction <add>, %207, %cst_75 [1] : vector<8x8xf32> to vector<8xf32>
    %209 = vector.shape_cast %208 : vector<8xf32> to vector<8x1xf32>
    %210 = vector.broadcast %209 : vector<8x1xf32> to vector<8x8xf32>
    %211 = arith.divf %207, %210 : vector<8x8xf32>
    %212 = vector.extract_strided_slice %165 {offsets = [16, 0], sizes = [8, 8], strides = [1, 1]} : vector<32x8xf32> to vector<8x8xf32>
    %cst_76 = arith.constant dense<0.000000e+00> : vector<8x8xf32>
    %213 = tpu.matmul %212, %211, %cst_76 {dimension_numbers = #tpu.dot_dimension_numbers<[1], [1], [0], [0], [0, 0, 1, 0], [], []>} : vector<8x8xf32>, vector<8x8xf32>, vector<8x8xf32> -> vector<8x8xf32>
    %214 = vector.extract_strided_slice %163 {offsets = [24, 0], sizes = [8, 8], strides = [1, 1]} : vector<32x8xf32> to vector<8x8xf32>
    %215 = vector.extract_strided_slice %164 {offsets = [24, 0], sizes = [8, 8], strides = [1, 1]} : vector<32x8xf32> to vector<8x8xf32>
    %cst_77 = arith.constant dense<0.000000e+00> : vector<8x8xf32>
    %216 = tpu.matmul %214, %215, %cst_77 {dimension_numbers = #tpu.dot_dimension_numbers<[0], [0], [1], [1], [0, 1, 1, 1], [], []>} : vector<8x8xf32>, vector<8x8xf32>, vector<8x8xf32> -> vector<8x8xf32>
    %cst_78 = arith.constant 0.353553385 : f32
    %217 = vector.broadcast %cst_78 : f32 to vector<8x8xf32>
    %218 = arith.mulf %216, %217 : vector<8x8xf32>
    %cst_79 = arith.constant dense<0xFF800000> : vector<8xf32>
    %219 = vector.multi_reduction <maximumf>, %218, %cst_79 [1] : vector<8x8xf32> to vector<8xf32>
    %220 = vector.shape_cast %219 : vector<8xf32> to vector<8x1xf32>
    %221 = vector.broadcast %220 : vector<8x1xf32> to vector<8x8xf32>
    %222 = arith.subf %218, %221 : vector<8x8xf32>
    %223 = math.exp %222 : vector<8x8xf32>
    %cst_80 = arith.constant dense<0.000000e+00> : vector<8xf32>
    %224 = vector.multi_reduction <add>, %223, %cst_80 [1] : vector<8x8xf32> to vector<8xf32>
    %225 = vector.shape_cast %224 : vector<8xf32> to vector<8x1xf32>
    %226 = vector.broadcast %225 : vector<8x1xf32> to vector<8x8xf32>
    %227 = arith.divf %223, %226 : vector<8x8xf32>
    %228 = vector.extract_strided_slice %165 {offsets = [24, 0], sizes = [8, 8], strides = [1, 1]} : vector<32x8xf32> to vector<8x8xf32>
    %cst_81 = arith.constant dense<0.000000e+00> : vector<8x8xf32>
    %229 = tpu.matmul %228, %227, %cst_81 {dimension_numbers = #tpu.dot_dimension_numbers<[1], [1], [0], [0], [0, 0, 1, 0], [], []>} : vector<8x8xf32>, vector<8x8xf32>, vector<8x8xf32> -> vector<8x8xf32>
    %230 = tpu.concatenate %181, %197, %213, %229 in 0 : vector<8x8xf32>, vector<8x8xf32>, vector<8x8xf32>, vector<8x8xf32> -> vector<32x8xf32>
    %c576 = arith.constant 576 : index
    %c0_82 = arith.constant 0 : index
    %231 = vector.load %arg3[%c576, %c0_82] : memref<2008x128xf32, #tpu.memory_space<vmem>>, vector<32x32xf32>
    %cst_83 = arith.constant dense<0.000000e+00> : vector<8x32xf32>
    %232 = tpu.matmul %230, %231, %cst_83 {dimension_numbers = #tpu.dot_dimension_numbers<[0], [0], [1], [1], [0, 1, 1, 1], [], []>} : vector<32x8xf32>, vector<32x32xf32>, vector<8x32xf32> -> vector<8x32xf32>
    %c608 = arith.constant 608 : index
    %c0_84 = arith.constant 0 : index
    %233 = vector.load %arg3[%c608, %c0_84] : memref<2008x128xf32, #tpu.memory_space<vmem>>, vector<1x32xf32>
    %234 = vector.broadcast %233 : vector<1x32xf32> to vector<8x32xf32>
    %235 = arith.addf %232, %234 : vector<8x32xf32>
    %236 = arith.addf %158, %235 : vector<8x32xf32>
    %c616 = arith.constant 616 : index
    %c0_85 = arith.constant 0 : index
    %237 = vector.load %arg3[%c616, %c0_85] : memref<2008x128xf32, #tpu.memory_space<vmem>>, vector<1x32xf32>
    %c624 = arith.constant 624 : index
    %c0_86 = arith.constant 0 : index
    %238 = vector.load %arg3[%c624, %c0_86] : memref<2008x128xf32, #tpu.memory_space<vmem>>, vector<1x32xf32>
    %cst_87 = arith.constant dense<0.000000e+00> : vector<8xf32>
    %239 = vector.multi_reduction <add>, %236, %cst_87 [1] : vector<8x32xf32> to vector<8xf32>
    %240 = vector.shape_cast %239 : vector<8xf32> to vector<8x1xf32>
    %cst_88 = arith.constant 3.200000e+01 : f32
    %241 = vector.broadcast %cst_88 : f32 to vector<8x1xf32>
    %242 = arith.divf %240, %241 : vector<8x1xf32>
    %243 = vector.broadcast %242 : vector<8x1xf32> to vector<8x32xf32>
    %244 = arith.subf %236, %243 : vector<8x32xf32>
    %245 = arith.mulf %244, %244 : vector<8x32xf32>
    %cst_89 = arith.constant dense<0.000000e+00> : vector<8xf32>
    %246 = vector.multi_reduction <add>, %245, %cst_89 [1] : vector<8x32xf32> to vector<8xf32>
    %247 = vector.shape_cast %246 : vector<8xf32> to vector<8x1xf32>
    %cst_90 = arith.constant 3.200000e+01 : f32
    %248 = vector.broadcast %cst_90 : f32 to vector<8x1xf32>
    %249 = arith.divf %247, %248 : vector<8x1xf32>
    %cst_91 = arith.constant 9.99999974E-6 : f32
    %250 = vector.broadcast %cst_91 : f32 to vector<8x1xf32>
    %251 = arith.addf %249, %250 : vector<8x1xf32>
    %252 = math.rsqrt %251 : vector<8x1xf32>
    %253 = vector.broadcast %252 : vector<8x1xf32> to vector<8x32xf32>
    %254 = arith.mulf %244, %253 : vector<8x32xf32>
    %255 = vector.broadcast %237 : vector<1x32xf32> to vector<8x32xf32>
    %256 = arith.mulf %254, %255 : vector<8x32xf32>
    %257 = vector.broadcast %238 : vector<1x32xf32> to vector<8x32xf32>
    %258 = arith.addf %256, %257 : vector<8x32xf32>
    %c632 = arith.constant 632 : index
    %c0_92 = arith.constant 0 : index
    %259 = vector.load %arg3[%c632, %c0_92] : memref<2008x128xf32, #tpu.memory_space<vmem>>, vector<32x64xf32>
    %cst_93 = arith.constant dense<0.000000e+00> : vector<8x64xf32>
    %260 = tpu.matmul %258, %259, %cst_93 {dimension_numbers = #tpu.dot_dimension_numbers<[1], [0], [0], [1], [0, 0, 1, 1], [], []>} : vector<8x32xf32>, vector<32x64xf32>, vector<8x64xf32> -> vector<8x64xf32>
    %c664 = arith.constant 664 : index
    %c0_94 = arith.constant 0 : index
    %261 = vector.load %arg3[%c664, %c0_94] : memref<2008x128xf32, #tpu.memory_space<vmem>>, vector<1x64xf32>
    %262 = vector.broadcast %261 : vector<1x64xf32> to vector<8x64xf32>
    %263 = arith.addf %260, %262 : vector<8x64xf32>
    %cst_95 = arith.constant 0.000000e+00 : f32
    %264 = vector.broadcast %cst_95 : f32 to vector<8x64xf32>
    %265 = arith.maximumf %263, %264 : vector<8x64xf32>
    %c672 = arith.constant 672 : index
    %c0_96 = arith.constant 0 : index
    %266 = vector.load %arg3[%c672, %c0_96] : memref<2008x128xf32, #tpu.memory_space<vmem>>, vector<64x32xf32>
    %cst_97 = arith.constant dense<0.000000e+00> : vector<8x32xf32>
    %267 = tpu.matmul %265, %266, %cst_97 {dimension_numbers = #tpu.dot_dimension_numbers<[1], [0], [0], [1], [0, 0, 1, 1], [], []>} : vector<8x64xf32>, vector<64x32xf32>, vector<8x32xf32> -> vector<8x32xf32>
    %c736 = arith.constant 736 : index
    %c0_98 = arith.constant 0 : index
    %268 = vector.load %arg3[%c736, %c0_98] : memref<2008x128xf32, #tpu.memory_space<vmem>>, vector<1x32xf32>
    %269 = vector.broadcast %268 : vector<1x32xf32> to vector<8x32xf32>
    %270 = arith.addf %267, %269 : vector<8x32xf32>
    %271 = arith.addf %258, %270 : vector<8x32xf32>
    %c744 = arith.constant 744 : index
    %c0_99 = arith.constant 0 : index
    %272 = vector.load %arg3[%c744, %c0_99] : memref<2008x128xf32, #tpu.memory_space<vmem>>, vector<1x32xf32>
    %c752 = arith.constant 752 : index
    %c0_100 = arith.constant 0 : index
    %273 = vector.load %arg3[%c752, %c0_100] : memref<2008x128xf32, #tpu.memory_space<vmem>>, vector<1x32xf32>
    %cst_101 = arith.constant dense<0.000000e+00> : vector<8xf32>
    %274 = vector.multi_reduction <add>, %271, %cst_101 [1] : vector<8x32xf32> to vector<8xf32>
    %275 = vector.shape_cast %274 : vector<8xf32> to vector<8x1xf32>
    %cst_102 = arith.constant 3.200000e+01 : f32
    %276 = vector.broadcast %cst_102 : f32 to vector<8x1xf32>
    %277 = arith.divf %275, %276 : vector<8x1xf32>
    %278 = vector.broadcast %277 : vector<8x1xf32> to vector<8x32xf32>
    %279 = arith.subf %271, %278 : vector<8x32xf32>
    %280 = arith.mulf %279, %279 : vector<8x32xf32>
    %cst_103 = arith.constant dense<0.000000e+00> : vector<8xf32>
    %281 = vector.multi_reduction <add>, %280, %cst_103 [1] : vector<8x32xf32> to vector<8xf32>
    %282 = vector.shape_cast %281 : vector<8xf32> to vector<8x1xf32>
    %cst_104 = arith.constant 3.200000e+01 : f32
    %283 = vector.broadcast %cst_104 : f32 to vector<8x1xf32>
    %284 = arith.divf %282, %283 : vector<8x1xf32>
    %cst_105 = arith.constant 9.99999974E-6 : f32
    %285 = vector.broadcast %cst_105 : f32 to vector<8x1xf32>
    %286 = arith.addf %284, %285 : vector<8x1xf32>
    %287 = math.rsqrt %286 : vector<8x1xf32>
    %288 = vector.broadcast %287 : vector<8x1xf32> to vector<8x32xf32>
    %289 = arith.mulf %279, %288 : vector<8x32xf32>
    %290 = vector.broadcast %272 : vector<1x32xf32> to vector<8x32xf32>
    %291 = arith.mulf %289, %290 : vector<8x32xf32>
    %292 = vector.broadcast %273 : vector<1x32xf32> to vector<8x32xf32>
    %293 = arith.addf %291, %292 : vector<8x32xf32>
    %c760 = arith.constant 760 : index
    %c0_106 = arith.constant 0 : index
    %294 = vector.load %arg3[%c760, %c0_106] : memref<2008x128xf32, #tpu.memory_space<vmem>>, vector<96x32xf32>
    %cst_107 = arith.constant dense<0.000000e+00> : vector<96x8xf32>
    %295 = tpu.matmul %294, %17, %cst_107 {dimension_numbers = #tpu.dot_dimension_numbers<[1], [1], [0], [0], [0, 0, 1, 0], [], []>} : vector<96x32xf32>, vector<8x32xf32>, vector<96x8xf32> -> vector<96x8xf32>
    %c856 = arith.constant 856 : index
    %c0_108 = arith.constant 0 : index
    %296 = vector.load %arg3[%c856, %c0_108] : memref<2008x128xf32, #tpu.memory_space<vmem>>, vector<96x8xf32>
    %297 = arith.addf %295, %296 : vector<96x8xf32>
    %298 = vector.extract_strided_slice %297 {offsets = [0, 0], sizes = [32, 8], strides = [1, 1]} : vector<96x8xf32> to vector<32x8xf32>
    %299 = vector.extract_strided_slice %297 {offsets = [32, 0], sizes = [32, 8], strides = [1, 1]} : vector<96x8xf32> to vector<32x8xf32>
    %300 = vector.extract_strided_slice %297 {offsets = [64, 0], sizes = [32, 8], strides = [1, 1]} : vector<96x8xf32> to vector<32x8xf32>
    %301 = vector.extract_strided_slice %298 {offsets = [0, 0], sizes = [8, 8], strides = [1, 1]} : vector<32x8xf32> to vector<8x8xf32>
    %302 = vector.extract_strided_slice %299 {offsets = [0, 0], sizes = [8, 8], strides = [1, 1]} : vector<32x8xf32> to vector<8x8xf32>
    %cst_109 = arith.constant dense<0.000000e+00> : vector<8x8xf32>
    %303 = tpu.matmul %301, %302, %cst_109 {dimension_numbers = #tpu.dot_dimension_numbers<[0], [0], [1], [1], [0, 1, 1, 1], [], []>} : vector<8x8xf32>, vector<8x8xf32>, vector<8x8xf32> -> vector<8x8xf32>
    %cst_110 = arith.constant 0.353553385 : f32
    %304 = vector.broadcast %cst_110 : f32 to vector<8x8xf32>
    %305 = arith.mulf %303, %304 : vector<8x8xf32>
    %306 = arith.addf %305, %23 : vector<8x8xf32>
    %cst_111 = arith.constant dense<0xFF800000> : vector<8xf32>
    %307 = vector.multi_reduction <maximumf>, %306, %cst_111 [1] : vector<8x8xf32> to vector<8xf32>
    %308 = vector.shape_cast %307 : vector<8xf32> to vector<8x1xf32>
    %309 = vector.broadcast %308 : vector<8x1xf32> to vector<8x8xf32>
    %310 = arith.subf %306, %309 : vector<8x8xf32>
    %311 = math.exp %310 : vector<8x8xf32>
    %cst_112 = arith.constant dense<0.000000e+00> : vector<8xf32>
    %312 = vector.multi_reduction <add>, %311, %cst_112 [1] : vector<8x8xf32> to vector<8xf32>
    %313 = vector.shape_cast %312 : vector<8xf32> to vector<8x1xf32>
    %314 = vector.broadcast %313 : vector<8x1xf32> to vector<8x8xf32>
    %315 = arith.divf %311, %314 : vector<8x8xf32>
    %316 = vector.extract_strided_slice %300 {offsets = [0, 0], sizes = [8, 8], strides = [1, 1]} : vector<32x8xf32> to vector<8x8xf32>
    %cst_113 = arith.constant dense<0.000000e+00> : vector<8x8xf32>
    %317 = tpu.matmul %316, %315, %cst_113 {dimension_numbers = #tpu.dot_dimension_numbers<[1], [1], [0], [0], [0, 0, 1, 0], [], []>} : vector<8x8xf32>, vector<8x8xf32>, vector<8x8xf32> -> vector<8x8xf32>
    %318 = vector.extract_strided_slice %298 {offsets = [8, 0], sizes = [8, 8], strides = [1, 1]} : vector<32x8xf32> to vector<8x8xf32>
    %319 = vector.extract_strided_slice %299 {offsets = [8, 0], sizes = [8, 8], strides = [1, 1]} : vector<32x8xf32> to vector<8x8xf32>
    %cst_114 = arith.constant dense<0.000000e+00> : vector<8x8xf32>
    %320 = tpu.matmul %318, %319, %cst_114 {dimension_numbers = #tpu.dot_dimension_numbers<[0], [0], [1], [1], [0, 1, 1, 1], [], []>} : vector<8x8xf32>, vector<8x8xf32>, vector<8x8xf32> -> vector<8x8xf32>
    %cst_115 = arith.constant 0.353553385 : f32
    %321 = vector.broadcast %cst_115 : f32 to vector<8x8xf32>
    %322 = arith.mulf %320, %321 : vector<8x8xf32>
    %323 = arith.addf %322, %23 : vector<8x8xf32>
    %cst_116 = arith.constant dense<0xFF800000> : vector<8xf32>
    %324 = vector.multi_reduction <maximumf>, %323, %cst_116 [1] : vector<8x8xf32> to vector<8xf32>
    %325 = vector.shape_cast %324 : vector<8xf32> to vector<8x1xf32>
    %326 = vector.broadcast %325 : vector<8x1xf32> to vector<8x8xf32>
    %327 = arith.subf %323, %326 : vector<8x8xf32>
    %328 = math.exp %327 : vector<8x8xf32>
    %cst_117 = arith.constant dense<0.000000e+00> : vector<8xf32>
    %329 = vector.multi_reduction <add>, %328, %cst_117 [1] : vector<8x8xf32> to vector<8xf32>
    %330 = vector.shape_cast %329 : vector<8xf32> to vector<8x1xf32>
    %331 = vector.broadcast %330 : vector<8x1xf32> to vector<8x8xf32>
    %332 = arith.divf %328, %331 : vector<8x8xf32>
    %333 = vector.extract_strided_slice %300 {offsets = [8, 0], sizes = [8, 8], strides = [1, 1]} : vector<32x8xf32> to vector<8x8xf32>
    %cst_118 = arith.constant dense<0.000000e+00> : vector<8x8xf32>
    %334 = tpu.matmul %333, %332, %cst_118 {dimension_numbers = #tpu.dot_dimension_numbers<[1], [1], [0], [0], [0, 0, 1, 0], [], []>} : vector<8x8xf32>, vector<8x8xf32>, vector<8x8xf32> -> vector<8x8xf32>
    %335 = vector.extract_strided_slice %298 {offsets = [16, 0], sizes = [8, 8], strides = [1, 1]} : vector<32x8xf32> to vector<8x8xf32>
    %336 = vector.extract_strided_slice %299 {offsets = [16, 0], sizes = [8, 8], strides = [1, 1]} : vector<32x8xf32> to vector<8x8xf32>
    %cst_119 = arith.constant dense<0.000000e+00> : vector<8x8xf32>
    %337 = tpu.matmul %335, %336, %cst_119 {dimension_numbers = #tpu.dot_dimension_numbers<[0], [0], [1], [1], [0, 1, 1, 1], [], []>} : vector<8x8xf32>, vector<8x8xf32>, vector<8x8xf32> -> vector<8x8xf32>
    %cst_120 = arith.constant 0.353553385 : f32
    %338 = vector.broadcast %cst_120 : f32 to vector<8x8xf32>
    %339 = arith.mulf %337, %338 : vector<8x8xf32>
    %340 = arith.addf %339, %23 : vector<8x8xf32>
    %cst_121 = arith.constant dense<0xFF800000> : vector<8xf32>
    %341 = vector.multi_reduction <maximumf>, %340, %cst_121 [1] : vector<8x8xf32> to vector<8xf32>
    %342 = vector.shape_cast %341 : vector<8xf32> to vector<8x1xf32>
    %343 = vector.broadcast %342 : vector<8x1xf32> to vector<8x8xf32>
    %344 = arith.subf %340, %343 : vector<8x8xf32>
    %345 = math.exp %344 : vector<8x8xf32>
    %cst_122 = arith.constant dense<0.000000e+00> : vector<8xf32>
    %346 = vector.multi_reduction <add>, %345, %cst_122 [1] : vector<8x8xf32> to vector<8xf32>
    %347 = vector.shape_cast %346 : vector<8xf32> to vector<8x1xf32>
    %348 = vector.broadcast %347 : vector<8x1xf32> to vector<8x8xf32>
    %349 = arith.divf %345, %348 : vector<8x8xf32>
    %350 = vector.extract_strided_slice %300 {offsets = [16, 0], sizes = [8, 8], strides = [1, 1]} : vector<32x8xf32> to vector<8x8xf32>
    %cst_123 = arith.constant dense<0.000000e+00> : vector<8x8xf32>
    %351 = tpu.matmul %350, %349, %cst_123 {dimension_numbers = #tpu.dot_dimension_numbers<[1], [1], [0], [0], [0, 0, 1, 0], [], []>} : vector<8x8xf32>, vector<8x8xf32>, vector<8x8xf32> -> vector<8x8xf32>
    %352 = vector.extract_strided_slice %298 {offsets = [24, 0], sizes = [8, 8], strides = [1, 1]} : vector<32x8xf32> to vector<8x8xf32>
    %353 = vector.extract_strided_slice %299 {offsets = [24, 0], sizes = [8, 8], strides = [1, 1]} : vector<32x8xf32> to vector<8x8xf32>
    %cst_124 = arith.constant dense<0.000000e+00> : vector<8x8xf32>
    %354 = tpu.matmul %352, %353, %cst_124 {dimension_numbers = #tpu.dot_dimension_numbers<[0], [0], [1], [1], [0, 1, 1, 1], [], []>} : vector<8x8xf32>, vector<8x8xf32>, vector<8x8xf32> -> vector<8x8xf32>
    %cst_125 = arith.constant 0.353553385 : f32
    %355 = vector.broadcast %cst_125 : f32 to vector<8x8xf32>
    %356 = arith.mulf %354, %355 : vector<8x8xf32>
    %357 = arith.addf %356, %23 : vector<8x8xf32>
    %cst_126 = arith.constant dense<0xFF800000> : vector<8xf32>
    %358 = vector.multi_reduction <maximumf>, %357, %cst_126 [1] : vector<8x8xf32> to vector<8xf32>
    %359 = vector.shape_cast %358 : vector<8xf32> to vector<8x1xf32>
    %360 = vector.broadcast %359 : vector<8x1xf32> to vector<8x8xf32>
    %361 = arith.subf %357, %360 : vector<8x8xf32>
    %362 = math.exp %361 : vector<8x8xf32>
    %cst_127 = arith.constant dense<0.000000e+00> : vector<8xf32>
    %363 = vector.multi_reduction <add>, %362, %cst_127 [1] : vector<8x8xf32> to vector<8xf32>
    %364 = vector.shape_cast %363 : vector<8xf32> to vector<8x1xf32>
    %365 = vector.broadcast %364 : vector<8x1xf32> to vector<8x8xf32>
    %366 = arith.divf %362, %365 : vector<8x8xf32>
    %367 = vector.extract_strided_slice %300 {offsets = [24, 0], sizes = [8, 8], strides = [1, 1]} : vector<32x8xf32> to vector<8x8xf32>
    %cst_128 = arith.constant dense<0.000000e+00> : vector<8x8xf32>
    %368 = tpu.matmul %367, %366, %cst_128 {dimension_numbers = #tpu.dot_dimension_numbers<[1], [1], [0], [0], [0, 0, 1, 0], [], []>} : vector<8x8xf32>, vector<8x8xf32>, vector<8x8xf32> -> vector<8x8xf32>
    %369 = tpu.concatenate %317, %334, %351, %368 in 0 : vector<8x8xf32>, vector<8x8xf32>, vector<8x8xf32>, vector<8x8xf32> -> vector<32x8xf32>
    %c952 = arith.constant 952 : index
    %c0_129 = arith.constant 0 : index
    %370 = vector.load %arg3[%c952, %c0_129] : memref<2008x128xf32, #tpu.memory_space<vmem>>, vector<32x32xf32>
    %cst_130 = arith.constant dense<0.000000e+00> : vector<8x32xf32>
    %371 = tpu.matmul %369, %370, %cst_130 {dimension_numbers = #tpu.dot_dimension_numbers<[0], [0], [1], [1], [0, 1, 1, 1], [], []>} : vector<32x8xf32>, vector<32x32xf32>, vector<8x32xf32> -> vector<8x32xf32>
    %c984 = arith.constant 984 : index
    %c0_131 = arith.constant 0 : index
    %372 = vector.load %arg3[%c984, %c0_131] : memref<2008x128xf32, #tpu.memory_space<vmem>>, vector<1x32xf32>
    %373 = vector.broadcast %372 : vector<1x32xf32> to vector<8x32xf32>
    %374 = arith.addf %371, %373 : vector<8x32xf32>
    %375 = arith.addf %17, %374 : vector<8x32xf32>
    %c992 = arith.constant 992 : index
    %c0_132 = arith.constant 0 : index
    %376 = vector.load %arg3[%c992, %c0_132] : memref<2008x128xf32, #tpu.memory_space<vmem>>, vector<1x32xf32>
    %c1000 = arith.constant 1000 : index
    %c0_133 = arith.constant 0 : index
    %377 = vector.load %arg3[%c1000, %c0_133] : memref<2008x128xf32, #tpu.memory_space<vmem>>, vector<1x32xf32>
    %cst_134 = arith.constant dense<0.000000e+00> : vector<8xf32>
    %378 = vector.multi_reduction <add>, %375, %cst_134 [1] : vector<8x32xf32> to vector<8xf32>
    %379 = vector.shape_cast %378 : vector<8xf32> to vector<8x1xf32>
    %cst_135 = arith.constant 3.200000e+01 : f32
    %380 = vector.broadcast %cst_135 : f32 to vector<8x1xf32>
    %381 = arith.divf %379, %380 : vector<8x1xf32>
    %382 = vector.broadcast %381 : vector<8x1xf32> to vector<8x32xf32>
    %383 = arith.subf %375, %382 : vector<8x32xf32>
    %384 = arith.mulf %383, %383 : vector<8x32xf32>
    %cst_136 = arith.constant dense<0.000000e+00> : vector<8xf32>
    %385 = vector.multi_reduction <add>, %384, %cst_136 [1] : vector<8x32xf32> to vector<8xf32>
    %386 = vector.shape_cast %385 : vector<8xf32> to vector<8x1xf32>
    %cst_137 = arith.constant 3.200000e+01 : f32
    %387 = vector.broadcast %cst_137 : f32 to vector<8x1xf32>
    %388 = arith.divf %386, %387 : vector<8x1xf32>
    %cst_138 = arith.constant 9.99999974E-6 : f32
    %389 = vector.broadcast %cst_138 : f32 to vector<8x1xf32>
    %390 = arith.addf %388, %389 : vector<8x1xf32>
    %391 = math.rsqrt %390 : vector<8x1xf32>
    %392 = vector.broadcast %391 : vector<8x1xf32> to vector<8x32xf32>
    %393 = arith.mulf %383, %392 : vector<8x32xf32>
    %394 = vector.broadcast %376 : vector<1x32xf32> to vector<8x32xf32>
    %395 = arith.mulf %393, %394 : vector<8x32xf32>
    %396 = vector.broadcast %377 : vector<1x32xf32> to vector<8x32xf32>
    %397 = arith.addf %395, %396 : vector<8x32xf32>
    %c1008 = arith.constant 1008 : index
    %c0_139 = arith.constant 0 : index
    %398 = vector.load %arg3[%c1008, %c0_139] : memref<2008x128xf32, #tpu.memory_space<vmem>>, vector<32x32xf32>
    %cst_140 = arith.constant dense<0.000000e+00> : vector<32x8xf32>
    %399 = tpu.matmul %398, %397, %cst_140 {dimension_numbers = #tpu.dot_dimension_numbers<[1], [1], [0], [0], [0, 0, 1, 0], [], []>} : vector<32x32xf32>, vector<8x32xf32>, vector<32x8xf32> -> vector<32x8xf32>
    %c1104 = arith.constant 1104 : index
    %c0_141 = arith.constant 0 : index
    %400 = vector.load %arg3[%c1104, %c0_141] : memref<2008x128xf32, #tpu.memory_space<vmem>>, vector<32x8xf32>
    %401 = arith.addf %399, %400 : vector<32x8xf32>
    %c1040 = arith.constant 1040 : index
    %c0_142 = arith.constant 0 : index
    %402 = vector.load %arg3[%c1040, %c0_142] : memref<2008x128xf32, #tpu.memory_space<vmem>>, vector<64x32xf32>
    %cst_143 = arith.constant dense<0.000000e+00> : vector<64x8xf32>
    %403 = tpu.matmul %402, %293, %cst_143 {dimension_numbers = #tpu.dot_dimension_numbers<[1], [1], [0], [0], [0, 0, 1, 0], [], []>} : vector<64x32xf32>, vector<8x32xf32>, vector<64x8xf32> -> vector<64x8xf32>
    %c1136 = arith.constant 1136 : index
    %c0_144 = arith.constant 0 : index
    %404 = vector.load %arg3[%c1136, %c0_144] : memref<2008x128xf32, #tpu.memory_space<vmem>>, vector<64x8xf32>
    %405 = arith.addf %403, %404 : vector<64x8xf32>
    %406 = vector.extract_strided_slice %405 {offsets = [0, 0], sizes = [32, 8], strides = [1, 1]} : vector<64x8xf32> to vector<32x8xf32>
    %407 = vector.extract_strided_slice %405 {offsets = [32, 0], sizes = [32, 8], strides = [1, 1]} : vector<64x8xf32> to vector<32x8xf32>
    %408 = vector.extract_strided_slice %401 {offsets = [0, 0], sizes = [8, 8], strides = [1, 1]} : vector<32x8xf32> to vector<8x8xf32>
    %409 = vector.extract_strided_slice %406 {offsets = [0, 0], sizes = [8, 8], strides = [1, 1]} : vector<32x8xf32> to vector<8x8xf32>
    %cst_145 = arith.constant dense<0.000000e+00> : vector<8x8xf32>
    %410 = tpu.matmul %408, %409, %cst_145 {dimension_numbers = #tpu.dot_dimension_numbers<[0], [0], [1], [1], [0, 1, 1, 1], [], []>} : vector<8x8xf32>, vector<8x8xf32>, vector<8x8xf32> -> vector<8x8xf32>
    %cst_146 = arith.constant 0.353553385 : f32
    %411 = vector.broadcast %cst_146 : f32 to vector<8x8xf32>
    %412 = arith.mulf %410, %411 : vector<8x8xf32>
    %cst_147 = arith.constant dense<0xFF800000> : vector<8xf32>
    %413 = vector.multi_reduction <maximumf>, %412, %cst_147 [1] : vector<8x8xf32> to vector<8xf32>
    %414 = vector.shape_cast %413 : vector<8xf32> to vector<8x1xf32>
    %415 = vector.broadcast %414 : vector<8x1xf32> to vector<8x8xf32>
    %416 = arith.subf %412, %415 : vector<8x8xf32>
    %417 = math.exp %416 : vector<8x8xf32>
    %cst_148 = arith.constant dense<0.000000e+00> : vector<8xf32>
    %418 = vector.multi_reduction <add>, %417, %cst_148 [1] : vector<8x8xf32> to vector<8xf32>
    %419 = vector.shape_cast %418 : vector<8xf32> to vector<8x1xf32>
    %420 = vector.broadcast %419 : vector<8x1xf32> to vector<8x8xf32>
    %421 = arith.divf %417, %420 : vector<8x8xf32>
    %422 = vector.extract_strided_slice %407 {offsets = [0, 0], sizes = [8, 8], strides = [1, 1]} : vector<32x8xf32> to vector<8x8xf32>
    %cst_149 = arith.constant dense<0.000000e+00> : vector<8x8xf32>
    %423 = tpu.matmul %422, %421, %cst_149 {dimension_numbers = #tpu.dot_dimension_numbers<[1], [1], [0], [0], [0, 0, 1, 0], [], []>} : vector<8x8xf32>, vector<8x8xf32>, vector<8x8xf32> -> vector<8x8xf32>
    %424 = vector.extract_strided_slice %401 {offsets = [8, 0], sizes = [8, 8], strides = [1, 1]} : vector<32x8xf32> to vector<8x8xf32>
    %425 = vector.extract_strided_slice %406 {offsets = [8, 0], sizes = [8, 8], strides = [1, 1]} : vector<32x8xf32> to vector<8x8xf32>
    %cst_150 = arith.constant dense<0.000000e+00> : vector<8x8xf32>
    %426 = tpu.matmul %424, %425, %cst_150 {dimension_numbers = #tpu.dot_dimension_numbers<[0], [0], [1], [1], [0, 1, 1, 1], [], []>} : vector<8x8xf32>, vector<8x8xf32>, vector<8x8xf32> -> vector<8x8xf32>
    %cst_151 = arith.constant 0.353553385 : f32
    %427 = vector.broadcast %cst_151 : f32 to vector<8x8xf32>
    %428 = arith.mulf %426, %427 : vector<8x8xf32>
    %cst_152 = arith.constant dense<0xFF800000> : vector<8xf32>
    %429 = vector.multi_reduction <maximumf>, %428, %cst_152 [1] : vector<8x8xf32> to vector<8xf32>
    %430 = vector.shape_cast %429 : vector<8xf32> to vector<8x1xf32>
    %431 = vector.broadcast %430 : vector<8x1xf32> to vector<8x8xf32>
    %432 = arith.subf %428, %431 : vector<8x8xf32>
    %433 = math.exp %432 : vector<8x8xf32>
    %cst_153 = arith.constant dense<0.000000e+00> : vector<8xf32>
    %434 = vector.multi_reduction <add>, %433, %cst_153 [1] : vector<8x8xf32> to vector<8xf32>
    %435 = vector.shape_cast %434 : vector<8xf32> to vector<8x1xf32>
    %436 = vector.broadcast %435 : vector<8x1xf32> to vector<8x8xf32>
    %437 = arith.divf %433, %436 : vector<8x8xf32>
    %438 = vector.extract_strided_slice %407 {offsets = [8, 0], sizes = [8, 8], strides = [1, 1]} : vector<32x8xf32> to vector<8x8xf32>
    %cst_154 = arith.constant dense<0.000000e+00> : vector<8x8xf32>
    %439 = tpu.matmul %438, %437, %cst_154 {dimension_numbers = #tpu.dot_dimension_numbers<[1], [1], [0], [0], [0, 0, 1, 0], [], []>} : vector<8x8xf32>, vector<8x8xf32>, vector<8x8xf32> -> vector<8x8xf32>
    %440 = vector.extract_strided_slice %401 {offsets = [16, 0], sizes = [8, 8], strides = [1, 1]} : vector<32x8xf32> to vector<8x8xf32>
    %441 = vector.extract_strided_slice %406 {offsets = [16, 0], sizes = [8, 8], strides = [1, 1]} : vector<32x8xf32> to vector<8x8xf32>
    %cst_155 = arith.constant dense<0.000000e+00> : vector<8x8xf32>
    %442 = tpu.matmul %440, %441, %cst_155 {dimension_numbers = #tpu.dot_dimension_numbers<[0], [0], [1], [1], [0, 1, 1, 1], [], []>} : vector<8x8xf32>, vector<8x8xf32>, vector<8x8xf32> -> vector<8x8xf32>
    %cst_156 = arith.constant 0.353553385 : f32
    %443 = vector.broadcast %cst_156 : f32 to vector<8x8xf32>
    %444 = arith.mulf %442, %443 : vector<8x8xf32>
    %cst_157 = arith.constant dense<0xFF800000> : vector<8xf32>
    %445 = vector.multi_reduction <maximumf>, %444, %cst_157 [1] : vector<8x8xf32> to vector<8xf32>
    %446 = vector.shape_cast %445 : vector<8xf32> to vector<8x1xf32>
    %447 = vector.broadcast %446 : vector<8x1xf32> to vector<8x8xf32>
    %448 = arith.subf %444, %447 : vector<8x8xf32>
    %449 = math.exp %448 : vector<8x8xf32>
    %cst_158 = arith.constant dense<0.000000e+00> : vector<8xf32>
    %450 = vector.multi_reduction <add>, %449, %cst_158 [1] : vector<8x8xf32> to vector<8xf32>
    %451 = vector.shape_cast %450 : vector<8xf32> to vector<8x1xf32>
    %452 = vector.broadcast %451 : vector<8x1xf32> to vector<8x8xf32>
    %453 = arith.divf %449, %452 : vector<8x8xf32>
    %454 = vector.extract_strided_slice %407 {offsets = [16, 0], sizes = [8, 8], strides = [1, 1]} : vector<32x8xf32> to vector<8x8xf32>
    %cst_159 = arith.constant dense<0.000000e+00> : vector<8x8xf32>
    %455 = tpu.matmul %454, %453, %cst_159 {dimension_numbers = #tpu.dot_dimension_numbers<[1], [1], [0], [0], [0, 0, 1, 0], [], []>} : vector<8x8xf32>, vector<8x8xf32>, vector<8x8xf32> -> vector<8x8xf32>
    %456 = vector.extract_strided_slice %401 {offsets = [24, 0], sizes = [8, 8], strides = [1, 1]} : vector<32x8xf32> to vector<8x8xf32>
    %457 = vector.extract_strided_slice %406 {offsets = [24, 0], sizes = [8, 8], strides = [1, 1]} : vector<32x8xf32> to vector<8x8xf32>
    %cst_160 = arith.constant dense<0.000000e+00> : vector<8x8xf32>
    %458 = tpu.matmul %456, %457, %cst_160 {dimension_numbers = #tpu.dot_dimension_numbers<[0], [0], [1], [1], [0, 1, 1, 1], [], []>} : vector<8x8xf32>, vector<8x8xf32>, vector<8x8xf32> -> vector<8x8xf32>
    %cst_161 = arith.constant 0.353553385 : f32
    %459 = vector.broadcast %cst_161 : f32 to vector<8x8xf32>
    %460 = arith.mulf %458, %459 : vector<8x8xf32>
    %cst_162 = arith.constant dense<0xFF800000> : vector<8xf32>
    %461 = vector.multi_reduction <maximumf>, %460, %cst_162 [1] : vector<8x8xf32> to vector<8xf32>
    %462 = vector.shape_cast %461 : vector<8xf32> to vector<8x1xf32>
    %463 = vector.broadcast %462 : vector<8x1xf32> to vector<8x8xf32>
    %464 = arith.subf %460, %463 : vector<8x8xf32>
    %465 = math.exp %464 : vector<8x8xf32>
    %cst_163 = arith.constant dense<0.000000e+00> : vector<8xf32>
    %466 = vector.multi_reduction <add>, %465, %cst_163 [1] : vector<8x8xf32> to vector<8xf32>
    %467 = vector.shape_cast %466 : vector<8xf32> to vector<8x1xf32>
    %468 = vector.broadcast %467 : vector<8x1xf32> to vector<8x8xf32>
    %469 = arith.divf %465, %468 : vector<8x8xf32>
    %470 = vector.extract_strided_slice %407 {offsets = [24, 0], sizes = [8, 8], strides = [1, 1]} : vector<32x8xf32> to vector<8x8xf32>
    %cst_164 = arith.constant dense<0.000000e+00> : vector<8x8xf32>
    %471 = tpu.matmul %470, %469, %cst_164 {dimension_numbers = #tpu.dot_dimension_numbers<[1], [1], [0], [0], [0, 0, 1, 0], [], []>} : vector<8x8xf32>, vector<8x8xf32>, vector<8x8xf32> -> vector<8x8xf32>
    %472 = tpu.concatenate %423, %439, %455, %471 in 0 : vector<8x8xf32>, vector<8x8xf32>, vector<8x8xf32>, vector<8x8xf32> -> vector<32x8xf32>
    %c1200 = arith.constant 1200 : index
    %c0_165 = arith.constant 0 : index
    %473 = vector.load %arg3[%c1200, %c0_165] : memref<2008x128xf32, #tpu.memory_space<vmem>>, vector<32x32xf32>
    %cst_166 = arith.constant dense<0.000000e+00> : vector<8x32xf32>
    %474 = tpu.matmul %472, %473, %cst_166 {dimension_numbers = #tpu.dot_dimension_numbers<[0], [0], [1], [1], [0, 1, 1, 1], [], []>} : vector<32x8xf32>, vector<32x32xf32>, vector<8x32xf32> -> vector<8x32xf32>
    %c1232 = arith.constant 1232 : index
    %c0_167 = arith.constant 0 : index
    %475 = vector.load %arg3[%c1232, %c0_167] : memref<2008x128xf32, #tpu.memory_space<vmem>>, vector<1x32xf32>
    %476 = vector.broadcast %475 : vector<1x32xf32> to vector<8x32xf32>
    %477 = arith.addf %474, %476 : vector<8x32xf32>
    %478 = arith.addf %397, %477 : vector<8x32xf32>
    %c1240 = arith.constant 1240 : index
    %c0_168 = arith.constant 0 : index
    %479 = vector.load %arg3[%c1240, %c0_168] : memref<2008x128xf32, #tpu.memory_space<vmem>>, vector<1x32xf32>
    %c1248 = arith.constant 1248 : index
    %c0_169 = arith.constant 0 : index
    %480 = vector.load %arg3[%c1248, %c0_169] : memref<2008x128xf32, #tpu.memory_space<vmem>>, vector<1x32xf32>
    %cst_170 = arith.constant dense<0.000000e+00> : vector<8xf32>
    %481 = vector.multi_reduction <add>, %478, %cst_170 [1] : vector<8x32xf32> to vector<8xf32>
    %482 = vector.shape_cast %481 : vector<8xf32> to vector<8x1xf32>
    %cst_171 = arith.constant 3.200000e+01 : f32
    %483 = vector.broadcast %cst_171 : f32 to vector<8x1xf32>
    %484 = arith.divf %482, %483 : vector<8x1xf32>
    %485 = vector.broadcast %484 : vector<8x1xf32> to vector<8x32xf32>
    %486 = arith.subf %478, %485 : vector<8x32xf32>
    %487 = arith.mulf %486, %486 : vector<8x32xf32>
    %cst_172 = arith.constant dense<0.000000e+00> : vector<8xf32>
    %488 = vector.multi_reduction <add>, %487, %cst_172 [1] : vector<8x32xf32> to vector<8xf32>
    %489 = vector.shape_cast %488 : vector<8xf32> to vector<8x1xf32>
    %cst_173 = arith.constant 3.200000e+01 : f32
    %490 = vector.broadcast %cst_173 : f32 to vector<8x1xf32>
    %491 = arith.divf %489, %490 : vector<8x1xf32>
    %cst_174 = arith.constant 9.99999974E-6 : f32
    %492 = vector.broadcast %cst_174 : f32 to vector<8x1xf32>
    %493 = arith.addf %491, %492 : vector<8x1xf32>
    %494 = math.rsqrt %493 : vector<8x1xf32>
    %495 = vector.broadcast %494 : vector<8x1xf32> to vector<8x32xf32>
    %496 = arith.mulf %486, %495 : vector<8x32xf32>
    %497 = vector.broadcast %479 : vector<1x32xf32> to vector<8x32xf32>
    %498 = arith.mulf %496, %497 : vector<8x32xf32>
    %499 = vector.broadcast %480 : vector<1x32xf32> to vector<8x32xf32>
    %500 = arith.addf %498, %499 : vector<8x32xf32>
    %c1256 = arith.constant 1256 : index
    %c0_175 = arith.constant 0 : index
    %501 = vector.load %arg3[%c1256, %c0_175] : memref<2008x128xf32, #tpu.memory_space<vmem>>, vector<32x64xf32>
    %cst_176 = arith.constant dense<0.000000e+00> : vector<8x64xf32>
    %502 = tpu.matmul %500, %501, %cst_176 {dimension_numbers = #tpu.dot_dimension_numbers<[1], [0], [0], [1], [0, 0, 1, 1], [], []>} : vector<8x32xf32>, vector<32x64xf32>, vector<8x64xf32> -> vector<8x64xf32>
    %c1288 = arith.constant 1288 : index
    %c0_177 = arith.constant 0 : index
    %503 = vector.load %arg3[%c1288, %c0_177] : memref<2008x128xf32, #tpu.memory_space<vmem>>, vector<1x64xf32>
    %504 = vector.broadcast %503 : vector<1x64xf32> to vector<8x64xf32>
    %505 = arith.addf %502, %504 : vector<8x64xf32>
    %cst_178 = arith.constant 0.000000e+00 : f32
    %506 = vector.broadcast %cst_178 : f32 to vector<8x64xf32>
    %507 = arith.maximumf %505, %506 : vector<8x64xf32>
    %c1296 = arith.constant 1296 : index
    %c0_179 = arith.constant 0 : index
    %508 = vector.load %arg3[%c1296, %c0_179] : memref<2008x128xf32, #tpu.memory_space<vmem>>, vector<64x32xf32>
    %cst_180 = arith.constant dense<0.000000e+00> : vector<8x32xf32>
    %509 = tpu.matmul %507, %508, %cst_180 {dimension_numbers = #tpu.dot_dimension_numbers<[1], [0], [0], [1], [0, 0, 1, 1], [], []>} : vector<8x64xf32>, vector<64x32xf32>, vector<8x32xf32> -> vector<8x32xf32>
    %c1360 = arith.constant 1360 : index
    %c0_181 = arith.constant 0 : index
    %510 = vector.load %arg3[%c1360, %c0_181] : memref<2008x128xf32, #tpu.memory_space<vmem>>, vector<1x32xf32>
    %511 = vector.broadcast %510 : vector<1x32xf32> to vector<8x32xf32>
    %512 = arith.addf %509, %511 : vector<8x32xf32>
    %513 = arith.addf %500, %512 : vector<8x32xf32>
    %c1368 = arith.constant 1368 : index
    %c0_182 = arith.constant 0 : index
    %514 = vector.load %arg3[%c1368, %c0_182] : memref<2008x128xf32, #tpu.memory_space<vmem>>, vector<1x32xf32>
    %c1376 = arith.constant 1376 : index
    %c0_183 = arith.constant 0 : index
    %515 = vector.load %arg3[%c1376, %c0_183] : memref<2008x128xf32, #tpu.memory_space<vmem>>, vector<1x32xf32>
    %cst_184 = arith.constant dense<0.000000e+00> : vector<8xf32>
    %516 = vector.multi_reduction <add>, %513, %cst_184 [1] : vector<8x32xf32> to vector<8xf32>
    %517 = vector.shape_cast %516 : vector<8xf32> to vector<8x1xf32>
    %cst_185 = arith.constant 3.200000e+01 : f32
    %518 = vector.broadcast %cst_185 : f32 to vector<8x1xf32>
    %519 = arith.divf %517, %518 : vector<8x1xf32>
    %520 = vector.broadcast %519 : vector<8x1xf32> to vector<8x32xf32>
    %521 = arith.subf %513, %520 : vector<8x32xf32>
    %522 = arith.mulf %521, %521 : vector<8x32xf32>
    %cst_186 = arith.constant dense<0.000000e+00> : vector<8xf32>
    %523 = vector.multi_reduction <add>, %522, %cst_186 [1] : vector<8x32xf32> to vector<8xf32>
    %524 = vector.shape_cast %523 : vector<8xf32> to vector<8x1xf32>
    %cst_187 = arith.constant 3.200000e+01 : f32
    %525 = vector.broadcast %cst_187 : f32 to vector<8x1xf32>
    %526 = arith.divf %524, %525 : vector<8x1xf32>
    %cst_188 = arith.constant 9.99999974E-6 : f32
    %527 = vector.broadcast %cst_188 : f32 to vector<8x1xf32>
    %528 = arith.addf %526, %527 : vector<8x1xf32>
    %529 = math.rsqrt %528 : vector<8x1xf32>
    %530 = vector.broadcast %529 : vector<8x1xf32> to vector<8x32xf32>
    %531 = arith.mulf %521, %530 : vector<8x32xf32>
    %532 = vector.broadcast %514 : vector<1x32xf32> to vector<8x32xf32>
    %533 = arith.mulf %531, %532 : vector<8x32xf32>
    %534 = vector.broadcast %515 : vector<1x32xf32> to vector<8x32xf32>
    %535 = arith.addf %533, %534 : vector<8x32xf32>
    %c1384 = arith.constant 1384 : index
    %c0_189 = arith.constant 0 : index
    %536 = vector.load %arg3[%c1384, %c0_189] : memref<2008x128xf32, #tpu.memory_space<vmem>>, vector<96x32xf32>
    %cst_190 = arith.constant dense<0.000000e+00> : vector<96x8xf32>
    %537 = tpu.matmul %536, %535, %cst_190 {dimension_numbers = #tpu.dot_dimension_numbers<[1], [1], [0], [0], [0, 0, 1, 0], [], []>} : vector<96x32xf32>, vector<8x32xf32>, vector<96x8xf32> -> vector<96x8xf32>
    %c1480 = arith.constant 1480 : index
    %c0_191 = arith.constant 0 : index
    %538 = vector.load %arg3[%c1480, %c0_191] : memref<2008x128xf32, #tpu.memory_space<vmem>>, vector<96x8xf32>
    %539 = arith.addf %537, %538 : vector<96x8xf32>
    %540 = vector.extract_strided_slice %539 {offsets = [0, 0], sizes = [32, 8], strides = [1, 1]} : vector<96x8xf32> to vector<32x8xf32>
    %541 = vector.extract_strided_slice %539 {offsets = [32, 0], sizes = [32, 8], strides = [1, 1]} : vector<96x8xf32> to vector<32x8xf32>
    %542 = vector.extract_strided_slice %539 {offsets = [64, 0], sizes = [32, 8], strides = [1, 1]} : vector<96x8xf32> to vector<32x8xf32>
    %543 = vector.extract_strided_slice %540 {offsets = [0, 0], sizes = [8, 8], strides = [1, 1]} : vector<32x8xf32> to vector<8x8xf32>
    %544 = vector.extract_strided_slice %541 {offsets = [0, 0], sizes = [8, 8], strides = [1, 1]} : vector<32x8xf32> to vector<8x8xf32>
    %cst_192 = arith.constant dense<0.000000e+00> : vector<8x8xf32>
    %545 = tpu.matmul %543, %544, %cst_192 {dimension_numbers = #tpu.dot_dimension_numbers<[0], [0], [1], [1], [0, 1, 1, 1], [], []>} : vector<8x8xf32>, vector<8x8xf32>, vector<8x8xf32> -> vector<8x8xf32>
    %cst_193 = arith.constant 0.353553385 : f32
    %546 = vector.broadcast %cst_193 : f32 to vector<8x8xf32>
    %547 = arith.mulf %545, %546 : vector<8x8xf32>
    %548 = arith.addf %547, %23 : vector<8x8xf32>
    %cst_194 = arith.constant dense<0xFF800000> : vector<8xf32>
    %549 = vector.multi_reduction <maximumf>, %548, %cst_194 [1] : vector<8x8xf32> to vector<8xf32>
    %550 = vector.shape_cast %549 : vector<8xf32> to vector<8x1xf32>
    %551 = vector.broadcast %550 : vector<8x1xf32> to vector<8x8xf32>
    %552 = arith.subf %548, %551 : vector<8x8xf32>
    %553 = math.exp %552 : vector<8x8xf32>
    %cst_195 = arith.constant dense<0.000000e+00> : vector<8xf32>
    %554 = vector.multi_reduction <add>, %553, %cst_195 [1] : vector<8x8xf32> to vector<8xf32>
    %555 = vector.shape_cast %554 : vector<8xf32> to vector<8x1xf32>
    %556 = vector.broadcast %555 : vector<8x1xf32> to vector<8x8xf32>
    %557 = arith.divf %553, %556 : vector<8x8xf32>
    %558 = vector.extract_strided_slice %542 {offsets = [0, 0], sizes = [8, 8], strides = [1, 1]} : vector<32x8xf32> to vector<8x8xf32>
    %cst_196 = arith.constant dense<0.000000e+00> : vector<8x8xf32>
    %559 = tpu.matmul %558, %557, %cst_196 {dimension_numbers = #tpu.dot_dimension_numbers<[1], [1], [0], [0], [0, 0, 1, 0], [], []>} : vector<8x8xf32>, vector<8x8xf32>, vector<8x8xf32> -> vector<8x8xf32>
    %560 = vector.extract_strided_slice %540 {offsets = [8, 0], sizes = [8, 8], strides = [1, 1]} : vector<32x8xf32> to vector<8x8xf32>
    %561 = vector.extract_strided_slice %541 {offsets = [8, 0], sizes = [8, 8], strides = [1, 1]} : vector<32x8xf32> to vector<8x8xf32>
    %cst_197 = arith.constant dense<0.000000e+00> : vector<8x8xf32>
    %562 = tpu.matmul %560, %561, %cst_197 {dimension_numbers = #tpu.dot_dimension_numbers<[0], [0], [1], [1], [0, 1, 1, 1], [], []>} : vector<8x8xf32>, vector<8x8xf32>, vector<8x8xf32> -> vector<8x8xf32>
    %cst_198 = arith.constant 0.353553385 : f32
    %563 = vector.broadcast %cst_198 : f32 to vector<8x8xf32>
    %564 = arith.mulf %562, %563 : vector<8x8xf32>
    %565 = arith.addf %564, %23 : vector<8x8xf32>
    %cst_199 = arith.constant dense<0xFF800000> : vector<8xf32>
    %566 = vector.multi_reduction <maximumf>, %565, %cst_199 [1] : vector<8x8xf32> to vector<8xf32>
    %567 = vector.shape_cast %566 : vector<8xf32> to vector<8x1xf32>
    %568 = vector.broadcast %567 : vector<8x1xf32> to vector<8x8xf32>
    %569 = arith.subf %565, %568 : vector<8x8xf32>
    %570 = math.exp %569 : vector<8x8xf32>
    %cst_200 = arith.constant dense<0.000000e+00> : vector<8xf32>
    %571 = vector.multi_reduction <add>, %570, %cst_200 [1] : vector<8x8xf32> to vector<8xf32>
    %572 = vector.shape_cast %571 : vector<8xf32> to vector<8x1xf32>
    %573 = vector.broadcast %572 : vector<8x1xf32> to vector<8x8xf32>
    %574 = arith.divf %570, %573 : vector<8x8xf32>
    %575 = vector.extract_strided_slice %542 {offsets = [8, 0], sizes = [8, 8], strides = [1, 1]} : vector<32x8xf32> to vector<8x8xf32>
    %cst_201 = arith.constant dense<0.000000e+00> : vector<8x8xf32>
    %576 = tpu.matmul %575, %574, %cst_201 {dimension_numbers = #tpu.dot_dimension_numbers<[1], [1], [0], [0], [0, 0, 1, 0], [], []>} : vector<8x8xf32>, vector<8x8xf32>, vector<8x8xf32> -> vector<8x8xf32>
    %577 = vector.extract_strided_slice %540 {offsets = [16, 0], sizes = [8, 8], strides = [1, 1]} : vector<32x8xf32> to vector<8x8xf32>
    %578 = vector.extract_strided_slice %541 {offsets = [16, 0], sizes = [8, 8], strides = [1, 1]} : vector<32x8xf32> to vector<8x8xf32>
    %cst_202 = arith.constant dense<0.000000e+00> : vector<8x8xf32>
    %579 = tpu.matmul %577, %578, %cst_202 {dimension_numbers = #tpu.dot_dimension_numbers<[0], [0], [1], [1], [0, 1, 1, 1], [], []>} : vector<8x8xf32>, vector<8x8xf32>, vector<8x8xf32> -> vector<8x8xf32>
    %cst_203 = arith.constant 0.353553385 : f32
    %580 = vector.broadcast %cst_203 : f32 to vector<8x8xf32>
    %581 = arith.mulf %579, %580 : vector<8x8xf32>
    %582 = arith.addf %581, %23 : vector<8x8xf32>
    %cst_204 = arith.constant dense<0xFF800000> : vector<8xf32>
    %583 = vector.multi_reduction <maximumf>, %582, %cst_204 [1] : vector<8x8xf32> to vector<8xf32>
    %584 = vector.shape_cast %583 : vector<8xf32> to vector<8x1xf32>
    %585 = vector.broadcast %584 : vector<8x1xf32> to vector<8x8xf32>
    %586 = arith.subf %582, %585 : vector<8x8xf32>
    %587 = math.exp %586 : vector<8x8xf32>
    %cst_205 = arith.constant dense<0.000000e+00> : vector<8xf32>
    %588 = vector.multi_reduction <add>, %587, %cst_205 [1] : vector<8x8xf32> to vector<8xf32>
    %589 = vector.shape_cast %588 : vector<8xf32> to vector<8x1xf32>
    %590 = vector.broadcast %589 : vector<8x1xf32> to vector<8x8xf32>
    %591 = arith.divf %587, %590 : vector<8x8xf32>
    %592 = vector.extract_strided_slice %542 {offsets = [16, 0], sizes = [8, 8], strides = [1, 1]} : vector<32x8xf32> to vector<8x8xf32>
    %cst_206 = arith.constant dense<0.000000e+00> : vector<8x8xf32>
    %593 = tpu.matmul %592, %591, %cst_206 {dimension_numbers = #tpu.dot_dimension_numbers<[1], [1], [0], [0], [0, 0, 1, 0], [], []>} : vector<8x8xf32>, vector<8x8xf32>, vector<8x8xf32> -> vector<8x8xf32>
    %594 = vector.extract_strided_slice %540 {offsets = [24, 0], sizes = [8, 8], strides = [1, 1]} : vector<32x8xf32> to vector<8x8xf32>
    %595 = vector.extract_strided_slice %541 {offsets = [24, 0], sizes = [8, 8], strides = [1, 1]} : vector<32x8xf32> to vector<8x8xf32>
    %cst_207 = arith.constant dense<0.000000e+00> : vector<8x8xf32>
    %596 = tpu.matmul %594, %595, %cst_207 {dimension_numbers = #tpu.dot_dimension_numbers<[0], [0], [1], [1], [0, 1, 1, 1], [], []>} : vector<8x8xf32>, vector<8x8xf32>, vector<8x8xf32> -> vector<8x8xf32>
    %cst_208 = arith.constant 0.353553385 : f32
    %597 = vector.broadcast %cst_208 : f32 to vector<8x8xf32>
    %598 = arith.mulf %596, %597 : vector<8x8xf32>
    %599 = arith.addf %598, %23 : vector<8x8xf32>
    %cst_209 = arith.constant dense<0xFF800000> : vector<8xf32>
    %600 = vector.multi_reduction <maximumf>, %599, %cst_209 [1] : vector<8x8xf32> to vector<8xf32>
    %601 = vector.shape_cast %600 : vector<8xf32> to vector<8x1xf32>
    %602 = vector.broadcast %601 : vector<8x1xf32> to vector<8x8xf32>
    %603 = arith.subf %599, %602 : vector<8x8xf32>
    %604 = math.exp %603 : vector<8x8xf32>
    %cst_210 = arith.constant dense<0.000000e+00> : vector<8xf32>
    %605 = vector.multi_reduction <add>, %604, %cst_210 [1] : vector<8x8xf32> to vector<8xf32>
    %606 = vector.shape_cast %605 : vector<8xf32> to vector<8x1xf32>
    %607 = vector.broadcast %606 : vector<8x1xf32> to vector<8x8xf32>
    %608 = arith.divf %604, %607 : vector<8x8xf32>
    %609 = vector.extract_strided_slice %542 {offsets = [24, 0], sizes = [8, 8], strides = [1, 1]} : vector<32x8xf32> to vector<8x8xf32>
    %cst_211 = arith.constant dense<0.000000e+00> : vector<8x8xf32>
    %610 = tpu.matmul %609, %608, %cst_211 {dimension_numbers = #tpu.dot_dimension_numbers<[1], [1], [0], [0], [0, 0, 1, 0], [], []>} : vector<8x8xf32>, vector<8x8xf32>, vector<8x8xf32> -> vector<8x8xf32>
    %611 = tpu.concatenate %559, %576, %593, %610 in 0 : vector<8x8xf32>, vector<8x8xf32>, vector<8x8xf32>, vector<8x8xf32> -> vector<32x8xf32>
    %c1576 = arith.constant 1576 : index
    %c0_212 = arith.constant 0 : index
    %612 = vector.load %arg3[%c1576, %c0_212] : memref<2008x128xf32, #tpu.memory_space<vmem>>, vector<32x32xf32>
    %cst_213 = arith.constant dense<0.000000e+00> : vector<8x32xf32>
    %613 = tpu.matmul %611, %612, %cst_213 {dimension_numbers = #tpu.dot_dimension_numbers<[0], [0], [1], [1], [0, 1, 1, 1], [], []>} : vector<32x8xf32>, vector<32x32xf32>, vector<8x32xf32> -> vector<8x32xf32>
    %c1608 = arith.constant 1608 : index
    %c0_214 = arith.constant 0 : index
    %614 = vector.load %arg3[%c1608, %c0_214] : memref<2008x128xf32, #tpu.memory_space<vmem>>, vector<1x32xf32>
    %615 = vector.broadcast %614 : vector<1x32xf32> to vector<8x32xf32>
    %616 = arith.addf %613, %615 : vector<8x32xf32>
    %617 = arith.addf %535, %616 : vector<8x32xf32>
    %c1616 = arith.constant 1616 : index
    %c0_215 = arith.constant 0 : index
    %618 = vector.load %arg3[%c1616, %c0_215] : memref<2008x128xf32, #tpu.memory_space<vmem>>, vector<1x32xf32>
    %c1624 = arith.constant 1624 : index
    %c0_216 = arith.constant 0 : index
    %619 = vector.load %arg3[%c1624, %c0_216] : memref<2008x128xf32, #tpu.memory_space<vmem>>, vector<1x32xf32>
    %cst_217 = arith.constant dense<0.000000e+00> : vector<8xf32>
    %620 = vector.multi_reduction <add>, %617, %cst_217 [1] : vector<8x32xf32> to vector<8xf32>
    %621 = vector.shape_cast %620 : vector<8xf32> to vector<8x1xf32>
    %cst_218 = arith.constant 3.200000e+01 : f32
    %622 = vector.broadcast %cst_218 : f32 to vector<8x1xf32>
    %623 = arith.divf %621, %622 : vector<8x1xf32>
    %624 = vector.broadcast %623 : vector<8x1xf32> to vector<8x32xf32>
    %625 = arith.subf %617, %624 : vector<8x32xf32>
    %626 = arith.mulf %625, %625 : vector<8x32xf32>
    %cst_219 = arith.constant dense<0.000000e+00> : vector<8xf32>
    %627 = vector.multi_reduction <add>, %626, %cst_219 [1] : vector<8x32xf32> to vector<8xf32>
    %628 = vector.shape_cast %627 : vector<8xf32> to vector<8x1xf32>
    %cst_220 = arith.constant 3.200000e+01 : f32
    %629 = vector.broadcast %cst_220 : f32 to vector<8x1xf32>
    %630 = arith.divf %628, %629 : vector<8x1xf32>
    %cst_221 = arith.constant 9.99999974E-6 : f32
    %631 = vector.broadcast %cst_221 : f32 to vector<8x1xf32>
    %632 = arith.addf %630, %631 : vector<8x1xf32>
    %633 = math.rsqrt %632 : vector<8x1xf32>
    %634 = vector.broadcast %633 : vector<8x1xf32> to vector<8x32xf32>
    %635 = arith.mulf %625, %634 : vector<8x32xf32>
    %636 = vector.broadcast %618 : vector<1x32xf32> to vector<8x32xf32>
    %637 = arith.mulf %635, %636 : vector<8x32xf32>
    %638 = vector.broadcast %619 : vector<1x32xf32> to vector<8x32xf32>
    %639 = arith.addf %637, %638 : vector<8x32xf32>
    %c1632 = arith.constant 1632 : index
    %c0_222 = arith.constant 0 : index
    %640 = vector.load %arg3[%c1632, %c0_222] : memref<2008x128xf32, #tpu.memory_space<vmem>>, vector<32x32xf32>
    %cst_223 = arith.constant dense<0.000000e+00> : vector<32x8xf32>
    %641 = tpu.matmul %640, %639, %cst_223 {dimension_numbers = #tpu.dot_dimension_numbers<[1], [1], [0], [0], [0, 0, 1, 0], [], []>} : vector<32x32xf32>, vector<8x32xf32>, vector<32x8xf32> -> vector<32x8xf32>
    %c1728 = arith.constant 1728 : index
    %c0_224 = arith.constant 0 : index
    %642 = vector.load %arg3[%c1728, %c0_224] : memref<2008x128xf32, #tpu.memory_space<vmem>>, vector<32x8xf32>
    %643 = arith.addf %641, %642 : vector<32x8xf32>
    %c1664 = arith.constant 1664 : index
    %c0_225 = arith.constant 0 : index
    %644 = vector.load %arg3[%c1664, %c0_225] : memref<2008x128xf32, #tpu.memory_space<vmem>>, vector<64x32xf32>
    %cst_226 = arith.constant dense<0.000000e+00> : vector<64x8xf32>
    %645 = tpu.matmul %644, %293, %cst_226 {dimension_numbers = #tpu.dot_dimension_numbers<[1], [1], [0], [0], [0, 0, 1, 0], [], []>} : vector<64x32xf32>, vector<8x32xf32>, vector<64x8xf32> -> vector<64x8xf32>
    %c1760 = arith.constant 1760 : index
    %c0_227 = arith.constant 0 : index
    %646 = vector.load %arg3[%c1760, %c0_227] : memref<2008x128xf32, #tpu.memory_space<vmem>>, vector<64x8xf32>
    %647 = arith.addf %645, %646 : vector<64x8xf32>
    %648 = vector.extract_strided_slice %647 {offsets = [0, 0], sizes = [32, 8], strides = [1, 1]} : vector<64x8xf32> to vector<32x8xf32>
    %649 = vector.extract_strided_slice %647 {offsets = [32, 0], sizes = [32, 8], strides = [1, 1]} : vector<64x8xf32> to vector<32x8xf32>
    %650 = vector.extract_strided_slice %643 {offsets = [0, 0], sizes = [8, 8], strides = [1, 1]} : vector<32x8xf32> to vector<8x8xf32>
    %651 = vector.extract_strided_slice %648 {offsets = [0, 0], sizes = [8, 8], strides = [1, 1]} : vector<32x8xf32> to vector<8x8xf32>
    %cst_228 = arith.constant dense<0.000000e+00> : vector<8x8xf32>
    %652 = tpu.matmul %650, %651, %cst_228 {dimension_numbers = #tpu.dot_dimension_numbers<[0], [0], [1], [1], [0, 1, 1, 1], [], []>} : vector<8x8xf32>, vector<8x8xf32>, vector<8x8xf32> -> vector<8x8xf32>
    %cst_229 = arith.constant 0.353553385 : f32
    %653 = vector.broadcast %cst_229 : f32 to vector<8x8xf32>
    %654 = arith.mulf %652, %653 : vector<8x8xf32>
    %cst_230 = arith.constant dense<0xFF800000> : vector<8xf32>
    %655 = vector.multi_reduction <maximumf>, %654, %cst_230 [1] : vector<8x8xf32> to vector<8xf32>
    %656 = vector.shape_cast %655 : vector<8xf32> to vector<8x1xf32>
    %657 = vector.broadcast %656 : vector<8x1xf32> to vector<8x8xf32>
    %658 = arith.subf %654, %657 : vector<8x8xf32>
    %659 = math.exp %658 : vector<8x8xf32>
    %cst_231 = arith.constant dense<0.000000e+00> : vector<8xf32>
    %660 = vector.multi_reduction <add>, %659, %cst_231 [1] : vector<8x8xf32> to vector<8xf32>
    %661 = vector.shape_cast %660 : vector<8xf32> to vector<8x1xf32>
    %662 = vector.broadcast %661 : vector<8x1xf32> to vector<8x8xf32>
    %663 = arith.divf %659, %662 : vector<8x8xf32>
    %664 = vector.extract_strided_slice %649 {offsets = [0, 0], sizes = [8, 8], strides = [1, 1]} : vector<32x8xf32> to vector<8x8xf32>
    %cst_232 = arith.constant dense<0.000000e+00> : vector<8x8xf32>
    %665 = tpu.matmul %664, %663, %cst_232 {dimension_numbers = #tpu.dot_dimension_numbers<[1], [1], [0], [0], [0, 0, 1, 0], [], []>} : vector<8x8xf32>, vector<8x8xf32>, vector<8x8xf32> -> vector<8x8xf32>
    %666 = vector.extract_strided_slice %643 {offsets = [8, 0], sizes = [8, 8], strides = [1, 1]} : vector<32x8xf32> to vector<8x8xf32>
    %667 = vector.extract_strided_slice %648 {offsets = [8, 0], sizes = [8, 8], strides = [1, 1]} : vector<32x8xf32> to vector<8x8xf32>
    %cst_233 = arith.constant dense<0.000000e+00> : vector<8x8xf32>
    %668 = tpu.matmul %666, %667, %cst_233 {dimension_numbers = #tpu.dot_dimension_numbers<[0], [0], [1], [1], [0, 1, 1, 1], [], []>} : vector<8x8xf32>, vector<8x8xf32>, vector<8x8xf32> -> vector<8x8xf32>
    %cst_234 = arith.constant 0.353553385 : f32
    %669 = vector.broadcast %cst_234 : f32 to vector<8x8xf32>
    %670 = arith.mulf %668, %669 : vector<8x8xf32>
    %cst_235 = arith.constant dense<0xFF800000> : vector<8xf32>
    %671 = vector.multi_reduction <maximumf>, %670, %cst_235 [1] : vector<8x8xf32> to vector<8xf32>
    %672 = vector.shape_cast %671 : vector<8xf32> to vector<8x1xf32>
    %673 = vector.broadcast %672 : vector<8x1xf32> to vector<8x8xf32>
    %674 = arith.subf %670, %673 : vector<8x8xf32>
    %675 = math.exp %674 : vector<8x8xf32>
    %cst_236 = arith.constant dense<0.000000e+00> : vector<8xf32>
    %676 = vector.multi_reduction <add>, %675, %cst_236 [1] : vector<8x8xf32> to vector<8xf32>
    %677 = vector.shape_cast %676 : vector<8xf32> to vector<8x1xf32>
    %678 = vector.broadcast %677 : vector<8x1xf32> to vector<8x8xf32>
    %679 = arith.divf %675, %678 : vector<8x8xf32>
    %680 = vector.extract_strided_slice %649 {offsets = [8, 0], sizes = [8, 8], strides = [1, 1]} : vector<32x8xf32> to vector<8x8xf32>
    %cst_237 = arith.constant dense<0.000000e+00> : vector<8x8xf32>
    %681 = tpu.matmul %680, %679, %cst_237 {dimension_numbers = #tpu.dot_dimension_numbers<[1], [1], [0], [0], [0, 0, 1, 0], [], []>} : vector<8x8xf32>, vector<8x8xf32>, vector<8x8xf32> -> vector<8x8xf32>
    %682 = vector.extract_strided_slice %643 {offsets = [16, 0], sizes = [8, 8], strides = [1, 1]} : vector<32x8xf32> to vector<8x8xf32>
    %683 = vector.extract_strided_slice %648 {offsets = [16, 0], sizes = [8, 8], strides = [1, 1]} : vector<32x8xf32> to vector<8x8xf32>
    %cst_238 = arith.constant dense<0.000000e+00> : vector<8x8xf32>
    %684 = tpu.matmul %682, %683, %cst_238 {dimension_numbers = #tpu.dot_dimension_numbers<[0], [0], [1], [1], [0, 1, 1, 1], [], []>} : vector<8x8xf32>, vector<8x8xf32>, vector<8x8xf32> -> vector<8x8xf32>
    %cst_239 = arith.constant 0.353553385 : f32
    %685 = vector.broadcast %cst_239 : f32 to vector<8x8xf32>
    %686 = arith.mulf %684, %685 : vector<8x8xf32>
    %cst_240 = arith.constant dense<0xFF800000> : vector<8xf32>
    %687 = vector.multi_reduction <maximumf>, %686, %cst_240 [1] : vector<8x8xf32> to vector<8xf32>
    %688 = vector.shape_cast %687 : vector<8xf32> to vector<8x1xf32>
    %689 = vector.broadcast %688 : vector<8x1xf32> to vector<8x8xf32>
    %690 = arith.subf %686, %689 : vector<8x8xf32>
    %691 = math.exp %690 : vector<8x8xf32>
    %cst_241 = arith.constant dense<0.000000e+00> : vector<8xf32>
    %692 = vector.multi_reduction <add>, %691, %cst_241 [1] : vector<8x8xf32> to vector<8xf32>
    %693 = vector.shape_cast %692 : vector<8xf32> to vector<8x1xf32>
    %694 = vector.broadcast %693 : vector<8x1xf32> to vector<8x8xf32>
    %695 = arith.divf %691, %694 : vector<8x8xf32>
    %696 = vector.extract_strided_slice %649 {offsets = [16, 0], sizes = [8, 8], strides = [1, 1]} : vector<32x8xf32> to vector<8x8xf32>
    %cst_242 = arith.constant dense<0.000000e+00> : vector<8x8xf32>
    %697 = tpu.matmul %696, %695, %cst_242 {dimension_numbers = #tpu.dot_dimension_numbers<[1], [1], [0], [0], [0, 0, 1, 0], [], []>} : vector<8x8xf32>, vector<8x8xf32>, vector<8x8xf32> -> vector<8x8xf32>
    %698 = vector.extract_strided_slice %643 {offsets = [24, 0], sizes = [8, 8], strides = [1, 1]} : vector<32x8xf32> to vector<8x8xf32>
    %699 = vector.extract_strided_slice %648 {offsets = [24, 0], sizes = [8, 8], strides = [1, 1]} : vector<32x8xf32> to vector<8x8xf32>
    %cst_243 = arith.constant dense<0.000000e+00> : vector<8x8xf32>
    %700 = tpu.matmul %698, %699, %cst_243 {dimension_numbers = #tpu.dot_dimension_numbers<[0], [0], [1], [1], [0, 1, 1, 1], [], []>} : vector<8x8xf32>, vector<8x8xf32>, vector<8x8xf32> -> vector<8x8xf32>
    %cst_244 = arith.constant 0.353553385 : f32
    %701 = vector.broadcast %cst_244 : f32 to vector<8x8xf32>
    %702 = arith.mulf %700, %701 : vector<8x8xf32>
    %cst_245 = arith.constant dense<0xFF800000> : vector<8xf32>
    %703 = vector.multi_reduction <maximumf>, %702, %cst_245 [1] : vector<8x8xf32> to vector<8xf32>
    %704 = vector.shape_cast %703 : vector<8xf32> to vector<8x1xf32>
    %705 = vector.broadcast %704 : vector<8x1xf32> to vector<8x8xf32>
    %706 = arith.subf %702, %705 : vector<8x8xf32>
    %707 = math.exp %706 : vector<8x8xf32>
    %cst_246 = arith.constant dense<0.000000e+00> : vector<8xf32>
    %708 = vector.multi_reduction <add>, %707, %cst_246 [1] : vector<8x8xf32> to vector<8xf32>
    %709 = vector.shape_cast %708 : vector<8xf32> to vector<8x1xf32>
    %710 = vector.broadcast %709 : vector<8x1xf32> to vector<8x8xf32>
    %711 = arith.divf %707, %710 : vector<8x8xf32>
    %712 = vector.extract_strided_slice %649 {offsets = [24, 0], sizes = [8, 8], strides = [1, 1]} : vector<32x8xf32> to vector<8x8xf32>
    %cst_247 = arith.constant dense<0.000000e+00> : vector<8x8xf32>
    %713 = tpu.matmul %712, %711, %cst_247 {dimension_numbers = #tpu.dot_dimension_numbers<[1], [1], [0], [0], [0, 0, 1, 0], [], []>} : vector<8x8xf32>, vector<8x8xf32>, vector<8x8xf32> -> vector<8x8xf32>
    %714 = tpu.concatenate %665, %681, %697, %713 in 0 : vector<8x8xf32>, vector<8x8xf32>, vector<8x8xf32>, vector<8x8xf32> -> vector<32x8xf32>
    %c1824 = arith.constant 1824 : index
    %c0_248 = arith.constant 0 : index
    %715 = vector.load %arg3[%c1824, %c0_248] : memref<2008x128xf32, #tpu.memory_space<vmem>>, vector<32x32xf32>
    %cst_249 = arith.constant dense<0.000000e+00> : vector<8x32xf32>
    %716 = tpu.matmul %714, %715, %cst_249 {dimension_numbers = #tpu.dot_dimension_numbers<[0], [0], [1], [1], [0, 1, 1, 1], [], []>} : vector<32x8xf32>, vector<32x32xf32>, vector<8x32xf32> -> vector<8x32xf32>
    %c1856 = arith.constant 1856 : index
    %c0_250 = arith.constant 0 : index
    %717 = vector.load %arg3[%c1856, %c0_250] : memref<2008x128xf32, #tpu.memory_space<vmem>>, vector<1x32xf32>
    %718 = vector.broadcast %717 : vector<1x32xf32> to vector<8x32xf32>
    %719 = arith.addf %716, %718 : vector<8x32xf32>
    %720 = arith.addf %639, %719 : vector<8x32xf32>
    %c1864 = arith.constant 1864 : index
    %c0_251 = arith.constant 0 : index
    %721 = vector.load %arg3[%c1864, %c0_251] : memref<2008x128xf32, #tpu.memory_space<vmem>>, vector<1x32xf32>
    %c1872 = arith.constant 1872 : index
    %c0_252 = arith.constant 0 : index
    %722 = vector.load %arg3[%c1872, %c0_252] : memref<2008x128xf32, #tpu.memory_space<vmem>>, vector<1x32xf32>
    %cst_253 = arith.constant dense<0.000000e+00> : vector<8xf32>
    %723 = vector.multi_reduction <add>, %720, %cst_253 [1] : vector<8x32xf32> to vector<8xf32>
    %724 = vector.shape_cast %723 : vector<8xf32> to vector<8x1xf32>
    %cst_254 = arith.constant 3.200000e+01 : f32
    %725 = vector.broadcast %cst_254 : f32 to vector<8x1xf32>
    %726 = arith.divf %724, %725 : vector<8x1xf32>
    %727 = vector.broadcast %726 : vector<8x1xf32> to vector<8x32xf32>
    %728 = arith.subf %720, %727 : vector<8x32xf32>
    %729 = arith.mulf %728, %728 : vector<8x32xf32>
    %cst_255 = arith.constant dense<0.000000e+00> : vector<8xf32>
    %730 = vector.multi_reduction <add>, %729, %cst_255 [1] : vector<8x32xf32> to vector<8xf32>
    %731 = vector.shape_cast %730 : vector<8xf32> to vector<8x1xf32>
    %cst_256 = arith.constant 3.200000e+01 : f32
    %732 = vector.broadcast %cst_256 : f32 to vector<8x1xf32>
    %733 = arith.divf %731, %732 : vector<8x1xf32>
    %cst_257 = arith.constant 9.99999974E-6 : f32
    %734 = vector.broadcast %cst_257 : f32 to vector<8x1xf32>
    %735 = arith.addf %733, %734 : vector<8x1xf32>
    %736 = math.rsqrt %735 : vector<8x1xf32>
    %737 = vector.broadcast %736 : vector<8x1xf32> to vector<8x32xf32>
    %738 = arith.mulf %728, %737 : vector<8x32xf32>
    %739 = vector.broadcast %721 : vector<1x32xf32> to vector<8x32xf32>
    %740 = arith.mulf %738, %739 : vector<8x32xf32>
    %741 = vector.broadcast %722 : vector<1x32xf32> to vector<8x32xf32>
    %742 = arith.addf %740, %741 : vector<8x32xf32>
    %c1880 = arith.constant 1880 : index
    %c0_258 = arith.constant 0 : index
    %743 = vector.load %arg3[%c1880, %c0_258] : memref<2008x128xf32, #tpu.memory_space<vmem>>, vector<32x64xf32>
    %cst_259 = arith.constant dense<0.000000e+00> : vector<8x64xf32>
    %744 = tpu.matmul %742, %743, %cst_259 {dimension_numbers = #tpu.dot_dimension_numbers<[1], [0], [0], [1], [0, 0, 1, 1], [], []>} : vector<8x32xf32>, vector<32x64xf32>, vector<8x64xf32> -> vector<8x64xf32>
    %c1912 = arith.constant 1912 : index
    %c0_260 = arith.constant 0 : index
    %745 = vector.load %arg3[%c1912, %c0_260] : memref<2008x128xf32, #tpu.memory_space<vmem>>, vector<1x64xf32>
    %746 = vector.broadcast %745 : vector<1x64xf32> to vector<8x64xf32>
    %747 = arith.addf %744, %746 : vector<8x64xf32>
    %cst_261 = arith.constant 0.000000e+00 : f32
    %748 = vector.broadcast %cst_261 : f32 to vector<8x64xf32>
    %749 = arith.maximumf %747, %748 : vector<8x64xf32>
    %c1920 = arith.constant 1920 : index
    %c0_262 = arith.constant 0 : index
    %750 = vector.load %arg3[%c1920, %c0_262] : memref<2008x128xf32, #tpu.memory_space<vmem>>, vector<64x32xf32>
    %cst_263 = arith.constant dense<0.000000e+00> : vector<8x32xf32>
    %751 = tpu.matmul %749, %750, %cst_263 {dimension_numbers = #tpu.dot_dimension_numbers<[1], [0], [0], [1], [0, 0, 1, 1], [], []>} : vector<8x64xf32>, vector<64x32xf32>, vector<8x32xf32> -> vector<8x32xf32>
    %c1984 = arith.constant 1984 : index
    %c0_264 = arith.constant 0 : index
    %752 = vector.load %arg3[%c1984, %c0_264] : memref<2008x128xf32, #tpu.memory_space<vmem>>, vector<1x32xf32>
    %753 = vector.broadcast %752 : vector<1x32xf32> to vector<8x32xf32>
    %754 = arith.addf %751, %753 : vector<8x32xf32>
    %755 = arith.addf %742, %754 : vector<8x32xf32>
    %c1992 = arith.constant 1992 : index
    %c0_265 = arith.constant 0 : index
    %756 = vector.load %arg3[%c1992, %c0_265] : memref<2008x128xf32, #tpu.memory_space<vmem>>, vector<1x32xf32>
    %c2000 = arith.constant 2000 : index
    %c0_266 = arith.constant 0 : index
    %757 = vector.load %arg3[%c2000, %c0_266] : memref<2008x128xf32, #tpu.memory_space<vmem>>, vector<1x32xf32>
    %cst_267 = arith.constant dense<0.000000e+00> : vector<8xf32>
    %758 = vector.multi_reduction <add>, %755, %cst_267 [1] : vector<8x32xf32> to vector<8xf32>
    %759 = vector.shape_cast %758 : vector<8xf32> to vector<8x1xf32>
    %cst_268 = arith.constant 3.200000e+01 : f32
    %760 = vector.broadcast %cst_268 : f32 to vector<8x1xf32>
    %761 = arith.divf %759, %760 : vector<8x1xf32>
    %762 = vector.broadcast %761 : vector<8x1xf32> to vector<8x32xf32>
    %763 = arith.subf %755, %762 : vector<8x32xf32>
    %764 = arith.mulf %763, %763 : vector<8x32xf32>
    %cst_269 = arith.constant dense<0.000000e+00> : vector<8xf32>
    %765 = vector.multi_reduction <add>, %764, %cst_269 [1] : vector<8x32xf32> to vector<8xf32>
    %766 = vector.shape_cast %765 : vector<8xf32> to vector<8x1xf32>
    %cst_270 = arith.constant 3.200000e+01 : f32
    %767 = vector.broadcast %cst_270 : f32 to vector<8x1xf32>
    %768 = arith.divf %766, %767 : vector<8x1xf32>
    %cst_271 = arith.constant 9.99999974E-6 : f32
    %769 = vector.broadcast %cst_271 : f32 to vector<8x1xf32>
    %770 = arith.addf %768, %769 : vector<8x1xf32>
    %771 = math.rsqrt %770 : vector<8x1xf32>
    %772 = vector.broadcast %771 : vector<8x1xf32> to vector<8x32xf32>
    %773 = arith.mulf %763, %772 : vector<8x32xf32>
    %774 = vector.broadcast %756 : vector<1x32xf32> to vector<8x32xf32>
    %775 = arith.mulf %773, %774 : vector<8x32xf32>
    %776 = vector.broadcast %757 : vector<1x32xf32> to vector<8x32xf32>
    %777 = arith.addf %775, %776 : vector<8x32xf32>
    %c0_272 = arith.constant 0 : index
    %c0_273 = arith.constant 0 : index
    %c0_274 = arith.constant 0 : index
    %778 = vector.load %arg4[%c0_272, %c0_273, %c0_274] : memref<1x8x32xf32, #tpu.memory_space<vmem>>, vector<1x8x32xf32>
    %779 = vector.shape_cast %778 : vector<1x8x32xf32> to vector<8x32xf32>
    %780 = vector.shape_cast %777 : vector<8x32xf32> to vector<1x8x32xf32>
    tpu.vector_store %arg4[%c0_272, %c0_273, %c0_274], %780 {strides = array<i32>} : memref<1x8x32xf32, #tpu.memory_space<vmem>>, vector<1x8x32xf32>,
    return
  }
  func.func @transform_0(%arg0: i32) -> (i32, i32, i32) {
    %c0_i32 = arith.constant 0 : i32
    %c0_i32_0 = arith.constant 0 : i32
    %c0_i32_1 = arith.constant 0 : i32
    %c0_i32_2 = arith.constant 0 : i32
    return %c0_i32, %c0_i32_0, %c0_i32_1 : i32, i32, i32
  }
  func.func @transform_1(%arg0: i32) -> (i32, i32, i32) {
    %c0_i32 = arith.constant 0 : i32
    %c0_i32_0 = arith.constant 0 : i32
    %c0_i32_1 = arith.constant 0 : i32
    %c0_i32_2 = arith.constant 0 : i32
    return %c0_i32, %c0_i32_0, %c0_i32_1 : i32, i32, i32
  }
  func.func @transform_2(%arg0: i32) -> (i32, i32) {
    %c0_i32 = arith.constant 0 : i32
    %c0_i32_0 = arith.constant 0 : i32
    %c0_i32_1 = arith.constant 0 : i32
    return %c0_i32, %c0_i32_0 : i32, i32
  }
  func.func @transform_3(%arg0: i32) -> (i32, i32, i32) {
    %c0_i32 = arith.constant 0 : i32
    %c0_i32_0 = arith.constant 0 : i32
    %c0_i32_1 = arith.constant 0 : i32
    return %arg0, %c0_i32, %c0_i32_0 : i32, i32, i32
  }
}

</mosaic_0001>

<llo_original>
// kernel: forward.1
$region0: #{forward.1}
  #allocation0 [shape = 'u32[]', space=smem, size = 0x4, offset = 0x4, fixed_abs, tag = 'smem constant byte address 0x4 - core index']
  #allocation1 [shape = 'u32[72,128]{1,0:T(1,128)}', space=vmem, size = 0x9000, scoped, tag = 'internal scratch']
  %s0 = inlined_call_operand.hbm [shape: f32[8,2,32], index: 0, kind: input, shape index: {}]
  %s1 = inlined_call_operand.hbm [shape: f32[8,2,32], index: 1, kind: input, shape index: {}]
  %s2 = inlined_call_operand.hbm [shape: f32[2008,128], index: 2, kind: input, shape index: {}]
  %s3 = inlined_call_operand.vmem [shape: f32[2,8,32], index: 3, kind: output, shape index: {}]
  %s4 = sld [smem:[#allocation0]]
  $region57: #{forward.1} parent=0
    _
  %s6 = ssub.s32 1, %s4
  %s7 = scalar_select 0, %s6, %s4
  $region1: #{forward.1} parent=0
    #allocation2 [shape = 'u8[8192]{0}', space=vmem, size = 0x2000, scoped, tag = 'input window, operand 0, single buffered']
    #allocation3 [shape = 's32[2]{0}', space=sflag, size = 0x8, scoped, tag = 'scoped memory for forward.1']
    #allocation4 [shape = 'u8[8192]{0}', space=vmem, size = 0x2000, scoped, tag = 'input window, operand 1, single buffered']
    #allocation5 [shape = 's32[1]{0}', space=sflag, size = 0x4, scoped, tag = 'scoped memory for forward.1']
    #allocation6 [shape = 'u8[1028096]{0}', space=vmem, size = 0xfb000, scoped, tag = 'input window, operand 2, single buffered']
    %8 = vsyncpa [#allocation3], 0
    %9 = vsyncpa [#allocation5], 0
    loop: start=0, step=1, limit=4
    $region2: #{forward.1} parent=1 // loop_pre_header
      _
    $region3: #{forward.1} parent=1 // loop_header
      %s11 = sphi 0, %s15
      %p12 = scmp.ge.s32.totalorder %s11, 4
      %s19 = sphi 0, %s19
      %s21 = sphi 0, %s19
      %s22 = sphi 0, %s21
      %s36 = sphi 0, %s22
      %s40 = sphi 0, %s40
      %s42 = sphi 0, %s40
      %s43 = sphi 0, %s42
      %s57 = sphi 0, %s43
      %s61 = sphi 0, %s61
      %s63 = sphi 0, %s61
      %s64 = sphi 0, %s63
      %s78 = sphi 0, %s64
      %s84 = sphi 0, %s86
      %s87 = sphi 0, %s84
      %s88 = sphi 0, %s87
      %s104 = sphi 0, %s88
    $region4: #{forward.1} parent=1 // loop_header_branch
      %14 = sbr.rel (%p12) target = $region8
    $region5: #{forward.1} parent=1 // loop_body
      %s16 = ssub.s32 %s11, 1
      %s17 = ssub.s32 %s11, 2
      %s18 = sadd.s32 %s11, 1
      %s20 = sadd.s32 %s19, 1
      %p23 = scmp.eq.s32.totalorder %s11, 1
      %p24 = scmp.ne.s32.totalorder %s19, %s21
      %p25 = scmp.eq.s32.totalorder %s11, 0
      %p26 = por %p24, %p25
      %p27 = scmp.ne.s32.totalorder %s19, %s21
      %p28 = scmp.eq.s32.totalorder %s16, 1
      %p29 = por %p27, %p28
      %p30 = scmp.ne.s32.totalorder %s21, %s22
      %p31 = scmp.eq.s32.totalorder %s16, 0
      %p32 = por %p30, %p31
      %p33 = scmp.ne.s32.totalorder %s21, %s22
      %p34 = scmp.eq.s32.totalorder %s17, 1
      %p35 = por %p33, %p34
      %p37 = scmp.ne.s32.totalorder %s22, %s36
      %p38 = scmp.eq.s32.totalorder %s17, 0
      %p39 = por %p37, %p38
      %s41 = sadd.s32 %s40, 1
      %p44 = scmp.eq.s32.totalorder %s11, 1
      %p45 = scmp.ne.s32.totalorder %s40, %s42
      %p46 = scmp.eq.s32.totalorder %s11, 0
      %p47 = por %p45, %p46
      %p48 = scmp.ne.s32.totalorder %s40, %s42
      %p49 = scmp.eq.s32.totalorder %s16, 1
      %p50 = por %p48, %p49
      %p51 = scmp.ne.s32.totalorder %s42, %s43
      %p52 = scmp.eq.s32.totalorder %s16, 0
      %p53 = por %p51, %p52
      %p54 = scmp.ne.s32.totalorder %s42, %s43
      %p55 = scmp.eq.s32.totalorder %s17, 1
      %p56 = por %p54, %p55
      %p58 = scmp.ne.s32.totalorder %s43, %s57
      %p59 = scmp.eq.s32.totalorder %s17, 0
      %p60 = por %p58, %p59
      %s62 = sadd.s32 %s61, 1
      %p65 = scmp.eq.s32.totalorder %s11, 1
      %p66 = scmp.ne.s32.totalorder %s61, %s63
      %p67 = scmp.eq.s32.totalorder %s11, 0
      %p68 = por %p66, %p67
      %p69 = scmp.ne.s32.totalorder %s61, %s63
      %p70 = scmp.eq.s32.totalorder %s16, 1
      %p71 = por %p69, %p70
      %p72 = scmp.ne.s32.totalorder %s63, %s64
      %p73 = scmp.eq.s32.totalorder %s16, 0
      %p74 = por %p72, %p73
      %p75 = scmp.ne.s32.totalorder %s63, %s64
      %p76 = scmp.eq.s32.totalorder %s17, 1
      %p77 = por %p75, %p76
      %p79 = scmp.ne.s32.totalorder %s64, %s78
      %p80 = scmp.eq.s32.totalorder %s17, 0
      %p81 = por %p79, %p80
      %s82 = ssub.s32 %s11, %s18
      %p83 = scmp.eq.s32.totalorder %s82, 0
      %s85 = sadd.s32 %s84, 1
      %s86 = scalar_select %p83, %s84, %s85
      %p89 = pneg %p83
      %p90 = scmp.eq.s32.totalorder %s11, 1
      %p91 = por %p89, %p90
      %p92 = scmp.ne.s32.totalorder %s84, %s87
      %p93 = scmp.eq.s32.totalorder %s11, 0
      %p94 = por %p92, %p93
      %p95 = scmp.ne.s32.totalorder %s84, %s87
      %p96 = scmp.eq.s32.totalorder %s16, 1
      %p97 = por %p95, %p96
      %p98 = scmp.ne.s32.totalorder %s87, %s88
      %p99 = scmp.eq.s32.totalorder %s16, 0
      %p100 = por %p98, %p99
      %p101 = scmp.ne.s32.totalorder %s87, %s88
      %p102 = scmp.eq.s32.totalorder %s17, 1
      %p103 = por %p101, %p102
      %p105 = scmp.ne.s32.totalorder %s88, %s104
      %p106 = scmp.eq.s32.totalorder %s17, 0
      %p107 = por %p105, %p106
      %p108 = scmp.le.s32.totalorder 1, %s11
      %p109 = scmp.lt.s32.totalorder %s11, 3
      %p110 = pnand %p108, %p109
      %p111 = pneg %p110
      // Predicated region
      $region9: #{forward.1} parent=5 // pred_check
        _
      $region10: #{forward.1} parent=5 // pred_check_branch
        %113 = sbr.rel (%p110) target = $region12
      $region11: #{forward.1} parent=5 // pred_region
        %s114 = ssub.s32 %s11, 1
        // Predicated region
        $region13: #{forward.1} parent=11 // pred_check
          %p115 = pneg %p32
        $region14: #{forward.1} parent=11 // pred_check_branch
          %117 = sbr.rel (%p115) target = $region16
        $region15: #{forward.1} parent=11 // pred_region
          %119 = vsyncadd [#allocation3], 0
          %s120 = sshll.u32 %s0, 4
          %s121 = int_to_ptr.hbm [resolvable:$true] %s120
          %s122 = sshll.u32 [#allocation2], 4
          %s123 = int_to_ptr.vmem [resolvable:$true] %s122
          %128 = dma.hbm_to_vmem [thread:$0]  %s121, 256, %s123, [#allocation3], 32, 32, 2
        $region16: #{forward.1} parent=11 // pred_fallthru
          _
        // Predicated region
        $region17: #{forward.1} parent=11 // pred_check
          %p129 = pneg %p53
        $region18: #{forward.1} parent=11 // pred_check_branch
          %131 = sbr.rel (%p129) target = $region20
        $region19: #{forward.1} parent=11 // pred_region
          %133 = vsyncadd [#allocation5], 0
          %s134 = sshll.u32 %s1, 4
          %s135 = int_to_ptr.hbm [resolvable:$true] %s134
          %s136 = sshll.u32 [#allocation4], 4
          %s137 = int_to_ptr.vmem [resolvable:$true] %s136
          %142 = dma.hbm_to_vmem [thread:$0]  %s135, 256, %s137, [#allocation5], 32, 32, 2
        $region20: #{forward.1} parent=11 // pred_fallthru
          _
        // Predicated region
        $region21: #{forward.1} parent=11 // pred_check
          %p143 = pneg %p74
        $region22: #{forward.1} parent=11 // pred_check_branch
          %145 = sbr.rel (%p143) target = $region24
        $region23: #{forward.1} parent=11 // pred_region
          %147 = vsyncadd [#allocation5], 0
          %s148 = sshll.u32 %s2, 4
          %s149 = int_to_ptr.hbm [resolvable:$true] %s148
          %s150 = sshll.u32 [#allocation6], 4
          %s151 = int_to_ptr.vmem [resolvable:$true] %s150
          %156 = dma.hbm_to_vmem [thread:$0]  %s149, 32128, %s151, [#allocation5], 128, 128, 8
        $region24: #{forward.1} parent=11 // pred_fallthru
          _
      $region12: #{forward.1} parent=5 // pred_fallthru
        _
      %p157 = scmp.lt.s32.totalorder %s11, 2
      // Predicated region
      $region25: #{forward.1} parent=5 // pred_check
        %p158 = pneg %p157
      $region26: #{forward.1} parent=5 // pred_check_branch
        %160 = sbr.rel (%p158) target = $region28
      $region27: #{forward.1} parent=5 // pred_region
        _
      $region28: #{forward.1} parent=5 // pred_fallthru
        _
      %p161 = scmp.le.s32.totalorder 1, %s11
      %p162 = scmp.lt.s32.totalorder %s11, 3
      %p163 = pnand %p161, %p162
      %p164 = pneg %p163
      // Predicated region
      $region29: #{forward.1} parent=5 // pred_check
        _
      $region30: #{forward.1} parent=5 // pred_check_branch
        %166 = sbr.rel (%p163) target = $region32
      $region31: #{forward.1} parent=5 // pred_region
        %s167 = ssub.s32 %s11, 1
        // Predicated region
        $region33: #{forward.1} parent=31 // pred_check
          %p168 = pneg %p32
        $region34: #{forward.1} parent=31 // pred_check_branch
          %170 = sbr.rel (%p168) target = $region36
        $region35: #{forward.1} parent=31 // pred_region
          %172 = dma.done [#allocation3], 256
        $region36: #{forward.1} parent=31 // pred_fallthru
          _
        // Predicated region
        $region37: #{forward.1} parent=31 // pred_check
          %p173 = pneg %p53
        $region38: #{forward.1} parent=31 // pred_check_branch
          %175 = sbr.rel (%p173) target = $region40
        $region39: #{forward.1} parent=31 // pred_region
          %177 = dma.done [#allocation5], 256
        $region40: #{forward.1} parent=31 // pred_fallthru
          _
        // Predicated region
        $region41: #{forward.1} parent=31 // pred_check
          %p178 = pneg %p74
        $region42: #{forward.1} parent=31 // pred_check_branch
          %180 = sbr.rel (%p178) target = $region44
        $region43: #{forward.1} parent=31 // pred_region
          %182 = dma.done [#allocation5], 32128
        $region44: #{forward.1} parent=31 // pred_fallthru
          _
        %p183 = pneg %p32
        %p184 = pneg %p29
        %p185 = pneg %p53
        %p186 = pneg %p50
        %p187 = pneg %p74
        %p188 = pneg %p71
        %p189 = pneg %p100
        %p190 = pneg %p97
        %p191 = scmp.lt.s32.totalorder %s16, 1
        %s192 = scalar_select %p191, %s16, 1
        %s193 = smul.addr %s192, 8
        %s194 = scalar_lea.vmem %s3, %s193
        %p195 = scmp.lt.s32.totalorder %s16, 1
        %s196 = scalar_select %p195, %s16, 1
        %s197 = smul.addr %s196, 8
        %s198 = scalar_lea.vmem %s3, %s197
        %v199 = vlaneseq
        %v200 = vshrl.u32 %v199, 7
        %v201 = vstv %s16
        %vm202 = vcmp.eq.s32.totalorder %v200, %v201
        %v203 = vld [vmem:[#allocation6] sm:$0xff]
        %v204 = vld [vmem:[#allocation2] sm:$0x3]
        %v205 = vld [vmem:[#allocation2 + $0x2] sm:$0x3]
        %v206 = vld [vmem:[#allocation2 + $0x4] sm:$0x3]
        %v207 = vld [vmem:[#allocation2 + $0x6] sm:$0x3]
        %v208 = vld [vmem:[#allocation2 + $0x8] sm:$0x3]
        %v209 = vld [vmem:[#allocation2 + $0xa] sm:$0x3]
        %v210 = vld [vmem:[#allocation2 + $0xc] sm:$0x3]
        %v211 = vld [vmem:[#allocation2 + $0xe] sm:$0x3]
        %v212 = vsel %vm202, 1, 0
        %vm213 = vcmp.eq.s32.totalorder %v212, 1
        %v214 = vsel %vm213, %v204, 0.0
        %v215 = vsel %vm213, %v205, 0.0
        %v216 = vsel %vm213, %v206, 0.0
        %v217 = vsel %vm213, %v207, 0.0
        %v218 = vsel %vm213, %v208, 0.0
        %v219 = vsel %vm213, %v209, 0.0
        %v220 = vsel %vm213, %v210, 0.0
        %v221 = vsel %vm213, %v211, 0.0
        %vm222 = vcmask 254976
        %v223 = vsel %vm222, %v214, 0.0
        %v224 = vrot.slane %v223, 4
        %v225 = vadd.f32 %v223, %v224
        %v226 = vrot.slane %v225, 2
        %v227 = vadd.f32 %v225, %v226
        %v228 = vrot.slane %v227, 1
        %v229 = vadd.f32 %v227, %v228
        %v230 = vsel %vm222, %v215, 0.0
        %v231 = vrot.slane %v230, 4
        %v232 = vadd.f32 %v230, %v231
        %v233 = vrot.slane %v232, 2
        %v234 = vadd.f32 %v232, %v233
        %v235 = vrot.slane %v234, 1
        %v236 = vadd.f32 %v234, %v235
        %v237 = vsel %vm222, %v216, 0.0
        %v238 = vrot.slane %v237, 4
        %v239 = vadd.f32 %v237, %v238
        %v240 = vrot.slane %v239, 2
        %v241 = vadd.f32 %v239, %v240
        %v242 = vrot.slane %v241, 1
        %v243 = vadd.f32 %v241, %v242
        %v244 = vsel %vm222, %v217, 0.0
        %v245 = vrot.slane %v244, 4
        %v246 = vadd.f32 %v244, %v245
        %v247 = vrot.slane %v246, 2
        %v248 = vadd.f32 %v246, %v247
        %v249 = vrot.slane %v248, 1
        %v250 = vadd.f32 %v248, %v249
        %v251 = vsel %vm222, %v218, 0.0
        %v252 = vrot.slane %v251, 4
        %v253 = vadd.f32 %v251, %v252
        %v254 = vrot.slane %v253, 2
        %v255 = vadd.f32 %v253, %v254
        %v256 = vrot.slane %v255, 1
        %v257 = vadd.f32 %v255, %v256
        %v258 = vsel %vm222, %v219, 0.0
        %v259 = vrot.slane %v258, 4
        %v260 = vadd.f32 %v258, %v259
        %v261 = vrot.slane %v260, 2
        %v262 = vadd.f32 %v260, %v261
        %v263 = vrot.slane %v262, 1
        %v264 = vadd.f32 %v262, %v263
        %v265 = vsel %vm222, %v220, 0.0
        %v266 = vrot.slane %v265, 4
        %v267 = vadd.f32 %v265, %v266
        %v268 = vrot.slane %v267, 2
        %v269 = vadd.f32 %v267, %v268
        %v270 = vrot.slane %v269, 1
        %v271 = vadd.f32 %v269, %v270
        %v272 = vsel %vm222, %v221, 0.0
        %v273 = vrot.slane %v272, 4
        %v274 = vadd.f32 %v272, %v273
        %v275 = vrot.slane %v274, 2
        %v276 = vadd.f32 %v274, %v275
        %v277 = vrot.slane %v276, 1
        %v278 = vadd.f32 %v276, %v277
        %v280 = vrot.slane %v203, 1
        %v281 = vrot.slane %v203, 2
        %v282 = vrot.slane %v203, 3
        %v283 = vrot.slane %v203, 4
        %v284 = vrot.slane %v203, 5
        %v285 = vrot.slane %v203, 6
        %v286 = vrot.slane %v203, 7
        %v295 = vadd.f32 %v229, %v203
        %v296 = vadd.f32 %v236, %v280
        %v297 = vadd.f32 %v243, %v281
        %v298 = vadd.f32 %v250, %v282
        %v299 = vadd.f32 %v257, %v283
        %v300 = vadd.f32 %v264, %v284
        %v301 = vadd.f32 %v271, %v285
        %v302 = vadd.f32 %v278, %v286
        %v303 = vld [vmem:[#allocation4] sm:$0x3]
        %v304 = vld [vmem:[#allocation4 + $0x2] sm:$0x3]
        %v305 = vld [vmem:[#allocation4 + $0x4] sm:$0x3]
        %v306 = vld [vmem:[#allocation4 + $0x6] sm:$0x3]
        %v307 = vld [vmem:[#allocation4 + $0x8] sm:$0x3]
        %v308 = vld [vmem:[#allocation4 + $0xa] sm:$0x3]
        %v309 = vld [vmem:[#allocation4 + $0xc] sm:$0x3]
        %v310 = vld [vmem:[#allocation4 + $0xe] sm:$0x3]
        %v311 = vsel %vm213, %v303, 0.0
        %v312 = vsel %vm213, %v304, 0.0
        %v313 = vsel %vm213, %v305, 0.0
        %v314 = vsel %vm213, %v306, 0.0
        %v315 = vsel %vm213, %v307, 0.0
        %v316 = vsel %vm213, %v308, 0.0
        %v317 = vsel %vm213, %v309, 0.0
        %v318 = vsel %vm213, %v310, 0.0
        %v319 = vsel %vm222, %v311, 0.0
        %v320 = vrot.slane %v319, 4
        %v321 = vadd.f32 %v319, %v320
        %v322 = vrot.slane %v321, 2
        %v323 = vadd.f32 %v321, %v322
        %v324 = vrot.slane %v323, 1
        %v325 = vadd.f32 %v323, %v324
        %v326 = vsel %vm222, %v312, 0.0
        %v327 = vrot.slane %v326, 4
        %v328 = vadd.f32 %v326, %v327
        %v329 = vrot.slane %v328, 2
        %v330 = vadd.f32 %v328, %v329
        %v331 = vrot.slane %v330, 1
        %v332 = vadd.f32 %v330, %v331
        %v333 = vsel %vm222, %v313, 0.0
        %v334 = vrot.slane %v333, 4
        %v335 = vadd.f32 %v333, %v334
        %v336 = vrot.slane %v335, 2
        %v337 = vadd.f32 %v335, %v336
        %v338 = vrot.slane %v337, 1
        %v339 = vadd.f32 %v337, %v338
        %v340 = vsel %vm222, %v314, 0.0
        %v341 = vrot.slane %v340, 4
        %v342 = vadd.f32 %v340, %v341
        %v343 = vrot.slane %v342, 2
        %v344 = vadd.f32 %v342, %v343
        %v345 = vrot.slane %v344, 1
        %v346 = vadd.f32 %v344, %v345
        %v347 = vsel %vm222, %v315, 0.0
        %v348 = vrot.slane %v347, 4
        %v349 = vadd.f32 %v347, %v348
        %v350 = vrot.slane %v349, 2
        %v351 = vadd.f32 %v349, %v350
        %v352 = vrot.slane %v351, 1
        %v353 = vadd.f32 %v351, %v352
        %v354 = vsel %vm222, %v316, 0.0
        %v355 = vrot.slane %v354, 4
        %v356 = vadd.f32 %v354, %v355
        %v357 = vrot.slane %v356, 2
        %v358 = vadd.f32 %v356, %v357
        %v359 = vrot.slane %v358, 1
        %v360 = vadd.f32 %v358, %v359
        %v361 = vsel %vm222, %v317, 0.0
        %v362 = vrot.slane %v361, 4
        %v363 = vadd.f32 %v361, %v362
        %v364 = vrot.slane %v363, 2
        %v365 = vadd.f32 %v363, %v364
        %v366 = vrot.slane %v365, 1
        %v367 = vadd.f32 %v365, %v366
        %v368 = vsel %vm222, %v318, 0.0
        %v369 = vrot.slane %v368, 4
        %v370 = vadd.f32 %v368, %v369
        %v371 = vrot.slane %v370, 2
        %v372 = vadd.f32 %v370, %v371
        %v373 = vrot.slane %v372, 1
        %v374 = vadd.f32 %v372, %v373
        %v375 = vadd.f32 %v325, %v203
        %v376 = vadd.f32 %v332, %v280
        %v377 = vadd.f32 %v339, %v281
        %v378 = vadd.f32 %v346, %v282
        %v379 = vadd.f32 %v353, %v283
        %v380 = vadd.f32 %v360, %v284
        %v381 = vadd.f32 %v367, %v285
        %v382 = vadd.f32 %v374, %v286
        %v383 = vlaneseq
        %v384 = vand.u32 %v383, 127
        %vm385 = vcmp.gt.s32.totalorder %v384, %v200
        %v386 = vsel %vm385, -1e+30, 0.0
        %v387 = vld [vmem:[#allocation6 + $0x8] sm:$0xff]
        %v388 = vld [vmem:[#allocation6 + $0x10] sm:$0xff]
        %v389 = vld [vmem:[#allocation6 + $0x18] sm:$0xff]
        %v390 = vld [vmem:[#allocation6 + $0x20] sm:$0xff]
        %v391 = vld [vmem:[#allocation6 + $0x28] sm:$0xff]
        %v392 = vld [vmem:[#allocation6 + $0x30] sm:$0xff]
        %v393 = vld [vmem:[#allocation6 + $0x38] sm:$0xff]
        %v394 = vld [vmem:[#allocation6 + $0x40] sm:$0xff]
        %v395 = vld [vmem:[#allocation6 + $0x48] sm:$0xff]
        %v396 = vld [vmem:[#allocation6 + $0x50] sm:$0xff]
        %v397 = vld [vmem:[#allocation6 + $0x58] sm:$0xff]
        %v398 = vld [vmem:[#allocation6 + $0x60] sm:$0xff]
        %v399 = vld [vmem:[#allocation6 + $0x68] sm:$0xff]
        %v400 = vld [vmem:[#allocation6 + $0x70] sm:$0xff]
        %v401 = vld [vmem:[#allocation6 + $0x78] sm:$0xff]
        %v402 = vld [vmem:[#allocation6 + $0x80] sm:$0xff]
        %v403 = vld [vmem:[#allocation6 + $0x88] sm:$0xff]
        %v404 = vld [vmem:[#allocation6 + $0x90] sm:$0xff]
        %v405 = vld [vmem:[#allocation6 + $0x98] sm:$0xff]
        %v406 = vld [vmem:[#allocation6 + $0xa0] sm:$0xff]
        %v407 = vld [vmem:[#allocation6 + $0xa8] sm:$0xff]
        %v408 = vld [vmem:[#allocation6 + $0xb0] sm:$0xff]
        %v409 = vld [vmem:[#allocation6 + $0xb8] sm:$0xff]
        %v410 = vld [vmem:[#allocation6 + $0xc0] sm:$0xff]
        %v419 = vrot.slane %v296, 7
        %vm420 = vcmask 1041409
        %v421 = vsel %vm420, %v419, %v295
        %v422 = vrot.slane %v297, 6
        %vm423 = vcmask 1042434
        %v424 = vsel %vm423, %v422, %v421
        %v425 = vrot.slane %v298, 5
        %vm426 = vcmask 1043459
        %v427 = vsel %vm426, %v425, %v424
        %v428 = vrot.slane %v299, 4
        %vm429 = vcmask 1044484
        %v430 = vsel %vm429, %v428, %v427
        %v431 = vrot.slane %v300, 3
        %vm432 = vcmask 1045509
        %v433 = vsel %vm432, %v431, %v430
        %v434 = vrot.slane %v301, 2
        %vm435 = vcmask 1046534
        %v436 = vsel %vm435, %v434, %v433
        %v437 = vrot.slane %v302, 1
        %vm438 = vcmask 1047559
        %v439 = vsel %vm438, %v437, %v436
        %vm440 = vcmask 261120
        %v442 = vsel %vm440, %v387, 0
        %v445 = vsel %vm440, %v388, 0
        %v448 = vsel %vm440, %v389, 0
        %v451 = vsel %vm440, %v390, 0
        %v454 = vsel %vm440, %v391, 0
        %v457 = vsel %vm440, %v392, 0
        %v460 = vsel %vm440, %v393, 0
        %v463 = vsel %vm440, %v394, 0
        %v466 = vsel %vm440, %v395, 0
        %v469 = vsel %vm440, %v396, 0
        %v472 = vsel %vm440, %v397, 0
        %v475 = vsel %vm440, %v398, 0
        %v477 = vsel %vm440, %v439, 0
        %479 = vmatpush.xpose.msra.mxu0 0.0
        %480 = vmatpush.xpose.msra.mxu0 0.0
        %481 = vmatpush.xpose.msra.mxu0 0.0
        %482 = vmatpush.xpose.msra.mxu0 0.0
        %483 = vmatpush.xpose.msra.mxu0 0.0
        %484 = vmatpush.xpose.msra.mxu0 0.0
        %485 = vmatpush.xpose.msra.mxu0 0.0
        %486 = vmatpush.xpose.msra.mxu0 0.0
        %487 = vmatpush.xpose.msra.mxu0 0.0
        %488 = vmatpush.xpose.msra.mxu0 0.0
        %489 = vmatpush.xpose.msra.mxu0 0.0
        %490 = vmatpush.xpose.msra.mxu0 0.0
        %491 = vmatpush.xpose.msra.mxu0 0.0
        %492 = vmatpush.xpose.msra.mxu0 0.0
        %493 = vmatpush.xpose.msra.mxu0 0.0
        %494 = vmatpush.xpose.msra.mxu0 %v477
        %495 = vmatmul.f32.gmra.mxu0 %v442
        %v496 = vpop.f32.mrf.mxu0
        %v497 = vadd.f32 %v399, %v496
        %498 = vmatmul.f32.gmra.mxu0 %v445
        %v499 = vpop.f32.mrf.mxu0
        %v500 = vadd.f32 %v400, %v499
        %501 = vmatmul.f32.gmra.mxu0 %v448
        %v502 = vpop.f32.mrf.mxu0
        %v503 = vadd.f32 %v401, %v502
        %504 = vmatmul.f32.gmra.mxu0 %v451
        %v505 = vpop.f32.mrf.mxu0
        %v506 = vadd.f32 %v402, %v505
        %507 = vmatmul.f32.gmra.mxu0 %v454
        %v508 = vpop.f32.mrf.mxu0
        %v509 = vadd.f32 %v403, %v508
        %510 = vmatmul.f32.gmra.mxu0 %v457
        %v511 = vpop.f32.mrf.mxu0
        %v512 = vadd.f32 %v404, %v511
        %513 = vmatmul.f32.gmra.mxu0 %v460
        %v514 = vpop.f32.mrf.mxu0
        %v515 = vadd.f32 %v405, %v514
        %516 = vmatmul.f32.gmra.mxu0 %v463
        %v517 = vpop.f32.mrf.mxu0
        %v518 = vadd.f32 %v406, %v517
        %519 = vmatmul.f32.gmra.mxu0 %v466
        %v520 = vpop.f32.mrf.mxu0
        %v521 = vadd.f32 %v407, %v520
        %522 = vmatmul.f32.gmra.mxu0 %v469
        %v523 = vpop.f32.mrf.mxu0
        %v524 = vadd.f32 %v408, %v523
        %525 = vmatmul.f32.gmra.mxu0 %v472
        %v526 = vpop.f32.mrf.mxu0
        %v527 = vadd.f32 %v409, %v526
        %528 = vmatmul.f32.gmra.mxu0 %v475
        %v529 = vpop.f32.mrf.mxu0
        %v530 = vadd.f32 %v410, %v529
        %531 = vdwg.mxu0
        %532 = vxpose.xlu0.b32.start [1/16] %v497, 128
        %533 = vxpose.xlu0.b32.cont [2/16] 0.0, 128
        %534 = vxpose.xlu0.b32.cont [3/16] 0.0, 128
        %535 = vxpose.xlu0.b32.cont [4/16] 0.0, 128
        %536 = vxpose.xlu0.b32.cont [5/16] 0.0, 128
        %537 = vxpose.xlu0.b32.cont [6/16] 0.0, 128
        %538 = vxpose.xlu0.b32.cont [7/16] 0.0, 128
        %539 = vxpose.xlu0.b32.cont [8/16] 0.0, 128
        %540 = vxpose.xlu0.b32.cont [9/16] 0.0, 128
        %541 = vxpose.xlu0.b32.cont [10/16] 0.0, 128
        %542 = vxpose.xlu0.b32.cont [11/16] 0.0, 128
        %543 = vxpose.xlu0.b32.cont [12/16] 0.0, 128
        %544 = vxpose.xlu0.b32.cont [13/16] 0.0, 128
        %545 = vxpose.xlu0.b32.cont [14/16] 0.0, 128
        %546 = vxpose.xlu0.b32.cont [15/16] 0.0, 128
        %547 = vxpose.xlu0.b32.end [16/16] 0.0, 128
        %v548 = vpop.trf.xlu0
        %v549 = vpop.trf.xlu0
        %v550 = vpop.trf.xlu0
        %v551 = vpop.trf.xlu0
        %v552 = vpop.trf.xlu0
        %v553 = vpop.trf.xlu0
        %v554 = vpop.trf.xlu0
        %v555 = vpop.trf.xlu0
        %v556 = vpop.trf.xlu0
        %v557 = vpop.trf.xlu0
        %v558 = vpop.trf.xlu0
        %v559 = vpop.trf.xlu0
        %v560 = vpop.trf.xlu0
        %v561 = vpop.trf.xlu0
        %v562 = vpop.trf.xlu0
        %v563 = vpop.trf.xlu0
        %vm564 = vcmask 64512
        %v566 = vsel %vm564, %v548, 0
        %568 = vmatpush.msra.mxu0 0.0
        %569 = vmatpush.msra.mxu0 0.0
        %570 = vmatpush.msra.mxu0 0.0
        %571 = vmatpush.msra.mxu0 0.0
        %572 = vmatpush.msra.mxu0 0.0
        %573 = vmatpush.msra.mxu0 0.0
        %574 = vmatpush.msra.mxu0 0.0
        %575 = vmatpush.msra.mxu0 0.0
        %576 = vmatpush.msra.mxu0 0.0
        %577 = vmatpush.msra.mxu0 0.0
        %578 = vmatpush.msra.mxu0 0.0
        %579 = vmatpush.msra.mxu0 0.0
        %580 = vmatpush.msra.mxu0 0.0
        %581 = vmatpush.msra.mxu0 0.0
        %582 = vmatpush.msra.mxu0 0.0
        %583 = vmatpush.msra.mxu0 %v509
        %584 = vmatmul.f32.gmra.mxu0 %v566
        %v585 = vpop.f32.mrf.mxu0
        %v586 = vadd.f32 0.0, %v585
        %587 = vdwg.mxu0
        %v588 = vmul.f32 %v586, 0.35355338
        %v589 = vsel %vm564, %v588, -inf
        %590 = vmax.xlane.f32.xlu0 %v589
        %v591 = vpop.xlane.xlu0 %590
        %v592 = vsub.f32 %v588, %v591
        %v593 = vmul.f32 %v592, 1.442695
        %v594 = vpow.pop %v593
        %v595 = vsel %vm564, %v594, 0.0
        %596 = vadd.xlane.f32.xlu0 %v595
        %v597 = vpop.xlane.xlu0 %596
        %v598 = vrcp.pop %v597
        %v599 = vmul.f32 %v597, %v598
        %v600 = vsub.f32 1.0, %v599
        %v601 = vmul.f32 %v598, %v600
        %v602 = vadd.f32 %v598, %v601
        %vm603 = vweird.f32 %v597
        %vm604 = vweird.f32 %v598
        %vm605 = vmor %vm603, %vm604
        %v606 = vsel %vm605, %v598, %v602
        %v607 = vand.u32 2147483647, %v597
        %vm608 = vcmp.eq.f32.partialorder %v607, 8.507059e+37
        %v609 = vand.u32 %v597, 2147483648
        %v610 = vor.u32 1.1754944e-38, %v609
        %v611 = vsel %vm608, %v610, %v606
        %v612 = vmul.f32 %v594, %v611
        %v614 = vsel %vm564, %v521, 0
        %v617 = vsel %vm564, %v612, 0
        %619 = vmatpush.xpose.msra.mxu0 0.0
        %620 = vmatpush.xpose.msra.mxu0 0.0
        %621 = vmatpush.xpose.msra.mxu0 0.0
        %622 = vmatpush.xpose.msra.mxu0 0.0
        %623 = vmatpush.xpose.msra.mxu0 0.0
        %624 = vmatpush.xpose.msra.mxu0 0.0
        %625 = vmatpush.xpose.msra.mxu0 0.0
        %626 = vmatpush.xpose.msra.mxu0 0.0
        %627 = vmatpush.xpose.msra.mxu0 0.0
        %628 = vmatpush.xpose.msra.mxu0 0.0
        %629 = vmatpush.xpose.msra.mxu0 0.0
        %630 = vmatpush.xpose.msra.mxu0 0.0
        %631 = vmatpush.xpose.msra.mxu0 0.0
        %632 = vmatpush.xpose.msra.mxu0 0.0
        %633 = vmatpush.xpose.msra.mxu0 0.0
        %634 = vmatpush.xpose.msra.mxu0 %v617
        %635 = vmatmul.f32.gmra.mxu0 %v614
        %v636 = vpop.f32.mrf.mxu0
        %v637 = vadd.f32 0.0, %v636
        %638 = vdwg.mxu0
        %639 = vxpose.xlu0.b32.start [1/16] %v500, 128
        %640 = vxpose.xlu0.b32.cont [2/16] 0.0, 128
        %641 = vxpose.xlu0.b32.cont [3/16] 0.0, 128
        %642 = vxpose.xlu0.b32.cont [4/16] 0.0, 128
        %643 = vxpose.xlu0.b32.cont [5/16] 0.0, 128
        %644 = vxpose.xlu0.b32.cont [6/16] 0.0, 128
        %645 = vxpose.xlu0.b32.cont [7/16] 0.0, 128
        %646 = vxpose.xlu0.b32.cont [8/16] 0.0, 128
        %647 = vxpose.xlu0.b32.cont [9/16] 0.0, 128
        %648 = vxpose.xlu0.b32.cont [10/16] 0.0, 128
        %649 = vxpose.xlu0.b32.cont [11/16] 0.0, 128
        %650 = vxpose.xlu0.b32.cont [12/16] 0.0, 128
        %651 = vxpose.xlu0.b32.cont [13/16] 0.0, 128
        %652 = vxpose.xlu0.b32.cont [14/16] 0.0, 128
        %653 = vxpose.xlu0.b32.cont [15/16] 0.0, 128
        %654 = vxpose.xlu0.b32.end [16/16] 0.0, 128
        %v655 = vpop.trf.xlu0
        %v656 = vpop.trf.xlu0
        %v657 = vpop.trf.xlu0
        %v658 = vpop.trf.xlu0
        %v659 = vpop.trf.xlu0
        %v660 = vpop.trf.xlu0
        %v661 = vpop.trf.xlu0
        %v662 = vpop.trf.xlu0
        %v663 = vpop.trf.xlu0
        %v664 = vpop.trf.xlu0
        %v665 = vpop.trf.xlu0
        %v666 = vpop.trf.xlu0
        %v667 = vpop.trf.xlu0
        %v668 = vpop.trf.xlu0
        %v669 = vpop.trf.xlu0
        %v670 = vpop.trf.xlu0
        %v672 = vsel %vm564, %v655, 0
        %674 = vmatpush.msra.mxu0 0.0
        %675 = vmatpush.msra.mxu0 0.0
        %676 = vmatpush.msra.mxu0 0.0
        %677 = vmatpush.msra.mxu0 0.0
        %678 = vmatpush.msra.mxu0 0.0
        %679 = vmatpush.msra.mxu0 0.0
        %680 = vmatpush.msra.mxu0 0.0
        %681 = vmatpush.msra.mxu0 0.0
        %682 = vmatpush.msra.mxu0 0.0
        %683 = vmatpush.msra.mxu0 0.0
        %684 = vmatpush.msra.mxu0 0.0
        %685 = vmatpush.msra.mxu0 0.0
        %686 = vmatpush.msra.mxu0 0.0
        %687 = vmatpush.msra.mxu0 0.0
        %688 = vmatpush.msra.mxu0 0.0
        %689 = vmatpush.msra.mxu0 %v512
        %690 = vmatmul.f32.gmra.mxu0 %v672
        %v691 = vpop.f32.mrf.mxu0
        %v692 = vadd.f32 0.0, %v691
        %693 = vdwg.mxu0
        %v694 = vmul.f32 %v692, 0.35355338
        %v695 = vsel %vm564, %v694, -inf
        %696 = vmax.xlane.f32.xlu0 %v695
        %v697 = vpop.xlane.xlu0 %696
        %v698 = vsub.f32 %v694, %v697
        %v699 = vmul.f32 %v698, 1.442695
        %v700 = vpow.pop %v699
        %v701 = vsel %vm564, %v700, 0.0
        %702 = vadd.xlane.f32.xlu0 %v701
        %v703 = vpop.xlane.xlu0 %702
        %v704 = vrcp.pop %v703
        %v705 = vmul.f32 %v703, %v704
        %v706 = vsub.f32 1.0, %v705
        %v707 = vmul.f32 %v704, %v706
        %v708 = vadd.f32 %v704, %v707
        %vm709 = vweird.f32 %v703
        %vm710 = vweird.f32 %v704
        %vm711 = vmor %vm709, %vm710
        %v712 = vsel %vm711, %v704, %v708
        %v713 = vand.u32 2147483647, %v703
        %vm714 = vcmp.eq.f32.partialorder %v713, 8.507059e+37
        %v715 = vand.u32 %v703, 2147483648
        %v716 = vor.u32 1.1754944e-38, %v715
        %v717 = vsel %vm714, %v716, %v712
        %v718 = vmul.f32 %v700, %v717
        %v720 = vsel %vm564, %v524, 0
        %v723 = vsel %vm564, %v718, 0
        %725 = vmatpush.xpose.msra.mxu0 0.0
        %726 = vmatpush.xpose.msra.mxu0 0.0
        %727 = vmatpush.xpose.msra.mxu0 0.0
        %728 = vmatpush.xpose.msra.mxu0 0.0
        %729 = vmatpush.xpose.msra.mxu0 0.0
        %730 = vmatpush.xpose.msra.mxu0 0.0
        %731 = vmatpush.xpose.msra.mxu0 0.0
        %732 = vmatpush.xpose.msra.mxu0 0.0
        %733 = vmatpush.xpose.msra.mxu0 0.0
        %734 = vmatpush.xpose.msra.mxu0 0.0
        %735 = vmatpush.xpose.msra.mxu0 0.0
        %736 = vmatpush.xpose.msra.mxu0 0.0
        %737 = vmatpush.xpose.msra.mxu0 0.0
        %738 = vmatpush.xpose.msra.mxu0 0.0
        %739 = vmatpush.xpose.msra.mxu0 0.0
        %740 = vmatpush.xpose.msra.mxu0 %v723
        %741 = vmatmul.f32.gmra.mxu0 %v720
        %v742 = vpop.f32.mrf.mxu0
        %v743 = vadd.f32 0.0, %v742
        %744 = vdwg.mxu0
        %745 = vxpose.xlu0.b32.start [1/16] %v503, 128
        %746 = vxpose.xlu0.b32.cont [2/16] 0.0, 128
        %747 = vxpose.xlu0.b32.cont [3/16] 0.0, 128
        %748 = vxpose.xlu0.b32.cont [4/16] 0.0, 128
        %749 = vxpose.xlu0.b32.cont [5/16] 0.0, 128
        %750 = vxpose.xlu0.b32.cont [6/16] 0.0, 128
        %751 = vxpose.xlu0.b32.cont [7/16] 0.0, 128
        %752 = vxpose.xlu0.b32.cont [8/16] 0.0, 128
        %753 = vxpose.xlu0.b32.cont [9/16] 0.0, 128
        %754 = vxpose.xlu0.b32.cont [10/16] 0.0, 128
        %755 = vxpose.xlu0.b32.cont [11/16] 0.0, 128
        %756 = vxpose.xlu0.b32.cont [12/16] 0.0, 128
        %757 = vxpose.xlu0.b32.cont [13/16] 0.0, 128
        %758 = vxpose.xlu0.b32.cont [14/16] 0.0, 128
        %759 = vxpose.xlu0.b32.cont [15/16] 0.0, 128
        %760 = vxpose.xlu0.b32.end [16/16] 0.0, 128
        %v761 = vpop.trf.xlu0
        %v762 = vpop.trf.xlu0
        %v763 = vpop.trf.xlu0
        %v764 = vpop.trf.xlu0
        %v765 = vpop.trf.xlu0
        %v766 = vpop.trf.xlu0
        %v767 = vpop.trf.xlu0
        %v768 = vpop.trf.xlu0
        %v769 = vpop.trf.xlu0
        %v770 = vpop.trf.xlu0
        %v771 = vpop.trf.xlu0
        %v772 = vpop.trf.xlu0
        %v773 = vpop.trf.xlu0
        %v774 = vpop.trf.xlu0
        %v775 = vpop.trf.xlu0
        %v776 = vpop.trf.xlu0
        %v778 = vsel %vm564, %v761, 0
        %780 = vmatpush.msra.mxu0 0.0
        %781 = vmatpush.msra.mxu0 0.0
        %782 = vmatpush.msra.mxu0 0.0
        %783 = vmatpush.msra.mxu0 0.0
        %784 = vmatpush.msra.mxu0 0.0
        %785 = vmatpush.msra.mxu0 0.0
        %786 = vmatpush.msra.mxu0 0.0
        %787 = vmatpush.msra.mxu0 0.0
        %788 = vmatpush.msra.mxu0 0.0
        %789 = vmatpush.msra.mxu0 0.0
        %790 = vmatpush.msra.mxu0 0.0
        %791 = vmatpush.msra.mxu0 0.0
        %792 = vmatpush.msra.mxu0 0.0
        %793 = vmatpush.msra.mxu0 0.0
        %794 = vmatpush.msra.mxu0 0.0
        %795 = vmatpush.msra.mxu0 %v515
        %796 = vmatmul.f32.gmra.mxu0 %v778
        %v797 = vpop.f32.mrf.mxu0
        %v798 = vadd.f32 0.0, %v797
        %799 = vdwg.mxu0
        %v800 = vmul.f32 %v798, 0.35355338
        %v801 = vsel %vm564, %v800, -inf
        %802 = vmax.xlane.f32.xlu0 %v801
        %v803 = vpop.xlane.xlu0 %802
        %v804 = vsub.f32 %v800, %v803
        %v805 = vmul.f32 %v804, 1.442695
        %v806 = vpow.pop %v805
        %v807 = vsel %vm564, %v806, 0.0
        %808 = vadd.xlane.f32.xlu0 %v807
        %v809 = vpop.xlane.xlu0 %808
        %v810 = vrcp.pop %v809
        %v811 = vmul.f32 %v809, %v810
        %v812 = vsub.f32 1.0, %v811
        %v813 = vmul.f32 %v810, %v812
        %v814 = vadd.f32 %v810, %v813
        %vm815 = vweird.f32 %v809
        %vm816 = vweird.f32 %v810
        %vm817 = vmor %vm815, %vm816
        %v818 = vsel %vm817, %v810, %v814
        %v819 = vand.u32 2147483647, %v809
        %vm820 = vcmp.eq.f32.partialorder %v819, 8.507059e+37
        %v821 = vand.u32 %v809, 2147483648
        %v822 = vor.u32 1.1754944e-38, %v821
        %v823 = vsel %vm820, %v822, %v818
        %v824 = vmul.f32 %v806, %v823
        %v826 = vsel %vm564, %v527, 0
        %v829 = vsel %vm564, %v824, 0
        %831 = vmatpush.xpose.msra.mxu0 0.0
        %832 = vmatpush.xpose.msra.mxu0 0.0
        %833 = vmatpush.xpose.msra.mxu0 0.0
        %834 = vmatpush.xpose.msra.mxu0 0.0
        %835 = vmatpush.xpose.msra.mxu0 0.0
        %836 = vmatpush.xpose.msra.mxu0 0.0
        %837 = vmatpush.xpose.msra.mxu0 0.0
        %838 = vmatpush.xpose.msra.mxu0 0.0
        %839 = vmatpush.xpose.msra.mxu0 0.0
        %840 = vmatpush.xpose.msra.mxu0 0.0
        %841 = vmatpush.xpose.msra.mxu0 0.0
        %842 = vmatpush.xpose.msra.mxu0 0.0
        %843 = vmatpush.xpose.msra.mxu0 0.0
        %844 = vmatpush.xpose.msra.mxu0 0.0
        %845 = vmatpush.xpose.msra.mxu0 0.0
        %846 = vmatpush.xpose.msra.mxu0 %v829
        %847 = vmatmul.f32.gmra.mxu0 %v826
        %v848 = vpop.f32.mrf.mxu0
        %v849 = vadd.f32 0.0, %v848
        %850 = vdwg.mxu0
        %851 = vxpose.xlu0.b32.start [1/16] %v506, 128
        %852 = vxpose.xlu0.b32.cont [2/16] 0.0, 128
        %853 = vxpose.xlu0.b32.cont [3/16] 0.0, 128
        %854 = vxpose.xlu0.b32.cont [4/16] 0.0, 128
        %855 = vxpose.xlu0.b32.cont [5/16] 0.0, 128
        %856 = vxpose.xlu0.b32.cont [6/16] 0.0, 128
        %857 = vxpose.xlu0.b32.cont [7/16] 0.0, 128
        %858 = vxpose.xlu0.b32.cont [8/16] 0.0, 128
        %859 = vxpose.xlu0.b32.cont [9/16] 0.0, 128
        %860 = vxpose.xlu0.b32.cont [10/16] 0.0, 128
        %861 = vxpose.xlu0.b32.cont [11/16] 0.0, 128
        %862 = vxpose.xlu0.b32.cont [12/16] 0.0, 128
        %863 = vxpose.xlu0.b32.cont [13/16] 0.0, 128
        %864 = vxpose.xlu0.b32.cont [14/16] 0.0, 128
        %865 = vxpose.xlu0.b32.cont [15/16] 0.0, 128
        %866 = vxpose.xlu0.b32.end [16/16] 0.0, 128
        %v867 = vpop.trf.xlu0
        %v868 = vpop.trf.xlu0
        %v869 = vpop.trf.xlu0
        %v870 = vpop.trf.xlu0
        %v871 = vpop.trf.xlu0
        %v872 = vpop.trf.xlu0
        %v873 = vpop.trf.xlu0
        %v874 = vpop.trf.xlu0
        %v875 = vpop.trf.xlu0
        %v876 = vpop.trf.xlu0
        %v877 = vpop.trf.xlu0
        %v878 = vpop.trf.xlu0
        %v879 = vpop.trf.xlu0
        %v880 = vpop.trf.xlu0
        %v881 = vpop.trf.xlu0
        %v882 = vpop.trf.xlu0
        %v884 = vsel %vm564, %v867, 0
        %886 = vmatpush.msra.mxu0 0.0
        %887 = vmatpush.msra.mxu0 0.0
        %888 = vmatpush.msra.mxu0 0.0
        %889 = vmatpush.msra.mxu0 0.0
        %890 = vmatpush.msra.mxu0 0.0
        %891 = vmatpush.msra.mxu0 0.0
        %892 = vmatpush.msra.mxu0 0.0
        %893 = vmatpush.msra.mxu0 0.0
        %894 = vmatpush.msra.mxu0 0.0
        %895 = vmatpush.msra.mxu0 0.0
        %896 = vmatpush.msra.mxu0 0.0
        %897 = vmatpush.msra.mxu0 0.0
        %898 = vmatpush.msra.mxu0 0.0
        %899 = vmatpush.msra.mxu0 0.0
        %900 = vmatpush.msra.mxu0 0.0
        %901 = vmatpush.msra.mxu0 %v518
        %902 = vmatmul.f32.gmra.mxu0 %v884
        %v903 = vpop.f32.mrf.mxu0
        %v904 = vadd.f32 0.0, %v903
        %905 = vdwg.mxu0
        %v906 = vmul.f32 %v904, 0.35355338
        %v907 = vsel %vm564, %v906, -inf
        %908 = vmax.xlane.f32.xlu0 %v907
        %v909 = vpop.xlane.xlu0 %908
        %v910 = vsub.f32 %v906, %v909
        %v911 = vmul.f32 %v910, 1.442695
        %v912 = vpow.pop %v911
        %v913 = vsel %vm564, %v912, 0.0
        %914 = vadd.xlane.f32.xlu0 %v913
        %v915 = vpop.xlane.xlu0 %914
        %v916 = vrcp.pop %v915
        %v917 = vmul.f32 %v915, %v916
        %v918 = vsub.f32 1.0, %v917
        %v919 = vmul.f32 %v916, %v918
        %v920 = vadd.f32 %v916, %v919
        %vm921 = vweird.f32 %v915
        %vm922 = vweird.f32 %v916
        %vm923 = vmor %vm921, %vm922
        %v924 = vsel %vm923, %v916, %v920
        %v925 = vand.u32 2147483647, %v915
        %vm926 = vcmp.eq.f32.partialorder %v925, 8.507059e+37
        %v927 = vand.u32 %v915, 2147483648
        %v928 = vor.u32 1.1754944e-38, %v927
        %v929 = vsel %vm926, %v928, %v924
        %v930 = vmul.f32 %v912, %v929
        %v932 = vsel %vm564, %v530, 0
        %v935 = vsel %vm564, %v930, 0
        %937 = vmatpush.xpose.msra.mxu0 0.0
        %938 = vmatpush.xpose.msra.mxu0 0.0
        %939 = vmatpush.xpose.msra.mxu0 0.0
        %940 = vmatpush.xpose.msra.mxu0 0.0
        %941 = vmatpush.xpose.msra.mxu0 0.0
        %942 = vmatpush.xpose.msra.mxu0 0.0
        %943 = vmatpush.xpose.msra.mxu0 0.0
        %944 = vmatpush.xpose.msra.mxu0 0.0
        %945 = vmatpush.xpose.msra.mxu0 0.0
        %946 = vmatpush.xpose.msra.mxu0 0.0
        %947 = vmatpush.xpose.msra.mxu0 0.0
        %948 = vmatpush.xpose.msra.mxu0 0.0
        %949 = vmatpush.xpose.msra.mxu0 0.0
        %950 = vmatpush.xpose.msra.mxu0 0.0
        %951 = vmatpush.xpose.msra.mxu0 0.0
        %952 = vmatpush.xpose.msra.mxu0 %v935
        %953 = vmatmul.f32.gmra.mxu0 %v932
        %v954 = vpop.f32.mrf.mxu0
        %v955 = vadd.f32 0.0, %v954
        %956 = vdwg.mxu0
        %v957 = vld [vmem:[#allocation6 + $0xc8] sm:$0xff]
        %v958 = vld [vmem:[#allocation6 + $0xd0] sm:$0xff]
        %v959 = vld [vmem:[#allocation6 + $0xd8] sm:$0xff]
        %v960 = vld [vmem:[#allocation6 + $0xe0] sm:$0xff]
        %v961 = vld [vmem:[#allocation6 + $0xe8] sm:$0x1]
        %v962 = vperm.slane %v961, 0
        %963 = vxpose.xlu0.b32.start [1/16] %v637, 128
        %964 = vxpose.xlu0.b32.cont [2/16] %v743, 128
        %965 = vxpose.xlu0.b32.cont [3/16] %v849, 128
        %966 = vxpose.xlu0.b32.cont [4/16] %v955, 128
        %967 = vxpose.xlu0.b32.cont [5/16] 0.0, 128
        %968 = vxpose.xlu0.b32.cont [6/16] 0.0, 128
        %969 = vxpose.xlu0.b32.cont [7/16] 0.0, 128
        %970 = vxpose.xlu0.b32.cont [8/16] 0.0, 128
        %971 = vxpose.xlu0.b32.cont [9/16] 0.0, 128
        %972 = vxpose.xlu0.b32.cont [10/16] 0.0, 128
        %973 = vxpose.xlu0.b32.cont [11/16] 0.0, 128
        %974 = vxpose.xlu0.b32.cont [12/16] 0.0, 128
        %975 = vxpose.xlu0.b32.cont [13/16] 0.0, 128
        %976 = vxpose.xlu0.b32.cont [14/16] 0.0, 128
        %977 = vxpose.xlu0.b32.cont [15/16] 0.0, 128
        %978 = vxpose.xlu0.b32.end [16/16] 0.0, 128
        %v979 = vpop.trf.xlu0
        %v980 = vpop.trf.xlu0
        %v981 = vpop.trf.xlu0
        %v982 = vpop.trf.xlu0
        %v983 = vpop.trf.xlu0
        %v984 = vpop.trf.xlu0
        %v985 = vpop.trf.xlu0
        %v986 = vpop.trf.xlu0
        %v987 = vpop.trf.xlu0
        %v988 = vpop.trf.xlu0
        %v989 = vpop.trf.xlu0
        %v990 = vpop.trf.xlu0
        %v991 = vpop.trf.xlu0
        %v992 = vpop.trf.xlu0
        %v993 = vpop.trf.xlu0
        %v994 = vpop.trf.xlu0
        %v996 = vsel %vm440, %v979, 0
        %998 = vmatpush.msra.mxu0 0.0
        %999 = vmatpush.msra.mxu0 0.0
        %1000 = vmatpush.msra.mxu0 0.0
        %1001 = vmatpush.msra.mxu0 0.0
        %1002 = vmatpush.msra.mxu0 0.0
        %1003 = vmatpush.msra.mxu0 0.0
        %1004 = vmatpush.msra.mxu0 0.0
        %1005 = vmatpush.msra.mxu0 0.0
        %1006 = vmatpush.msra.mxu0 0.0
        %1007 = vmatpush.msra.mxu0 0.0
        %1008 = vmatpush.msra.mxu0 0.0
        %1009 = vmatpush.msra.mxu0 0.0
        %1010 = vmatpush.msra.mxu0 %v960
        %1011 = vmatpush.msra.mxu0 %v959
        %1012 = vmatpush.msra.mxu0 %v958
        %1013 = vmatpush.msra.mxu0 %v957
        %1014 = vmatmul.f32.gmra.mxu0 %v996
        %v1015 = vpop.f32.mrf.mxu0
        %v1016 = vadd.f32 %v962, %v1015
        %1017 = vdwg.mxu0
        %v1019 = vrot.slane %v1016, 1
        %v1020 = vrot.slane %v1016, 2
        %v1021 = vrot.slane %v1016, 3
        %v1022 = vrot.slane %v1016, 4
        %v1023 = vrot.slane %v1016, 5
        %v1024 = vrot.slane %v1016, 6
        %v1025 = vrot.slane %v1016, 7
        %v1034 = vadd.f32 %v295, %v1016
        %v1035 = vadd.f32 %v296, %v1019
        %v1036 = vadd.f32 %v297, %v1020
        %v1037 = vadd.f32 %v298, %v1021
        %v1038 = vadd.f32 %v299, %v1022
        %v1039 = vadd.f32 %v300, %v1023
        %v1040 = vadd.f32 %v301, %v1024
        %v1041 = vadd.f32 %v302, %v1025
        %v1042 = vld [vmem:[#allocation6 + $0xf0] sm:$0x1]
        %v1043 = vld [vmem:[#allocation6 + $0xf8] sm:$0x1]
        %v1052 = vrot.slane %v1035, 7
        %v1053 = vsel %vm420, %v1052, %v1034
        %v1054 = vrot.slane %v1036, 6
        %v1055 = vsel %vm423, %v1054, %v1053
        %v1056 = vrot.slane %v1037, 5
        %v1057 = vsel %vm426, %v1056, %v1055
        %v1058 = vrot.slane %v1038, 4
        %v1059 = vsel %vm429, %v1058, %v1057
        %v1060 = vrot.slane %v1039, 3
        %v1061 = vsel %vm432, %v1060, %v1059
        %v1062 = vrot.slane %v1040, 2
        %v1063 = vsel %vm435, %v1062, %v1061
        %v1064 = vrot.slane %v1041, 1
        %v1065 = vsel %vm438, %v1064, %v1063
        %v1067 = vsel %vm440, %v1065, 0.0
        %1068 = vadd.xlane.f32.xlu0 %v1067
        %v1069 = vpop.xlane.xlu0 %1068
        %v1070 = vrcp.pop 32.0
        %v1071 = vmul.f32 32.0, %v1070
        %v1072 = vsub.f32 1.0, %v1071
        %v1073 = vmul.f32 %v1070, %v1072
        %v1074 = vadd.f32 %v1070, %v1073
        %vm1075 = vweird.f32 %v1070
        %v1076 = vsel %vm1075, %v1070, %v1074
        %v1077 = vmul.f32 %v1069, %v1076
        %v1079 = vrot.slane %v1077, 1
        %v1080 = vrot.slane %v1077, 2
        %v1081 = vrot.slane %v1077, 3
        %v1082 = vrot.slane %v1077, 4
        %v1083 = vrot.slane %v1077, 5
        %v1084 = vrot.slane %v1077, 6
        %v1085 = vrot.slane %v1077, 7
        %v1094 = vsub.f32 %v1034, %v1077
        %v1095 = vsub.f32 %v1035, %v1079
        %v1096 = vsub.f32 %v1036, %v1080
        %v1097 = vsub.f32 %v1037, %v1081
        %v1098 = vsub.f32 %v1038, %v1082
        %v1099 = vsub.f32 %v1039, %v1083
        %v1100 = vsub.f32 %v1040, %v1084
        %v1101 = vsub.f32 %v1041, %v1085
        %v1102 = vmul.f32 %v1094, %v1094
        %v1103 = vmul.f32 %v1095, %v1095
        %v1104 = vmul.f32 %v1096, %v1096
        %v1105 = vmul.f32 %v1097, %v1097
        %v1106 = vmul.f32 %v1098, %v1098
        %v1107 = vmul.f32 %v1099, %v1099
        %v1108 = vmul.f32 %v1100, %v1100
        %v1109 = vmul.f32 %v1101, %v1101
        %v1118 = vrot.slane %v1103, 7
        %v1119 = vsel %vm420, %v1118, %v1102
        %v1120 = vrot.slane %v1104, 6
        %v1121 = vsel %vm423, %v1120, %v1119
        %v1122 = vrot.slane %v1105, 5
        %v1123 = vsel %vm426, %v1122, %v1121
        %v1124 = vrot.slane %v1106, 4
        %v1125 = vsel %vm429, %v1124, %v1123
        %v1126 = vrot.slane %v1107, 3
        %v1127 = vsel %vm432, %v1126, %v1125
        %v1128 = vrot.slane %v1108, 2
        %v1129 = vsel %vm435, %v1128, %v1127
        %v1130 = vrot.slane %v1109, 1
        %v1131 = vsel %vm438, %v1130, %v1129
        %v1133 = vsel %vm440, %v1131, 0.0
        %1134 = vadd.xlane.f32.xlu0 %v1133
        %v1135 = vpop.xlane.xlu0 %1134
        %v1136 = vmul.f32 %v1135, %v1076
        %v1137 = vadd.f32 %v1136, 1e-05
        %v1138 = vrsqrt.pop %v1137
        %v1139 = vmul.f32 %v1138, %v1137
        %v1140 = vmul.f32 %v1139, %v1138
        %v1141 = vmul.f32 0.5, %v1140
        %v1142 = vsub.f32 1.5, %v1141
        %v1143 = vmul.f32 %v1138, %v1142
        %vm1144 = vweird.f32 %v1137
        %vm1145 = vweird.f32 %v1138
        %vm1146 = vmor %vm1144, %vm1145
        %v1147 = vsel %vm1146, %v1138, %v1143
        %v1149 = vrot.slane %v1147, 1
        %v1150 = vrot.slane %v1147, 2
        %v1151 = vrot.slane %v1147, 3
        %v1152 = vrot.slane %v1147, 4
        %v1153 = vrot.slane %v1147, 5
        %v1154 = vrot.slane %v1147, 6
        %v1155 = vrot.slane %v1147, 7
        %v1164 = vmul.f32 %v1094, %v1147
        %v1165 = vmul.f32 %v1095, %v1149
        %v1166 = vmul.f32 %v1096, %v1150
        %v1167 = vmul.f32 %v1097, %v1151
        %v1168 = vmul.f32 %v1098, %v1152
        %v1169 = vmul.f32 %v1099, %v1153
        %v1170 = vmul.f32 %v1100, %v1154
        %v1171 = vmul.f32 %v1101, %v1155
        %v1172 = vperm.slane %v1042, 0
        %v1173 = vmul.f32 %v1164, %v1172
        %v1174 = vmul.f32 %v1165, %v1172
        %v1175 = vmul.f32 %v1166, %v1172
        %v1176 = vmul.f32 %v1167, %v1172
        %v1177 = vmul.f32 %v1168, %v1172
        %v1178 = vmul.f32 %v1169, %v1172
        %v1179 = vmul.f32 %v1170, %v1172
        %v1180 = vmul.f32 %v1171, %v1172
        %v1181 = vperm.slane %v1043, 0
        %v1182 = vadd.f32 %v1173, %v1181
        %v1183 = vadd.f32 %v1174, %v1181
        %v1184 = vadd.f32 %v1175, %v1181
        %v1185 = vadd.f32 %v1176, %v1181
        %v1186 = vadd.f32 %v1177, %v1181
        %v1187 = vadd.f32 %v1178, %v1181
        %v1188 = vadd.f32 %v1179, %v1181
        %v1189 = vadd.f32 %v1180, %v1181
        %v1190 = vld [vmem:[#allocation6 + $0x100] sm:$0xff]
        %v1191 = vld [vmem:[#allocation6 + $0x108] sm:$0xff]
        %v1192 = vld [vmem:[#allocation6 + $0x110] sm:$0xff]
        %v1193 = vld [vmem:[#allocation6 + $0x118] sm:$0xff]
        %v1194 = vld [vmem:[#allocation6 + $0x120] sm:$0x1]
        %v1195 = vperm.slane %v1194, 0
        %v1204 = vrot.slane %v1183, 7
        %v1205 = vsel %vm420, %v1204, %v1182
        %v1206 = vrot.slane %v1184, 6
        %v1207 = vsel %vm423, %v1206, %v1205
        %v1208 = vrot.slane %v1185, 5
        %v1209 = vsel %vm426, %v1208, %v1207
        %v1210 = vrot.slane %v1186, 4
        %v1211 = vsel %vm429, %v1210, %v1209
        %v1212 = vrot.slane %v1187, 3
        %v1213 = vsel %vm432, %v1212, %v1211
        %v1214 = vrot.slane %v1188, 2
        %v1215 = vsel %vm435, %v1214, %v1213
        %v1216 = vrot.slane %v1189, 1
        %v1217 = vsel %vm438, %v1216, %v1215
        %v1218 = vsel %vm440, %v1217, 0
        %1220 = vmatpush.msra.mxu0 0.0
        %1221 = vmatpush.msra.mxu0 0.0
        %1222 = vmatpush.msra.mxu0 0.0
        %1223 = vmatpush.msra.mxu0 0.0
        %1224 = vmatpush.msra.mxu0 0.0
        %1225 = vmatpush.msra.mxu0 0.0
        %1226 = vmatpush.msra.mxu0 0.0
        %1227 = vmatpush.msra.mxu0 0.0
        %1228 = vmatpush.msra.mxu0 0.0
        %1229 = vmatpush.msra.mxu0 0.0
        %1230 = vmatpush.msra.mxu0 0.0
        %1231 = vmatpush.msra.mxu0 0.0
        %1232 = vmatpush.msra.mxu0 %v1193
        %1233 = vmatpush.msra.mxu0 %v1192
        %1234 = vmatpush.msra.mxu0 %v1191
        %1235 = vmatpush.msra.mxu0 %v1190
        %1236 = vmatmul.f32.gmra.mxu0 %v1218
        %v1237 = vpop.f32.mrf.mxu0
        %v1238 = vadd.f32 %v1195, %v1237
        %1239 = vdwg.mxu0
        %v1240 = vmax.f32 %v1238, 0.0
        %v1241 = vld [vmem:[#allocation6 + $0x128] sm:$0xff]
        %v1242 = vld [vmem:[#allocation6 + $0x130] sm:$0xff]
        %v1243 = vld [vmem:[#allocation6 + $0x138] sm:$0xff]
        %v1244 = vld [vmem:[#allocation6 + $0x140] sm:$0xff]
        %v1245 = vld [vmem:[#allocation6 + $0x148] sm:$0xff]
        %v1246 = vld [vmem:[#allocation6 + $0x150] sm:$0xff]
        %v1247 = vld [vmem:[#allocation6 + $0x158] sm:$0xff]
        %v1248 = vld [vmem:[#allocation6 + $0x160] sm:$0xff]
        %v1249 = vld [vmem:[#allocation6 + $0x168] sm:$0x1]
        %v1250 = vperm.slane %v1249, 0
        %vm1251 = vcmask 523264
        %v1253 = vsel %vm1251, %v1240, 0
        %1255 = vmatpush.msra.mxu0 0.0
        %1256 = vmatpush.msra.mxu0 0.0
        %1257 = vmatpush.msra.mxu0 0.0
        %1258 = vmatpush.msra.mxu0 0.0
        %1259 = vmatpush.msra.mxu0 0.0
        %1260 = vmatpush.msra.mxu0 0.0
        %1261 = vmatpush.msra.mxu0 0.0
        %1262 = vmatpush.msra.mxu0 0.0
        %1263 = vmatpush.msra.mxu0 %v1248
        %1264 = vmatpush.msra.mxu0 %v1247
        %1265 = vmatpush.msra.mxu0 %v1246
        %1266 = vmatpush.msra.mxu0 %v1245
        %1267 = vmatpush.msra.mxu0 %v1244
        %1268 = vmatpush.msra.mxu0 %v1243
        %1269 = vmatpush.msra.mxu0 %v1242
        %1270 = vmatpush.msra.mxu0 %v1241
        %1271 = vmatmul.f32.gmra.mxu0 %v1253
        %v1272 = vpop.f32.mrf.mxu0
        %v1273 = vadd.f32 %v1250, %v1272
        %1274 = vdwg.mxu0
        %v1276 = vrot.slane %v1273, 1
        %v1277 = vrot.slane %v1273, 2
        %v1278 = vrot.slane %v1273, 3
        %v1279 = vrot.slane %v1273, 4
        %v1280 = vrot.slane %v1273, 5
        %v1281 = vrot.slane %v1273, 6
        %v1282 = vrot.slane %v1273, 7
        %v1291 = vadd.f32 %v1182, %v1273
        %v1292 = vadd.f32 %v1183, %v1276
        %v1293 = vadd.f32 %v1184, %v1277
        %v1294 = vadd.f32 %v1185, %v1278
        %v1295 = vadd.f32 %v1186, %v1279
        %v1296 = vadd.f32 %v1187, %v1280
        %v1297 = vadd.f32 %v1188, %v1281
        %v1298 = vadd.f32 %v1189, %v1282
        %v1299 = vld [vmem:[#allocation6 + $0x170] sm:$0x1]
        %v1300 = vld [vmem:[#allocation6 + $0x178] sm:$0x1]
        %v1309 = vrot.slane %v1292, 7
        %v1310 = vsel %vm420, %v1309, %v1291
        %v1311 = vrot.slane %v1293, 6
        %v1312 = vsel %vm423, %v1311, %v1310
        %v1313 = vrot.slane %v1294, 5
        %v1314 = vsel %vm426, %v1313, %v1312
        %v1315 = vrot.slane %v1295, 4
        %v1316 = vsel %vm429, %v1315, %v1314
        %v1317 = vrot.slane %v1296, 3
        %v1318 = vsel %vm432, %v1317, %v1316
        %v1319 = vrot.slane %v1297, 2
        %v1320 = vsel %vm435, %v1319, %v1318
        %v1321 = vrot.slane %v1298, 1
        %v1322 = vsel %vm438, %v1321, %v1320
        %v1324 = vsel %vm440, %v1322, 0.0
        %1325 = vadd.xlane.f32.xlu0 %v1324
        %v1326 = vpop.xlane.xlu0 %1325
        %v1327 = vmul.f32 %v1326, %v1076
        %v1329 = vrot.slane %v1327, 1
        %v1330 = vrot.slane %v1327, 2
        %v1331 = vrot.slane %v1327, 3
        %v1332 = vrot.slane %v1327, 4
        %v1333 = vrot.slane %v1327, 5
        %v1334 = vrot.slane %v1327, 6
        %v1335 = vrot.slane %v1327, 7
        %v1344 = vsub.f32 %v1291, %v1327
        %v1345 = vsub.f32 %v1292, %v1329
        %v1346 = vsub.f32 %v1293, %v1330
        %v1347 = vsub.f32 %v1294, %v1331
        %v1348 = vsub.f32 %v1295, %v1332
        %v1349 = vsub.f32 %v1296, %v1333
        %v1350 = vsub.f32 %v1297, %v1334
        %v1351 = vsub.f32 %v1298, %v1335
        %v1352 = vmul.f32 %v1344, %v1344
        %v1353 = vmul.f32 %v1345, %v1345
        %v1354 = vmul.f32 %v1346, %v1346
        %v1355 = vmul.f32 %v1347, %v1347
        %v1356 = vmul.f32 %v1348, %v1348
        %v1357 = vmul.f32 %v1349, %v1349
        %v1358 = vmul.f32 %v1350, %v1350
        %v1359 = vmul.f32 %v1351, %v1351
        %v1368 = vrot.slane %v1353, 7
        %v1369 = vsel %vm420, %v1368, %v1352
        %v1370 = vrot.slane %v1354, 6
        %v1371 = vsel %vm423, %v1370, %v1369
        %v1372 = vrot.slane %v1355, 5
        %v1373 = vsel %vm426, %v1372, %v1371
        %v1374 = vrot.slane %v1356, 4
        %v1375 = vsel %vm429, %v1374, %v1373
        %v1376 = vrot.slane %v1357, 3
        %v1377 = vsel %vm432, %v1376, %v1375
        %v1378 = vrot.slane %v1358, 2
        %v1379 = vsel %vm435, %v1378, %v1377
        %v1380 = vrot.slane %v1359, 1
        %v1381 = vsel %vm438, %v1380, %v1379
        %v1383 = vsel %vm440, %v1381, 0.0
        %1384 = vadd.xlane.f32.xlu0 %v1383
        %v1385 = vpop.xlane.xlu0 %1384
        %v1386 = vmul.f32 %v1385, %v1076
        %v1387 = vadd.f32 %v1386, 1e-05
        %v1388 = vrsqrt.pop %v1387
        %v1389 = vmul.f32 %v1388, %v1387
        %v1390 = vmul.f32 %v1389, %v1388
        %v1391 = vmul.f32 0.5, %v1390
        %v1392 = vsub.f32 1.5, %v1391
        %v1393 = vmul.f32 %v1388, %v1392
        %vm1394 = vweird.f32 %v1387
        %vm1395 = vweird.f32 %v1388
        %vm1396 = vmor %vm1394, %vm1395
        %v1397 = vsel %vm1396, %v1388, %v1393
        %v1399 = vrot.slane %v1397, 1
        %v1400 = vrot.slane %v1397, 2
        %v1401 = vrot.slane %v1397, 3
        %v1402 = vrot.slane %v1397, 4
        %v1403 = vrot.slane %v1397, 5
        %v1404 = vrot.slane %v1397, 6
        %v1405 = vrot.slane %v1397, 7
        %v1414 = vmul.f32 %v1344, %v1397
        %v1415 = vmul.f32 %v1345, %v1399
        %v1416 = vmul.f32 %v1346, %v1400
        %v1417 = vmul.f32 %v1347, %v1401
        %v1418 = vmul.f32 %v1348, %v1402
        %v1419 = vmul.f32 %v1349, %v1403
        %v1420 = vmul.f32 %v1350, %v1404
        %v1421 = vmul.f32 %v1351, %v1405
        %v1422 = vperm.slane %v1299, 0
        %v1423 = vmul.f32 %v1414, %v1422
        %v1424 = vmul.f32 %v1415, %v1422
        %v1425 = vmul.f32 %v1416, %v1422
        %v1426 = vmul.f32 %v1417, %v1422
        %v1427 = vmul.f32 %v1418, %v1422
        %v1428 = vmul.f32 %v1419, %v1422
        %v1429 = vmul.f32 %v1420, %v1422
        %v1430 = vmul.f32 %v1421, %v1422
        %v1431 = vperm.slane %v1300, 0
        %v1432 = vadd.f32 %v1423, %v1431
        %v1433 = vadd.f32 %v1424, %v1431
        %v1434 = vadd.f32 %v1425, %v1431
        %v1435 = vadd.f32 %v1426, %v1431
        %v1436 = vadd.f32 %v1427, %v1431
        %v1437 = vadd.f32 %v1428, %v1431
        %v1438 = vadd.f32 %v1429, %v1431
        %v1439 = vadd.f32 %v1430, %v1431
        %v1440 = vld [vmem:[#allocation6 + $0x180] sm:$0xff]
        %v1441 = vld [vmem:[#allocation6 + $0x188] sm:$0xff]
        %v1442 = vld [vmem:[#allocation6 + $0x190] sm:$0xff]
        %v1443 = vld [vmem:[#allocation6 + $0x198] sm:$0xff]
        %v1444 = vld [vmem:[#allocation6 + $0x1a0] sm:$0xff]
        %v1445 = vld [vmem:[#allocation6 + $0x1a8] sm:$0xff]
        %v1446 = vld [vmem:[#allocation6 + $0x1b0] sm:$0xff]
        %v1447 = vld [vmem:[#allocation6 + $0x1b8] sm:$0xff]
        %v1448 = vld [vmem:[#allocation6 + $0x1c0] sm:$0xff]
        %v1449 = vld [vmem:[#allocation6 + $0x1c8] sm:$0xff]
        %v1450 = vld [vmem:[#allocation6 + $0x1d0] sm:$0xff]
        %v1451 = vld [vmem:[#allocation6 + $0x1d8] sm:$0xff]
        %v1452 = vld [vmem:[#allocation6 + $0x1e0] sm:$0xff]
        %v1453 = vld [vmem:[#allocation6 + $0x1e8] sm:$0xff]
        %v1454 = vld [vmem:[#allocation6 + $0x1f0] sm:$0xff]
        %v1455 = vld [vmem:[#allocation6 + $0x1f8] sm:$0xff]
        %v1456 = vld [vmem:[#allocation6 + $0x200] sm:$0xff]
        %v1457 = vld [vmem:[#allocation6 + $0x208] sm:$0xff]
        %v1458 = vld [vmem:[#allocation6 + $0x210] sm:$0xff]
        %v1459 = vld [vmem:[#allocation6 + $0x218] sm:$0xff]
        %v1460 = vld [vmem:[#allocation6 + $0x220] sm:$0xff]
        %v1461 = vld [vmem:[#allocation6 + $0x228] sm:$0xff]
        %v1462 = vld [vmem:[#allocation6 + $0x230] sm:$0xff]
        %v1463 = vld [vmem:[#allocation6 + $0x238] sm:$0xff]
        %v1472 = vrot.slane %v1433, 7
        %v1473 = vsel %vm420, %v1472, %v1432
        %v1474 = vrot.slane %v1434, 6
        %v1475 = vsel %vm423, %v1474, %v1473
        %v1476 = vrot.slane %v1435, 5
        %v1477 = vsel %vm426, %v1476, %v1475
        %v1478 = vrot.slane %v1436, 4
        %v1479 = vsel %vm429, %v1478, %v1477
        %v1480 = vrot.slane %v1437, 3
        %v1481 = vsel %vm432, %v1480, %v1479
        %v1482 = vrot.slane %v1438, 2
        %v1483 = vsel %vm435, %v1482, %v1481
        %v1484 = vrot.slane %v1439, 1
        %v1485 = vsel %vm438, %v1484, %v1483
        %v1487 = vsel %vm440, %v1440, 0
        %v1490 = vsel %vm440, %v1441, 0
        %v1493 = vsel %vm440, %v1442, 0
        %v1496 = vsel %vm440, %v1443, 0
        %v1499 = vsel %vm440, %v1444, 0
        %v1502 = vsel %vm440, %v1445, 0
        %v1505 = vsel %vm440, %v1446, 0
        %v1508 = vsel %vm440, %v1447, 0
        %v1511 = vsel %vm440, %v1448, 0
        %v1514 = vsel %vm440, %v1449, 0
        %v1517 = vsel %vm440, %v1450, 0
        %v1520 = vsel %vm440, %v1451, 0
        %v1522 = vsel %vm440, %v1485, 0
        %1524 = vmatpush.xpose.msra.mxu0 0.0
        %1525 = vmatpush.xpose.msra.mxu0 0.0
        %1526 = vmatpush.xpose.msra.mxu0 0.0
        %1527 = vmatpush.xpose.msra.mxu0 0.0
        %1528 = vmatpush.xpose.msra.mxu0 0.0
        %1529 = vmatpush.xpose.msra.mxu0 0.0
        %1530 = vmatpush.xpose.msra.mxu0 0.0
        %1531 = vmatpush.xpose.msra.mxu0 0.0
        %1532 = vmatpush.xpose.msra.mxu0 0.0
        %1533 = vmatpush.xpose.msra.mxu0 0.0
        %1534 = vmatpush.xpose.msra.mxu0 0.0
        %1535 = vmatpush.xpose.msra.mxu0 0.0
        %1536 = vmatpush.xpose.msra.mxu0 0.0
        %1537 = vmatpush.xpose.msra.mxu0 0.0
        %1538 = vmatpush.xpose.msra.mxu0 0.0
        %1539 = vmatpush.xpose.msra.mxu0 %v1522
        %1540 = vmatmul.f32.gmra.mxu0 %v1487
        %v1541 = vpop.f32.mrf.mxu0
        %v1542 = vadd.f32 %v1452, %v1541
        %1543 = vmatmul.f32.gmra.mxu0 %v1490
        %v1544 = vpop.f32.mrf.mxu0
        %v1545 = vadd.f32 %v1453, %v1544
        %1546 = vmatmul.f32.gmra.mxu0 %v1493
        %v1547 = vpop.f32.mrf.mxu0
        %v1548 = vadd.f32 %v1454, %v1547
        %1549 = vmatmul.f32.gmra.mxu0 %v1496
        %v1550 = vpop.f32.mrf.mxu0
        %v1551 = vadd.f32 %v1455, %v1550
        %1552 = vmatmul.f32.gmra.mxu0 %v1499
        %v1553 = vpop.f32.mrf.mxu0
        %v1554 = vadd.f32 %v1456, %v1553
        %1555 = vmatmul.f32.gmra.mxu0 %v1502
        %v1556 = vpop.f32.mrf.mxu0
        %v1557 = vadd.f32 %v1457, %v1556
        %1558 = vmatmul.f32.gmra.mxu0 %v1505
        %v1559 = vpop.f32.mrf.mxu0
        %v1560 = vadd.f32 %v1458, %v1559
        %1561 = vmatmul.f32.gmra.mxu0 %v1508
        %v1562 = vpop.f32.mrf.mxu0
        %v1563 = vadd.f32 %v1459, %v1562
        %1564 = vmatmul.f32.gmra.mxu0 %v1511
        %v1565 = vpop.f32.mrf.mxu0
        %v1566 = vadd.f32 %v1460, %v1565
        %1567 = vmatmul.f32.gmra.mxu0 %v1514
        %v1568 = vpop.f32.mrf.mxu0
        %v1569 = vadd.f32 %v1461, %v1568
        %1570 = vmatmul.f32.gmra.mxu0 %v1517
        %v1571 = vpop.f32.mrf.mxu0
        %v1572 = vadd.f32 %v1462, %v1571
        %1573 = vmatmul.f32.gmra.mxu0 %v1520
        %v1574 = vpop.f32.mrf.mxu0
        %v1575 = vadd.f32 %v1463, %v1574
        %1576 = vdwg.mxu0
        %1577 = vxpose.xlu0.b32.start [1/16] %v1542, 128
        %1578 = vxpose.xlu0.b32.cont [2/16] 0.0, 128
        %1579 = vxpose.xlu0.b32.cont [3/16] 0.0, 128
        %1580 = vxpose.xlu0.b32.cont [4/16] 0.0, 128
        %1581 = vxpose.xlu0.b32.cont [5/16] 0.0, 128
        %1582 = vxpose.xlu0.b32.cont [6/16] 0.0, 128
        %1583 = vxpose.xlu0.b32.cont [7/16] 0.0, 128
        %1584 = vxpose.xlu0.b32.cont [8/16] 0.0, 128
        %1585 = vxpose.xlu0.b32.cont [9/16] 0.0, 128
        %1586 = vxpose.xlu0.b32.cont [10/16] 0.0, 128
        %1587 = vxpose.xlu0.b32.cont [11/16] 0.0, 128
        %1588 = vxpose.xlu0.b32.cont [12/16] 0.0, 128
        %1589 = vxpose.xlu0.b32.cont [13/16] 0.0, 128
        %1590 = vxpose.xlu0.b32.cont [14/16] 0.0, 128
        %1591 = vxpose.xlu0.b32.cont [15/16] 0.0, 128
        %1592 = vxpose.xlu0.b32.end [16/16] 0.0, 128
        %v1593 = vpop.trf.xlu0
        %v1594 = vpop.trf.xlu0
        %v1595 = vpop.trf.xlu0
        %v1596 = vpop.trf.xlu0
        %v1597 = vpop.trf.xlu0
        %v1598 = vpop.trf.xlu0
        %v1599 = vpop.trf.xlu0
        %v1600 = vpop.trf.xlu0
        %v1601 = vpop.trf.xlu0
        %v1602 = vpop.trf.xlu0
        %v1603 = vpop.trf.xlu0
        %v1604 = vpop.trf.xlu0
        %v1605 = vpop.trf.xlu0
        %v1606 = vpop.trf.xlu0
        %v1607 = vpop.trf.xlu0
        %v1608 = vpop.trf.xlu0
        %v1610 = vsel %vm564, %v1593, 0
        %1612 = vmatpush.msra.mxu0 0.0
        %1613 = vmatpush.msra.mxu0 0.0
        %1614 = vmatpush.msra.mxu0 0.0
        %1615 = vmatpush.msra.mxu0 0.0
        %1616 = vmatpush.msra.mxu0 0.0
        %1617 = vmatpush.msra.mxu0 0.0
        %1618 = vmatpush.msra.mxu0 0.0
        %1619 = vmatpush.msra.mxu0 0.0
        %1620 = vmatpush.msra.mxu0 0.0
        %1621 = vmatpush.msra.mxu0 0.0
        %1622 = vmatpush.msra.mxu0 0.0
        %1623 = vmatpush.msra.mxu0 0.0
        %1624 = vmatpush.msra.mxu0 0.0
        %1625 = vmatpush.msra.mxu0 0.0
        %1626 = vmatpush.msra.mxu0 0.0
        %1627 = vmatpush.msra.mxu0 %v1554
        %1628 = vmatmul.f32.gmra.mxu0 %v1610
        %v1629 = vpop.f32.mrf.mxu0
        %v1630 = vadd.f32 0.0, %v1629
        %1631 = vdwg.mxu0
        %v1632 = vmul.f32 %v1630, 0.35355338
        %v1633 = vsel %vm564, %v1632, -inf
        %1634 = vmax.xlane.f32.xlu0 %v1633
        %v1635 = vpop.xlane.xlu0 %1634
        %v1636 = vsub.f32 %v1632, %v1635
        %v1637 = vmul.f32 %v1636, 1.442695
        %v1638 = vpow.pop %v1637
        %v1639 = vsel %vm564, %v1638, 0.0
        %1640 = vadd.xlane.f32.xlu0 %v1639
        %v1641 = vpop.xlane.xlu0 %1640
        %v1642 = vrcp.pop %v1641
        %v1643 = vmul.f32 %v1641, %v1642
        %v1644 = vsub.f32 1.0, %v1643
        %v1645 = vmul.f32 %v1642, %v1644
        %v1646 = vadd.f32 %v1642, %v1645
        %vm1647 = vweird.f32 %v1641
        %vm1648 = vweird.f32 %v1642
        %vm1649 = vmor %vm1647, %vm1648
        %v1650 = vsel %vm1649, %v1642, %v1646
        %v1651 = vand.u32 2147483647, %v1641
        %vm1652 = vcmp.eq.f32.partialorder %v1651, 8.507059e+37
        %v1653 = vand.u32 %v1641, 2147483648
        %v1654 = vor.u32 1.1754944e-38, %v1653
        %v1655 = vsel %vm1652, %v1654, %v1650
        %v1656 = vmul.f32 %v1638, %v1655
        %v1658 = vsel %vm564, %v1566, 0
        %v1661 = vsel %vm564, %v1656, 0
        %1663 = vmatpush.xpose.msra.mxu0 0.0
        %1664 = vmatpush.xpose.msra.mxu0 0.0
        %1665 = vmatpush.xpose.msra.mxu0 0.0
        %1666 = vmatpush.xpose.msra.mxu0 0.0
        %1667 = vmatpush.xpose.msra.mxu0 0.0
        %1668 = vmatpush.xpose.msra.mxu0 0.0
        %1669 = vmatpush.xpose.msra.mxu0 0.0
        %1670 = vmatpush.xpose.msra.mxu0 0.0
        %1671 = vmatpush.xpose.msra.mxu0 0.0
        %1672 = vmatpush.xpose.msra.mxu0 0.0
        %1673 = vmatpush.xpose.msra.mxu0 0.0
        %1674 = vmatpush.xpose.msra.mxu0 0.0
        %1675 = vmatpush.xpose.msra.mxu0 0.0
        %1676 = vmatpush.xpose.msra.mxu0 0.0
        %1677 = vmatpush.xpose.msra.mxu0 0.0
        %1678 = vmatpush.xpose.msra.mxu0 %v1661
        %1679 = vmatmul.f32.gmra.mxu0 %v1658
        %v1680 = vpop.f32.mrf.mxu0
        %v1681 = vadd.f32 0.0, %v1680
        %1682 = vdwg.mxu0
        %1683 = vxpose.xlu0.b32.start [1/16] %v1545, 128
        %1684 = vxpose.xlu0.b32.cont [2/16] 0.0, 128
        %1685 = vxpose.xlu0.b32.cont [3/16] 0.0, 128
        %1686 = vxpose.xlu0.b32.cont [4/16] 0.0, 128
        %1687 = vxpose.xlu0.b32.cont [5/16] 0.0, 128
        %1688 = vxpose.xlu0.b32.cont [6/16] 0.0, 128
        %1689 = vxpose.xlu0.b32.cont [7/16] 0.0, 128
        %1690 = vxpose.xlu0.b32.cont [8/16] 0.0, 128
        %1691 = vxpose.xlu0.b32.cont [9/16] 0.0, 128
        %1692 = vxpose.xlu0.b32.cont [10/16] 0.0, 128
        %1693 = vxpose.xlu0.b32.cont [11/16] 0.0, 128
        %1694 = vxpose.xlu0.b32.cont [12/16] 0.0, 128
        %1695 = vxpose.xlu0.b32.cont [13/16] 0.0, 128
        %1696 = vxpose.xlu0.b32.cont [14/16] 0.0, 128
        %1697 = vxpose.xlu0.b32.cont [15/16] 0.0, 128
        %1698 = vxpose.xlu0.b32.end [16/16] 0.0, 128
        %v1699 = vpop.trf.xlu0
        %v1700 = vpop.trf.xlu0
        %v1701 = vpop.trf.xlu0
        %v1702 = vpop.trf.xlu0
        %v1703 = vpop.trf.xlu0
        %v1704 = vpop.trf.xlu0
        %v1705 = vpop.trf.xlu0
        %v1706 = vpop.trf.xlu0
        %v1707 = vpop.trf.xlu0
        %v1708 = vpop.trf.xlu0
        %v1709 = vpop.trf.xlu0
        %v1710 = vpop.trf.xlu0
        %v1711 = vpop.trf.xlu0
        %v1712 = vpop.trf.xlu0
        %v1713 = vpop.trf.xlu0
        %v1714 = vpop.trf.xlu0
        %v1716 = vsel %vm564, %v1699, 0
        %1718 = vmatpush.msra.mxu0 0.0
        %1719 = vmatpush.msra.mxu0 0.0
        %1720 = vmatpush.msra.mxu0 0.0
        %1721 = vmatpush.msra.mxu0 0.0
        %1722 = vmatpush.msra.mxu0 0.0
        %1723 = vmatpush.msra.mxu0 0.0
        %1724 = vmatpush.msra.mxu0 0.0
        %1725 = vmatpush.msra.mxu0 0.0
        %1726 = vmatpush.msra.mxu0 0.0
        %1727 = vmatpush.msra.mxu0 0.0
        %1728 = vmatpush.msra.mxu0 0.0
        %1729 = vmatpush.msra.mxu0 0.0
        %1730 = vmatpush.msra.mxu0 0.0
        %1731 = vmatpush.msra.mxu0 0.0
        %1732 = vmatpush.msra.mxu0 0.0
        %1733 = vmatpush.msra.mxu0 %v1557
        %1734 = vmatmul.f32.gmra.mxu0 %v1716
        %v1735 = vpop.f32.mrf.mxu0
        %v1736 = vadd.f32 0.0, %v1735
        %1737 = vdwg.mxu0
        %v1738 = vmul.f32 %v1736, 0.35355338
        %v1739 = vsel %vm564, %v1738, -inf
        %1740 = vmax.xlane.f32.xlu0 %v1739
        %v1741 = vpop.xlane.xlu0 %1740
        %v1742 = vsub.f32 %v1738, %v1741
        %v1743 = vmul.f32 %v1742, 1.442695
        %v1744 = vpow.pop %v1743
        %v1745 = vsel %vm564, %v1744, 0.0
        %1746 = vadd.xlane.f32.xlu0 %v1745
        %v1747 = vpop.xlane.xlu0 %1746
        %v1748 = vrcp.pop %v1747
        %v1749 = vmul.f32 %v1747, %v1748
        %v1750 = vsub.f32 1.0, %v1749
        %v1751 = vmul.f32 %v1748, %v1750
        %v1752 = vadd.f32 %v1748, %v1751
        %vm1753 = vweird.f32 %v1747
        %vm1754 = vweird.f32 %v1748
        %vm1755 = vmor %vm1753, %vm1754
        %v1756 = vsel %vm1755, %v1748, %v1752
        %v1757 = vand.u32 2147483647, %v1747
        %vm1758 = vcmp.eq.f32.partialorder %v1757, 8.507059e+37
        %v1759 = vand.u32 %v1747, 2147483648
        %v1760 = vor.u32 1.1754944e-38, %v1759
        %v1761 = vsel %vm1758, %v1760, %v1756
        %v1762 = vmul.f32 %v1744, %v1761
        %v1764 = vsel %vm564, %v1569, 0
        %v1767 = vsel %vm564, %v1762, 0
        %1769 = vmatpush.xpose.msra.mxu0 0.0
        %1770 = vmatpush.xpose.msra.mxu0 0.0
        %1771 = vmatpush.xpose.msra.mxu0 0.0
        %1772 = vmatpush.xpose.msra.mxu0 0.0
        %1773 = vmatpush.xpose.msra.mxu0 0.0
        %1774 = vmatpush.xpose.msra.mxu0 0.0
        %1775 = vmatpush.xpose.msra.mxu0 0.0
        %1776 = vmatpush.xpose.msra.mxu0 0.0
        %1777 = vmatpush.xpose.msra.mxu0 0.0
        %1778 = vmatpush.xpose.msra.mxu0 0.0
        %1779 = vmatpush.xpose.msra.mxu0 0.0
        %1780 = vmatpush.xpose.msra.mxu0 0.0
        %1781 = vmatpush.xpose.msra.mxu0 0.0
        %1782 = vmatpush.xpose.msra.mxu0 0.0
        %1783 = vmatpush.xpose.msra.mxu0 0.0
        %1784 = vmatpush.xpose.msra.mxu0 %v1767
        %1785 = vmatmul.f32.gmra.mxu0 %v1764
        %v1786 = vpop.f32.mrf.mxu0
        %v1787 = vadd.f32 0.0, %v1786
        %1788 = vdwg.mxu0
        %1789 = vxpose.xlu0.b32.start [1/16] %v1548, 128
        %1790 = vxpose.xlu0.b32.cont [2/16] 0.0, 128
        %1791 = vxpose.xlu0.b32.cont [3/16] 0.0, 128
        %1792 = vxpose.xlu0.b32.cont [4/16] 0.0, 128
        %1793 = vxpose.xlu0.b32.cont [5/16] 0.0, 128
        %1794 = vxpose.xlu0.b32.cont [6/16] 0.0, 128
        %1795 = vxpose.xlu0.b32.cont [7/16] 0.0, 128
        %1796 = vxpose.xlu0.b32.cont [8/16] 0.0, 128
        %1797 = vxpose.xlu0.b32.cont [9/16] 0.0, 128
        %1798 = vxpose.xlu0.b32.cont [10/16] 0.0, 128
        %1799 = vxpose.xlu0.b32.cont [11/16] 0.0, 128
        %1800 = vxpose.xlu0.b32.cont [12/16] 0.0, 128
        %1801 = vxpose.xlu0.b32.cont [13/16] 0.0, 128
        %1802 = vxpose.xlu0.b32.cont [14/16] 0.0, 128
        %1803 = vxpose.xlu0.b32.cont [15/16] 0.0, 128
        %1804 = vxpose.xlu0.b32.end [16/16] 0.0, 128
        %v1805 = vpop.trf.xlu0
        %v1806 = vpop.trf.xlu0
        %v1807 = vpop.trf.xlu0
        %v1808 = vpop.trf.xlu0
        %v1809 = vpop.trf.xlu0
        %v1810 = vpop.trf.xlu0
        %v1811 = vpop.trf.xlu0
        %v1812 = vpop.trf.xlu0
        %v1813 = vpop.trf.xlu0
        %v1814 = vpop.trf.xlu0
        %v1815 = vpop.trf.xlu0
        %v1816 = vpop.trf.xlu0
        %v1817 = vpop.trf.xlu0
        %v1818 = vpop.trf.xlu0
        %v1819 = vpop.trf.xlu0
        %v1820 = vpop.trf.xlu0
        %v1822 = vsel %vm564, %v1805, 0
        %1824 = vmatpush.msra.mxu0 0.0
        %1825 = vmatpush.msra.mxu0 0.0
        %1826 = vmatpush.msra.mxu0 0.0
        %1827 = vmatpush.msra.mxu0 0.0
        %1828 = vmatpush.msra.mxu0 0.0
        %1829 = vmatpush.msra.mxu0 0.0
        %1830 = vmatpush.msra.mxu0 0.0
        %1831 = vmatpush.msra.mxu0 0.0
        %1832 = vmatpush.msra.mxu0 0.0
        %1833 = vmatpush.msra.mxu0 0.0
        %1834 = vmatpush.msra.mxu0 0.0
        %1835 = vmatpush.msra.mxu0 0.0
        %1836 = vmatpush.msra.mxu0 0.0
        %1837 = vmatpush.msra.mxu0 0.0
        %1838 = vmatpush.msra.mxu0 0.0
        %1839 = vmatpush.msra.mxu0 %v1560
        %1840 = vmatmul.f32.gmra.mxu0 %v1822
        %v1841 = vpop.f32.mrf.mxu0
        %v1842 = vadd.f32 0.0, %v1841
        %1843 = vdwg.mxu0
        %v1844 = vmul.f32 %v1842, 0.35355338
        %v1845 = vsel %vm564, %v1844, -inf
        %1846 = vmax.xlane.f32.xlu0 %v1845
        %v1847 = vpop.xlane.xlu0 %1846
        %v1848 = vsub.f32 %v1844, %v1847
        %v1849 = vmul.f32 %v1848, 1.442695
        %v1850 = vpow.pop %v1849
        %v1851 = vsel %vm564, %v1850, 0.0
        %1852 = vadd.xlane.f32.xlu0 %v1851
        %v1853 = vpop.xlane.xlu0 %1852
        %v1854 = vrcp.pop %v1853
        %v1855 = vmul.f32 %v1853, %v1854
        %v1856 = vsub.f32 1.0, %v1855
        %v1857 = vmul.f32 %v1854, %v1856
        %v1858 = vadd.f32 %v1854, %v1857
        %vm1859 = vweird.f32 %v1853
        %vm1860 = vweird.f32 %v1854
        %vm1861 = vmor %vm1859, %vm1860
        %v1862 = vsel %vm1861, %v1854, %v1858
        %v1863 = vand.u32 2147483647, %v1853
        %vm1864 = vcmp.eq.f32.partialorder %v1863, 8.507059e+37
        %v1865 = vand.u32 %v1853, 2147483648
        %v1866 = vor.u32 1.1754944e-38, %v1865
        %v1867 = vsel %vm1864, %v1866, %v1862
        %v1868 = vmul.f32 %v1850, %v1867
        %v1870 = vsel %vm564, %v1572, 0
        %v1873 = vsel %vm564, %v1868, 0
        %1875 = vmatpush.xpose.msra.mxu0 0.0
        %1876 = vmatpush.xpose.msra.mxu0 0.0
        %1877 = vmatpush.xpose.msra.mxu0 0.0
        %1878 = vmatpush.xpose.msra.mxu0 0.0
        %1879 = vmatpush.xpose.msra.mxu0 0.0
        %1880 = vmatpush.xpose.msra.mxu0 0.0
        %1881 = vmatpush.xpose.msra.mxu0 0.0
        %1882 = vmatpush.xpose.msra.mxu0 0.0
        %1883 = vmatpush.xpose.msra.mxu0 0.0
        %1884 = vmatpush.xpose.msra.mxu0 0.0
        %1885 = vmatpush.xpose.msra.mxu0 0.0
        %1886 = vmatpush.xpose.msra.mxu0 0.0
        %1887 = vmatpush.xpose.msra.mxu0 0.0
        %1888 = vmatpush.xpose.msra.mxu0 0.0
        %1889 = vmatpush.xpose.msra.mxu0 0.0
        %1890 = vmatpush.xpose.msra.mxu0 %v1873
        %1891 = vmatmul.f32.gmra.mxu0 %v1870
        %v1892 = vpop.f32.mrf.mxu0
        %v1893 = vadd.f32 0.0, %v1892
        %1894 = vdwg.mxu0
        %1895 = vxpose.xlu0.b32.start [1/16] %v1551, 128
        %1896 = vxpose.xlu0.b32.cont [2/16] 0.0, 128
        %1897 = vxpose.xlu0.b32.cont [3/16] 0.0, 128
        %1898 = vxpose.xlu0.b32.cont [4/16] 0.0, 128
        %1899 = vxpose.xlu0.b32.cont [5/16] 0.0, 128
        %1900 = vxpose.xlu0.b32.cont [6/16] 0.0, 128
        %1901 = vxpose.xlu0.b32.cont [7/16] 0.0, 128
        %1902 = vxpose.xlu0.b32.cont [8/16] 0.0, 128
        %1903 = vxpose.xlu0.b32.cont [9/16] 0.0, 128
        %1904 = vxpose.xlu0.b32.cont [10/16] 0.0, 128
        %1905 = vxpose.xlu0.b32.cont [11/16] 0.0, 128
        %1906 = vxpose.xlu0.b32.cont [12/16] 0.0, 128
        %1907 = vxpose.xlu0.b32.cont [13/16] 0.0, 128
        %1908 = vxpose.xlu0.b32.cont [14/16] 0.0, 128
        %1909 = vxpose.xlu0.b32.cont [15/16] 0.0, 128
        %1910 = vxpose.xlu0.b32.end [16/16] 0.0, 128
        %v1911 = vpop.trf.xlu0
        %v1912 = vpop.trf.xlu0
        %v1913 = vpop.trf.xlu0
        %v1914 = vpop.trf.xlu0
        %v1915 = vpop.trf.xlu0
        %v1916 = vpop.trf.xlu0
        %v1917 = vpop.trf.xlu0
        %v1918 = vpop.trf.xlu0
        %v1919 = vpop.trf.xlu0
        %v1920 = vpop.trf.xlu0
        %v1921 = vpop.trf.xlu0
        %v1922 = vpop.trf.xlu0
        %v1923 = vpop.trf.xlu0
        %v1924 = vpop.trf.xlu0
        %v1925 = vpop.trf.xlu0
        %v1926 = vpop.trf.xlu0
        %v1928 = vsel %vm564, %v1911, 0
        %1930 = vmatpush.msra.mxu0 0.0
        %1931 = vmatpush.msra.mxu0 0.0
        %1932 = vmatpush.msra.mxu0 0.0
        %1933 = vmatpush.msra.mxu0 0.0
        %1934 = vmatpush.msra.mxu0 0.0
        %1935 = vmatpush.msra.mxu0 0.0
        %1936 = vmatpush.msra.mxu0 0.0
        %1937 = vmatpush.msra.mxu0 0.0
        %1938 = vmatpush.msra.mxu0 0.0
        %1939 = vmatpush.msra.mxu0 0.0
        %1940 = vmatpush.msra.mxu0 0.0
        %1941 = vmatpush.msra.mxu0 0.0
        %1942 = vmatpush.msra.mxu0 0.0
        %1943 = vmatpush.msra.mxu0 0.0
        %1944 = vmatpush.msra.mxu0 0.0
        %1945 = vmatpush.msra.mxu0 %v1563
        %1946 = vmatmul.f32.gmra.mxu0 %v1928
        %v1947 = vpop.f32.mrf.mxu0
        %v1948 = vadd.f32 0.0, %v1947
        %1949 = vdwg.mxu0
        %v1950 = vmul.f32 %v1948, 0.35355338
        %v1951 = vsel %vm564, %v1950, -inf
        %1952 = vmax.xlane.f32.xlu0 %v1951
        %v1953 = vpop.xlane.xlu0 %1952
        %v1954 = vsub.f32 %v1950, %v1953
        %v1955 = vmul.f32 %v1954, 1.442695
        %v1956 = vpow.pop %v1955
        %v1957 = vsel %vm564, %v1956, 0.0
        %1958 = vadd.xlane.f32.xlu0 %v1957
        %v1959 = vpop.xlane.xlu0 %1958
        %v1960 = vrcp.pop %v1959
        %v1961 = vmul.f32 %v1959, %v1960
        %v1962 = vsub.f32 1.0, %v1961
        %v1963 = vmul.f32 %v1960, %v1962
        %v1964 = vadd.f32 %v1960, %v1963
        %vm1965 = vweird.f32 %v1959
        %vm1966 = vweird.f32 %v1960
        %vm1967 = vmor %vm1965, %vm1966
        %v1968 = vsel %vm1967, %v1960, %v1964
        %v1969 = vand.u32 2147483647, %v1959
        %vm1970 = vcmp.eq.f32.partialorder %v1969, 8.507059e+37
        %v1971 = vand.u32 %v1959, 2147483648
        %v1972 = vor.u32 1.1754944e-38, %v1971
        %v1973 = vsel %vm1970, %v1972, %v1968
        %v1974 = vmul.f32 %v1956, %v1973
        %v1976 = vsel %vm564, %v1575, 0
        %v1979 = vsel %vm564, %v1974, 0
        %1981 = vmatpush.xpose.msra.mxu0 0.0
        %1982 = vmatpush.xpose.msra.mxu0 0.0
        %1983 = vmatpush.xpose.msra.mxu0 0.0
        %1984 = vmatpush.xpose.msra.mxu0 0.0
        %1985 = vmatpush.xpose.msra.mxu0 0.0
        %1986 = vmatpush.xpose.msra.mxu0 0.0
        %1987 = vmatpush.xpose.msra.mxu0 0.0
        %1988 = vmatpush.xpose.msra.mxu0 0.0
        %1989 = vmatpush.xpose.msra.mxu0 0.0
        %1990 = vmatpush.xpose.msra.mxu0 0.0
        %1991 = vmatpush.xpose.msra.mxu0 0.0
        %1992 = vmatpush.xpose.msra.mxu0 0.0
        %1993 = vmatpush.xpose.msra.mxu0 0.0
        %1994 = vmatpush.xpose.msra.mxu0 0.0
        %1995 = vmatpush.xpose.msra.mxu0 0.0
        %1996 = vmatpush.xpose.msra.mxu0 %v1979
        %1997 = vmatmul.f32.gmra.mxu0 %v1976
        %v1998 = vpop.f32.mrf.mxu0
        %v1999 = vadd.f32 0.0, %v1998
        %2000 = vdwg.mxu0
        %v2001 = vld [vmem:[#allocation6 + $0x240] sm:$0xff]
        %v2002 = vld [vmem:[#allocation6 + $0x248] sm:$0xff]
        %v2003 = vld [vmem:[#allocation6 + $0x250] sm:$0xff]
        %v2004 = vld [vmem:[#allocation6 + $0x258] sm:$0xff]
        %v2005 = vld [vmem:[#allocation6 + $0x260] sm:$0x1]
        %v2006 = vperm.slane %v2005, 0
        %2007 = vxpose.xlu0.b32.start [1/16] %v1681, 128
        %2008 = vxpose.xlu0.b32.cont [2/16] %v1787, 128
        %2009 = vxpose.xlu0.b32.cont [3/16] %v1893, 128
        %2010 = vxpose.xlu0.b32.cont [4/16] %v1999, 128
        %2011 = vxpose.xlu0.b32.cont [5/16] 0.0, 128
        %2012 = vxpose.xlu0.b32.cont [6/16] 0.0, 128
        %2013 = vxpose.xlu0.b32.cont [7/16] 0.0, 128
        %2014 = vxpose.xlu0.b32.cont [8/16] 0.0, 128
        %2015 = vxpose.xlu0.b32.cont [9/16] 0.0, 128
        %2016 = vxpose.xlu0.b32.cont [10/16] 0.0, 128
        %2017 = vxpose.xlu0.b32.cont [11/16] 0.0, 128
        %2018 = vxpose.xlu0.b32.cont [12/16] 0.0, 128
        %2019 = vxpose.xlu0.b32.cont [13/16] 0.0, 128
        %2020 = vxpose.xlu0.b32.cont [14/16] 0.0, 128
        %2021 = vxpose.xlu0.b32.cont [15/16] 0.0, 128
        %2022 = vxpose.xlu0.b32.end [16/16] 0.0, 128
        %v2023 = vpop.trf.xlu0
        %v2024 = vpop.trf.xlu0
        %v2025 = vpop.trf.xlu0
        %v2026 = vpop.trf.xlu0
        %v2027 = vpop.trf.xlu0
        %v2028 = vpop.trf.xlu0
        %v2029 = vpop.trf.xlu0
        %v2030 = vpop.trf.xlu0
        %v2031 = vpop.trf.xlu0
        %v2032 = vpop.trf.xlu0
        %v2033 = vpop.trf.xlu0
        %v2034 = vpop.trf.xlu0
        %v2035 = vpop.trf.xlu0
        %v2036 = vpop.trf.xlu0
        %v2037 = vpop.trf.xlu0
        %v2038 = vpop.trf.xlu0
        %v2040 = vsel %vm440, %v2023, 0
        %2042 = vmatpush.msra.mxu0 0.0
        %2043 = vmatpush.msra.mxu0 0.0
        %2044 = vmatpush.msra.mxu0 0.0
        %2045 = vmatpush.msra.mxu0 0.0
        %2046 = vmatpush.msra.mxu0 0.0
        %2047 = vmatpush.msra.mxu0 0.0
        %2048 = vmatpush.msra.mxu0 0.0
        %2049 = vmatpush.msra.mxu0 0.0
        %2050 = vmatpush.msra.mxu0 0.0
        %2051 = vmatpush.msra.mxu0 0.0
        %2052 = vmatpush.msra.mxu0 0.0
        %2053 = vmatpush.msra.mxu0 0.0
        %2054 = vmatpush.msra.mxu0 %v2004
        %2055 = vmatpush.msra.mxu0 %v2003
        %2056 = vmatpush.msra.mxu0 %v2002
        %2057 = vmatpush.msra.mxu0 %v2001
        %2058 = vmatmul.f32.gmra.mxu0 %v2040
        %v2059 = vpop.f32.mrf.mxu0
        %v2060 = vadd.f32 %v2006, %v2059
        %2061 = vdwg.mxu0
        %v2063 = vrot.slane %v2060, 1
        %v2064 = vrot.slane %v2060, 2
        %v2065 = vrot.slane %v2060, 3
        %v2066 = vrot.slane %v2060, 4
        %v2067 = vrot.slane %v2060, 5
        %v2068 = vrot.slane %v2060, 6
        %v2069 = vrot.slane %v2060, 7
        %v2078 = vadd.f32 %v1432, %v2060
        %v2079 = vadd.f32 %v1433, %v2063
        %v2080 = vadd.f32 %v1434, %v2064
        %v2081 = vadd.f32 %v1435, %v2065
        %v2082 = vadd.f32 %v1436, %v2066
        %v2083 = vadd.f32 %v1437, %v2067
        %v2084 = vadd.f32 %v1438, %v2068
        %v2085 = vadd.f32 %v1439, %v2069
        %v2086 = vld [vmem:[#allocation6 + $0x268] sm:$0x1]
        %v2087 = vld [vmem:[#allocation6 + $0x270] sm:$0x1]
        %v2096 = vrot.slane %v2079, 7
        %v2097 = vsel %vm420, %v2096, %v2078
        %v2098 = vrot.slane %v2080, 6
        %v2099 = vsel %vm423, %v2098, %v2097
        %v2100 = vrot.slane %v2081, 5
        %v2101 = vsel %vm426, %v2100, %v2099
        %v2102 = vrot.slane %v2082, 4
        %v2103 = vsel %vm429, %v2102, %v2101
        %v2104 = vrot.slane %v2083, 3
        %v2105 = vsel %vm432, %v2104, %v2103
        %v2106 = vrot.slane %v2084, 2
        %v2107 = vsel %vm435, %v2106, %v2105
        %v2108 = vrot.slane %v2085, 1
        %v2109 = vsel %vm438, %v2108, %v2107
        %v2111 = vsel %vm440, %v2109, 0.0
        %2112 = vadd.xlane.f32.xlu0 %v2111
        %v2113 = vpop.xlane.xlu0 %2112
        %v2114 = vmul.f32 %v2113, %v1076
        %v2116 = vrot.slane %v2114, 1
        %v2117 = vrot.slane %v2114, 2
        %v2118 = vrot.slane %v2114, 3
        %v2119 = vrot.slane %v2114, 4
        %v2120 = vrot.slane %v2114, 5
        %v2121 = vrot.slane %v2114, 6
        %v2122 = vrot.slane %v2114, 7
        %v2131 = vsub.f32 %v2078, %v2114
        %v2132 = vsub.f32 %v2079, %v2116
        %v2133 = vsub.f32 %v2080, %v2117
        %v2134 = vsub.f32 %v2081, %v2118
        %v2135 = vsub.f32 %v2082, %v2119
        %v2136 = vsub.f32 %v2083, %v2120
        %v2137 = vsub.f32 %v2084, %v2121
        %v2138 = vsub.f32 %v2085, %v2122
        %v2139 = vmul.f32 %v2131, %v2131
        %v2140 = vmul.f32 %v2132, %v2132
        %v2141 = vmul.f32 %v2133, %v2133
        %v2142 = vmul.f32 %v2134, %v2134
        %v2143 = vmul.f32 %v2135, %v2135
        %v2144 = vmul.f32 %v2136, %v2136
        %v2145 = vmul.f32 %v2137, %v2137
        %v2146 = vmul.f32 %v2138, %v2138
        %v2155 = vrot.slane %v2140, 7
        %v2156 = vsel %vm420, %v2155, %v2139
        %v2157 = vrot.slane %v2141, 6
        %v2158 = vsel %vm423, %v2157, %v2156
        %v2159 = vrot.slane %v2142, 5
        %v2160 = vsel %vm426, %v2159, %v2158
        %v2161 = vrot.slane %v2143, 4
        %v2162 = vsel %vm429, %v2161, %v2160
        %v2163 = vrot.slane %v2144, 3
        %v2164 = vsel %vm432, %v2163, %v2162
        %v2165 = vrot.slane %v2145, 2
        %v2166 = vsel %vm435, %v2165, %v2164
        %v2167 = vrot.slane %v2146, 1
        %v2168 = vsel %vm438, %v2167, %v2166
        %v2170 = vsel %vm440, %v2168, 0.0
        %2171 = vadd.xlane.f32.xlu0 %v2170
        %v2172 = vpop.xlane.xlu0 %2171
        %v2173 = vmul.f32 %v2172, %v1076
        %v2174 = vadd.f32 %v2173, 1e-05
        %v2175 = vrsqrt.pop %v2174
        %v2176 = vmul.f32 %v2175, %v2174
        %v2177 = vmul.f32 %v2176, %v2175
        %v2178 = vmul.f32 0.5, %v2177
        %v2179 = vsub.f32 1.5, %v2178
        %v2180 = vmul.f32 %v2175, %v2179
        %vm2181 = vweird.f32 %v2174
        %vm2182 = vweird.f32 %v2175
        %vm2183 = vmor %vm2181, %vm2182
        %v2184 = vsel %vm2183, %v2175, %v2180
        %v2186 = vrot.slane %v2184, 1
        %v2187 = vrot.slane %v2184, 2
        %v2188 = vrot.slane %v2184, 3
        %v2189 = vrot.slane %v2184, 4
        %v2190 = vrot.slane %v2184, 5
        %v2191 = vrot.slane %v2184, 6
        %v2192 = vrot.slane %v2184, 7
        %v2201 = vmul.f32 %v2131, %v2184
        %v2202 = vmul.f32 %v2132, %v2186
        %v2203 = vmul.f32 %v2133, %v2187
        %v2204 = vmul.f32 %v2134, %v2188
        %v2205 = vmul.f32 %v2135, %v2189
        %v2206 = vmul.f32 %v2136, %v2190
        %v2207 = vmul.f32 %v2137, %v2191
        %v2208 = vmul.f32 %v2138, %v2192
        %v2209 = vperm.slane %v2086, 0
        %v2210 = vmul.f32 %v2201, %v2209
        %v2211 = vmul.f32 %v2202, %v2209
        %v2212 = vmul.f32 %v2203, %v2209
        %v2213 = vmul.f32 %v2204, %v2209
        %v2214 = vmul.f32 %v2205, %v2209
        %v2215 = vmul.f32 %v2206, %v2209
        %v2216 = vmul.f32 %v2207, %v2209
        %v2217 = vmul.f32 %v2208, %v2209
        %v2218 = vperm.slane %v2087, 0
        %v2219 = vadd.f32 %v2210, %v2218
        %v2220 = vadd.f32 %v2211, %v2218
        %v2221 = vadd.f32 %v2212, %v2218
        %v2222 = vadd.f32 %v2213, %v2218
        %v2223 = vadd.f32 %v2214, %v2218
        %v2224 = vadd.f32 %v2215, %v2218
        %v2225 = vadd.f32 %v2216, %v2218
        %v2226 = vadd.f32 %v2217, %v2218
        %v2227 = vld [vmem:[#allocation6 + $0x278] sm:$0xff]
        %v2228 = vld [vmem:[#allocation6 + $0x280] sm:$0xff]
        %v2229 = vld [vmem:[#allocation6 + $0x288] sm:$0xff]
        %v2230 = vld [vmem:[#allocation6 + $0x290] sm:$0xff]
        %v2231 = vld [vmem:[#allocation6 + $0x298] sm:$0x1]
        %v2232 = vperm.slane %v2231, 0
        %v2241 = vrot.slane %v2220, 7
        %v2242 = vsel %vm420, %v2241, %v2219
        %v2243 = vrot.slane %v2221, 6
        %v2244 = vsel %vm423, %v2243, %v2242
        %v2245 = vrot.slane %v2222, 5
        %v2246 = vsel %vm426, %v2245, %v2244
        %v2247 = vrot.slane %v2223, 4
        %v2248 = vsel %vm429, %v2247, %v2246
        %v2249 = vrot.slane %v2224, 3
        %v2250 = vsel %vm432, %v2249, %v2248
        %v2251 = vrot.slane %v2225, 2
        %v2252 = vsel %vm435, %v2251, %v2250
        %v2253 = vrot.slane %v2226, 1
        %v2254 = vsel %vm438, %v2253, %v2252
        %v2255 = vsel %vm440, %v2254, 0
        %2257 = vmatpush.msra.mxu0 0.0
        %2258 = vmatpush.msra.mxu0 0.0
        %2259 = vmatpush.msra.mxu0 0.0
        %2260 = vmatpush.msra.mxu0 0.0
        %2261 = vmatpush.msra.mxu0 0.0
        %2262 = vmatpush.msra.mxu0 0.0
        %2263 = vmatpush.msra.mxu0 0.0
        %2264 = vmatpush.msra.mxu0 0.0
        %2265 = vmatpush.msra.mxu0 0.0
        %2266 = vmatpush.msra.mxu0 0.0
        %2267 = vmatpush.msra.mxu0 0.0
        %2268 = vmatpush.msra.mxu0 0.0
        %2269 = vmatpush.msra.mxu0 %v2230
        %2270 = vmatpush.msra.mxu0 %v2229
        %2271 = vmatpush.msra.mxu0 %v2228
        %2272 = vmatpush.msra.mxu0 %v2227
        %2273 = vmatmul.f32.gmra.mxu0 %v2255
        %v2274 = vpop.f32.mrf.mxu0
        %v2275 = vadd.f32 %v2232, %v2274
        %2276 = vdwg.mxu0
        %v2277 = vmax.f32 %v2275, 0.0
        %v2278 = vld [vmem:[#allocation6 + $0x2a0] sm:$0xff]
        %v2279 = vld [vmem:[#allocation6 + $0x2a8] sm:$0xff]
        %v2280 = vld [vmem:[#allocation6 + $0x2b0] sm:$0xff]
        %v2281 = vld [vmem:[#allocation6 + $0x2b8] sm:$0xff]
        %v2282 = vld [vmem:[#allocation6 + $0x2c0] sm:$0xff]
        %v2283 = vld [vmem:[#allocation6 + $0x2c8] sm:$0xff]
        %v2284 = vld [vmem:[#allocation6 + $0x2d0] sm:$0xff]
        %v2285 = vld [vmem:[#allocation6 + $0x2d8] sm:$0xff]
        %v2286 = vld [vmem:[#allocation6 + $0x2e0] sm:$0x1]
        %v2287 = vperm.slane %v2286, 0
        %v2289 = vsel %vm1251, %v2277, 0
        %2291 = vmatpush.msra.mxu0 0.0
        %2292 = vmatpush.msra.mxu0 0.0
        %2293 = vmatpush.msra.mxu0 0.0
        %2294 = vmatpush.msra.mxu0 0.0
        %2295 = vmatpush.msra.mxu0 0.0
        %2296 = vmatpush.msra.mxu0 0.0
        %2297 = vmatpush.msra.mxu0 0.0
        %2298 = vmatpush.msra.mxu0 0.0
        %2299 = vmatpush.msra.mxu0 %v2285
        %2300 = vmatpush.msra.mxu0 %v2284
        %2301 = vmatpush.msra.mxu0 %v2283
        %2302 = vmatpush.msra.mxu0 %v2282
        %2303 = vmatpush.msra.mxu0 %v2281
        %2304 = vmatpush.msra.mxu0 %v2280
        %2305 = vmatpush.msra.mxu0 %v2279
        %2306 = vmatpush.msra.mxu0 %v2278
        %2307 = vmatmul.f32.gmra.mxu0 %v2289
        %v2308 = vpop.f32.mrf.mxu0
        %v2309 = vadd.f32 %v2287, %v2308
        %2310 = vdwg.mxu0
        %v2312 = vrot.slane %v2309, 1
        %v2313 = vrot.slane %v2309, 2
        %v2314 = vrot.slane %v2309, 3
        %v2315 = vrot.slane %v2309, 4
        %v2316 = vrot.slane %v2309, 5
        %v2317 = vrot.slane %v2309, 6
        %v2318 = vrot.slane %v2309, 7
        %v2327 = vadd.f32 %v2219, %v2309
        %v2328 = vadd.f32 %v2220, %v2312
        %v2329 = vadd.f32 %v2221, %v2313
        %v2330 = vadd.f32 %v2222, %v2314
        %v2331 = vadd.f32 %v2223, %v2315
        %v2332 = vadd.f32 %v2224, %v2316
        %v2333 = vadd.f32 %v2225, %v2317
        %v2334 = vadd.f32 %v2226, %v2318
        %v2335 = vld [vmem:[#allocation6 + $0x2e8] sm:$0x1]
        %v2336 = vld [vmem:[#allocation6 + $0x2f0] sm:$0x1]
        %v2345 = vrot.slane %v2328, 7
        %v2346 = vsel %vm420, %v2345, %v2327
        %v2347 = vrot.slane %v2329, 6
        %v2348 = vsel %vm423, %v2347, %v2346
        %v2349 = vrot.slane %v2330, 5
        %v2350 = vsel %vm426, %v2349, %v2348
        %v2351 = vrot.slane %v2331, 4
        %v2352 = vsel %vm429, %v2351, %v2350
        %v2353 = vrot.slane %v2332, 3
        %v2354 = vsel %vm432, %v2353, %v2352
        %v2355 = vrot.slane %v2333, 2
        %v2356 = vsel %vm435, %v2355, %v2354
        %v2357 = vrot.slane %v2334, 1
        %v2358 = vsel %vm438, %v2357, %v2356
        %v2360 = vsel %vm440, %v2358, 0.0
        %2361 = vadd.xlane.f32.xlu0 %v2360
        %v2362 = vpop.xlane.xlu0 %2361
        %v2363 = vmul.f32 %v2362, %v1076
        %v2365 = vrot.slane %v2363, 1
        %v2366 = vrot.slane %v2363, 2
        %v2367 = vrot.slane %v2363, 3
        %v2368 = vrot.slane %v2363, 4
        %v2369 = vrot.slane %v2363, 5
        %v2370 = vrot.slane %v2363, 6
        %v2371 = vrot.slane %v2363, 7
        %v2380 = vsub.f32 %v2327, %v2363
        %v2381 = vsub.f32 %v2328, %v2365
        %v2382 = vsub.f32 %v2329, %v2366
        %v2383 = vsub.f32 %v2330, %v2367
        %v2384 = vsub.f32 %v2331, %v2368
        %v2385 = vsub.f32 %v2332, %v2369
        %v2386 = vsub.f32 %v2333, %v2370
        %v2387 = vsub.f32 %v2334, %v2371
        %v2388 = vmul.f32 %v2380, %v2380
        %v2389 = vmul.f32 %v2381, %v2381
        %v2390 = vmul.f32 %v2382, %v2382
        %v2391 = vmul.f32 %v2383, %v2383
        %v2392 = vmul.f32 %v2384, %v2384
        %v2393 = vmul.f32 %v2385, %v2385
        %v2394 = vmul.f32 %v2386, %v2386
        %v2395 = vmul.f32 %v2387, %v2387
        %v2404 = vrot.slane %v2389, 7
        %v2405 = vsel %vm420, %v2404, %v2388
        %v2406 = vrot.slane %v2390, 6
        %v2407 = vsel %vm423, %v2406, %v2405
        %v2408 = vrot.slane %v2391, 5
        %v2409 = vsel %vm426, %v2408, %v2407
        %v2410 = vrot.slane %v2392, 4
        %v2411 = vsel %vm429, %v2410, %v2409
        %v2412 = vrot.slane %v2393, 3
        %v2413 = vsel %vm432, %v2412, %v2411
        %v2414 = vrot.slane %v2394, 2
        %v2415 = vsel %vm435, %v2414, %v2413
        %v2416 = vrot.slane %v2395, 1
        %v2417 = vsel %vm438, %v2416, %v2415
        %v2419 = vsel %vm440, %v2417, 0.0
        %2420 = vadd.xlane.f32.xlu0 %v2419
        %v2421 = vpop.xlane.xlu0 %2420
        %v2422 = vmul.f32 %v2421, %v1076
        %v2423 = vadd.f32 %v2422, 1e-05
        %v2424 = vrsqrt.pop %v2423
        %v2425 = vmul.f32 %v2424, %v2423
        %v2426 = vmul.f32 %v2425, %v2424
        %v2427 = vmul.f32 0.5, %v2426
        %v2428 = vsub.f32 1.5, %v2427
        %v2429 = vmul.f32 %v2424, %v2428
        %vm2430 = vweird.f32 %v2423
        %vm2431 = vweird.f32 %v2424
        %vm2432 = vmor %vm2430, %vm2431
        %v2433 = vsel %vm2432, %v2424, %v2429
        %v2435 = vrot.slane %v2433, 1
        %v2436 = vrot.slane %v2433, 2
        %v2437 = vrot.slane %v2433, 3
        %v2438 = vrot.slane %v2433, 4
        %v2439 = vrot.slane %v2433, 5
        %v2440 = vrot.slane %v2433, 6
        %v2441 = vrot.slane %v2433, 7
        %v2450 = vmul.f32 %v2380, %v2433
        %v2451 = vmul.f32 %v2381, %v2435
        %v2452 = vmul.f32 %v2382, %v2436
        %v2453 = vmul.f32 %v2383, %v2437
        %v2454 = vmul.f32 %v2384, %v2438
        %v2455 = vmul.f32 %v2385, %v2439
        %v2456 = vmul.f32 %v2386, %v2440
        %v2457 = vmul.f32 %v2387, %v2441
        %v2458 = vperm.slane %v2335, 0
        %v2459 = vmul.f32 %v2450, %v2458
        %v2460 = vmul.f32 %v2451, %v2458
        %v2461 = vmul.f32 %v2452, %v2458
        %v2462 = vmul.f32 %v2453, %v2458
        %v2463 = vmul.f32 %v2454, %v2458
        %v2464 = vmul.f32 %v2455, %v2458
        %v2465 = vmul.f32 %v2456, %v2458
        %v2466 = vmul.f32 %v2457, %v2458
        %v2467 = vperm.slane %v2336, 0
        %v2468 = vadd.f32 %v2459, %v2467
        %v2469 = vadd.f32 %v2460, %v2467
        %v2470 = vadd.f32 %v2461, %v2467
        %v2471 = vadd.f32 %v2462, %v2467
        %v2472 = vadd.f32 %v2463, %v2467
        %v2473 = vadd.f32 %v2464, %v2467
        %v2474 = vadd.f32 %v2465, %v2467
        %v2475 = vadd.f32 %v2466, %v2467
        %v2476 = vld [vmem:[#allocation6 + $0x2f8] sm:$0xff]
        %v2477 = vld [vmem:[#allocation6 + $0x300] sm:$0xff]
        %v2478 = vld [vmem:[#allocation6 + $0x308] sm:$0xff]
        %v2479 = vld [vmem:[#allocation6 + $0x310] sm:$0xff]
        %v2480 = vld [vmem:[#allocation6 + $0x318] sm:$0xff]
        %v2481 = vld [vmem:[#allocation6 + $0x320] sm:$0xff]
        %v2482 = vld [vmem:[#allocation6 + $0x328] sm:$0xff]
        %v2483 = vld [vmem:[#allocation6 + $0x330] sm:$0xff]
        %v2484 = vld [vmem:[#allocation6 + $0x338] sm:$0xff]
        %v2485 = vld [vmem:[#allocation6 + $0x340] sm:$0xff]
        %v2486 = vld [vmem:[#allocation6 + $0x348] sm:$0xff]
        %v2487 = vld [vmem:[#allocation6 + $0x350] sm:$0xff]
        %v2488 = vld [vmem:[#allocation6 + $0x358] sm:$0xff]
        %v2489 = vld [vmem:[#allocation6 + $0x360] sm:$0xff]
        %v2490 = vld [vmem:[#allocation6 + $0x368] sm:$0xff]
        %v2491 = vld [vmem:[#allocation6 + $0x370] sm:$0xff]
        %v2492 = vld [vmem:[#allocation6 + $0x378] sm:$0xff]
        %v2493 = vld [vmem:[#allocation6 + $0x380] sm:$0xff]
        %v2494 = vld [vmem:[#allocation6 + $0x388] sm:$0xff]
        %v2495 = vld [vmem:[#allocation6 + $0x390] sm:$0xff]
        %v2496 = vld [vmem:[#allocation6 + $0x398] sm:$0xff]
        %v2497 = vld [vmem:[#allocation6 + $0x3a0] sm:$0xff]
        %v2498 = vld [vmem:[#allocation6 + $0x3a8] sm:$0xff]
        %v2499 = vld [vmem:[#allocation6 + $0x3b0] sm:$0xff]
        %v2508 = vrot.slane %v376, 7
        %v2509 = vsel %vm420, %v2508, %v375
        %v2510 = vrot.slane %v377, 6
        %v2511 = vsel %vm423, %v2510, %v2509
        %v2512 = vrot.slane %v378, 5
        %v2513 = vsel %vm426, %v2512, %v2511
        %v2514 = vrot.slane %v379, 4
        %v2515 = vsel %vm429, %v2514, %v2513
        %v2516 = vrot.slane %v380, 3
        %v2517 = vsel %vm432, %v2516, %v2515
        %v2518 = vrot.slane %v381, 2
        %v2519 = vsel %vm435, %v2518, %v2517
        %v2520 = vrot.slane %v382, 1
        %v2521 = vsel %vm438, %v2520, %v2519
        %v2523 = vsel %vm440, %v2476, 0
        %v2526 = vsel %vm440, %v2477, 0
        %v2529 = vsel %vm440, %v2478, 0
        %v2532 = vsel %vm440, %v2479, 0
        %v2535 = vsel %vm440, %v2480, 0
        %v2538 = vsel %vm440, %v2481, 0
        %v2541 = vsel %vm440, %v2482, 0
        %v2544 = vsel %vm440, %v2483, 0
        %v2547 = vsel %vm440, %v2484, 0
        %v2550 = vsel %vm440, %v2485, 0
        %v2553 = vsel %vm440, %v2486, 0
        %v2556 = vsel %vm440, %v2487, 0
        %v2558 = vsel %vm440, %v2521, 0
        %2560 = vmatpush.xpose.msra.mxu0 0.0
        %2561 = vmatpush.xpose.msra.mxu0 0.0
        %2562 = vmatpush.xpose.msra.mxu0 0.0
        %2563 = vmatpush.xpose.msra.mxu0 0.0
        %2564 = vmatpush.xpose.msra.mxu0 0.0
        %2565 = vmatpush.xpose.msra.mxu0 0.0
        %2566 = vmatpush.xpose.msra.mxu0 0.0
        %2567 = vmatpush.xpose.msra.mxu0 0.0
        %2568 = vmatpush.xpose.msra.mxu0 0.0
        %2569 = vmatpush.xpose.msra.mxu0 0.0
        %2570 = vmatpush.xpose.msra.mxu0 0.0
        %2571 = vmatpush.xpose.msra.mxu0 0.0
        %2572 = vmatpush.xpose.msra.mxu0 0.0
        %2573 = vmatpush.xpose.msra.mxu0 0.0
        %2574 = vmatpush.xpose.msra.mxu0 0.0
        %2575 = vmatpush.xpose.msra.mxu0 %v2558
        %2576 = vmatmul.f32.gmra.mxu0 %v2523
        %v2577 = vpop.f32.mrf.mxu0
        %v2578 = vadd.f32 %v2488, %v2577
        %2579 = vmatmul.f32.gmra.mxu0 %v2526
        %v2580 = vpop.f32.mrf.mxu0
        %v2581 = vadd.f32 %v2489, %v2580
        %2582 = vmatmul.f32.gmra.mxu0 %v2529
        %v2583 = vpop.f32.mrf.mxu0
        %v2584 = vadd.f32 %v2490, %v2583
        %2585 = vmatmul.f32.gmra.mxu0 %v2532
        %v2586 = vpop.f32.mrf.mxu0
        %v2587 = vadd.f32 %v2491, %v2586
        %2588 = vmatmul.f32.gmra.mxu0 %v2535
        %v2589 = vpop.f32.mrf.mxu0
        %v2590 = vadd.f32 %v2492, %v2589
        %2591 = vmatmul.f32.gmra.mxu0 %v2538
        %v2592 = vpop.f32.mrf.mxu0
        %v2593 = vadd.f32 %v2493, %v2592
        %2594 = vmatmul.f32.gmra.mxu0 %v2541
        %v2595 = vpop.f32.mrf.mxu0
        %v2596 = vadd.f32 %v2494, %v2595
        %2597 = vmatmul.f32.gmra.mxu0 %v2544
        %v2598 = vpop.f32.mrf.mxu0
        %v2599 = vadd.f32 %v2495, %v2598
        %2600 = vmatmul.f32.gmra.mxu0 %v2547
        %v2601 = vpop.f32.mrf.mxu0
        %v2602 = vadd.f32 %v2496, %v2601
        %2603 = vmatmul.f32.gmra.mxu0 %v2550
        %v2604 = vpop.f32.mrf.mxu0
        %v2605 = vadd.f32 %v2497, %v2604
        %2606 = vmatmul.f32.gmra.mxu0 %v2553
        %v2607 = vpop.f32.mrf.mxu0
        %v2608 = vadd.f32 %v2498, %v2607
        %2609 = vmatmul.f32.gmra.mxu0 %v2556
        %v2610 = vpop.f32.mrf.mxu0
        %v2611 = vadd.f32 %v2499, %v2610
        %2612 = vdwg.mxu0
        %2613 = vxpose.xlu0.b32.start [1/16] %v2578, 128
        %2614 = vxpose.xlu0.b32.cont [2/16] 0.0, 128
        %2615 = vxpose.xlu0.b32.cont [3/16] 0.0, 128
        %2616 = vxpose.xlu0.b32.cont [4/16] 0.0, 128
        %2617 = vxpose.xlu0.b32.cont [5/16] 0.0, 128
        %2618 = vxpose.xlu0.b32.cont [6/16] 0.0, 128
        %2619 = vxpose.xlu0.b32.cont [7/16] 0.0, 128
        %2620 = vxpose.xlu0.b32.cont [8/16] 0.0, 128
        %2621 = vxpose.xlu0.b32.cont [9/16] 0.0, 128
        %2622 = vxpose.xlu0.b32.cont [10/16] 0.0, 128
        %2623 = vxpose.xlu0.b32.cont [11/16] 0.0, 128
        %2624 = vxpose.xlu0.b32.cont [12/16] 0.0, 128
        %2625 = vxpose.xlu0.b32.cont [13/16] 0.0, 128
        %2626 = vxpose.xlu0.b32.cont [14/16] 0.0, 128
        %2627 = vxpose.xlu0.b32.cont [15/16] 0.0, 128
        %2628 = vxpose.xlu0.b32.end [16/16] 0.0, 128
        %v2629 = vpop.trf.xlu0
        %v2630 = vpop.trf.xlu0
        %v2631 = vpop.trf.xlu0
        %v2632 = vpop.trf.xlu0
        %v2633 = vpop.trf.xlu0
        %v2634 = vpop.trf.xlu0
        %v2635 = vpop.trf.xlu0
        %v2636 = vpop.trf.xlu0
        %v2637 = vpop.trf.xlu0
        %v2638 = vpop.trf.xlu0
        %v2639 = vpop.trf.xlu0
        %v2640 = vpop.trf.xlu0
        %v2641 = vpop.trf.xlu0
        %v2642 = vpop.trf.xlu0
        %v2643 = vpop.trf.xlu0
        %v2644 = vpop.trf.xlu0
        %v2646 = vsel %vm564, %v2629, 0
        %2648 = vmatpush.msra.mxu0 0.0
        %2649 = vmatpush.msra.mxu0 0.0
        %2650 = vmatpush.msra.mxu0 0.0
        %2651 = vmatpush.msra.mxu0 0.0
        %2652 = vmatpush.msra.mxu0 0.0
        %2653 = vmatpush.msra.mxu0 0.0
        %2654 = vmatpush.msra.mxu0 0.0
        %2655 = vmatpush.msra.mxu0 0.0
        %2656 = vmatpush.msra.mxu0 0.0
        %2657 = vmatpush.msra.mxu0 0.0
        %2658 = vmatpush.msra.mxu0 0.0
        %2659 = vmatpush.msra.mxu0 0.0
        %2660 = vmatpush.msra.mxu0 0.0
        %2661 = vmatpush.msra.mxu0 0.0
        %2662 = vmatpush.msra.mxu0 0.0
        %2663 = vmatpush.msra.mxu0 %v2590
        %2664 = vmatmul.f32.gmra.mxu0 %v2646
        %v2665 = vpop.f32.mrf.mxu0
        %v2666 = vadd.f32 0.0, %v2665
        %2667 = vdwg.mxu0
        %v2668 = vmul.f32 %v2666, 0.35355338
        %v2669 = vadd.f32 %v2668, %v386
        %v2670 = vsel %vm564, %v2669, -inf
        %2671 = vmax.xlane.f32.xlu0 %v2670
        %v2672 = vpop.xlane.xlu0 %2671
        %v2673 = vsub.f32 %v2669, %v2672
        %v2674 = vmul.f32 %v2673, 1.442695
        %v2675 = vpow.pop %v2674
        %v2676 = vsel %vm564, %v2675, 0.0
        %2677 = vadd.xlane.f32.xlu0 %v2676
        %v2678 = vpop.xlane.xlu0 %2677
        %v2679 = vrcp.pop %v2678
        %v2680 = vmul.f32 %v2678, %v2679
        %v2681 = vsub.f32 1.0, %v2680
        %v2682 = vmul.f32 %v2679, %v2681
        %v2683 = vadd.f32 %v2679, %v2682
        %vm2684 = vweird.f32 %v2678
        %vm2685 = vweird.f32 %v2679
        %vm2686 = vmor %vm2684, %vm2685
        %v2687 = vsel %vm2686, %v2679, %v2683
        %v2688 = vand.u32 2147483647, %v2678
        %vm2689 = vcmp.eq.f32.partialorder %v2688, 8.507059e+37
        %v2690 = vand.u32 %v2678, 2147483648
        %v2691 = vor.u32 1.1754944e-38, %v2690
        %v2692 = vsel %vm2689, %v2691, %v2687
        %v2693 = vmul.f32 %v2675, %v2692
        %v2695 = vsel %vm564, %v2602, 0
        %v2698 = vsel %vm564, %v2693, 0
        %2700 = vmatpush.xpose.msra.mxu0 0.0
        %2701 = vmatpush.xpose.msra.mxu0 0.0
        %2702 = vmatpush.xpose.msra.mxu0 0.0
        %2703 = vmatpush.xpose.msra.mxu0 0.0
        %2704 = vmatpush.xpose.msra.mxu0 0.0
        %2705 = vmatpush.xpose.msra.mxu0 0.0
        %2706 = vmatpush.xpose.msra.mxu0 0.0
        %2707 = vmatpush.xpose.msra.mxu0 0.0
        %2708 = vmatpush.xpose.msra.mxu0 0.0
        %2709 = vmatpush.xpose.msra.mxu0 0.0
        %2710 = vmatpush.xpose.msra.mxu0 0.0
        %2711 = vmatpush.xpose.msra.mxu0 0.0
        %2712 = vmatpush.xpose.msra.mxu0 0.0
        %2713 = vmatpush.xpose.msra.mxu0 0.0
        %2714 = vmatpush.xpose.msra.mxu0 0.0
        %2715 = vmatpush.xpose.msra.mxu0 %v2698
        %2716 = vmatmul.f32.gmra.mxu0 %v2695
        %v2717 = vpop.f32.mrf.mxu0
        %v2718 = vadd.f32 0.0, %v2717
        %2719 = vdwg.mxu0
        %2720 = vxpose.xlu0.b32.start [1/16] %v2581, 128
        %2721 = vxpose.xlu0.b32.cont [2/16] 0.0, 128
        %2722 = vxpose.xlu0.b32.cont [3/16] 0.0, 128
        %2723 = vxpose.xlu0.b32.cont [4/16] 0.0, 128
        %2724 = vxpose.xlu0.b32.cont [5/16] 0.0, 128
        %2725 = vxpose.xlu0.b32.cont [6/16] 0.0, 128
        %2726 = vxpose.xlu0.b32.cont [7/16] 0.0, 128
        %2727 = vxpose.xlu0.b32.cont [8/16] 0.0, 128
        %2728 = vxpose.xlu0.b32.cont [9/16] 0.0, 128
        %2729 = vxpose.xlu0.b32.cont [10/16] 0.0, 128
        %2730 = vxpose.xlu0.b32.cont [11/16] 0.0, 128
        %2731 = vxpose.xlu0.b32.cont [12/16] 0.0, 128
        %2732 = vxpose.xlu0.b32.cont [13/16] 0.0, 128
        %2733 = vxpose.xlu0.b32.cont [14/16] 0.0, 128
        %2734 = vxpose.xlu0.b32.cont [15/16] 0.0, 128
        %2735 = vxpose.xlu0.b32.end [16/16] 0.0, 128
        %v2736 = vpop.trf.xlu0
        %v2737 = vpop.trf.xlu0
        %v2738 = vpop.trf.xlu0
        %v2739 = vpop.trf.xlu0
        %v2740 = vpop.trf.xlu0
        %v2741 = vpop.trf.xlu0
        %v2742 = vpop.trf.xlu0
        %v2743 = vpop.trf.xlu0
        %v2744 = vpop.trf.xlu0
        %v2745 = vpop.trf.xlu0
        %v2746 = vpop.trf.xlu0
        %v2747 = vpop.trf.xlu0
        %v2748 = vpop.trf.xlu0
        %v2749 = vpop.trf.xlu0
        %v2750 = vpop.trf.xlu0
        %v2751 = vpop.trf.xlu0
        %v2753 = vsel %vm564, %v2736, 0
        %2755 = vmatpush.msra.mxu0 0.0
        %2756 = vmatpush.msra.mxu0 0.0
        %2757 = vmatpush.msra.mxu0 0.0
        %2758 = vmatpush.msra.mxu0 0.0
        %2759 = vmatpush.msra.mxu0 0.0
        %2760 = vmatpush.msra.mxu0 0.0
        %2761 = vmatpush.msra.mxu0 0.0
        %2762 = vmatpush.msra.mxu0 0.0
        %2763 = vmatpush.msra.mxu0 0.0
        %2764 = vmatpush.msra.mxu0 0.0
        %2765 = vmatpush.msra.mxu0 0.0
        %2766 = vmatpush.msra.mxu0 0.0
        %2767 = vmatpush.msra.mxu0 0.0
        %2768 = vmatpush.msra.mxu0 0.0
        %2769 = vmatpush.msra.mxu0 0.0
        %2770 = vmatpush.msra.mxu0 %v2593
        %2771 = vmatmul.f32.gmra.mxu0 %v2753
        %v2772 = vpop.f32.mrf.mxu0
        %v2773 = vadd.f32 0.0, %v2772
        %2774 = vdwg.mxu0
        %v2775 = vmul.f32 %v2773, 0.35355338
        %v2776 = vadd.f32 %v2775, %v386
        %v2777 = vsel %vm564, %v2776, -inf
        %2778 = vmax.xlane.f32.xlu0 %v2777
        %v2779 = vpop.xlane.xlu0 %2778
        %v2780 = vsub.f32 %v2776, %v2779
        %v2781 = vmul.f32 %v2780, 1.442695
        %v2782 = vpow.pop %v2781
        %v2783 = vsel %vm564, %v2782, 0.0
        %2784 = vadd.xlane.f32.xlu0 %v2783
        %v2785 = vpop.xlane.xlu0 %2784
        %v2786 = vrcp.pop %v2785
        %v2787 = vmul.f32 %v2785, %v2786
        %v2788 = vsub.f32 1.0, %v2787
        %v2789 = vmul.f32 %v2786, %v2788
        %v2790 = vadd.f32 %v2786, %v2789
        %vm2791 = vweird.f32 %v2785
        %vm2792 = vweird.f32 %v2786
        %vm2793 = vmor %vm2791, %vm2792
        %v2794 = vsel %vm2793, %v2786, %v2790
        %v2795 = vand.u32 2147483647, %v2785
        %vm2796 = vcmp.eq.f32.partialorder %v2795, 8.507059e+37
        %v2797 = vand.u32 %v2785, 2147483648
        %v2798 = vor.u32 1.1754944e-38, %v2797
        %v2799 = vsel %vm2796, %v2798, %v2794
        %v2800 = vmul.f32 %v2782, %v2799
        %v2802 = vsel %vm564, %v2605, 0
        %v2805 = vsel %vm564, %v2800, 0
        %2807 = vmatpush.xpose.msra.mxu0 0.0
        %2808 = vmatpush.xpose.msra.mxu0 0.0
        %2809 = vmatpush.xpose.msra.mxu0 0.0
        %2810 = vmatpush.xpose.msra.mxu0 0.0
        %2811 = vmatpush.xpose.msra.mxu0 0.0
        %2812 = vmatpush.xpose.msra.mxu0 0.0
        %2813 = vmatpush.xpose.msra.mxu0 0.0
        %2814 = vmatpush.xpose.msra.mxu0 0.0
        %2815 = vmatpush.xpose.msra.mxu0 0.0
        %2816 = vmatpush.xpose.msra.mxu0 0.0
        %2817 = vmatpush.xpose.msra.mxu0 0.0
        %2818 = vmatpush.xpose.msra.mxu0 0.0
        %2819 = vmatpush.xpose.msra.mxu0 0.0
        %2820 = vmatpush.xpose.msra.mxu0 0.0
        %2821 = vmatpush.xpose.msra.mxu0 0.0
        %2822 = vmatpush.xpose.msra.mxu0 %v2805
        %2823 = vmatmul.f32.gmra.mxu0 %v2802
        %v2824 = vpop.f32.mrf.mxu0
        %v2825 = vadd.f32 0.0, %v2824
        %2826 = vdwg.mxu0
        %2827 = vxpose.xlu0.b32.start [1/16] %v2584, 128
        %2828 = vxpose.xlu0.b32.cont [2/16] 0.0, 128
        %2829 = vxpose.xlu0.b32.cont [3/16] 0.0, 128
        %2830 = vxpose.xlu0.b32.cont [4/16] 0.0, 128
        %2831 = vxpose.xlu0.b32.cont [5/16] 0.0, 128
        %2832 = vxpose.xlu0.b32.cont [6/16] 0.0, 128
        %2833 = vxpose.xlu0.b32.cont [7/16] 0.0, 128
        %2834 = vxpose.xlu0.b32.cont [8/16] 0.0, 128
        %2835 = vxpose.xlu0.b32.cont [9/16] 0.0, 128
        %2836 = vxpose.xlu0.b32.cont [10/16] 0.0, 128
        %2837 = vxpose.xlu0.b32.cont [11/16] 0.0, 128
        %2838 = vxpose.xlu0.b32.cont [12/16] 0.0, 128
        %2839 = vxpose.xlu0.b32.cont [13/16] 0.0, 128
        %2840 = vxpose.xlu0.b32.cont [14/16] 0.0, 128
        %2841 = vxpose.xlu0.b32.cont [15/16] 0.0, 128
        %2842 = vxpose.xlu0.b32.end [16/16] 0.0, 128
        %v2843 = vpop.trf.xlu0
        %v2844 = vpop.trf.xlu0
        %v2845 = vpop.trf.xlu0
        %v2846 = vpop.trf.xlu0
        %v2847 = vpop.trf.xlu0
        %v2848 = vpop.trf.xlu0
        %v2849 = vpop.trf.xlu0
        %v2850 = vpop.trf.xlu0
        %v2851 = vpop.trf.xlu0
        %v2852 = vpop.trf.xlu0
        %v2853 = vpop.trf.xlu0
        %v2854 = vpop.trf.xlu0
        %v2855 = vpop.trf.xlu0
        %v2856 = vpop.trf.xlu0
        %v2857 = vpop.trf.xlu0
        %v2858 = vpop.trf.xlu0
        %v2860 = vsel %vm564, %v2843, 0
        %2862 = vmatpush.msra.mxu0 0.0
        %2863 = vmatpush.msra.mxu0 0.0
        %2864 = vmatpush.msra.mxu0 0.0
        %2865 = vmatpush.msra.mxu0 0.0
        %2866 = vmatpush.msra.mxu0 0.0
        %2867 = vmatpush.msra.mxu0 0.0
        %2868 = vmatpush.msra.mxu0 0.0
        %2869 = vmatpush.msra.mxu0 0.0
        %2870 = vmatpush.msra.mxu0 0.0
        %2871 = vmatpush.msra.mxu0 0.0
        %2872 = vmatpush.msra.mxu0 0.0
        %2873 = vmatpush.msra.mxu0 0.0
        %2874 = vmatpush.msra.mxu0 0.0
        %2875 = vmatpush.msra.mxu0 0.0
        %2876 = vmatpush.msra.mxu0 0.0
        %2877 = vmatpush.msra.mxu0 %v2596
        %2878 = vmatmul.f32.gmra.mxu0 %v2860
        %v2879 = vpop.f32.mrf.mxu0
        %v2880 = vadd.f32 0.0, %v2879
        %2881 = vdwg.mxu0
        %v2882 = vmul.f32 %v2880, 0.35355338
        %v2883 = vadd.f32 %v2882, %v386
        %v2884 = vsel %vm564, %v2883, -inf
        %2885 = vmax.xlane.f32.xlu0 %v2884
        %v2886 = vpop.xlane.xlu0 %2885
        %v2887 = vsub.f32 %v2883, %v2886
        %v2888 = vmul.f32 %v2887, 1.442695
        %v2889 = vpow.pop %v2888
        %v2890 = vsel %vm564, %v2889, 0.0
        %2891 = vadd.xlane.f32.xlu0 %v2890
        %v2892 = vpop.xlane.xlu0 %2891
        %v2893 = vrcp.pop %v2892
        %v2894 = vmul.f32 %v2892, %v2893
        %v2895 = vsub.f32 1.0, %v2894
        %v2896 = vmul.f32 %v2893, %v2895
        %v2897 = vadd.f32 %v2893, %v2896
        %vm2898 = vweird.f32 %v2892
        %vm2899 = vweird.f32 %v2893
        %vm2900 = vmor %vm2898, %vm2899
        %v2901 = vsel %vm2900, %v2893, %v2897
        %v2902 = vand.u32 2147483647, %v2892
        %vm2903 = vcmp.eq.f32.partialorder %v2902, 8.507059e+37
        %v2904 = vand.u32 %v2892, 2147483648
        %v2905 = vor.u32 1.1754944e-38, %v2904
        %v2906 = vsel %vm2903, %v2905, %v2901
        %v2907 = vmul.f32 %v2889, %v2906
        %v2909 = vsel %vm564, %v2608, 0
        %v2912 = vsel %vm564, %v2907, 0
        %2914 = vmatpush.xpose.msra.mxu0 0.0
        %2915 = vmatpush.xpose.msra.mxu0 0.0
        %2916 = vmatpush.xpose.msra.mxu0 0.0
        %2917 = vmatpush.xpose.msra.mxu0 0.0
        %2918 = vmatpush.xpose.msra.mxu0 0.0
        %2919 = vmatpush.xpose.msra.mxu0 0.0
        %2920 = vmatpush.xpose.msra.mxu0 0.0
        %2921 = vmatpush.xpose.msra.mxu0 0.0
        %2922 = vmatpush.xpose.msra.mxu0 0.0
        %2923 = vmatpush.xpose.msra.mxu0 0.0
        %2924 = vmatpush.xpose.msra.mxu0 0.0
        %2925 = vmatpush.xpose.msra.mxu0 0.0
        %2926 = vmatpush.xpose.msra.mxu0 0.0
        %2927 = vmatpush.xpose.msra.mxu0 0.0
        %2928 = vmatpush.xpose.msra.mxu0 0.0
        %2929 = vmatpush.xpose.msra.mxu0 %v2912
        %2930 = vmatmul.f32.gmra.mxu0 %v2909
        %v2931 = vpop.f32.mrf.mxu0
        %v2932 = vadd.f32 0.0, %v2931
        %2933 = vdwg.mxu0
        %2934 = vxpose.xlu0.b32.start [1/16] %v2587, 128
        %2935 = vxpose.xlu0.b32.cont [2/16] 0.0, 128
        %2936 = vxpose.xlu0.b32.cont [3/16] 0.0, 128
        %2937 = vxpose.xlu0.b32.cont [4/16] 0.0, 128
        %2938 = vxpose.xlu0.b32.cont [5/16] 0.0, 128
        %2939 = vxpose.xlu0.b32.cont [6/16] 0.0, 128
        %2940 = vxpose.xlu0.b32.cont [7/16] 0.0, 128
        %2941 = vxpose.xlu0.b32.cont [8/16] 0.0, 128
        %2942 = vxpose.xlu0.b32.cont [9/16] 0.0, 128
        %2943 = vxpose.xlu0.b32.cont [10/16] 0.0, 128
        %2944 = vxpose.xlu0.b32.cont [11/16] 0.0, 128
        %2945 = vxpose.xlu0.b32.cont [12/16] 0.0, 128
        %2946 = vxpose.xlu0.b32.cont [13/16] 0.0, 128
        %2947 = vxpose.xlu0.b32.cont [14/16] 0.0, 128
        %2948 = vxpose.xlu0.b32.cont [15/16] 0.0, 128
        %2949 = vxpose.xlu0.b32.end [16/16] 0.0, 128
        %v2950 = vpop.trf.xlu0
        %v2951 = vpop.trf.xlu0
        %v2952 = vpop.trf.xlu0
        %v2953 = vpop.trf.xlu0
        %v2954 = vpop.trf.xlu0
        %v2955 = vpop.trf.xlu0
        %v2956 = vpop.trf.xlu0
        %v2957 = vpop.trf.xlu0
        %v2958 = vpop.trf.xlu0
        %v2959 = vpop.trf.xlu0
        %v2960 = vpop.trf.xlu0
        %v2961 = vpop.trf.xlu0
        %v2962 = vpop.trf.xlu0
        %v2963 = vpop.trf.xlu0
        %v2964 = vpop.trf.xlu0
        %v2965 = vpop.trf.xlu0
        %v2967 = vsel %vm564, %v2950, 0
        %2969 = vmatpush.msra.mxu0 0.0
        %2970 = vmatpush.msra.mxu0 0.0
        %2971 = vmatpush.msra.mxu0 0.0
        %2972 = vmatpush.msra.mxu0 0.0
        %2973 = vmatpush.msra.mxu0 0.0
        %2974 = vmatpush.msra.mxu0 0.0
        %2975 = vmatpush.msra.mxu0 0.0
        %2976 = vmatpush.msra.mxu0 0.0
        %2977 = vmatpush.msra.mxu0 0.0
        %2978 = vmatpush.msra.mxu0 0.0
        %2979 = vmatpush.msra.mxu0 0.0
        %2980 = vmatpush.msra.mxu0 0.0
        %2981 = vmatpush.msra.mxu0 0.0
        %2982 = vmatpush.msra.mxu0 0.0
        %2983 = vmatpush.msra.mxu0 0.0
        %2984 = vmatpush.msra.mxu0 %v2599
        %2985 = vmatmul.f32.gmra.mxu0 %v2967
        %v2986 = vpop.f32.mrf.mxu0
        %v2987 = vadd.f32 0.0, %v2986
        %2988 = vdwg.mxu0
        %v2989 = vmul.f32 %v2987, 0.35355338
        %v2990 = vadd.f32 %v2989, %v386
        %v2991 = vsel %vm564, %v2990, -inf
        %2992 = vmax.xlane.f32.xlu0 %v2991
        %v2993 = vpop.xlane.xlu0 %2992
        %v2994 = vsub.f32 %v2990, %v2993
        %v2995 = vmul.f32 %v2994, 1.442695
        %v2996 = vpow.pop %v2995
        %v2997 = vsel %vm564, %v2996, 0.0
        %2998 = vadd.xlane.f32.xlu0 %v2997
        %v2999 = vpop.xlane.xlu0 %2998
        %v3000 = vrcp.pop %v2999
        %v3001 = vmul.f32 %v2999, %v3000
        %v3002 = vsub.f32 1.0, %v3001
        %v3003 = vmul.f32 %v3000, %v3002
        %v3004 = vadd.f32 %v3000, %v3003
        %vm3005 = vweird.f32 %v2999
        %vm3006 = vweird.f32 %v3000
        %vm3007 = vmor %vm3005, %vm3006
        %v3008 = vsel %vm3007, %v3000, %v3004
        %v3009 = vand.u32 2147483647, %v2999
        %vm3010 = vcmp.eq.f32.partialorder %v3009, 8.507059e+37
        %v3011 = vand.u32 %v2999, 2147483648
        %v3012 = vor.u32 1.1754944e-38, %v3011
        %v3013 = vsel %vm3010, %v3012, %v3008
        %v3014 = vmul.f32 %v2996, %v3013
        %v3016 = vsel %vm564, %v2611, 0
        %v3019 = vsel %vm564, %v3014, 0
        %3021 = vmatpush.xpose.msra.mxu0 0.0
        %3022 = vmatpush.xpose.msra.mxu0 0.0
        %3023 = vmatpush.xpose.msra.mxu0 0.0
        %3024 = vmatpush.xpose.msra.mxu0 0.0
        %3025 = vmatpush.xpose.msra.mxu0 0.0
        %3026 = vmatpush.xpose.msra.mxu0 0.0
        %3027 = vmatpush.xpose.msra.mxu0 0.0
        %3028 = vmatpush.xpose.msra.mxu0 0.0
        %3029 = vmatpush.xpose.msra.mxu0 0.0
        %3030 = vmatpush.xpose.msra.mxu0 0.0
        %3031 = vmatpush.xpose.msra.mxu0 0.0
        %3032 = vmatpush.xpose.msra.mxu0 0.0
        %3033 = vmatpush.xpose.msra.mxu0 0.0
        %3034 = vmatpush.xpose.msra.mxu0 0.0
        %3035 = vmatpush.xpose.msra.mxu0 0.0
        %3036 = vmatpush.xpose.msra.mxu0 %v3019
        %3037 = vmatmul.f32.gmra.mxu0 %v3016
        %v3038 = vpop.f32.mrf.mxu0
        %v3039 = vadd.f32 0.0, %v3038
        %3040 = vdwg.mxu0
        %v3041 = vld [vmem:[#allocation6 + $0x3b8] sm:$0xff]
        %v3042 = vld [vmem:[#allocation6 + $0x3c0] sm:$0xff]
        %v3043 = vld [vmem:[#allocation6 + $0x3c8] sm:$0xff]
        %v3044 = vld [vmem:[#allocation6 + $0x3d0] sm:$0xff]
        %v3045 = vld [vmem:[#allocation6 + $0x3d8] sm:$0x1]
        %v3046 = vperm.slane %v3045, 0
        %3047 = vxpose.xlu0.b32.start [1/16] %v2718, 128
        %3048 = vxpose.xlu0.b32.cont [2/16] %v2825, 128
        %3049 = vxpose.xlu0.b32.cont [3/16] %v2932, 128
        %3050 = vxpose.xlu0.b32.cont [4/16] %v3039, 128
        %3051 = vxpose.xlu0.b32.cont [5/16] 0.0, 128
        %3052 = vxpose.xlu0.b32.cont [6/16] 0.0, 128
        %3053 = vxpose.xlu0.b32.cont [7/16] 0.0, 128
        %3054 = vxpose.xlu0.b32.cont [8/16] 0.0, 128
        %3055 = vxpose.xlu0.b32.cont [9/16] 0.0, 128
        %3056 = vxpose.xlu0.b32.cont [10/16] 0.0, 128
        %3057 = vxpose.xlu0.b32.cont [11/16] 0.0, 128
        %3058 = vxpose.xlu0.b32.cont [12/16] 0.0, 128
        %3059 = vxpose.xlu0.b32.cont [13/16] 0.0, 128
        %3060 = vxpose.xlu0.b32.cont [14/16] 0.0, 128
        %3061 = vxpose.xlu0.b32.cont [15/16] 0.0, 128
        %3062 = vxpose.xlu0.b32.end [16/16] 0.0, 128
        %v3063 = vpop.trf.xlu0
        %v3064 = vpop.trf.xlu0
        %v3065 = vpop.trf.xlu0
        %v3066 = vpop.trf.xlu0
        %v3067 = vpop.trf.xlu0
        %v3068 = vpop.trf.xlu0
        %v3069 = vpop.trf.xlu0
        %v3070 = vpop.trf.xlu0
        %v3071 = vpop.trf.xlu0
        %v3072 = vpop.trf.xlu0
        %v3073 = vpop.trf.xlu0
        %v3074 = vpop.trf.xlu0
        %v3075 = vpop.trf.xlu0
        %v3076 = vpop.trf.xlu0
        %v3077 = vpop.trf.xlu0
        %v3078 = vpop.trf.xlu0
        %v3080 = vsel %vm440, %v3063, 0
        %3082 = vmatpush.msra.mxu0 0.0
        %3083 = vmatpush.msra.mxu0 0.0
        %3084 = vmatpush.msra.mxu0 0.0
        %3085 = vmatpush.msra.mxu0 0.0
        %3086 = vmatpush.msra.mxu0 0.0
        %3087 = vmatpush.msra.mxu0 0.0
        %3088 = vmatpush.msra.mxu0 0.0
        %3089 = vmatpush.msra.mxu0 0.0
        %3090 = vmatpush.msra.mxu0 0.0
        %3091 = vmatpush.msra.mxu0 0.0
        %3092 = vmatpush.msra.mxu0 0.0
        %3093 = vmatpush.msra.mxu0 0.0
        %3094 = vmatpush.msra.mxu0 %v3044
        %3095 = vmatpush.msra.mxu0 %v3043
        %3096 = vmatpush.msra.mxu0 %v3042
        %3097 = vmatpush.msra.mxu0 %v3041
        %3098 = vmatmul.f32.gmra.mxu0 %v3080
        %v3099 = vpop.f32.mrf.mxu0
        %v3100 = vadd.f32 %v3046, %v3099
        %3101 = vdwg.mxu0
        %v3103 = vrot.slane %v3100, 1
        %v3104 = vrot.slane %v3100, 2
        %v3105 = vrot.slane %v3100, 3
        %v3106 = vrot.slane %v3100, 4
        %v3107 = vrot.slane %v3100, 5
        %v3108 = vrot.slane %v3100, 6
        %v3109 = vrot.slane %v3100, 7
        %v3118 = vadd.f32 %v375, %v3100
        %v3119 = vadd.f32 %v376, %v3103
        %v3120 = vadd.f32 %v377, %v3104
        %v3121 = vadd.f32 %v378, %v3105
        %v3122 = vadd.f32 %v379, %v3106
        %v3123 = vadd.f32 %v380, %v3107
        %v3124 = vadd.f32 %v381, %v3108
        %v3125 = vadd.f32 %v382, %v3109
        %v3126 = vld [vmem:[#allocation6 + $0x3e0] sm:$0x1]
        %v3127 = vld [vmem:[#allocation6 + $0x3e8] sm:$0x1]
        %v3136 = vrot.slane %v3119, 7
        %v3137 = vsel %vm420, %v3136, %v3118
        %v3138 = vrot.slane %v3120, 6
        %v3139 = vsel %vm423, %v3138, %v3137
        %v3140 = vrot.slane %v3121, 5
        %v3141 = vsel %vm426, %v3140, %v3139
        %v3142 = vrot.slane %v3122, 4
        %v3143 = vsel %vm429, %v3142, %v3141
        %v3144 = vrot.slane %v3123, 3
        %v3145 = vsel %vm432, %v3144, %v3143
        %v3146 = vrot.slane %v3124, 2
        %v3147 = vsel %vm435, %v3146, %v3145
        %v3148 = vrot.slane %v3125, 1
        %v3149 = vsel %vm438, %v3148, %v3147
        %v3151 = vsel %vm440, %v3149, 0.0
        %3152 = vadd.xlane.f32.xlu0 %v3151
        %v3153 = vpop.xlane.xlu0 %3152
        %v3154 = vmul.f32 %v3153, %v1076
        %v3156 = vrot.slane %v3154, 1
        %v3157 = vrot.slane %v3154, 2
        %v3158 = vrot.slane %v3154, 3
        %v3159 = vrot.slane %v3154, 4
        %v3160 = vrot.slane %v3154, 5
        %v3161 = vrot.slane %v3154, 6
        %v3162 = vrot.slane %v3154, 7
        %v3171 = vsub.f32 %v3118, %v3154
        %v3172 = vsub.f32 %v3119, %v3156
        %v3173 = vsub.f32 %v3120, %v3157
        %v3174 = vsub.f32 %v3121, %v3158
        %v3175 = vsub.f32 %v3122, %v3159
        %v3176 = vsub.f32 %v3123, %v3160
        %v3177 = vsub.f32 %v3124, %v3161
        %v3178 = vsub.f32 %v3125, %v3162
        %v3179 = vmul.f32 %v3171, %v3171
        %v3180 = vmul.f32 %v3172, %v3172
        %v3181 = vmul.f32 %v3173, %v3173
        %v3182 = vmul.f32 %v3174, %v3174
        %v3183 = vmul.f32 %v3175, %v3175
        %v3184 = vmul.f32 %v3176, %v3176
        %v3185 = vmul.f32 %v3177, %v3177
        %v3186 = vmul.f32 %v3178, %v3178
        %v3195 = vrot.slane %v3180, 7
        %v3196 = vsel %vm420, %v3195, %v3179
        %v3197 = vrot.slane %v3181, 6
        %v3198 = vsel %vm423, %v3197, %v3196
        %v3199 = vrot.slane %v3182, 5
        %v3200 = vsel %vm426, %v3199, %v3198
        %v3201 = vrot.slane %v3183, 4
        %v3202 = vsel %vm429, %v3201, %v3200
        %v3203 = vrot.slane %v3184, 3
        %v3204 = vsel %vm432, %v3203, %v3202
        %v3205 = vrot.slane %v3185, 2
        %v3206 = vsel %vm435, %v3205, %v3204
        %v3207 = vrot.slane %v3186, 1
        %v3208 = vsel %vm438, %v3207, %v3206
        %v3210 = vsel %vm440, %v3208, 0.0
        %3211 = vadd.xlane.f32.xlu0 %v3210
        %v3212 = vpop.xlane.xlu0 %3211
        %v3213 = vmul.f32 %v3212, %v1076
        %v3214 = vadd.f32 %v3213, 1e-05
        %v3215 = vrsqrt.pop %v3214
        %v3216 = vmul.f32 %v3215, %v3214
        %v3217 = vmul.f32 %v3216, %v3215
        %v3218 = vmul.f32 0.5, %v3217
        %v3219 = vsub.f32 1.5, %v3218
        %v3220 = vmul.f32 %v3215, %v3219
        %vm3221 = vweird.f32 %v3214
        %vm3222 = vweird.f32 %v3215
        %vm3223 = vmor %vm3221, %vm3222
        %v3224 = vsel %vm3223, %v3215, %v3220
        %v3226 = vrot.slane %v3224, 1
        %v3227 = vrot.slane %v3224, 2
        %v3228 = vrot.slane %v3224, 3
        %v3229 = vrot.slane %v3224, 4
        %v3230 = vrot.slane %v3224, 5
        %v3231 = vrot.slane %v3224, 6
        %v3232 = vrot.slane %v3224, 7
        %v3241 = vmul.f32 %v3171, %v3224
        %v3242 = vmul.f32 %v3172, %v3226
        %v3243 = vmul.f32 %v3173, %v3227
        %v3244 = vmul.f32 %v3174, %v3228
        %v3245 = vmul.f32 %v3175, %v3229
        %v3246 = vmul.f32 %v3176, %v3230
        %v3247 = vmul.f32 %v3177, %v3231
        %v3248 = vmul.f32 %v3178, %v3232
        %v3249 = vperm.slane %v3126, 0
        %v3250 = vmul.f32 %v3241, %v3249
        %v3251 = vmul.f32 %v3242, %v3249
        %v3252 = vmul.f32 %v3243, %v3249
        %v3253 = vmul.f32 %v3244, %v3249
        %v3254 = vmul.f32 %v3245, %v3249
        %v3255 = vmul.f32 %v3246, %v3249
        %v3256 = vmul.f32 %v3247, %v3249
        %v3257 = vmul.f32 %v3248, %v3249
        %v3258 = vperm.slane %v3127, 0
        %v3259 = vadd.f32 %v3250, %v3258
        %v3260 = vadd.f32 %v3251, %v3258
        %v3261 = vadd.f32 %v3252, %v3258
        %v3262 = vadd.f32 %v3253, %v3258
        %v3263 = vadd.f32 %v3254, %v3258
        %v3264 = vadd.f32 %v3255, %v3258
        %v3265 = vadd.f32 %v3256, %v3258
        %v3266 = vadd.f32 %v3257, %v3258
        %v3267 = vld [vmem:[#allocation6 + $0x3f0] sm:$0xff]
        %v3268 = vld [vmem:[#allocation6 + $0x3f8] sm:$0xff]
        %v3269 = vld [vmem:[#allocation6 + $0x400] sm:$0xff]
        %v3270 = vld [vmem:[#allocation6 + $0x408] sm:$0xff]
        %v3271 = vld [vmem:[#allocation6 + $0x450] sm:$0xff]
        %v3272 = vld [vmem:[#allocation6 + $0x458] sm:$0xff]
        %v3273 = vld [vmem:[#allocation6 + $0x460] sm:$0xff]
        %v3274 = vld [vmem:[#allocation6 + $0x468] sm:$0xff]
        %v3283 = vrot.slane %v3260, 7
        %v3284 = vsel %vm420, %v3283, %v3259
        %v3285 = vrot.slane %v3261, 6
        %v3286 = vsel %vm423, %v3285, %v3284
        %v3287 = vrot.slane %v3262, 5
        %v3288 = vsel %vm426, %v3287, %v3286
        %v3289 = vrot.slane %v3263, 4
        %v3290 = vsel %vm429, %v3289, %v3288
        %v3291 = vrot.slane %v3264, 3
        %v3292 = vsel %vm432, %v3291, %v3290
        %v3293 = vrot.slane %v3265, 2
        %v3294 = vsel %vm435, %v3293, %v3292
        %v3295 = vrot.slane %v3266, 1
        %v3296 = vsel %vm438, %v3295, %v3294
        %v3298 = vsel %vm440, %v3267, 0
        %v3301 = vsel %vm440, %v3268, 0
        %v3304 = vsel %vm440, %v3269, 0
        %v3307 = vsel %vm440, %v3270, 0
        %v3309 = vsel %vm440, %v3296, 0
        %3311 = vmatpush.xpose.msra.mxu0 0.0
        %3312 = vmatpush.xpose.msra.mxu0 0.0
        %3313 = vmatpush.xpose.msra.mxu0 0.0
        %3314 = vmatpush.xpose.msra.mxu0 0.0
        %3315 = vmatpush.xpose.msra.mxu0 0.0
        %3316 = vmatpush.xpose.msra.mxu0 0.0
        %3317 = vmatpush.xpose.msra.mxu0 0.0
        %3318 = vmatpush.xpose.msra.mxu0 0.0
        %3319 = vmatpush.xpose.msra.mxu0 0.0
        %3320 = vmatpush.xpose.msra.mxu0 0.0
        %3321 = vmatpush.xpose.msra.mxu0 0.0
        %3322 = vmatpush.xpose.msra.mxu0 0.0
        %3323 = vmatpush.xpose.msra.mxu0 0.0
        %3324 = vmatpush.xpose.msra.mxu0 0.0
        %3325 = vmatpush.xpose.msra.mxu0 0.0
        %3326 = vmatpush.xpose.msra.mxu0 %v3309
        %3327 = vmatmul.f32.gmra.mxu0 %v3298
        %v3328 = vpop.f32.mrf.mxu0
        %v3329 = vadd.f32 %v3271, %v3328
        %3330 = vmatmul.f32.gmra.mxu0 %v3301
        %v3331 = vpop.f32.mrf.mxu0
        %v3332 = vadd.f32 %v3272, %v3331
        %3333 = vmatmul.f32.gmra.mxu0 %v3304
        %v3334 = vpop.f32.mrf.mxu0
        %v3335 = vadd.f32 %v3273, %v3334
        %3336 = vmatmul.f32.gmra.mxu0 %v3307
        %v3337 = vpop.f32.mrf.mxu0
        %v3338 = vadd.f32 %v3274, %v3337
        %3339 = vdwg.mxu0
        %v3340 = vld [vmem:[#allocation6 + $0x410] sm:$0xff]
        %v3341 = vld [vmem:[#allocation6 + $0x418] sm:$0xff]
        %v3342 = vld [vmem:[#allocation6 + $0x420] sm:$0xff]
        %v3343 = vld [vmem:[#allocation6 + $0x428] sm:$0xff]
        %v3344 = vld [vmem:[#allocation6 + $0x430] sm:$0xff]
        %v3345 = vld [vmem:[#allocation6 + $0x438] sm:$0xff]
        %v3346 = vld [vmem:[#allocation6 + $0x440] sm:$0xff]
        %v3347 = vld [vmem:[#allocation6 + $0x448] sm:$0xff]
        %v3348 = vld [vmem:[#allocation6 + $0x470] sm:$0xff]
        %v3349 = vld [vmem:[#allocation6 + $0x478] sm:$0xff]
        %v3350 = vld [vmem:[#allocation6 + $0x480] sm:$0xff]
        %v3351 = vld [vmem:[#allocation6 + $0x488] sm:$0xff]
        %v3352 = vld [vmem:[#allocation6 + $0x490] sm:$0xff]
        %v3353 = vld [vmem:[#allocation6 + $0x498] sm:$0xff]
        %v3354 = vld [vmem:[#allocation6 + $0x4a0] sm:$0xff]
        %v3355 = vld [vmem:[#allocation6 + $0x4a8] sm:$0xff]
        %v3364 = vrot.slane %v2469, 7
        %v3365 = vsel %vm420, %v3364, %v2468
        %v3366 = vrot.slane %v2470, 6
        %v3367 = vsel %vm423, %v3366, %v3365
        %v3368 = vrot.slane %v2471, 5
        %v3369 = vsel %vm426, %v3368, %v3367
        %v3370 = vrot.slane %v2472, 4
        %v3371 = vsel %vm429, %v3370, %v3369
        %v3372 = vrot.slane %v2473, 3
        %v3373 = vsel %vm432, %v3372, %v3371
        %v3374 = vrot.slane %v2474, 2
        %v3375 = vsel %vm435, %v3374, %v3373
        %v3376 = vrot.slane %v2475, 1
        %v3377 = vsel %vm438, %v3376, %v3375
        %v3379 = vsel %vm440, %v3340, 0
        %v3382 = vsel %vm440, %v3341, 0
        %v3385 = vsel %vm440, %v3342, 0
        %v3388 = vsel %vm440, %v3343, 0
        %v3391 = vsel %vm440, %v3344, 0
        %v3394 = vsel %vm440, %v3345, 0
        %v3397 = vsel %vm440, %v3346, 0
        %v3400 = vsel %vm440, %v3347, 0
        %v3402 = vsel %vm440, %v3377, 0
        %3404 = vmatpush.xpose.msra.mxu0 0.0
        %3405 = vmatpush.xpose.msra.mxu0 0.0
        %3406 = vmatpush.xpose.msra.mxu0 0.0
        %3407 = vmatpush.xpose.msra.mxu0 0.0
        %3408 = vmatpush.xpose.msra.mxu0 0.0
        %3409 = vmatpush.xpose.msra.mxu0 0.0
        %3410 = vmatpush.xpose.msra.mxu0 0.0
        %3411 = vmatpush.xpose.msra.mxu0 0.0
        %3412 = vmatpush.xpose.msra.mxu0 0.0
        %3413 = vmatpush.xpose.msra.mxu0 0.0
        %3414 = vmatpush.xpose.msra.mxu0 0.0
        %3415 = vmatpush.xpose.msra.mxu0 0.0
        %3416 = vmatpush.xpose.msra.mxu0 0.0
        %3417 = vmatpush.xpose.msra.mxu0 0.0
        %3418 = vmatpush.xpose.msra.mxu0 0.0
        %3419 = vmatpush.xpose.msra.mxu0 %v3402
        %3420 = vmatmul.f32.gmra.mxu0 %v3379
        %v3421 = vpop.f32.mrf.mxu0
        %v3422 = vadd.f32 %v3348, %v3421
        %3423 = vmatmul.f32.gmra.mxu0 %v3382
        %v3424 = vpop.f32.mrf.mxu0
        %v3425 = vadd.f32 %v3349, %v3424
        %3426 = vmatmul.f32.gmra.mxu0 %v3385
        %v3427 = vpop.f32.mrf.mxu0
        %v3428 = vadd.f32 %v3350, %v3427
        %3429 = vmatmul.f32.gmra.mxu0 %v3388
        %v3430 = vpop.f32.mrf.mxu0
        %v3431 = vadd.f32 %v3351, %v3430
        %3432 = vmatmul.f32.gmra.mxu0 %v3391
        %v3433 = vpop.f32.mrf.mxu0
        %v3434 = vadd.f32 %v3352, %v3433
        %3435 = vmatmul.f32.gmra.mxu0 %v3394
        %v3436 = vpop.f32.mrf.mxu0
        %v3437 = vadd.f32 %v3353, %v3436
        %3438 = vmatmul.f32.gmra.mxu0 %v3397
        %v3439 = vpop.f32.mrf.mxu0
        %v3440 = vadd.f32 %v3354, %v3439
        %3441 = vmatmul.f32.gmra.mxu0 %v3400
        %v3442 = vpop.f32.mrf.mxu0
        %v3443 = vadd.f32 %v3355, %v3442
        %3444 = vdwg.mxu0
        %3445 = vxpose.xlu0.b32.start [1/16] %v3329, 128
        %3446 = vxpose.xlu0.b32.cont [2/16] 0.0, 128
        %3447 = vxpose.xlu0.b32.cont [3/16] 0.0, 128
        %3448 = vxpose.xlu0.b32.cont [4/16] 0.0, 128
        %3449 = vxpose.xlu0.b32.cont [5/16] 0.0, 128
        %3450 = vxpose.xlu0.b32.cont [6/16] 0.0, 128
        %3451 = vxpose.xlu0.b32.cont [7/16] 0.0, 128
        %3452 = vxpose.xlu0.b32.cont [8/16] 0.0, 128
        %3453 = vxpose.xlu0.b32.cont [9/16] 0.0, 128
        %3454 = vxpose.xlu0.b32.cont [10/16] 0.0, 128
        %3455 = vxpose.xlu0.b32.cont [11/16] 0.0, 128
        %3456 = vxpose.xlu0.b32.cont [12/16] 0.0, 128
        %3457 = vxpose.xlu0.b32.cont [13/16] 0.0, 128
        %3458 = vxpose.xlu0.b32.cont [14/16] 0.0, 128
        %3459 = vxpose.xlu0.b32.cont [15/16] 0.0, 128
        %3460 = vxpose.xlu0.b32.end [16/16] 0.0, 128
        %v3461 = vpop.trf.xlu0
        %v3462 = vpop.trf.xlu0
        %v3463 = vpop.trf.xlu0
        %v3464 = vpop.trf.xlu0
        %v3465 = vpop.trf.xlu0
        %v3466 = vpop.trf.xlu0
        %v3467 = vpop.trf.xlu0
        %v3468 = vpop.trf.xlu0
        %v3469 = vpop.trf.xlu0
        %v3470 = vpop.trf.xlu0
        %v3471 = vpop.trf.xlu0
        %v3472 = vpop.trf.xlu0
        %v3473 = vpop.trf.xlu0
        %v3474 = vpop.trf.xlu0
        %v3475 = vpop.trf.xlu0
        %v3476 = vpop.trf.xlu0
        %v3478 = vsel %vm564, %v3461, 0
        %3480 = vmatpush.msra.mxu0 0.0
        %3481 = vmatpush.msra.mxu0 0.0
        %3482 = vmatpush.msra.mxu0 0.0
        %3483 = vmatpush.msra.mxu0 0.0
        %3484 = vmatpush.msra.mxu0 0.0
        %3485 = vmatpush.msra.mxu0 0.0
        %3486 = vmatpush.msra.mxu0 0.0
        %3487 = vmatpush.msra.mxu0 0.0
        %3488 = vmatpush.msra.mxu0 0.0
        %3489 = vmatpush.msra.mxu0 0.0
        %3490 = vmatpush.msra.mxu0 0.0
        %3491 = vmatpush.msra.mxu0 0.0
        %3492 = vmatpush.msra.mxu0 0.0
        %3493 = vmatpush.msra.mxu0 0.0
        %3494 = vmatpush.msra.mxu0 0.0
        %3495 = vmatpush.msra.mxu0 %v3422
        %3496 = vmatmul.f32.gmra.mxu0 %v3478
        %v3497 = vpop.f32.mrf.mxu0
        %v3498 = vadd.f32 0.0, %v3497
        %3499 = vdwg.mxu0
        %v3500 = vmul.f32 %v3498, 0.35355338
        %v3501 = vsel %vm564, %v3500, -inf
        %3502 = vmax.xlane.f32.xlu0 %v3501
        %v3503 = vpop.xlane.xlu0 %3502
        %v3504 = vsub.f32 %v3500, %v3503
        %v3505 = vmul.f32 %v3504, 1.442695
        %v3506 = vpow.pop %v3505
        %v3507 = vsel %vm564, %v3506, 0.0
        %3508 = vadd.xlane.f32.xlu0 %v3507
        %v3509 = vpop.xlane.xlu0 %3508
        %v3510 = vrcp.pop %v3509
        %v3511 = vmul.f32 %v3509, %v3510
        %v3512 = vsub.f32 1.0, %v3511
        %v3513 = vmul.f32 %v3510, %v3512
        %v3514 = vadd.f32 %v3510, %v3513
        %vm3515 = vweird.f32 %v3509
        %vm3516 = vweird.f32 %v3510
        %vm3517 = vmor %vm3515, %vm3516
        %v3518 = vsel %vm3517, %v3510, %v3514
        %v3519 = vand.u32 2147483647, %v3509
        %vm3520 = vcmp.eq.f32.partialorder %v3519, 8.507059e+37
        %v3521 = vand.u32 %v3509, 2147483648
        %v3522 = vor.u32 1.1754944e-38, %v3521
        %v3523 = vsel %vm3520, %v3522, %v3518
        %v3524 = vmul.f32 %v3506, %v3523
        %v3526 = vsel %vm564, %v3434, 0
        %v3529 = vsel %vm564, %v3524, 0
        %3531 = vmatpush.xpose.msra.mxu0 0.0
        %3532 = vmatpush.xpose.msra.mxu0 0.0
        %3533 = vmatpush.xpose.msra.mxu0 0.0
        %3534 = vmatpush.xpose.msra.mxu0 0.0
        %3535 = vmatpush.xpose.msra.mxu0 0.0
        %3536 = vmatpush.xpose.msra.mxu0 0.0
        %3537 = vmatpush.xpose.msra.mxu0 0.0
        %3538 = vmatpush.xpose.msra.mxu0 0.0
        %3539 = vmatpush.xpose.msra.mxu0 0.0
        %3540 = vmatpush.xpose.msra.mxu0 0.0
        %3541 = vmatpush.xpose.msra.mxu0 0.0
        %3542 = vmatpush.xpose.msra.mxu0 0.0
        %3543 = vmatpush.xpose.msra.mxu0 0.0
        %3544 = vmatpush.xpose.msra.mxu0 0.0
        %3545 = vmatpush.xpose.msra.mxu0 0.0
        %3546 = vmatpush.xpose.msra.mxu0 %v3529
        %3547 = vmatmul.f32.gmra.mxu0 %v3526
        %v3548 = vpop.f32.mrf.mxu0
        %v3549 = vadd.f32 0.0, %v3548
        %3550 = vdwg.mxu0
        %3551 = vxpose.xlu0.b32.start [1/16] %v3332, 128
        %3552 = vxpose.xlu0.b32.cont [2/16] 0.0, 128
        %3553 = vxpose.xlu0.b32.cont [3/16] 0.0, 128
        %3554 = vxpose.xlu0.b32.cont [4/16] 0.0, 128
        %3555 = vxpose.xlu0.b32.cont [5/16] 0.0, 128
        %3556 = vxpose.xlu0.b32.cont [6/16] 0.0, 128
        %3557 = vxpose.xlu0.b32.cont [7/16] 0.0, 128
        %3558 = vxpose.xlu0.b32.cont [8/16] 0.0, 128
        %3559 = vxpose.xlu0.b32.cont [9/16] 0.0, 128
        %3560 = vxpose.xlu0.b32.cont [10/16] 0.0, 128
        %3561 = vxpose.xlu0.b32.cont [11/16] 0.0, 128
        %3562 = vxpose.xlu0.b32.cont [12/16] 0.0, 128
        %3563 = vxpose.xlu0.b32.cont [13/16] 0.0, 128
        %3564 = vxpose.xlu0.b32.cont [14/16] 0.0, 128
        %3565 = vxpose.xlu0.b32.cont [15/16] 0.0, 128
        %3566 = vxpose.xlu0.b32.end [16/16] 0.0, 128
        %v3567 = vpop.trf.xlu0
        %v3568 = vpop.trf.xlu0
        %v3569 = vpop.trf.xlu0
        %v3570 = vpop.trf.xlu0
        %v3571 = vpop.trf.xlu0
        %v3572 = vpop.trf.xlu0
        %v3573 = vpop.trf.xlu0
        %v3574 = vpop.trf.xlu0
        %v3575 = vpop.trf.xlu0
        %v3576 = vpop.trf.xlu0
        %v3577 = vpop.trf.xlu0
        %v3578 = vpop.trf.xlu0
        %v3579 = vpop.trf.xlu0
        %v3580 = vpop.trf.xlu0
        %v3581 = vpop.trf.xlu0
        %v3582 = vpop.trf.xlu0
        %v3584 = vsel %vm564, %v3567, 0
        %3586 = vmatpush.msra.mxu0 0.0
        %3587 = vmatpush.msra.mxu0 0.0
        %3588 = vmatpush.msra.mxu0 0.0
        %3589 = vmatpush.msra.mxu0 0.0
        %3590 = vmatpush.msra.mxu0 0.0
        %3591 = vmatpush.msra.mxu0 0.0
        %3592 = vmatpush.msra.mxu0 0.0
        %3593 = vmatpush.msra.mxu0 0.0
        %3594 = vmatpush.msra.mxu0 0.0
        %3595 = vmatpush.msra.mxu0 0.0
        %3596 = vmatpush.msra.mxu0 0.0
        %3597 = vmatpush.msra.mxu0 0.0
        %3598 = vmatpush.msra.mxu0 0.0
        %3599 = vmatpush.msra.mxu0 0.0
        %3600 = vmatpush.msra.mxu0 0.0
        %3601 = vmatpush.msra.mxu0 %v3425
        %3602 = vmatmul.f32.gmra.mxu0 %v3584
        %v3603 = vpop.f32.mrf.mxu0
        %v3604 = vadd.f32 0.0, %v3603
        %3605 = vdwg.mxu0
        %v3606 = vmul.f32 %v3604, 0.35355338
        %v3607 = vsel %vm564, %v3606, -inf
        %3608 = vmax.xlane.f32.xlu0 %v3607
        %v3609 = vpop.xlane.xlu0 %3608
        %v3610 = vsub.f32 %v3606, %v3609
        %v3611 = vmul.f32 %v3610, 1.442695
        %v3612 = vpow.pop %v3611
        %v3613 = vsel %vm564, %v3612, 0.0
        %3614 = vadd.xlane.f32.xlu0 %v3613
        %v3615 = vpop.xlane.xlu0 %3614
        %v3616 = vrcp.pop %v3615
        %v3617 = vmul.f32 %v3615, %v3616
        %v3618 = vsub.f32 1.0, %v3617
        %v3619 = vmul.f32 %v3616, %v3618
        %v3620 = vadd.f32 %v3616, %v3619
        %vm3621 = vweird.f32 %v3615
        %vm3622 = vweird.f32 %v3616
        %vm3623 = vmor %vm3621, %vm3622
        %v3624 = vsel %vm3623, %v3616, %v3620
        %v3625 = vand.u32 2147483647, %v3615
        %vm3626 = vcmp.eq.f32.partialorder %v3625, 8.507059e+37
        %v3627 = vand.u32 %v3615, 2147483648
        %v3628 = vor.u32 1.1754944e-38, %v3627
        %v3629 = vsel %vm3626, %v3628, %v3624
        %v3630 = vmul.f32 %v3612, %v3629
        %v3632 = vsel %vm564, %v3437, 0
        %v3635 = vsel %vm564, %v3630, 0
        %3637 = vmatpush.xpose.msra.mxu0 0.0
        %3638 = vmatpush.xpose.msra.mxu0 0.0
        %3639 = vmatpush.xpose.msra.mxu0 0.0
        %3640 = vmatpush.xpose.msra.mxu0 0.0
        %3641 = vmatpush.xpose.msra.mxu0 0.0
        %3642 = vmatpush.xpose.msra.mxu0 0.0
        %3643 = vmatpush.xpose.msra.mxu0 0.0
        %3644 = vmatpush.xpose.msra.mxu0 0.0
        %3645 = vmatpush.xpose.msra.mxu0 0.0
        %3646 = vmatpush.xpose.msra.mxu0 0.0
        %3647 = vmatpush.xpose.msra.mxu0 0.0
        %3648 = vmatpush.xpose.msra.mxu0 0.0
        %3649 = vmatpush.xpose.msra.mxu0 0.0
        %3650 = vmatpush.xpose.msra.mxu0 0.0
        %3651 = vmatpush.xpose.msra.mxu0 0.0
        %3652 = vmatpush.xpose.msra.mxu0 %v3635
        %3653 = vmatmul.f32.gmra.mxu0 %v3632
        %v3654 = vpop.f32.mrf.mxu0
        %v3655 = vadd.f32 0.0, %v3654
        %3656 = vdwg.mxu0
        %3657 = vxpose.xlu0.b32.start [1/16] %v3335, 128
        %3658 = vxpose.xlu0.b32.cont [2/16] 0.0, 128
        %3659 = vxpose.xlu0.b32.cont [3/16] 0.0, 128
        %3660 = vxpose.xlu0.b32.cont [4/16] 0.0, 128
        %3661 = vxpose.xlu0.b32.cont [5/16] 0.0, 128
        %3662 = vxpose.xlu0.b32.cont [6/16] 0.0, 128
        %3663 = vxpose.xlu0.b32.cont [7/16] 0.0, 128
        %3664 = vxpose.xlu0.b32.cont [8/16] 0.0, 128
        %3665 = vxpose.xlu0.b32.cont [9/16] 0.0, 128
        %3666 = vxpose.xlu0.b32.cont [10/16] 0.0, 128
        %3667 = vxpose.xlu0.b32.cont [11/16] 0.0, 128
        %3668 = vxpose.xlu0.b32.cont [12/16] 0.0, 128
        %3669 = vxpose.xlu0.b32.cont [13/16] 0.0, 128
        %3670 = vxpose.xlu0.b32.cont [14/16] 0.0, 128
        %3671 = vxpose.xlu0.b32.cont [15/16] 0.0, 128
        %3672 = vxpose.xlu0.b32.end [16/16] 0.0, 128
        %v3673 = vpop.trf.xlu0
        %v3674 = vpop.trf.xlu0
        %v3675 = vpop.trf.xlu0
        %v3676 = vpop.trf.xlu0
        %v3677 = vpop.trf.xlu0
        %v3678 = vpop.trf.xlu0
        %v3679 = vpop.trf.xlu0
        %v3680 = vpop.trf.xlu0
        %v3681 = vpop.trf.xlu0
        %v3682 = vpop.trf.xlu0
        %v3683 = vpop.trf.xlu0
        %v3684 = vpop.trf.xlu0
        %v3685 = vpop.trf.xlu0
        %v3686 = vpop.trf.xlu0
        %v3687 = vpop.trf.xlu0
        %v3688 = vpop.trf.xlu0
        %v3690 = vsel %vm564, %v3673, 0
        %3692 = vmatpush.msra.mxu0 0.0
        %3693 = vmatpush.msra.mxu0 0.0
        %3694 = vmatpush.msra.mxu0 0.0
        %3695 = vmatpush.msra.mxu0 0.0
        %3696 = vmatpush.msra.mxu0 0.0
        %3697 = vmatpush.msra.mxu0 0.0
        %3698 = vmatpush.msra.mxu0 0.0
        %3699 = vmatpush.msra.mxu0 0.0
        %3700 = vmatpush.msra.mxu0 0.0
        %3701 = vmatpush.msra.mxu0 0.0
        %3702 = vmatpush.msra.mxu0 0.0
        %3703 = vmatpush.msra.mxu0 0.0
        %3704 = vmatpush.msra.mxu0 0.0
        %3705 = vmatpush.msra.mxu0 0.0
        %3706 = vmatpush.msra.mxu0 0.0
        %3707 = vmatpush.msra.mxu0 %v3428
        %3708 = vmatmul.f32.gmra.mxu0 %v3690
        %v3709 = vpop.f32.mrf.mxu0
        %v3710 = vadd.f32 0.0, %v3709
        %3711 = vdwg.mxu0
        %v3712 = vmul.f32 %v3710, 0.35355338
        %v3713 = vsel %vm564, %v3712, -inf
        %3714 = vmax.xlane.f32.xlu0 %v3713
        %v3715 = vpop.xlane.xlu0 %3714
        %v3716 = vsub.f32 %v3712, %v3715
        %v3717 = vmul.f32 %v3716, 1.442695
        %v3718 = vpow.pop %v3717
        %v3719 = vsel %vm564, %v3718, 0.0
        %3720 = vadd.xlane.f32.xlu0 %v3719
        %v3721 = vpop.xlane.xlu0 %3720
        %v3722 = vrcp.pop %v3721
        %v3723 = vmul.f32 %v3721, %v3722
        %v3724 = vsub.f32 1.0, %v3723
        %v3725 = vmul.f32 %v3722, %v3724
        %v3726 = vadd.f32 %v3722, %v3725
        %vm3727 = vweird.f32 %v3721
        %vm3728 = vweird.f32 %v3722
        %vm3729 = vmor %vm3727, %vm3728
        %v3730 = vsel %vm3729, %v3722, %v3726
        %v3731 = vand.u32 2147483647, %v3721
        %vm3732 = vcmp.eq.f32.partialorder %v3731, 8.507059e+37
        %v3733 = vand.u32 %v3721, 2147483648
        %v3734 = vor.u32 1.1754944e-38, %v3733
        %v3735 = vsel %vm3732, %v3734, %v3730
        %v3736 = vmul.f32 %v3718, %v3735
        %v3738 = vsel %vm564, %v3440, 0
        %v3741 = vsel %vm564, %v3736, 0
        %3743 = vmatpush.xpose.msra.mxu0 0.0
        %3744 = vmatpush.xpose.msra.mxu0 0.0
        %3745 = vmatpush.xpose.msra.mxu0 0.0
        %3746 = vmatpush.xpose.msra.mxu0 0.0
        %3747 = vmatpush.xpose.msra.mxu0 0.0
        %3748 = vmatpush.xpose.msra.mxu0 0.0
        %3749 = vmatpush.xpose.msra.mxu0 0.0
        %3750 = vmatpush.xpose.msra.mxu0 0.0
        %3751 = vmatpush.xpose.msra.mxu0 0.0
        %3752 = vmatpush.xpose.msra.mxu0 0.0
        %3753 = vmatpush.xpose.msra.mxu0 0.0
        %3754 = vmatpush.xpose.msra.mxu0 0.0
        %3755 = vmatpush.xpose.msra.mxu0 0.0
        %3756 = vmatpush.xpose.msra.mxu0 0.0
        %3757 = vmatpush.xpose.msra.mxu0 0.0
        %3758 = vmatpush.xpose.msra.mxu0 %v3741
        %3759 = vmatmul.f32.gmra.mxu0 %v3738
        %v3760 = vpop.f32.mrf.mxu0
        %v3761 = vadd.f32 0.0, %v3760
        %3762 = vdwg.mxu0
        %3763 = vxpose.xlu0.b32.start [1/16] %v3338, 128
        %3764 = vxpose.xlu0.b32.cont [2/16] 0.0, 128
        %3765 = vxpose.xlu0.b32.cont [3/16] 0.0, 128
        %3766 = vxpose.xlu0.b32.cont [4/16] 0.0, 128
        %3767 = vxpose.xlu0.b32.cont [5/16] 0.0, 128
        %3768 = vxpose.xlu0.b32.cont [6/16] 0.0, 128
        %3769 = vxpose.xlu0.b32.cont [7/16] 0.0, 128
        %3770 = vxpose.xlu0.b32.cont [8/16] 0.0, 128
        %3771 = vxpose.xlu0.b32.cont [9/16] 0.0, 128
        %3772 = vxpose.xlu0.b32.cont [10/16] 0.0, 128
        %3773 = vxpose.xlu0.b32.cont [11/16] 0.0, 128
        %3774 = vxpose.xlu0.b32.cont [12/16] 0.0, 128
        %3775 = vxpose.xlu0.b32.cont [13/16] 0.0, 128
        %3776 = vxpose.xlu0.b32.cont [14/16] 0.0, 128
        %3777 = vxpose.xlu0.b32.cont [15/16] 0.0, 128
        %3778 = vxpose.xlu0.b32.end [16/16] 0.0, 128
        %v3779 = vpop.trf.xlu0
        %v3780 = vpop.trf.xlu0
        %v3781 = vpop.trf.xlu0
        %v3782 = vpop.trf.xlu0
        %v3783 = vpop.trf.xlu0
        %v3784 = vpop.trf.xlu0
        %v3785 = vpop.trf.xlu0
        %v3786 = vpop.trf.xlu0
        %v3787 = vpop.trf.xlu0
        %v3788 = vpop.trf.xlu0
        %v3789 = vpop.trf.xlu0
        %v3790 = vpop.trf.xlu0
        %v3791 = vpop.trf.xlu0
        %v3792 = vpop.trf.xlu0
        %v3793 = vpop.trf.xlu0
        %v3794 = vpop.trf.xlu0
        %v3796 = vsel %vm564, %v3779, 0
        %3798 = vmatpush.msra.mxu0 0.0
        %3799 = vmatpush.msra.mxu0 0.0
        %3800 = vmatpush.msra.mxu0 0.0
        %3801 = vmatpush.msra.mxu0 0.0
        %3802 = vmatpush.msra.mxu0 0.0
        %3803 = vmatpush.msra.mxu0 0.0
        %3804 = vmatpush.msra.mxu0 0.0
        %3805 = vmatpush.msra.mxu0 0.0
        %3806 = vmatpush.msra.mxu0 0.0
        %3807 = vmatpush.msra.mxu0 0.0
        %3808 = vmatpush.msra.mxu0 0.0
        %3809 = vmatpush.msra.mxu0 0.0
        %3810 = vmatpush.msra.mxu0 0.0
        %3811 = vmatpush.msra.mxu0 0.0
        %3812 = vmatpush.msra.mxu0 0.0
        %3813 = vmatpush.msra.mxu0 %v3431
        %3814 = vmatmul.f32.gmra.mxu0 %v3796
        %v3815 = vpop.f32.mrf.mxu0
        %v3816 = vadd.f32 0.0, %v3815
        %3817 = vdwg.mxu0
        %v3818 = vmul.f32 %v3816, 0.35355338
        %v3819 = vsel %vm564, %v3818, -inf
        %3820 = vmax.xlane.f32.xlu0 %v3819
        %v3821 = vpop.xlane.xlu0 %3820
        %v3822 = vsub.f32 %v3818, %v3821
        %v3823 = vmul.f32 %v3822, 1.442695
        %v3824 = vpow.pop %v3823
        %v3825 = vsel %vm564, %v3824, 0.0
        %3826 = vadd.xlane.f32.xlu0 %v3825
        %v3827 = vpop.xlane.xlu0 %3826
        %v3828 = vrcp.pop %v3827
        %v3829 = vmul.f32 %v3827, %v3828
        %v3830 = vsub.f32 1.0, %v3829
        %v3831 = vmul.f32 %v3828, %v3830
        %v3832 = vadd.f32 %v3828, %v3831
        %vm3833 = vweird.f32 %v3827
        %vm3834 = vweird.f32 %v3828
        %vm3835 = vmor %vm3833, %vm3834
        %v3836 = vsel %vm3835, %v3828, %v3832
        %v3837 = vand.u32 2147483647, %v3827
        %vm3838 = vcmp.eq.f32.partialorder %v3837, 8.507059e+37
        %v3839 = vand.u32 %v3827, 2147483648
        %v3840 = vor.u32 1.1754944e-38, %v3839
        %v3841 = vsel %vm3838, %v3840, %v3836
        %v3842 = vmul.f32 %v3824, %v3841
        %v3844 = vsel %vm564, %v3443, 0
        %v3847 = vsel %vm564, %v3842, 0
        %3849 = vmatpush.xpose.msra.mxu0 0.0
        %3850 = vmatpush.xpose.msra.mxu0 0.0
        %3851 = vmatpush.xpose.msra.mxu0 0.0
        %3852 = vmatpush.xpose.msra.mxu0 0.0
        %3853 = vmatpush.xpose.msra.mxu0 0.0
        %3854 = vmatpush.xpose.msra.mxu0 0.0
        %3855 = vmatpush.xpose.msra.mxu0 0.0
        %3856 = vmatpush.xpose.msra.mxu0 0.0
        %3857 = vmatpush.xpose.msra.mxu0 0.0
        %3858 = vmatpush.xpose.msra.mxu0 0.0
        %3859 = vmatpush.xpose.msra.mxu0 0.0
        %3860 = vmatpush.xpose.msra.mxu0 0.0
        %3861 = vmatpush.xpose.msra.mxu0 0.0
        %3862 = vmatpush.xpose.msra.mxu0 0.0
        %3863 = vmatpush.xpose.msra.mxu0 0.0
        %3864 = vmatpush.xpose.msra.mxu0 %v3847
        %3865 = vmatmul.f32.gmra.mxu0 %v3844
        %v3866 = vpop.f32.mrf.mxu0
        %v3867 = vadd.f32 0.0, %v3866
        %3868 = vdwg.mxu0
        %v3869 = vld [vmem:[#allocation6 + $0x4b0] sm:$0xff]
        %v3870 = vld [vmem:[#allocation6 + $0x4b8] sm:$0xff]
        %v3871 = vld [vmem:[#allocation6 + $0x4c0] sm:$0xff]
        %v3872 = vld [vmem:[#allocation6 + $0x4c8] sm:$0xff]
        %v3873 = vld [vmem:[#allocation6 + $0x4d0] sm:$0x1]
        %v3874 = vperm.slane %v3873, 0
        %3875 = vxpose.xlu0.b32.start [1/16] %v3549, 128
        %3876 = vxpose.xlu0.b32.cont [2/16] %v3655, 128
        %3877 = vxpose.xlu0.b32.cont [3/16] %v3761, 128
        %3878 = vxpose.xlu0.b32.cont [4/16] %v3867, 128
        %3879 = vxpose.xlu0.b32.cont [5/16] 0.0, 128
        %3880 = vxpose.xlu0.b32.cont [6/16] 0.0, 128
        %3881 = vxpose.xlu0.b32.cont [7/16] 0.0, 128
        %3882 = vxpose.xlu0.b32.cont [8/16] 0.0, 128
        %3883 = vxpose.xlu0.b32.cont [9/16] 0.0, 128
        %3884 = vxpose.xlu0.b32.cont [10/16] 0.0, 128
        %3885 = vxpose.xlu0.b32.cont [11/16] 0.0, 128
        %3886 = vxpose.xlu0.b32.cont [12/16] 0.0, 128
        %3887 = vxpose.xlu0.b32.cont [13/16] 0.0, 128
        %3888 = vxpose.xlu0.b32.cont [14/16] 0.0, 128
        %3889 = vxpose.xlu0.b32.cont [15/16] 0.0, 128
        %3890 = vxpose.xlu0.b32.end [16/16] 0.0, 128
        %v3891 = vpop.trf.xlu0
        %v3892 = vpop.trf.xlu0
        %v3893 = vpop.trf.xlu0
        %v3894 = vpop.trf.xlu0
        %v3895 = vpop.trf.xlu0
        %v3896 = vpop.trf.xlu0
        %v3897 = vpop.trf.xlu0
        %v3898 = vpop.trf.xlu0
        %v3899 = vpop.trf.xlu0
        %v3900 = vpop.trf.xlu0
        %v3901 = vpop.trf.xlu0
        %v3902 = vpop.trf.xlu0
        %v3903 = vpop.trf.xlu0
        %v3904 = vpop.trf.xlu0
        %v3905 = vpop.trf.xlu0
        %v3906 = vpop.trf.xlu0
        %v3908 = vsel %vm440, %v3891, 0
        %3910 = vmatpush.msra.mxu0 0.0
        %3911 = vmatpush.msra.mxu0 0.0
        %3912 = vmatpush.msra.mxu0 0.0
        %3913 = vmatpush.msra.mxu0 0.0
        %3914 = vmatpush.msra.mxu0 0.0
        %3915 = vmatpush.msra.mxu0 0.0
        %3916 = vmatpush.msra.mxu0 0.0
        %3917 = vmatpush.msra.mxu0 0.0
        %3918 = vmatpush.msra.mxu0 0.0
        %3919 = vmatpush.msra.mxu0 0.0
        %3920 = vmatpush.msra.mxu0 0.0
        %3921 = vmatpush.msra.mxu0 0.0
        %3922 = vmatpush.msra.mxu0 %v3872
        %3923 = vmatpush.msra.mxu0 %v3871
        %3924 = vmatpush.msra.mxu0 %v3870
        %3925 = vmatpush.msra.mxu0 %v3869
        %3926 = vmatmul.f32.gmra.mxu0 %v3908
        %v3927 = vpop.f32.mrf.mxu0
        %v3928 = vadd.f32 %v3874, %v3927
        %3929 = vdwg.mxu0
        %v3931 = vrot.slane %v3928, 1
        %v3932 = vrot.slane %v3928, 2
        %v3933 = vrot.slane %v3928, 3
        %v3934 = vrot.slane %v3928, 4
        %v3935 = vrot.slane %v3928, 5
        %v3936 = vrot.slane %v3928, 6
        %v3937 = vrot.slane %v3928, 7
        %v3946 = vadd.f32 %v3259, %v3928
        %v3947 = vadd.f32 %v3260, %v3931
        %v3948 = vadd.f32 %v3261, %v3932
        %v3949 = vadd.f32 %v3262, %v3933
        %v3950 = vadd.f32 %v3263, %v3934
        %v3951 = vadd.f32 %v3264, %v3935
        %v3952 = vadd.f32 %v3265, %v3936
        %v3953 = vadd.f32 %v3266, %v3937
        %v3954 = vld [vmem:[#allocation6 + $0x4d8] sm:$0x1]
        %v3955 = vld [vmem:[#allocation6 + $0x4e0] sm:$0x1]
        %v3964 = vrot.slane %v3947, 7
        %v3965 = vsel %vm420, %v3964, %v3946
        %v3966 = vrot.slane %v3948, 6
        %v3967 = vsel %vm423, %v3966, %v3965
        %v3968 = vrot.slane %v3949, 5
        %v3969 = vsel %vm426, %v3968, %v3967
        %v3970 = vrot.slane %v3950, 4
        %v3971 = vsel %vm429, %v3970, %v3969
        %v3972 = vrot.slane %v3951, 3
        %v3973 = vsel %vm432, %v3972, %v3971
        %v3974 = vrot.slane %v3952, 2
        %v3975 = vsel %vm435, %v3974, %v3973
        %v3976 = vrot.slane %v3953, 1
        %v3977 = vsel %vm438, %v3976, %v3975
        %v3979 = vsel %vm440, %v3977, 0.0
        %3980 = vadd.xlane.f32.xlu0 %v3979
        %v3981 = vpop.xlane.xlu0 %3980
        %v3982 = vmul.f32 %v3981, %v1076
        %v3984 = vrot.slane %v3982, 1
        %v3985 = vrot.slane %v3982, 2
        %v3986 = vrot.slane %v3982, 3
        %v3987 = vrot.slane %v3982, 4
        %v3988 = vrot.slane %v3982, 5
        %v3989 = vrot.slane %v3982, 6
        %v3990 = vrot.slane %v3982, 7
        %v3999 = vsub.f32 %v3946, %v3982
        %v4000 = vsub.f32 %v3947, %v3984
        %v4001 = vsub.f32 %v3948, %v3985
        %v4002 = vsub.f32 %v3949, %v3986
        %v4003 = vsub.f32 %v3950, %v3987
        %v4004 = vsub.f32 %v3951, %v3988
        %v4005 = vsub.f32 %v3952, %v3989
        %v4006 = vsub.f32 %v3953, %v3990
        %v4007 = vmul.f32 %v3999, %v3999
        %v4008 = vmul.f32 %v4000, %v4000
        %v4009 = vmul.f32 %v4001, %v4001
        %v4010 = vmul.f32 %v4002, %v4002
        %v4011 = vmul.f32 %v4003, %v4003
        %v4012 = vmul.f32 %v4004, %v4004
        %v4013 = vmul.f32 %v4005, %v4005
        %v4014 = vmul.f32 %v4006, %v4006
        %v4023 = vrot.slane %v4008, 7
        %v4024 = vsel %vm420, %v4023, %v4007
        %v4025 = vrot.slane %v4009, 6
        %v4026 = vsel %vm423, %v4025, %v4024
        %v4027 = vrot.slane %v4010, 5
        %v4028 = vsel %vm426, %v4027, %v4026
        %v4029 = vrot.slane %v4011, 4
        %v4030 = vsel %vm429, %v4029, %v4028
        %v4031 = vrot.slane %v4012, 3
        %v4032 = vsel %vm432, %v4031, %v4030
        %v4033 = vrot.slane %v4013, 2
        %v4034 = vsel %vm435, %v4033, %v4032
        %v4035 = vrot.slane %v4014, 1
        %v4036 = vsel %vm438, %v4035, %v4034
        %v4038 = vsel %vm440, %v4036, 0.0
        %4039 = vadd.xlane.f32.xlu0 %v4038
        %v4040 = vpop.xlane.xlu0 %4039
        %v4041 = vmul.f32 %v4040, %v1076
        %v4042 = vadd.f32 %v4041, 1e-05
        %v4043 = vrsqrt.pop %v4042
        %v4044 = vmul.f32 %v4043, %v4042
        %v4045 = vmul.f32 %v4044, %v4043
        %v4046 = vmul.f32 0.5, %v4045
        %v4047 = vsub.f32 1.5, %v4046
        %v4048 = vmul.f32 %v4043, %v4047
        %vm4049 = vweird.f32 %v4042
        %vm4050 = vweird.f32 %v4043
        %vm4051 = vmor %vm4049, %vm4050
        %v4052 = vsel %vm4051, %v4043, %v4048
        %v4054 = vrot.slane %v4052, 1
        %v4055 = vrot.slane %v4052, 2
        %v4056 = vrot.slane %v4052, 3
        %v4057 = vrot.slane %v4052, 4
        %v4058 = vrot.slane %v4052, 5
        %v4059 = vrot.slane %v4052, 6
        %v4060 = vrot.slane %v4052, 7
        %v4069 = vmul.f32 %v3999, %v4052
        %v4070 = vmul.f32 %v4000, %v4054
        %v4071 = vmul.f32 %v4001, %v4055
        %v4072 = vmul.f32 %v4002, %v4056
        %v4073 = vmul.f32 %v4003, %v4057
        %v4074 = vmul.f32 %v4004, %v4058
        %v4075 = vmul.f32 %v4005, %v4059
        %v4076 = vmul.f32 %v4006, %v4060
        %v4077 = vperm.slane %v3954, 0
        %v4078 = vmul.f32 %v4069, %v4077
        %v4079 = vmul.f32 %v4070, %v4077
        %v4080 = vmul.f32 %v4071, %v4077
        %v4081 = vmul.f32 %v4072, %v4077
        %v4082 = vmul.f32 %v4073, %v4077
        %v4083 = vmul.f32 %v4074, %v4077
        %v4084 = vmul.f32 %v4075, %v4077
        %v4085 = vmul.f32 %v4076, %v4077
        %v4086 = vperm.slane %v3955, 0
        %v4087 = vadd.f32 %v4078, %v4086
        %v4088 = vadd.f32 %v4079, %v4086
        %v4089 = vadd.f32 %v4080, %v4086
        %v4090 = vadd.f32 %v4081, %v4086
        %v4091 = vadd.f32 %v4082, %v4086
        %v4092 = vadd.f32 %v4083, %v4086
        %v4093 = vadd.f32 %v4084, %v4086
        %v4094 = vadd.f32 %v4085, %v4086
        %v4095 = vld [vmem:[#allocation6 + $0x4e8] sm:$0xff]
        %v4096 = vld [vmem:[#allocation6 + $0x4f0] sm:$0xff]
        %v4097 = vld [vmem:[#allocation6 + $0x4f8] sm:$0xff]
        %v4098 = vld [vmem:[#allocation6 + $0x500] sm:$0xff]
        %v4099 = vld [vmem:[#allocation6 + $0x508] sm:$0x1]
        %v4100 = vperm.slane %v4099, 0
        %v4109 = vrot.slane %v4088, 7
        %v4110 = vsel %vm420, %v4109, %v4087
        %v4111 = vrot.slane %v4089, 6
        %v4112 = vsel %vm423, %v4111, %v4110
        %v4113 = vrot.slane %v4090, 5
        %v4114 = vsel %vm426, %v4113, %v4112
        %v4115 = vrot.slane %v4091, 4
        %v4116 = vsel %vm429, %v4115, %v4114
        %v4117 = vrot.slane %v4092, 3
        %v4118 = vsel %vm432, %v4117, %v4116
        %v4119 = vrot.slane %v4093, 2
        %v4120 = vsel %vm435, %v4119, %v4118
        %v4121 = vrot.slane %v4094, 1
        %v4122 = vsel %vm438, %v4121, %v4120
        %v4123 = vsel %vm440, %v4122, 0
        %4125 = vmatpush.msra.mxu0 0.0
        %4126 = vmatpush.msra.mxu0 0.0
        %4127 = vmatpush.msra.mxu0 0.0
        %4128 = vmatpush.msra.mxu0 0.0
        %4129 = vmatpush.msra.mxu0 0.0
        %4130 = vmatpush.msra.mxu0 0.0
        %4131 = vmatpush.msra.mxu0 0.0
        %4132 = vmatpush.msra.mxu0 0.0
        %4133 = vmatpush.msra.mxu0 0.0
        %4134 = vmatpush.msra.mxu0 0.0
        %4135 = vmatpush.msra.mxu0 0.0
        %4136 = vmatpush.msra.mxu0 0.0
        %4137 = vmatpush.msra.mxu0 %v4098
        %4138 = vmatpush.msra.mxu0 %v4097
        %4139 = vmatpush.msra.mxu0 %v4096
        %4140 = vmatpush.msra.mxu0 %v4095
        %4141 = vmatmul.f32.gmra.mxu0 %v4123
        %v4142 = vpop.f32.mrf.mxu0
        %v4143 = vadd.f32 %v4100, %v4142
        %4144 = vdwg.mxu0
        %v4145 = vmax.f32 %v4143, 0.0
        %v4146 = vld [vmem:[#allocation6 + $0x510] sm:$0xff]
        %v4147 = vld [vmem:[#allocation6 + $0x518] sm:$0xff]
        %v4148 = vld [vmem:[#allocation6 + $0x520] sm:$0xff]
        %v4149 = vld [vmem:[#allocation6 + $0x528] sm:$0xff]
        %v4150 = vld [vmem:[#allocation6 + $0x530] sm:$0xff]
        %v4151 = vld [vmem:[#allocation6 + $0x538] sm:$0xff]
        %v4152 = vld [vmem:[#allocation6 + $0x540] sm:$0xff]
        %v4153 = vld [vmem:[#allocation6 + $0x548] sm:$0xff]
        %v4154 = vld [vmem:[#allocation6 + $0x550] sm:$0x1]
        %v4155 = vperm.slane %v4154, 0
        %v4157 = vsel %vm1251, %v4145, 0
        %4159 = vmatpush.msra.mxu0 0.0
        %4160 = vmatpush.msra.mxu0 0.0
        %4161 = vmatpush.msra.mxu0 0.0
        %4162 = vmatpush.msra.mxu0 0.0
        %4163 = vmatpush.msra.mxu0 0.0
        %4164 = vmatpush.msra.mxu0 0.0
        %4165 = vmatpush.msra.mxu0 0.0
        %4166 = vmatpush.msra.mxu0 0.0
        %4167 = vmatpush.msra.mxu0 %v4153
        %4168 = vmatpush.msra.mxu0 %v4152
        %4169 = vmatpush.msra.mxu0 %v4151
        %4170 = vmatpush.msra.mxu0 %v4150
        %4171 = vmatpush.msra.mxu0 %v4149
        %4172 = vmatpush.msra.mxu0 %v4148
        %4173 = vmatpush.msra.mxu0 %v4147
        %4174 = vmatpush.msra.mxu0 %v4146
        %4175 = vmatmul.f32.gmra.mxu0 %v4157
        %v4176 = vpop.f32.mrf.mxu0
        %v4177 = vadd.f32 %v4155, %v4176
        %4178 = vdwg.mxu0
        %v4180 = vrot.slane %v4177, 1
        %v4181 = vrot.slane %v4177, 2
        %v4182 = vrot.slane %v4177, 3
        %v4183 = vrot.slane %v4177, 4
        %v4184 = vrot.slane %v4177, 5
        %v4185 = vrot.slane %v4177, 6
        %v4186 = vrot.slane %v4177, 7
        %v4195 = vadd.f32 %v4087, %v4177
        %v4196 = vadd.f32 %v4088, %v4180
        %v4197 = vadd.f32 %v4089, %v4181
        %v4198 = vadd.f32 %v4090, %v4182
        %v4199 = vadd.f32 %v4091, %v4183
        %v4200 = vadd.f32 %v4092, %v4184
        %v4201 = vadd.f32 %v4093, %v4185
        %v4202 = vadd.f32 %v4094, %v4186
        %v4203 = vld [vmem:[#allocation6 + $0x558] sm:$0x1]
        %v4204 = vld [vmem:[#allocation6 + $0x560] sm:$0x1]
        %v4213 = vrot.slane %v4196, 7
        %v4214 = vsel %vm420, %v4213, %v4195
        %v4215 = vrot.slane %v4197, 6
        %v4216 = vsel %vm423, %v4215, %v4214
        %v4217 = vrot.slane %v4198, 5
        %v4218 = vsel %vm426, %v4217, %v4216
        %v4219 = vrot.slane %v4199, 4
        %v4220 = vsel %vm429, %v4219, %v4218
        %v4221 = vrot.slane %v4200, 3
        %v4222 = vsel %vm432, %v4221, %v4220
        %v4223 = vrot.slane %v4201, 2
        %v4224 = vsel %vm435, %v4223, %v4222
        %v4225 = vrot.slane %v4202, 1
        %v4226 = vsel %vm438, %v4225, %v4224
        %v4228 = vsel %vm440, %v4226, 0.0
        %4229 = vadd.xlane.f32.xlu0 %v4228
        %v4230 = vpop.xlane.xlu0 %4229
        %v4231 = vmul.f32 %v4230, %v1076
        %v4233 = vrot.slane %v4231, 1
        %v4234 = vrot.slane %v4231, 2
        %v4235 = vrot.slane %v4231, 3
        %v4236 = vrot.slane %v4231, 4
        %v4237 = vrot.slane %v4231, 5
        %v4238 = vrot.slane %v4231, 6
        %v4239 = vrot.slane %v4231, 7
        %v4248 = vsub.f32 %v4195, %v4231
        %v4249 = vsub.f32 %v4196, %v4233
        %v4250 = vsub.f32 %v4197, %v4234
        %v4251 = vsub.f32 %v4198, %v4235
        %v4252 = vsub.f32 %v4199, %v4236
        %v4253 = vsub.f32 %v4200, %v4237
        %v4254 = vsub.f32 %v4201, %v4238
        %v4255 = vsub.f32 %v4202, %v4239
        %v4256 = vmul.f32 %v4248, %v4248
        %v4257 = vmul.f32 %v4249, %v4249
        %v4258 = vmul.f32 %v4250, %v4250
        %v4259 = vmul.f32 %v4251, %v4251
        %v4260 = vmul.f32 %v4252, %v4252
        %v4261 = vmul.f32 %v4253, %v4253
        %v4262 = vmul.f32 %v4254, %v4254
        %v4263 = vmul.f32 %v4255, %v4255
        %v4272 = vrot.slane %v4257, 7
        %v4273 = vsel %vm420, %v4272, %v4256
        %v4274 = vrot.slane %v4258, 6
        %v4275 = vsel %vm423, %v4274, %v4273
        %v4276 = vrot.slane %v4259, 5
        %v4277 = vsel %vm426, %v4276, %v4275
        %v4278 = vrot.slane %v4260, 4
        %v4279 = vsel %vm429, %v4278, %v4277
        %v4280 = vrot.slane %v4261, 3
        %v4281 = vsel %vm432, %v4280, %v4279
        %v4282 = vrot.slane %v4262, 2
        %v4283 = vsel %vm435, %v4282, %v4281
        %v4284 = vrot.slane %v4263, 1
        %v4285 = vsel %vm438, %v4284, %v4283
        %v4287 = vsel %vm440, %v4285, 0.0
        %4288 = vadd.xlane.f32.xlu0 %v4287
        %v4289 = vpop.xlane.xlu0 %4288
        %v4290 = vmul.f32 %v4289, %v1076
        %v4291 = vadd.f32 %v4290, 1e-05
        %v4292 = vrsqrt.pop %v4291
        %v4293 = vmul.f32 %v4292, %v4291
        %v4294 = vmul.f32 %v4293, %v4292
        %v4295 = vmul.f32 0.5, %v4294
        %v4296 = vsub.f32 1.5, %v4295
        %v4297 = vmul.f32 %v4292, %v4296
        %vm4298 = vweird.f32 %v4291
        %vm4299 = vweird.f32 %v4292
        %vm4300 = vmor %vm4298, %vm4299
        %v4301 = vsel %vm4300, %v4292, %v4297
        %v4303 = vrot.slane %v4301, 1
        %v4304 = vrot.slane %v4301, 2
        %v4305 = vrot.slane %v4301, 3
        %v4306 = vrot.slane %v4301, 4
        %v4307 = vrot.slane %v4301, 5
        %v4308 = vrot.slane %v4301, 6
        %v4309 = vrot.slane %v4301, 7
        %v4318 = vmul.f32 %v4248, %v4301
        %v4319 = vmul.f32 %v4249, %v4303
        %v4320 = vmul.f32 %v4250, %v4304
        %v4321 = vmul.f32 %v4251, %v4305
        %v4322 = vmul.f32 %v4252, %v4306
        %v4323 = vmul.f32 %v4253, %v4307
        %v4324 = vmul.f32 %v4254, %v4308
        %v4325 = vmul.f32 %v4255, %v4309
        %v4326 = vperm.slane %v4203, 0
        %v4327 = vmul.f32 %v4318, %v4326
        %v4328 = vmul.f32 %v4319, %v4326
        %v4329 = vmul.f32 %v4320, %v4326
        %v4330 = vmul.f32 %v4321, %v4326
        %v4331 = vmul.f32 %v4322, %v4326
        %v4332 = vmul.f32 %v4323, %v4326
        %v4333 = vmul.f32 %v4324, %v4326
        %v4334 = vmul.f32 %v4325, %v4326
        %v4335 = vperm.slane %v4204, 0
        %v4336 = vadd.f32 %v4327, %v4335
        %v4337 = vadd.f32 %v4328, %v4335
        %v4338 = vadd.f32 %v4329, %v4335
        %v4339 = vadd.f32 %v4330, %v4335
        %v4340 = vadd.f32 %v4331, %v4335
        %v4341 = vadd.f32 %v4332, %v4335
        %v4342 = vadd.f32 %v4333, %v4335
        %v4343 = vadd.f32 %v4334, %v4335
        %v4344 = vld [vmem:[#allocation6 + $0x568] sm:$0xff]
        %v4345 = vld [vmem:[#allocation6 + $0x570] sm:$0xff]
        %v4346 = vld [vmem:[#allocation6 + $0x578] sm:$0xff]
        %v4347 = vld [vmem:[#allocation6 + $0x580] sm:$0xff]
        %v4348 = vld [vmem:[#allocation6 + $0x588] sm:$0xff]
        %v4349 = vld [vmem:[#allocation6 + $0x590] sm:$0xff]
        %v4350 = vld [vmem:[#allocation6 + $0x598] sm:$0xff]
        %v4351 = vld [vmem:[#allocation6 + $0x5a0] sm:$0xff]
        %v4352 = vld [vmem:[#allocation6 + $0x5a8] sm:$0xff]
        %v4353 = vld [vmem:[#allocation6 + $0x5b0] sm:$0xff]
        %v4354 = vld [vmem:[#allocation6 + $0x5b8] sm:$0xff]
        %v4355 = vld [vmem:[#allocation6 + $0x5c0] sm:$0xff]
        %v4356 = vld [vmem:[#allocation6 + $0x5c8] sm:$0xff]
        %v4357 = vld [vmem:[#allocation6 + $0x5d0] sm:$0xff]
        %v4358 = vld [vmem:[#allocation6 + $0x5d8] sm:$0xff]
        %v4359 = vld [vmem:[#allocation6 + $0x5e0] sm:$0xff]
        %v4360 = vld [vmem:[#allocation6 + $0x5e8] sm:$0xff]
        %v4361 = vld [vmem:[#allocation6 + $0x5f0] sm:$0xff]
        %v4362 = vld [vmem:[#allocation6 + $0x5f8] sm:$0xff]
        %v4363 = vld [vmem:[#allocation6 + $0x600] sm:$0xff]
        %v4364 = vld [vmem:[#allocation6 + $0x608] sm:$0xff]
        %v4365 = vld [vmem:[#allocation6 + $0x610] sm:$0xff]
        %v4366 = vld [vmem:[#allocation6 + $0x618] sm:$0xff]
        %v4367 = vld [vmem:[#allocation6 + $0x620] sm:$0xff]
        %v4376 = vrot.slane %v4337, 7
        %v4377 = vsel %vm420, %v4376, %v4336
        %v4378 = vrot.slane %v4338, 6
        %v4379 = vsel %vm423, %v4378, %v4377
        %v4380 = vrot.slane %v4339, 5
        %v4381 = vsel %vm426, %v4380, %v4379
        %v4382 = vrot.slane %v4340, 4
        %v4383 = vsel %vm429, %v4382, %v4381
        %v4384 = vrot.slane %v4341, 3
        %v4385 = vsel %vm432, %v4384, %v4383
        %v4386 = vrot.slane %v4342, 2
        %v4387 = vsel %vm435, %v4386, %v4385
        %v4388 = vrot.slane %v4343, 1
        %v4389 = vsel %vm438, %v4388, %v4387
        %v4391 = vsel %vm440, %v4344, 0
        %v4394 = vsel %vm440, %v4345, 0
        %v4397 = vsel %vm440, %v4346, 0
        %v4400 = vsel %vm440, %v4347, 0
        %v4403 = vsel %vm440, %v4348, 0
        %v4406 = vsel %vm440, %v4349, 0
        %v4409 = vsel %vm440, %v4350, 0
        %v4412 = vsel %vm440, %v4351, 0
        %v4415 = vsel %vm440, %v4352, 0
        %v4418 = vsel %vm440, %v4353, 0
        %v4421 = vsel %vm440, %v4354, 0
        %v4424 = vsel %vm440, %v4355, 0
        %v4426 = vsel %vm440, %v4389, 0
        %4428 = vmatpush.xpose.msra.mxu0 0.0
        %4429 = vmatpush.xpose.msra.mxu0 0.0
        %4430 = vmatpush.xpose.msra.mxu0 0.0
        %4431 = vmatpush.xpose.msra.mxu0 0.0
        %4432 = vmatpush.xpose.msra.mxu0 0.0
        %4433 = vmatpush.xpose.msra.mxu0 0.0
        %4434 = vmatpush.xpose.msra.mxu0 0.0
        %4435 = vmatpush.xpose.msra.mxu0 0.0
        %4436 = vmatpush.xpose.msra.mxu0 0.0
        %4437 = vmatpush.xpose.msra.mxu0 0.0
        %4438 = vmatpush.xpose.msra.mxu0 0.0
        %4439 = vmatpush.xpose.msra.mxu0 0.0
        %4440 = vmatpush.xpose.msra.mxu0 0.0
        %4441 = vmatpush.xpose.msra.mxu0 0.0
        %4442 = vmatpush.xpose.msra.mxu0 0.0
        %4443 = vmatpush.xpose.msra.mxu0 %v4426
        %4444 = vmatmul.f32.gmra.mxu0 %v4391
        %v4445 = vpop.f32.mrf.mxu0
        %v4446 = vadd.f32 %v4356, %v4445
        %4447 = vmatmul.f32.gmra.mxu0 %v4394
        %v4448 = vpop.f32.mrf.mxu0
        %v4449 = vadd.f32 %v4357, %v4448
        %4450 = vmatmul.f32.gmra.mxu0 %v4397
        %v4451 = vpop.f32.mrf.mxu0
        %v4452 = vadd.f32 %v4358, %v4451
        %4453 = vmatmul.f32.gmra.mxu0 %v4400
        %v4454 = vpop.f32.mrf.mxu0
        %v4455 = vadd.f32 %v4359, %v4454
        %4456 = vmatmul.f32.gmra.mxu0 %v4403
        %v4457 = vpop.f32.mrf.mxu0
        %v4458 = vadd.f32 %v4360, %v4457
        %4459 = vmatmul.f32.gmra.mxu0 %v4406
        %v4460 = vpop.f32.mrf.mxu0
        %v4461 = vadd.f32 %v4361, %v4460
        %4462 = vmatmul.f32.gmra.mxu0 %v4409
        %v4463 = vpop.f32.mrf.mxu0
        %v4464 = vadd.f32 %v4362, %v4463
        %4465 = vmatmul.f32.gmra.mxu0 %v4412
        %v4466 = vpop.f32.mrf.mxu0
        %v4467 = vadd.f32 %v4363, %v4466
        %4468 = vmatmul.f32.gmra.mxu0 %v4415
        %v4469 = vpop.f32.mrf.mxu0
        %v4470 = vadd.f32 %v4364, %v4469
        %4471 = vmatmul.f32.gmra.mxu0 %v4418
        %v4472 = vpop.f32.mrf.mxu0
        %v4473 = vadd.f32 %v4365, %v4472
        %4474 = vmatmul.f32.gmra.mxu0 %v4421
        %v4475 = vpop.f32.mrf.mxu0
        %v4476 = vadd.f32 %v4366, %v4475
        %4477 = vmatmul.f32.gmra.mxu0 %v4424
        %v4478 = vpop.f32.mrf.mxu0
        %v4479 = vadd.f32 %v4367, %v4478
        %4480 = vdwg.mxu0
        %4481 = vxpose.xlu0.b32.start [1/16] %v4446, 128
        %4482 = vxpose.xlu0.b32.cont [2/16] 0.0, 128
        %4483 = vxpose.xlu0.b32.cont [3/16] 0.0, 128
        %4484 = vxpose.xlu0.b32.cont [4/16] 0.0, 128
        %4485 = vxpose.xlu0.b32.cont [5/16] 0.0, 128
        %4486 = vxpose.xlu0.b32.cont [6/16] 0.0, 128
        %4487 = vxpose.xlu0.b32.cont [7/16] 0.0, 128
        %4488 = vxpose.xlu0.b32.cont [8/16] 0.0, 128
        %4489 = vxpose.xlu0.b32.cont [9/16] 0.0, 128
        %4490 = vxpose.xlu0.b32.cont [10/16] 0.0, 128
        %4491 = vxpose.xlu0.b32.cont [11/16] 0.0, 128
        %4492 = vxpose.xlu0.b32.cont [12/16] 0.0, 128
        %4493 = vxpose.xlu0.b32.cont [13/16] 0.0, 128
        %4494 = vxpose.xlu0.b32.cont [14/16] 0.0, 128
        %4495 = vxpose.xlu0.b32.cont [15/16] 0.0, 128
        %4496 = vxpose.xlu0.b32.end [16/16] 0.0, 128
        %v4497 = vpop.trf.xlu0
        %v4498 = vpop.trf.xlu0
        %v4499 = vpop.trf.xlu0
        %v4500 = vpop.trf.xlu0
        %v4501 = vpop.trf.xlu0
        %v4502 = vpop.trf.xlu0
        %v4503 = vpop.trf.xlu0
        %v4504 = vpop.trf.xlu0
        %v4505 = vpop.trf.xlu0
        %v4506 = vpop.trf.xlu0
        %v4507 = vpop.trf.xlu0
        %v4508 = vpop.trf.xlu0
        %v4509 = vpop.trf.xlu0
        %v4510 = vpop.trf.xlu0
        %v4511 = vpop.trf.xlu0
        %v4512 = vpop.trf.xlu0
        %v4514 = vsel %vm564, %v4497, 0
        %4516 = vmatpush.msra.mxu0 0.0
        %4517 = vmatpush.msra.mxu0 0.0
        %4518 = vmatpush.msra.mxu0 0.0
        %4519 = vmatpush.msra.mxu0 0.0
        %4520 = vmatpush.msra.mxu0 0.0
        %4521 = vmatpush.msra.mxu0 0.0
        %4522 = vmatpush.msra.mxu0 0.0
        %4523 = vmatpush.msra.mxu0 0.0
        %4524 = vmatpush.msra.mxu0 0.0
        %4525 = vmatpush.msra.mxu0 0.0
        %4526 = vmatpush.msra.mxu0 0.0
        %4527 = vmatpush.msra.mxu0 0.0
        %4528 = vmatpush.msra.mxu0 0.0
        %4529 = vmatpush.msra.mxu0 0.0
        %4530 = vmatpush.msra.mxu0 0.0
        %4531 = vmatpush.msra.mxu0 %v4458
        %4532 = vmatmul.f32.gmra.mxu0 %v4514
        %v4533 = vpop.f32.mrf.mxu0
        %v4534 = vadd.f32 0.0, %v4533
        %4535 = vdwg.mxu0
        %v4536 = vmul.f32 %v4534, 0.35355338
        %v4537 = vadd.f32 %v4536, %v386
        %v4538 = vsel %vm564, %v4537, -inf
        %4539 = vmax.xlane.f32.xlu0 %v4538
        %v4540 = vpop.xlane.xlu0 %4539
        %v4541 = vsub.f32 %v4537, %v4540
        %v4542 = vmul.f32 %v4541, 1.442695
        %v4543 = vpow.pop %v4542
        %v4544 = vsel %vm564, %v4543, 0.0
        %4545 = vadd.xlane.f32.xlu0 %v4544
        %v4546 = vpop.xlane.xlu0 %4545
        %v4547 = vrcp.pop %v4546
        %v4548 = vmul.f32 %v4546, %v4547
        %v4549 = vsub.f32 1.0, %v4548
        %v4550 = vmul.f32 %v4547, %v4549
        %v4551 = vadd.f32 %v4547, %v4550
        %vm4552 = vweird.f32 %v4546
        %vm4553 = vweird.f32 %v4547
        %vm4554 = vmor %vm4552, %vm4553
        %v4555 = vsel %vm4554, %v4547, %v4551
        %v4556 = vand.u32 2147483647, %v4546
        %vm4557 = vcmp.eq.f32.partialorder %v4556, 8.507059e+37
        %v4558 = vand.u32 %v4546, 2147483648
        %v4559 = vor.u32 1.1754944e-38, %v4558
        %v4560 = vsel %vm4557, %v4559, %v4555
        %v4561 = vmul.f32 %v4543, %v4560
        %v4563 = vsel %vm564, %v4470, 0
        %v4566 = vsel %vm564, %v4561, 0
        %4568 = vmatpush.xpose.msra.mxu0 0.0
        %4569 = vmatpush.xpose.msra.mxu0 0.0
        %4570 = vmatpush.xpose.msra.mxu0 0.0
        %4571 = vmatpush.xpose.msra.mxu0 0.0
        %4572 = vmatpush.xpose.msra.mxu0 0.0
        %4573 = vmatpush.xpose.msra.mxu0 0.0
        %4574 = vmatpush.xpose.msra.mxu0 0.0
        %4575 = vmatpush.xpose.msra.mxu0 0.0
        %4576 = vmatpush.xpose.msra.mxu0 0.0
        %4577 = vmatpush.xpose.msra.mxu0 0.0
        %4578 = vmatpush.xpose.msra.mxu0 0.0
        %4579 = vmatpush.xpose.msra.mxu0 0.0
        %4580 = vmatpush.xpose.msra.mxu0 0.0
        %4581 = vmatpush.xpose.msra.mxu0 0.0
        %4582 = vmatpush.xpose.msra.mxu0 0.0
        %4583 = vmatpush.xpose.msra.mxu0 %v4566
        %4584 = vmatmul.f32.gmra.mxu0 %v4563
        %v4585 = vpop.f32.mrf.mxu0
        %v4586 = vadd.f32 0.0, %v4585
        %4587 = vdwg.mxu0
        %4588 = vxpose.xlu0.b32.start [1/16] %v4449, 128
        %4589 = vxpose.xlu0.b32.cont [2/16] 0.0, 128
        %4590 = vxpose.xlu0.b32.cont [3/16] 0.0, 128
        %4591 = vxpose.xlu0.b32.cont [4/16] 0.0, 128
        %4592 = vxpose.xlu0.b32.cont [5/16] 0.0, 128
        %4593 = vxpose.xlu0.b32.cont [6/16] 0.0, 128
        %4594 = vxpose.xlu0.b32.cont [7/16] 0.0, 128
        %4595 = vxpose.xlu0.b32.cont [8/16] 0.0, 128
        %4596 = vxpose.xlu0.b32.cont [9/16] 0.0, 128
        %4597 = vxpose.xlu0.b32.cont [10/16] 0.0, 128
        %4598 = vxpose.xlu0.b32.cont [11/16] 0.0, 128
        %4599 = vxpose.xlu0.b32.cont [12/16] 0.0, 128
        %4600 = vxpose.xlu0.b32.cont [13/16] 0.0, 128
        %4601 = vxpose.xlu0.b32.cont [14/16] 0.0, 128
        %4602 = vxpose.xlu0.b32.cont [15/16] 0.0, 128
        %4603 = vxpose.xlu0.b32.end [16/16] 0.0, 128
        %v4604 = vpop.trf.xlu0
        %v4605 = vpop.trf.xlu0
        %v4606 = vpop.trf.xlu0
        %v4607 = vpop.trf.xlu0
        %v4608 = vpop.trf.xlu0
        %v4609 = vpop.trf.xlu0
        %v4610 = vpop.trf.xlu0
        %v4611 = vpop.trf.xlu0
        %v4612 = vpop.trf.xlu0
        %v4613 = vpop.trf.xlu0
        %v4614 = vpop.trf.xlu0
        %v4615 = vpop.trf.xlu0
        %v4616 = vpop.trf.xlu0
        %v4617 = vpop.trf.xlu0
        %v4618 = vpop.trf.xlu0
        %v4619 = vpop.trf.xlu0
        %v4621 = vsel %vm564, %v4604, 0
        %4623 = vmatpush.msra.mxu0 0.0
        %4624 = vmatpush.msra.mxu0 0.0
        %4625 = vmatpush.msra.mxu0 0.0
        %4626 = vmatpush.msra.mxu0 0.0
        %4627 = vmatpush.msra.mxu0 0.0
        %4628 = vmatpush.msra.mxu0 0.0
        %4629 = vmatpush.msra.mxu0 0.0
        %4630 = vmatpush.msra.mxu0 0.0
        %4631 = vmatpush.msra.mxu0 0.0
        %4632 = vmatpush.msra.mxu0 0.0
        %4633 = vmatpush.msra.mxu0 0.0
        %4634 = vmatpush.msra.mxu0 0.0
        %4635 = vmatpush.msra.mxu0 0.0
        %4636 = vmatpush.msra.mxu0 0.0
        %4637 = vmatpush.msra.mxu0 0.0
        %4638 = vmatpush.msra.mxu0 %v4461
        %4639 = vmatmul.f32.gmra.mxu0 %v4621
        %v4640 = vpop.f32.mrf.mxu0
        %v4641 = vadd.f32 0.0, %v4640
        %4642 = vdwg.mxu0
        %v4643 = vmul.f32 %v4641, 0.35355338
        %v4644 = vadd.f32 %v4643, %v386
        %v4645 = vsel %vm564, %v4644, -inf
        %4646 = vmax.xlane.f32.xlu0 %v4645
        %v4647 = vpop.xlane.xlu0 %4646
        %v4648 = vsub.f32 %v4644, %v4647
        %v4649 = vmul.f32 %v4648, 1.442695
        %v4650 = vpow.pop %v4649
        %v4651 = vsel %vm564, %v4650, 0.0
        %4652 = vadd.xlane.f32.xlu0 %v4651
        %v4653 = vpop.xlane.xlu0 %4652
        %v4654 = vrcp.pop %v4653
        %v4655 = vmul.f32 %v4653, %v4654
        %v4656 = vsub.f32 1.0, %v4655
        %v4657 = vmul.f32 %v4654, %v4656
        %v4658 = vadd.f32 %v4654, %v4657
        %vm4659 = vweird.f32 %v4653
        %vm4660 = vweird.f32 %v4654
        %vm4661 = vmor %vm4659, %vm4660
        %v4662 = vsel %vm4661, %v4654, %v4658
        %v4663 = vand.u32 2147483647, %v4653
        %vm4664 = vcmp.eq.f32.partialorder %v4663, 8.507059e+37
        %v4665 = vand.u32 %v4653, 2147483648
        %v4666 = vor.u32 1.1754944e-38, %v4665
        %v4667 = vsel %vm4664, %v4666, %v4662
        %v4668 = vmul.f32 %v4650, %v4667
        %v4670 = vsel %vm564, %v4473, 0
        %v4673 = vsel %vm564, %v4668, 0
        %4675 = vmatpush.xpose.msra.mxu0 0.0
        %4676 = vmatpush.xpose.msra.mxu0 0.0
        %4677 = vmatpush.xpose.msra.mxu0 0.0
        %4678 = vmatpush.xpose.msra.mxu0 0.0
        %4679 = vmatpush.xpose.msra.mxu0 0.0
        %4680 = vmatpush.xpose.msra.mxu0 0.0
        %4681 = vmatpush.xpose.msra.mxu0 0.0
        %4682 = vmatpush.xpose.msra.mxu0 0.0
        %4683 = vmatpush.xpose.msra.mxu0 0.0
        %4684 = vmatpush.xpose.msra.mxu0 0.0
        %4685 = vmatpush.xpose.msra.mxu0 0.0
        %4686 = vmatpush.xpose.msra.mxu0 0.0
        %4687 = vmatpush.xpose.msra.mxu0 0.0
        %4688 = vmatpush.xpose.msra.mxu0 0.0
        %4689 = vmatpush.xpose.msra.mxu0 0.0
        %4690 = vmatpush.xpose.msra.mxu0 %v4673
        %4691 = vmatmul.f32.gmra.mxu0 %v4670
        %v4692 = vpop.f32.mrf.mxu0
        %v4693 = vadd.f32 0.0, %v4692
        %4694 = vdwg.mxu0
        %4695 = vxpose.xlu0.b32.start [1/16] %v4452, 128
        %4696 = vxpose.xlu0.b32.cont [2/16] 0.0, 128
        %4697 = vxpose.xlu0.b32.cont [3/16] 0.0, 128
        %4698 = vxpose.xlu0.b32.cont [4/16] 0.0, 128
        %4699 = vxpose.xlu0.b32.cont [5/16] 0.0, 128
        %4700 = vxpose.xlu0.b32.cont [6/16] 0.0, 128
        %4701 = vxpose.xlu0.b32.cont [7/16] 0.0, 128
        %4702 = vxpose.xlu0.b32.cont [8/16] 0.0, 128
        %4703 = vxpose.xlu0.b32.cont [9/16] 0.0, 128
        %4704 = vxpose.xlu0.b32.cont [10/16] 0.0, 128
        %4705 = vxpose.xlu0.b32.cont [11/16] 0.0, 128
        %4706 = vxpose.xlu0.b32.cont [12/16] 0.0, 128
        %4707 = vxpose.xlu0.b32.cont [13/16] 0.0, 128
        %4708 = vxpose.xlu0.b32.cont [14/16] 0.0, 128
        %4709 = vxpose.xlu0.b32.cont [15/16] 0.0, 128
        %4710 = vxpose.xlu0.b32.end [16/16] 0.0, 128
        %v4711 = vpop.trf.xlu0
        %v4712 = vpop.trf.xlu0
        %v4713 = vpop.trf.xlu0
        %v4714 = vpop.trf.xlu0
        %v4715 = vpop.trf.xlu0
        %v4716 = vpop.trf.xlu0
        %v4717 = vpop.trf.xlu0
        %v4718 = vpop.trf.xlu0
        %v4719 = vpop.trf.xlu0
        %v4720 = vpop.trf.xlu0
        %v4721 = vpop.trf.xlu0
        %v4722 = vpop.trf.xlu0
        %v4723 = vpop.trf.xlu0
        %v4724 = vpop.trf.xlu0
        %v4725 = vpop.trf.xlu0
        %v4726 = vpop.trf.xlu0
        %v4728 = vsel %vm564, %v4711, 0
        %4730 = vmatpush.msra.mxu0 0.0
        %4731 = vmatpush.msra.mxu0 0.0
        %4732 = vmatpush.msra.mxu0 0.0
        %4733 = vmatpush.msra.mxu0 0.0
        %4734 = vmatpush.msra.mxu0 0.0
        %4735 = vmatpush.msra.mxu0 0.0
        %4736 = vmatpush.msra.mxu0 0.0
        %4737 = vmatpush.msra.mxu0 0.0
        %4738 = vmatpush.msra.mxu0 0.0
        %4739 = vmatpush.msra.mxu0 0.0
        %4740 = vmatpush.msra.mxu0 0.0
        %4741 = vmatpush.msra.mxu0 0.0
        %4742 = vmatpush.msra.mxu0 0.0
        %4743 = vmatpush.msra.mxu0 0.0
        %4744 = vmatpush.msra.mxu0 0.0
        %4745 = vmatpush.msra.mxu0 %v4464
        %4746 = vmatmul.f32.gmra.mxu0 %v4728
        %v4747 = vpop.f32.mrf.mxu0
        %v4748 = vadd.f32 0.0, %v4747
        %4749 = vdwg.mxu0
        %v4750 = vmul.f32 %v4748, 0.35355338
        %v4751 = vadd.f32 %v4750, %v386
        %v4752 = vsel %vm564, %v4751, -inf
        %4753 = vmax.xlane.f32.xlu0 %v4752
        %v4754 = vpop.xlane.xlu0 %4753
        %v4755 = vsub.f32 %v4751, %v4754
        %v4756 = vmul.f32 %v4755, 1.442695
        %v4757 = vpow.pop %v4756
        %v4758 = vsel %vm564, %v4757, 0.0
        %4759 = vadd.xlane.f32.xlu0 %v4758
        %v4760 = vpop.xlane.xlu0 %4759
        %v4761 = vrcp.pop %v4760
        %v4762 = vmul.f32 %v4760, %v4761
        %v4763 = vsub.f32 1.0, %v4762
        %v4764 = vmul.f32 %v4761, %v4763
        %v4765 = vadd.f32 %v4761, %v4764
        %vm4766 = vweird.f32 %v4760
        %vm4767 = vweird.f32 %v4761
        %vm4768 = vmor %vm4766, %vm4767
        %v4769 = vsel %vm4768, %v4761, %v4765
        %v4770 = vand.u32 2147483647, %v4760
        %vm4771 = vcmp.eq.f32.partialorder %v4770, 8.507059e+37
        %v4772 = vand.u32 %v4760, 2147483648
        %v4773 = vor.u32 1.1754944e-38, %v4772
        %v4774 = vsel %vm4771, %v4773, %v4769
        %v4775 = vmul.f32 %v4757, %v4774
        %v4777 = vsel %vm564, %v4476, 0
        %v4780 = vsel %vm564, %v4775, 0
        %4782 = vmatpush.xpose.msra.mxu0 0.0
        %4783 = vmatpush.xpose.msra.mxu0 0.0
        %4784 = vmatpush.xpose.msra.mxu0 0.0
        %4785 = vmatpush.xpose.msra.mxu0 0.0
        %4786 = vmatpush.xpose.msra.mxu0 0.0
        %4787 = vmatpush.xpose.msra.mxu0 0.0
        %4788 = vmatpush.xpose.msra.mxu0 0.0
        %4789 = vmatpush.xpose.msra.mxu0 0.0
        %4790 = vmatpush.xpose.msra.mxu0 0.0
        %4791 = vmatpush.xpose.msra.mxu0 0.0
        %4792 = vmatpush.xpose.msra.mxu0 0.0
        %4793 = vmatpush.xpose.msra.mxu0 0.0
        %4794 = vmatpush.xpose.msra.mxu0 0.0
        %4795 = vmatpush.xpose.msra.mxu0 0.0
        %4796 = vmatpush.xpose.msra.mxu0 0.0
        %4797 = vmatpush.xpose.msra.mxu0 %v4780
        %4798 = vmatmul.f32.gmra.mxu0 %v4777
        %v4799 = vpop.f32.mrf.mxu0
        %v4800 = vadd.f32 0.0, %v4799
        %4801 = vdwg.mxu0
        %4802 = vxpose.xlu0.b32.start [1/16] %v4455, 128
        %4803 = vxpose.xlu0.b32.cont [2/16] 0.0, 128
        %4804 = vxpose.xlu0.b32.cont [3/16] 0.0, 128
        %4805 = vxpose.xlu0.b32.cont [4/16] 0.0, 128
        %4806 = vxpose.xlu0.b32.cont [5/16] 0.0, 128
        %4807 = vxpose.xlu0.b32.cont [6/16] 0.0, 128
        %4808 = vxpose.xlu0.b32.cont [7/16] 0.0, 128
        %4809 = vxpose.xlu0.b32.cont [8/16] 0.0, 128
        %4810 = vxpose.xlu0.b32.cont [9/16] 0.0, 128
        %4811 = vxpose.xlu0.b32.cont [10/16] 0.0, 128
        %4812 = vxpose.xlu0.b32.cont [11/16] 0.0, 128
        %4813 = vxpose.xlu0.b32.cont [12/16] 0.0, 128
        %4814 = vxpose.xlu0.b32.cont [13/16] 0.0, 128
        %4815 = vxpose.xlu0.b32.cont [14/16] 0.0, 128
        %4816 = vxpose.xlu0.b32.cont [15/16] 0.0, 128
        %4817 = vxpose.xlu0.b32.end [16/16] 0.0, 128
        %v4818 = vpop.trf.xlu0
        %v4819 = vpop.trf.xlu0
        %v4820 = vpop.trf.xlu0
        %v4821 = vpop.trf.xlu0
        %v4822 = vpop.trf.xlu0
        %v4823 = vpop.trf.xlu0
        %v4824 = vpop.trf.xlu0
        %v4825 = vpop.trf.xlu0
        %v4826 = vpop.trf.xlu0
        %v4827 = vpop.trf.xlu0
        %v4828 = vpop.trf.xlu0
        %v4829 = vpop.trf.xlu0
        %v4830 = vpop.trf.xlu0
        %v4831 = vpop.trf.xlu0
        %v4832 = vpop.trf.xlu0
        %v4833 = vpop.trf.xlu0
        %v4835 = vsel %vm564, %v4818, 0
        %4837 = vmatpush.msra.mxu0 0.0
        %4838 = vmatpush.msra.mxu0 0.0
        %4839 = vmatpush.msra.mxu0 0.0
        %4840 = vmatpush.msra.mxu0 0.0
        %4841 = vmatpush.msra.mxu0 0.0
        %4842 = vmatpush.msra.mxu0 0.0
        %4843 = vmatpush.msra.mxu0 0.0
        %4844 = vmatpush.msra.mxu0 0.0
        %4845 = vmatpush.msra.mxu0 0.0
        %4846 = vmatpush.msra.mxu0 0.0
        %4847 = vmatpush.msra.mxu0 0.0
        %4848 = vmatpush.msra.mxu0 0.0
        %4849 = vmatpush.msra.mxu0 0.0
        %4850 = vmatpush.msra.mxu0 0.0
        %4851 = vmatpush.msra.mxu0 0.0
        %4852 = vmatpush.msra.mxu0 %v4467
        %4853 = vmatmul.f32.gmra.mxu0 %v4835
        %v4854 = vpop.f32.mrf.mxu0
        %v4855 = vadd.f32 0.0, %v4854
        %4856 = vdwg.mxu0
        %v4857 = vmul.f32 %v4855, 0.35355338
        %v4858 = vadd.f32 %v4857, %v386
        %v4859 = vsel %vm564, %v4858, -inf
        %4860 = vmax.xlane.f32.xlu0 %v4859
        %v4861 = vpop.xlane.xlu0 %4860
        %v4862 = vsub.f32 %v4858, %v4861
        %v4863 = vmul.f32 %v4862, 1.442695
        %v4864 = vpow.pop %v4863
        %v4865 = vsel %vm564, %v4864, 0.0
        %4866 = vadd.xlane.f32.xlu0 %v4865
        %v4867 = vpop.xlane.xlu0 %4866
        %v4868 = vrcp.pop %v4867
        %v4869 = vmul.f32 %v4867, %v4868
        %v4870 = vsub.f32 1.0, %v4869
        %v4871 = vmul.f32 %v4868, %v4870
        %v4872 = vadd.f32 %v4868, %v4871
        %vm4873 = vweird.f32 %v4867
        %vm4874 = vweird.f32 %v4868
        %vm4875 = vmor %vm4873, %vm4874
        %v4876 = vsel %vm4875, %v4868, %v4872
        %v4877 = vand.u32 2147483647, %v4867
        %vm4878 = vcmp.eq.f32.partialorder %v4877, 8.507059e+37
        %v4879 = vand.u32 %v4867, 2147483648
        %v4880 = vor.u32 1.1754944e-38, %v4879
        %v4881 = vsel %vm4878, %v4880, %v4876
        %v4882 = vmul.f32 %v4864, %v4881
        %v4884 = vsel %vm564, %v4479, 0
        %v4887 = vsel %vm564, %v4882, 0
        %4889 = vmatpush.xpose.msra.mxu0 0.0
        %4890 = vmatpush.xpose.msra.mxu0 0.0
        %4891 = vmatpush.xpose.msra.mxu0 0.0
        %4892 = vmatpush.xpose.msra.mxu0 0.0
        %4893 = vmatpush.xpose.msra.mxu0 0.0
        %4894 = vmatpush.xpose.msra.mxu0 0.0
        %4895 = vmatpush.xpose.msra.mxu0 0.0
        %4896 = vmatpush.xpose.msra.mxu0 0.0
        %4897 = vmatpush.xpose.msra.mxu0 0.0
        %4898 = vmatpush.xpose.msra.mxu0 0.0
        %4899 = vmatpush.xpose.msra.mxu0 0.0
        %4900 = vmatpush.xpose.msra.mxu0 0.0
        %4901 = vmatpush.xpose.msra.mxu0 0.0
        %4902 = vmatpush.xpose.msra.mxu0 0.0
        %4903 = vmatpush.xpose.msra.mxu0 0.0
        %4904 = vmatpush.xpose.msra.mxu0 %v4887
        %4905 = vmatmul.f32.gmra.mxu0 %v4884
        %v4906 = vpop.f32.mrf.mxu0
        %v4907 = vadd.f32 0.0, %v4906
        %4908 = vdwg.mxu0
        %v4909 = vld [vmem:[#allocation6 + $0x628] sm:$0xff]
        %v4910 = vld [vmem:[#allocation6 + $0x630] sm:$0xff]
        %v4911 = vld [vmem:[#allocation6 + $0x638] sm:$0xff]
        %v4912 = vld [vmem:[#allocation6 + $0x640] sm:$0xff]
        %v4913 = vld [vmem:[#allocation6 + $0x648] sm:$0x1]
        %v4914 = vperm.slane %v4913, 0
        %4915 = vxpose.xlu0.b32.start [1/16] %v4586, 128
        %4916 = vxpose.xlu0.b32.cont [2/16] %v4693, 128
        %4917 = vxpose.xlu0.b32.cont [3/16] %v4800, 128
        %4918 = vxpose.xlu0.b32.cont [4/16] %v4907, 128
        %4919 = vxpose.xlu0.b32.cont [5/16] 0.0, 128
        %4920 = vxpose.xlu0.b32.cont [6/16] 0.0, 128
        %4921 = vxpose.xlu0.b32.cont [7/16] 0.0, 128
        %4922 = vxpose.xlu0.b32.cont [8/16] 0.0, 128
        %4923 = vxpose.xlu0.b32.cont [9/16] 0.0, 128
        %4924 = vxpose.xlu0.b32.cont [10/16] 0.0, 128
        %4925 = vxpose.xlu0.b32.cont [11/16] 0.0, 128
        %4926 = vxpose.xlu0.b32.cont [12/16] 0.0, 128
        %4927 = vxpose.xlu0.b32.cont [13/16] 0.0, 128
        %4928 = vxpose.xlu0.b32.cont [14/16] 0.0, 128
        %4929 = vxpose.xlu0.b32.cont [15/16] 0.0, 128
        %4930 = vxpose.xlu0.b32.end [16/16] 0.0, 128
        %v4931 = vpop.trf.xlu0
        %v4932 = vpop.trf.xlu0
        %v4933 = vpop.trf.xlu0
        %v4934 = vpop.trf.xlu0
        %v4935 = vpop.trf.xlu0
        %v4936 = vpop.trf.xlu0
        %v4937 = vpop.trf.xlu0
        %v4938 = vpop.trf.xlu0
        %v4939 = vpop.trf.xlu0
        %v4940 = vpop.trf.xlu0
        %v4941 = vpop.trf.xlu0
        %v4942 = vpop.trf.xlu0
        %v4943 = vpop.trf.xlu0
        %v4944 = vpop.trf.xlu0
        %v4945 = vpop.trf.xlu0
        %v4946 = vpop.trf.xlu0
        %v4948 = vsel %vm440, %v4931, 0
        %4950 = vmatpush.msra.mxu0 0.0
        %4951 = vmatpush.msra.mxu0 0.0
        %4952 = vmatpush.msra.mxu0 0.0
        %4953 = vmatpush.msra.mxu0 0.0
        %4954 = vmatpush.msra.mxu0 0.0
        %4955 = vmatpush.msra.mxu0 0.0
        %4956 = vmatpush.msra.mxu0 0.0
        %4957 = vmatpush.msra.mxu0 0.0
        %4958 = vmatpush.msra.mxu0 0.0
        %4959 = vmatpush.msra.mxu0 0.0
        %4960 = vmatpush.msra.mxu0 0.0
        %4961 = vmatpush.msra.mxu0 0.0
        %4962 = vmatpush.msra.mxu0 %v4912
        %4963 = vmatpush.msra.mxu0 %v4911
        %4964 = vmatpush.msra.mxu0 %v4910
        %4965 = vmatpush.msra.mxu0 %v4909
        %4966 = vmatmul.f32.gmra.mxu0 %v4948
        %v4967 = vpop.f32.mrf.mxu0
        %v4968 = vadd.f32 %v4914, %v4967
        %4969 = vdwg.mxu0
        %v4971 = vrot.slane %v4968, 1
        %v4972 = vrot.slane %v4968, 2
        %v4973 = vrot.slane %v4968, 3
        %v4974 = vrot.slane %v4968, 4
        %v4975 = vrot.slane %v4968, 5
        %v4976 = vrot.slane %v4968, 6
        %v4977 = vrot.slane %v4968, 7
        %v4986 = vadd.f32 %v4336, %v4968
        %v4987 = vadd.f32 %v4337, %v4971
        %v4988 = vadd.f32 %v4338, %v4972
        %v4989 = vadd.f32 %v4339, %v4973
        %v4990 = vadd.f32 %v4340, %v4974
        %v4991 = vadd.f32 %v4341, %v4975
        %v4992 = vadd.f32 %v4342, %v4976
        %v4993 = vadd.f32 %v4343, %v4977
        %v4994 = vld [vmem:[#allocation6 + $0x650] sm:$0x1]
        %v4995 = vld [vmem:[#allocation6 + $0x658] sm:$0x1]
        %v5004 = vrot.slane %v4987, 7
        %v5005 = vsel %vm420, %v5004, %v4986
        %v5006 = vrot.slane %v4988, 6
        %v5007 = vsel %vm423, %v5006, %v5005
        %v5008 = vrot.slane %v4989, 5
        %v5009 = vsel %vm426, %v5008, %v5007
        %v5010 = vrot.slane %v4990, 4
        %v5011 = vsel %vm429, %v5010, %v5009
        %v5012 = vrot.slane %v4991, 3
        %v5013 = vsel %vm432, %v5012, %v5011
        %v5014 = vrot.slane %v4992, 2
        %v5015 = vsel %vm435, %v5014, %v5013
        %v5016 = vrot.slane %v4993, 1
        %v5017 = vsel %vm438, %v5016, %v5015
        %v5019 = vsel %vm440, %v5017, 0.0
        %5020 = vadd.xlane.f32.xlu0 %v5019
        %v5021 = vpop.xlane.xlu0 %5020
        %v5022 = vmul.f32 %v5021, %v1076
        %v5024 = vrot.slane %v5022, 1
        %v5025 = vrot.slane %v5022, 2
        %v5026 = vrot.slane %v5022, 3
        %v5027 = vrot.slane %v5022, 4
        %v5028 = vrot.slane %v5022, 5
        %v5029 = vrot.slane %v5022, 6
        %v5030 = vrot.slane %v5022, 7
        %v5039 = vsub.f32 %v4986, %v5022
        %v5040 = vsub.f32 %v4987, %v5024
        %v5041 = vsub.f32 %v4988, %v5025
        %v5042 = vsub.f32 %v4989, %v5026
        %v5043 = vsub.f32 %v4990, %v5027
        %v5044 = vsub.f32 %v4991, %v5028
        %v5045 = vsub.f32 %v4992, %v5029
        %v5046 = vsub.f32 %v4993, %v5030
        %v5047 = vmul.f32 %v5039, %v5039
        %v5048 = vmul.f32 %v5040, %v5040
        %v5049 = vmul.f32 %v5041, %v5041
        %v5050 = vmul.f32 %v5042, %v5042
        %v5051 = vmul.f32 %v5043, %v5043
        %v5052 = vmul.f32 %v5044, %v5044
        %v5053 = vmul.f32 %v5045, %v5045
        %v5054 = vmul.f32 %v5046, %v5046
        %v5063 = vrot.slane %v5048, 7
        %v5064 = vsel %vm420, %v5063, %v5047
        %v5065 = vrot.slane %v5049, 6
        %v5066 = vsel %vm423, %v5065, %v5064
        %v5067 = vrot.slane %v5050, 5
        %v5068 = vsel %vm426, %v5067, %v5066
        %v5069 = vrot.slane %v5051, 4
        %v5070 = vsel %vm429, %v5069, %v5068
        %v5071 = vrot.slane %v5052, 3
        %v5072 = vsel %vm432, %v5071, %v5070
        %v5073 = vrot.slane %v5053, 2
        %v5074 = vsel %vm435, %v5073, %v5072
        %v5075 = vrot.slane %v5054, 1
        %v5076 = vsel %vm438, %v5075, %v5074
        %v5078 = vsel %vm440, %v5076, 0.0
        %5079 = vadd.xlane.f32.xlu0 %v5078
        %v5080 = vpop.xlane.xlu0 %5079
        %v5081 = vmul.f32 %v5080, %v1076
        %v5082 = vadd.f32 %v5081, 1e-05
        %v5083 = vrsqrt.pop %v5082
        %v5084 = vmul.f32 %v5083, %v5082
        %v5085 = vmul.f32 %v5084, %v5083
        %v5086 = vmul.f32 0.5, %v5085
        %v5087 = vsub.f32 1.5, %v5086
        %v5088 = vmul.f32 %v5083, %v5087
        %vm5089 = vweird.f32 %v5082
        %vm5090 = vweird.f32 %v5083
        %vm5091 = vmor %vm5089, %vm5090
        %v5092 = vsel %vm5091, %v5083, %v5088
        %v5094 = vrot.slane %v5092, 1
        %v5095 = vrot.slane %v5092, 2
        %v5096 = vrot.slane %v5092, 3
        %v5097 = vrot.slane %v5092, 4
        %v5098 = vrot.slane %v5092, 5
        %v5099 = vrot.slane %v5092, 6
        %v5100 = vrot.slane %v5092, 7
        %v5109 = vmul.f32 %v5039, %v5092
        %v5110 = vmul.f32 %v5040, %v5094
        %v5111 = vmul.f32 %v5041, %v5095
        %v5112 = vmul.f32 %v5042, %v5096
        %v5113 = vmul.f32 %v5043, %v5097
        %v5114 = vmul.f32 %v5044, %v5098
        %v5115 = vmul.f32 %v5045, %v5099
        %v5116 = vmul.f32 %v5046, %v5100
        %v5117 = vperm.slane %v4994, 0
        %v5118 = vmul.f32 %v5109, %v5117
        %v5119 = vmul.f32 %v5110, %v5117
        %v5120 = vmul.f32 %v5111, %v5117
        %v5121 = vmul.f32 %v5112, %v5117
        %v5122 = vmul.f32 %v5113, %v5117
        %v5123 = vmul.f32 %v5114, %v5117
        %v5124 = vmul.f32 %v5115, %v5117
        %v5125 = vmul.f32 %v5116, %v5117
        %v5126 = vperm.slane %v4995, 0
        %v5127 = vadd.f32 %v5118, %v5126
        %v5128 = vadd.f32 %v5119, %v5126
        %v5129 = vadd.f32 %v5120, %v5126
        %v5130 = vadd.f32 %v5121, %v5126
        %v5131 = vadd.f32 %v5122, %v5126
        %v5132 = vadd.f32 %v5123, %v5126
        %v5133 = vadd.f32 %v5124, %v5126
        %v5134 = vadd.f32 %v5125, %v5126
        %v5135 = vld [vmem:[#allocation6 + $0x660] sm:$0xff]
        %v5136 = vld [vmem:[#allocation6 + $0x668] sm:$0xff]
        %v5137 = vld [vmem:[#allocation6 + $0x670] sm:$0xff]
        %v5138 = vld [vmem:[#allocation6 + $0x678] sm:$0xff]
        %v5139 = vld [vmem:[#allocation6 + $0x6c0] sm:$0xff]
        %v5140 = vld [vmem:[#allocation6 + $0x6c8] sm:$0xff]
        %v5141 = vld [vmem:[#allocation6 + $0x6d0] sm:$0xff]
        %v5142 = vld [vmem:[#allocation6 + $0x6d8] sm:$0xff]
        %v5151 = vrot.slane %v5128, 7
        %v5152 = vsel %vm420, %v5151, %v5127
        %v5153 = vrot.slane %v5129, 6
        %v5154 = vsel %vm423, %v5153, %v5152
        %v5155 = vrot.slane %v5130, 5
        %v5156 = vsel %vm426, %v5155, %v5154
        %v5157 = vrot.slane %v5131, 4
        %v5158 = vsel %vm429, %v5157, %v5156
        %v5159 = vrot.slane %v5132, 3
        %v5160 = vsel %vm432, %v5159, %v5158
        %v5161 = vrot.slane %v5133, 2
        %v5162 = vsel %vm435, %v5161, %v5160
        %v5163 = vrot.slane %v5134, 1
        %v5164 = vsel %vm438, %v5163, %v5162
        %v5166 = vsel %vm440, %v5135, 0
        %v5169 = vsel %vm440, %v5136, 0
        %v5172 = vsel %vm440, %v5137, 0
        %v5175 = vsel %vm440, %v5138, 0
        %v5177 = vsel %vm440, %v5164, 0
        %5179 = vmatpush.xpose.msra.mxu0 0.0
        %5180 = vmatpush.xpose.msra.mxu0 0.0
        %5181 = vmatpush.xpose.msra.mxu0 0.0
        %5182 = vmatpush.xpose.msra.mxu0 0.0
        %5183 = vmatpush.xpose.msra.mxu0 0.0
        %5184 = vmatpush.xpose.msra.mxu0 0.0
        %5185 = vmatpush.xpose.msra.mxu0 0.0
        %5186 = vmatpush.xpose.msra.mxu0 0.0
        %5187 = vmatpush.xpose.msra.mxu0 0.0
        %5188 = vmatpush.xpose.msra.mxu0 0.0
        %5189 = vmatpush.xpose.msra.mxu0 0.0
        %5190 = vmatpush.xpose.msra.mxu0 0.0
        %5191 = vmatpush.xpose.msra.mxu0 0.0
        %5192 = vmatpush.xpose.msra.mxu0 0.0
        %5193 = vmatpush.xpose.msra.mxu0 0.0
        %5194 = vmatpush.xpose.msra.mxu0 %v5177
        %5195 = vmatmul.f32.gmra.mxu0 %v5166
        %v5196 = vpop.f32.mrf.mxu0
        %v5197 = vadd.f32 %v5139, %v5196
        %5198 = vmatmul.f32.gmra.mxu0 %v5169
        %v5199 = vpop.f32.mrf.mxu0
        %v5200 = vadd.f32 %v5140, %v5199
        %5201 = vmatmul.f32.gmra.mxu0 %v5172
        %v5202 = vpop.f32.mrf.mxu0
        %v5203 = vadd.f32 %v5141, %v5202
        %5204 = vmatmul.f32.gmra.mxu0 %v5175
        %v5205 = vpop.f32.mrf.mxu0
        %v5206 = vadd.f32 %v5142, %v5205
        %5207 = vdwg.mxu0
        %v5208 = vld [vmem:[#allocation6 + $0x680] sm:$0xff]
        %v5209 = vld [vmem:[#allocation6 + $0x688] sm:$0xff]
        %v5210 = vld [vmem:[#allocation6 + $0x690] sm:$0xff]
        %v5211 = vld [vmem:[#allocation6 + $0x698] sm:$0xff]
        %v5212 = vld [vmem:[#allocation6 + $0x6a0] sm:$0xff]
        %v5213 = vld [vmem:[#allocation6 + $0x6a8] sm:$0xff]
        %v5214 = vld [vmem:[#allocation6 + $0x6b0] sm:$0xff]
        %v5215 = vld [vmem:[#allocation6 + $0x6b8] sm:$0xff]
        %v5216 = vld [vmem:[#allocation6 + $0x6e0] sm:$0xff]
        %v5217 = vld [vmem:[#allocation6 + $0x6e8] sm:$0xff]
        %v5218 = vld [vmem:[#allocation6 + $0x6f0] sm:$0xff]
        %v5219 = vld [vmem:[#allocation6 + $0x6f8] sm:$0xff]
        %v5220 = vld [vmem:[#allocation6 + $0x700] sm:$0xff]
        %v5221 = vld [vmem:[#allocation6 + $0x708] sm:$0xff]
        %v5222 = vld [vmem:[#allocation6 + $0x710] sm:$0xff]
        %v5223 = vld [vmem:[#allocation6 + $0x718] sm:$0xff]
        %v5225 = vsel %vm440, %v5208, 0
        %v5228 = vsel %vm440, %v5209, 0
        %v5231 = vsel %vm440, %v5210, 0
        %v5234 = vsel %vm440, %v5211, 0
        %v5237 = vsel %vm440, %v5212, 0
        %v5240 = vsel %vm440, %v5213, 0
        %v5243 = vsel %vm440, %v5214, 0
        %v5246 = vsel %vm440, %v5215, 0
        %5248 = vmatpush.xpose.msra.mxu0 0.0
        %5249 = vmatpush.xpose.msra.mxu0 0.0
        %5250 = vmatpush.xpose.msra.mxu0 0.0
        %5251 = vmatpush.xpose.msra.mxu0 0.0
        %5252 = vmatpush.xpose.msra.mxu0 0.0
        %5253 = vmatpush.xpose.msra.mxu0 0.0
        %5254 = vmatpush.xpose.msra.mxu0 0.0
        %5255 = vmatpush.xpose.msra.mxu0 0.0
        %5256 = vmatpush.xpose.msra.mxu0 0.0
        %5257 = vmatpush.xpose.msra.mxu0 0.0
        %5258 = vmatpush.xpose.msra.mxu0 0.0
        %5259 = vmatpush.xpose.msra.mxu0 0.0
        %5260 = vmatpush.xpose.msra.mxu0 0.0
        %5261 = vmatpush.xpose.msra.mxu0 0.0
        %5262 = vmatpush.xpose.msra.mxu0 0.0
        %5263 = vmatpush.xpose.msra.mxu0 %v3402
        %5264 = vmatmul.f32.gmra.mxu0 %v5225
        %v5265 = vpop.f32.mrf.mxu0
        %v5266 = vadd.f32 %v5216, %v5265
        %5267 = vmatmul.f32.gmra.mxu0 %v5228
        %v5268 = vpop.f32.mrf.mxu0
        %v5269 = vadd.f32 %v5217, %v5268
        %5270 = vmatmul.f32.gmra.mxu0 %v5231
        %v5271 = vpop.f32.mrf.mxu0
        %v5272 = vadd.f32 %v5218, %v5271
        %5273 = vmatmul.f32.gmra.mxu0 %v5234
        %v5274 = vpop.f32.mrf.mxu0
        %v5275 = vadd.f32 %v5219, %v5274
        %5276 = vmatmul.f32.gmra.mxu0 %v5237
        %v5277 = vpop.f32.mrf.mxu0
        %v5278 = vadd.f32 %v5220, %v5277
        %5279 = vmatmul.f32.gmra.mxu0 %v5240
        %v5280 = vpop.f32.mrf.mxu0
        %v5281 = vadd.f32 %v5221, %v5280
        %5282 = vmatmul.f32.gmra.mxu0 %v5243
        %v5283 = vpop.f32.mrf.mxu0
        %v5284 = vadd.f32 %v5222, %v5283
        %5285 = vmatmul.f32.gmra.mxu0 %v5246
        %v5286 = vpop.f32.mrf.mxu0
        %v5287 = vadd.f32 %v5223, %v5286
        %5288 = vdwg.mxu0
        %5289 = vxpose.xlu0.b32.start [1/16] %v5197, 128
        %5290 = vxpose.xlu0.b32.cont [2/16] 0.0, 128
        %5291 = vxpose.xlu0.b32.cont [3/16] 0.0, 128
        %5292 = vxpose.xlu0.b32.cont [4/16] 0.0, 128
        %5293 = vxpose.xlu0.b32.cont [5/16] 0.0, 128
        %5294 = vxpose.xlu0.b32.cont [6/16] 0.0, 128
        %5295 = vxpose.xlu0.b32.cont [7/16] 0.0, 128
        %5296 = vxpose.xlu0.b32.cont [8/16] 0.0, 128
        %5297 = vxpose.xlu0.b32.cont [9/16] 0.0, 128
        %5298 = vxpose.xlu0.b32.cont [10/16] 0.0, 128
        %5299 = vxpose.xlu0.b32.cont [11/16] 0.0, 128
        %5300 = vxpose.xlu0.b32.cont [12/16] 0.0, 128
        %5301 = vxpose.xlu0.b32.cont [13/16] 0.0, 128
        %5302 = vxpose.xlu0.b32.cont [14/16] 0.0, 128
        %5303 = vxpose.xlu0.b32.cont [15/16] 0.0, 128
        %5304 = vxpose.xlu0.b32.end [16/16] 0.0, 128
        %v5305 = vpop.trf.xlu0
        %v5306 = vpop.trf.xlu0
        %v5307 = vpop.trf.xlu0
        %v5308 = vpop.trf.xlu0
        %v5309 = vpop.trf.xlu0
        %v5310 = vpop.trf.xlu0
        %v5311 = vpop.trf.xlu0
        %v5312 = vpop.trf.xlu0
        %v5313 = vpop.trf.xlu0
        %v5314 = vpop.trf.xlu0
        %v5315 = vpop.trf.xlu0
        %v5316 = vpop.trf.xlu0
        %v5317 = vpop.trf.xlu0
        %v5318 = vpop.trf.xlu0
        %v5319 = vpop.trf.xlu0
        %v5320 = vpop.trf.xlu0
        %v5322 = vsel %vm564, %v5305, 0
        %5324 = vmatpush.msra.mxu0 0.0
        %5325 = vmatpush.msra.mxu0 0.0
        %5326 = vmatpush.msra.mxu0 0.0
        %5327 = vmatpush.msra.mxu0 0.0
        %5328 = vmatpush.msra.mxu0 0.0
        %5329 = vmatpush.msra.mxu0 0.0
        %5330 = vmatpush.msra.mxu0 0.0
        %5331 = vmatpush.msra.mxu0 0.0
        %5332 = vmatpush.msra.mxu0 0.0
        %5333 = vmatpush.msra.mxu0 0.0
        %5334 = vmatpush.msra.mxu0 0.0
        %5335 = vmatpush.msra.mxu0 0.0
        %5336 = vmatpush.msra.mxu0 0.0
        %5337 = vmatpush.msra.mxu0 0.0
        %5338 = vmatpush.msra.mxu0 0.0
        %5339 = vmatpush.msra.mxu0 %v5266
        %5340 = vmatmul.f32.gmra.mxu0 %v5322
        %v5341 = vpop.f32.mrf.mxu0
        %v5342 = vadd.f32 0.0, %v5341
        %5343 = vdwg.mxu0
        %v5344 = vmul.f32 %v5342, 0.35355338
        %v5345 = vsel %vm564, %v5344, -inf
        %5346 = vmax.xlane.f32.xlu0 %v5345
        %v5347 = vpop.xlane.xlu0 %5346
        %v5348 = vsub.f32 %v5344, %v5347
        %v5349 = vmul.f32 %v5348, 1.442695
        %v5350 = vpow.pop %v5349
        %v5351 = vsel %vm564, %v5350, 0.0
        %5352 = vadd.xlane.f32.xlu0 %v5351
        %v5353 = vpop.xlane.xlu0 %5352
        %v5354 = vrcp.pop %v5353
        %v5355 = vmul.f32 %v5353, %v5354
        %v5356 = vsub.f32 1.0, %v5355
        %v5357 = vmul.f32 %v5354, %v5356
        %v5358 = vadd.f32 %v5354, %v5357
        %vm5359 = vweird.f32 %v5353
        %vm5360 = vweird.f32 %v5354
        %vm5361 = vmor %vm5359, %vm5360
        %v5362 = vsel %vm5361, %v5354, %v5358
        %v5363 = vand.u32 2147483647, %v5353
        %vm5364 = vcmp.eq.f32.partialorder %v5363, 8.507059e+37
        %v5365 = vand.u32 %v5353, 2147483648
        %v5366 = vor.u32 1.1754944e-38, %v5365
        %v5367 = vsel %vm5364, %v5366, %v5362
        %v5368 = vmul.f32 %v5350, %v5367
        %v5370 = vsel %vm564, %v5278, 0
        %v5373 = vsel %vm564, %v5368, 0
        %5375 = vmatpush.xpose.msra.mxu0 0.0
        %5376 = vmatpush.xpose.msra.mxu0 0.0
        %5377 = vmatpush.xpose.msra.mxu0 0.0
        %5378 = vmatpush.xpose.msra.mxu0 0.0
        %5379 = vmatpush.xpose.msra.mxu0 0.0
        %5380 = vmatpush.xpose.msra.mxu0 0.0
        %5381 = vmatpush.xpose.msra.mxu0 0.0
        %5382 = vmatpush.xpose.msra.mxu0 0.0
        %5383 = vmatpush.xpose.msra.mxu0 0.0
        %5384 = vmatpush.xpose.msra.mxu0 0.0
        %5385 = vmatpush.xpose.msra.mxu0 0.0
        %5386 = vmatpush.xpose.msra.mxu0 0.0
        %5387 = vmatpush.xpose.msra.mxu0 0.0
        %5388 = vmatpush.xpose.msra.mxu0 0.0
        %5389 = vmatpush.xpose.msra.mxu0 0.0
        %5390 = vmatpush.xpose.msra.mxu0 %v5373
        %5391 = vmatmul.f32.gmra.mxu0 %v5370
        %v5392 = vpop.f32.mrf.mxu0
        %v5393 = vadd.f32 0.0, %v5392
        %5394 = vdwg.mxu0
        %5395 = vxpose.xlu0.b32.start [1/16] %v5200, 128
        %5396 = vxpose.xlu0.b32.cont [2/16] 0.0, 128
        %5397 = vxpose.xlu0.b32.cont [3/16] 0.0, 128
        %5398 = vxpose.xlu0.b32.cont [4/16] 0.0, 128
        %5399 = vxpose.xlu0.b32.cont [5/16] 0.0, 128
        %5400 = vxpose.xlu0.b32.cont [6/16] 0.0, 128
        %5401 = vxpose.xlu0.b32.cont [7/16] 0.0, 128
        %5402 = vxpose.xlu0.b32.cont [8/16] 0.0, 128
        %5403 = vxpose.xlu0.b32.cont [9/16] 0.0, 128
        %5404 = vxpose.xlu0.b32.cont [10/16] 0.0, 128
        %5405 = vxpose.xlu0.b32.cont [11/16] 0.0, 128
        %5406 = vxpose.xlu0.b32.cont [12/16] 0.0, 128
        %5407 = vxpose.xlu0.b32.cont [13/16] 0.0, 128
        %5408 = vxpose.xlu0.b32.cont [14/16] 0.0, 128
        %5409 = vxpose.xlu0.b32.cont [15/16] 0.0, 128
        %5410 = vxpose.xlu0.b32.end [16/16] 0.0, 128
        %v5411 = vpop.trf.xlu0
        %v5412 = vpop.trf.xlu0
        %v5413 = vpop.trf.xlu0
        %v5414 = vpop.trf.xlu0
        %v5415 = vpop.trf.xlu0
        %v5416 = vpop.trf.xlu0
        %v5417 = vpop.trf.xlu0
        %v5418 = vpop.trf.xlu0
        %v5419 = vpop.trf.xlu0
        %v5420 = vpop.trf.xlu0
        %v5421 = vpop.trf.xlu0
        %v5422 = vpop.trf.xlu0
        %v5423 = vpop.trf.xlu0
        %v5424 = vpop.trf.xlu0
        %v5425 = vpop.trf.xlu0
        %v5426 = vpop.trf.xlu0
        %v5428 = vsel %vm564, %v5411, 0
        %5430 = vmatpush.msra.mxu0 0.0
        %5431 = vmatpush.msra.mxu0 0.0
        %5432 = vmatpush.msra.mxu0 0.0
        %5433 = vmatpush.msra.mxu0 0.0
        %5434 = vmatpush.msra.mxu0 0.0
        %5435 = vmatpush.msra.mxu0 0.0
        %5436 = vmatpush.msra.mxu0 0.0
        %5437 = vmatpush.msra.mxu0 0.0
        %5438 = vmatpush.msra.mxu0 0.0
        %5439 = vmatpush.msra.mxu0 0.0
        %5440 = vmatpush.msra.mxu0 0.0
        %5441 = vmatpush.msra.mxu0 0.0
        %5442 = vmatpush.msra.mxu0 0.0
        %5443 = vmatpush.msra.mxu0 0.0
        %5444 = vmatpush.msra.mxu0 0.0
        %5445 = vmatpush.msra.mxu0 %v5269
        %5446 = vmatmul.f32.gmra.mxu0 %v5428
        %v5447 = vpop.f32.mrf.mxu0
        %v5448 = vadd.f32 0.0, %v5447
        %5449 = vdwg.mxu0
        %v5450 = vmul.f32 %v5448, 0.35355338
        %v5451 = vsel %vm564, %v5450, -inf
        %5452 = vmax.xlane.f32.xlu0 %v5451
        %v5453 = vpop.xlane.xlu0 %5452
        %v5454 = vsub.f32 %v5450, %v5453
        %v5455 = vmul.f32 %v5454, 1.442695
        %v5456 = vpow.pop %v5455
        %v5457 = vsel %vm564, %v5456, 0.0
        %5458 = vadd.xlane.f32.xlu0 %v5457
        %v5459 = vpop.xlane.xlu0 %5458
        %v5460 = vrcp.pop %v5459
        %v5461 = vmul.f32 %v5459, %v5460
        %v5462 = vsub.f32 1.0, %v5461
        %v5463 = vmul.f32 %v5460, %v5462
        %v5464 = vadd.f32 %v5460, %v5463
        %vm5465 = vweird.f32 %v5459
        %vm5466 = vweird.f32 %v5460
        %vm5467 = vmor %vm5465, %vm5466
        %v5468 = vsel %vm5467, %v5460, %v5464
        %v5469 = vand.u32 2147483647, %v5459
        %vm5470 = vcmp.eq.f32.partialorder %v5469, 8.507059e+37
        %v5471 = vand.u32 %v5459, 2147483648
        %v5472 = vor.u32 1.1754944e-38, %v5471
        %v5473 = vsel %vm5470, %v5472, %v5468
        %v5474 = vmul.f32 %v5456, %v5473
        %v5476 = vsel %vm564, %v5281, 0
        %v5479 = vsel %vm564, %v5474, 0
        %5481 = vmatpush.xpose.msra.mxu0 0.0
        %5482 = vmatpush.xpose.msra.mxu0 0.0
        %5483 = vmatpush.xpose.msra.mxu0 0.0
        %5484 = vmatpush.xpose.msra.mxu0 0.0
        %5485 = vmatpush.xpose.msra.mxu0 0.0
        %5486 = vmatpush.xpose.msra.mxu0 0.0
        %5487 = vmatpush.xpose.msra.mxu0 0.0
        %5488 = vmatpush.xpose.msra.mxu0 0.0
        %5489 = vmatpush.xpose.msra.mxu0 0.0
        %5490 = vmatpush.xpose.msra.mxu0 0.0
        %5491 = vmatpush.xpose.msra.mxu0 0.0
        %5492 = vmatpush.xpose.msra.mxu0 0.0
        %5493 = vmatpush.xpose.msra.mxu0 0.0
        %5494 = vmatpush.xpose.msra.mxu0 0.0
        %5495 = vmatpush.xpose.msra.mxu0 0.0
        %5496 = vmatpush.xpose.msra.mxu0 %v5479
        %5497 = vmatmul.f32.gmra.mxu0 %v5476
        %v5498 = vpop.f32.mrf.mxu0
        %v5499 = vadd.f32 0.0, %v5498
        %5500 = vdwg.mxu0
        %5501 = vxpose.xlu0.b32.start [1/16] %v5203, 128
        %5502 = vxpose.xlu0.b32.cont [2/16] 0.0, 128
        %5503 = vxpose.xlu0.b32.cont [3/16] 0.0, 128
        %5504 = vxpose.xlu0.b32.cont [4/16] 0.0, 128
        %5505 = vxpose.xlu0.b32.cont [5/16] 0.0, 128
        %5506 = vxpose.xlu0.b32.cont [6/16] 0.0, 128
        %5507 = vxpose.xlu0.b32.cont [7/16] 0.0, 128
        %5508 = vxpose.xlu0.b32.cont [8/16] 0.0, 128
        %5509 = vxpose.xlu0.b32.cont [9/16] 0.0, 128
        %5510 = vxpose.xlu0.b32.cont [10/16] 0.0, 128
        %5511 = vxpose.xlu0.b32.cont [11/16] 0.0, 128
        %5512 = vxpose.xlu0.b32.cont [12/16] 0.0, 128
        %5513 = vxpose.xlu0.b32.cont [13/16] 0.0, 128
        %5514 = vxpose.xlu0.b32.cont [14/16] 0.0, 128
        %5515 = vxpose.xlu0.b32.cont [15/16] 0.0, 128
        %5516 = vxpose.xlu0.b32.end [16/16] 0.0, 128
        %v5517 = vpop.trf.xlu0
        %v5518 = vpop.trf.xlu0
        %v5519 = vpop.trf.xlu0
        %v5520 = vpop.trf.xlu0
        %v5521 = vpop.trf.xlu0
        %v5522 = vpop.trf.xlu0
        %v5523 = vpop.trf.xlu0
        %v5524 = vpop.trf.xlu0
        %v5525 = vpop.trf.xlu0
        %v5526 = vpop.trf.xlu0
        %v5527 = vpop.trf.xlu0
        %v5528 = vpop.trf.xlu0
        %v5529 = vpop.trf.xlu0
        %v5530 = vpop.trf.xlu0
        %v5531 = vpop.trf.xlu0
        %v5532 = vpop.trf.xlu0
        %v5534 = vsel %vm564, %v5517, 0
        %5536 = vmatpush.msra.mxu0 0.0
        %5537 = vmatpush.msra.mxu0 0.0
        %5538 = vmatpush.msra.mxu0 0.0
        %5539 = vmatpush.msra.mxu0 0.0
        %5540 = vmatpush.msra.mxu0 0.0
        %5541 = vmatpush.msra.mxu0 0.0
        %5542 = vmatpush.msra.mxu0 0.0
        %5543 = vmatpush.msra.mxu0 0.0
        %5544 = vmatpush.msra.mxu0 0.0
        %5545 = vmatpush.msra.mxu0 0.0
        %5546 = vmatpush.msra.mxu0 0.0
        %5547 = vmatpush.msra.mxu0 0.0
        %5548 = vmatpush.msra.mxu0 0.0
        %5549 = vmatpush.msra.mxu0 0.0
        %5550 = vmatpush.msra.mxu0 0.0
        %5551 = vmatpush.msra.mxu0 %v5272
        %5552 = vmatmul.f32.gmra.mxu0 %v5534
        %v5553 = vpop.f32.mrf.mxu0
        %v5554 = vadd.f32 0.0, %v5553
        %5555 = vdwg.mxu0
        %v5556 = vmul.f32 %v5554, 0.35355338
        %v5557 = vsel %vm564, %v5556, -inf
        %5558 = vmax.xlane.f32.xlu0 %v5557
        %v5559 = vpop.xlane.xlu0 %5558
        %v5560 = vsub.f32 %v5556, %v5559
        %v5561 = vmul.f32 %v5560, 1.442695
        %v5562 = vpow.pop %v5561
        %v5563 = vsel %vm564, %v5562, 0.0
        %5564 = vadd.xlane.f32.xlu0 %v5563
        %v5565 = vpop.xlane.xlu0 %5564
        %v5566 = vrcp.pop %v5565
        %v5567 = vmul.f32 %v5565, %v5566
        %v5568 = vsub.f32 1.0, %v5567
        %v5569 = vmul.f32 %v5566, %v5568
        %v5570 = vadd.f32 %v5566, %v5569
        %vm5571 = vweird.f32 %v5565
        %vm5572 = vweird.f32 %v5566
        %vm5573 = vmor %vm5571, %vm5572
        %v5574 = vsel %vm5573, %v5566, %v5570
        %v5575 = vand.u32 2147483647, %v5565
        %vm5576 = vcmp.eq.f32.partialorder %v5575, 8.507059e+37
        %v5577 = vand.u32 %v5565, 2147483648
        %v5578 = vor.u32 1.1754944e-38, %v5577
        %v5579 = vsel %vm5576, %v5578, %v5574
        %v5580 = vmul.f32 %v5562, %v5579
        %v5582 = vsel %vm564, %v5284, 0
        %v5585 = vsel %vm564, %v5580, 0
        %5587 = vmatpush.xpose.msra.mxu0 0.0
        %5588 = vmatpush.xpose.msra.mxu0 0.0
        %5589 = vmatpush.xpose.msra.mxu0 0.0
        %5590 = vmatpush.xpose.msra.mxu0 0.0
        %5591 = vmatpush.xpose.msra.mxu0 0.0
        %5592 = vmatpush.xpose.msra.mxu0 0.0
        %5593 = vmatpush.xpose.msra.mxu0 0.0
        %5594 = vmatpush.xpose.msra.mxu0 0.0
        %5595 = vmatpush.xpose.msra.mxu0 0.0
        %5596 = vmatpush.xpose.msra.mxu0 0.0
        %5597 = vmatpush.xpose.msra.mxu0 0.0
        %5598 = vmatpush.xpose.msra.mxu0 0.0
        %5599 = vmatpush.xpose.msra.mxu0 0.0
        %5600 = vmatpush.xpose.msra.mxu0 0.0
        %5601 = vmatpush.xpose.msra.mxu0 0.0
        %5602 = vmatpush.xpose.msra.mxu0 %v5585
        %5603 = vmatmul.f32.gmra.mxu0 %v5582
        %v5604 = vpop.f32.mrf.mxu0
        %v5605 = vadd.f32 0.0, %v5604
        %5606 = vdwg.mxu0
        %5607 = vxpose.xlu0.b32.start [1/16] %v5206, 128
        %5608 = vxpose.xlu0.b32.cont [2/16] 0.0, 128
        %5609 = vxpose.xlu0.b32.cont [3/16] 0.0, 128
        %5610 = vxpose.xlu0.b32.cont [4/16] 0.0, 128
        %5611 = vxpose.xlu0.b32.cont [5/16] 0.0, 128
        %5612 = vxpose.xlu0.b32.cont [6/16] 0.0, 128
        %5613 = vxpose.xlu0.b32.cont [7/16] 0.0, 128
        %5614 = vxpose.xlu0.b32.cont [8/16] 0.0, 128
        %5615 = vxpose.xlu0.b32.cont [9/16] 0.0, 128
        %5616 = vxpose.xlu0.b32.cont [10/16] 0.0, 128
        %5617 = vxpose.xlu0.b32.cont [11/16] 0.0, 128
        %5618 = vxpose.xlu0.b32.cont [12/16] 0.0, 128
        %5619 = vxpose.xlu0.b32.cont [13/16] 0.0, 128
        %5620 = vxpose.xlu0.b32.cont [14/16] 0.0, 128
        %5621 = vxpose.xlu0.b32.cont [15/16] 0.0, 128
        %5622 = vxpose.xlu0.b32.end [16/16] 0.0, 128
        %v5623 = vpop.trf.xlu0
        %v5624 = vpop.trf.xlu0
        %v5625 = vpop.trf.xlu0
        %v5626 = vpop.trf.xlu0
        %v5627 = vpop.trf.xlu0
        %v5628 = vpop.trf.xlu0
        %v5629 = vpop.trf.xlu0
        %v5630 = vpop.trf.xlu0
        %v5631 = vpop.trf.xlu0
        %v5632 = vpop.trf.xlu0
        %v5633 = vpop.trf.xlu0
        %v5634 = vpop.trf.xlu0
        %v5635 = vpop.trf.xlu0
        %v5636 = vpop.trf.xlu0
        %v5637 = vpop.trf.xlu0
        %v5638 = vpop.trf.xlu0
        %v5640 = vsel %vm564, %v5623, 0
        %5642 = vmatpush.msra.mxu0 0.0
        %5643 = vmatpush.msra.mxu0 0.0
        %5644 = vmatpush.msra.mxu0 0.0
        %5645 = vmatpush.msra.mxu0 0.0
        %5646 = vmatpush.msra.mxu0 0.0
        %5647 = vmatpush.msra.mxu0 0.0
        %5648 = vmatpush.msra.mxu0 0.0
        %5649 = vmatpush.msra.mxu0 0.0
        %5650 = vmatpush.msra.mxu0 0.0
        %5651 = vmatpush.msra.mxu0 0.0
        %5652 = vmatpush.msra.mxu0 0.0
        %5653 = vmatpush.msra.mxu0 0.0
        %5654 = vmatpush.msra.mxu0 0.0
        %5655 = vmatpush.msra.mxu0 0.0
        %5656 = vmatpush.msra.mxu0 0.0
        %5657 = vmatpush.msra.mxu0 %v5275
        %5658 = vmatmul.f32.gmra.mxu0 %v5640
        %v5659 = vpop.f32.mrf.mxu0
        %v5660 = vadd.f32 0.0, %v5659
        %5661 = vdwg.mxu0
        %v5662 = vmul.f32 %v5660, 0.35355338
        %v5663 = vsel %vm564, %v5662, -inf
        %5664 = vmax.xlane.f32.xlu0 %v5663
        %v5665 = vpop.xlane.xlu0 %5664
        %v5666 = vsub.f32 %v5662, %v5665
        %v5667 = vmul.f32 %v5666, 1.442695
        %v5668 = vpow.pop %v5667
        %v5669 = vsel %vm564, %v5668, 0.0
        %5670 = vadd.xlane.f32.xlu0 %v5669
        %v5671 = vpop.xlane.xlu0 %5670
        %v5672 = vrcp.pop %v5671
        %v5673 = vmul.f32 %v5671, %v5672
        %v5674 = vsub.f32 1.0, %v5673
        %v5675 = vmul.f32 %v5672, %v5674
        %v5676 = vadd.f32 %v5672, %v5675
        %vm5677 = vweird.f32 %v5671
        %vm5678 = vweird.f32 %v5672
        %vm5679 = vmor %vm5677, %vm5678
        %v5680 = vsel %vm5679, %v5672, %v5676
        %v5681 = vand.u32 2147483647, %v5671
        %vm5682 = vcmp.eq.f32.partialorder %v5681, 8.507059e+37
        %v5683 = vand.u32 %v5671, 2147483648
        %v5684 = vor.u32 1.1754944e-38, %v5683
        %v5685 = vsel %vm5682, %v5684, %v5680
        %v5686 = vmul.f32 %v5668, %v5685
        %v5688 = vsel %vm564, %v5287, 0
        %v5691 = vsel %vm564, %v5686, 0
        %5693 = vmatpush.xpose.msra.mxu0 0.0
        %5694 = vmatpush.xpose.msra.mxu0 0.0
        %5695 = vmatpush.xpose.msra.mxu0 0.0
        %5696 = vmatpush.xpose.msra.mxu0 0.0
        %5697 = vmatpush.xpose.msra.mxu0 0.0
        %5698 = vmatpush.xpose.msra.mxu0 0.0
        %5699 = vmatpush.xpose.msra.mxu0 0.0
        %5700 = vmatpush.xpose.msra.mxu0 0.0
        %5701 = vmatpush.xpose.msra.mxu0 0.0
        %5702 = vmatpush.xpose.msra.mxu0 0.0
        %5703 = vmatpush.xpose.msra.mxu0 0.0
        %5704 = vmatpush.xpose.msra.mxu0 0.0
        %5705 = vmatpush.xpose.msra.mxu0 0.0
        %5706 = vmatpush.xpose.msra.mxu0 0.0
        %5707 = vmatpush.xpose.msra.mxu0 0.0
        %5708 = vmatpush.xpose.msra.mxu0 %v5691
        %5709 = vmatmul.f32.gmra.mxu0 %v5688
        %v5710 = vpop.f32.mrf.mxu0
        %v5711 = vadd.f32 0.0, %v5710
        %5712 = vdwg.mxu0
        %v5713 = vld [vmem:[#allocation6 + $0x720] sm:$0xff]
        %v5714 = vld [vmem:[#allocation6 + $0x728] sm:$0xff]
        %v5715 = vld [vmem:[#allocation6 + $0x730] sm:$0xff]
        %v5716 = vld [vmem:[#allocation6 + $0x738] sm:$0xff]
        %v5717 = vld [vmem:[#allocation6 + $0x740] sm:$0x1]
        %v5718 = vperm.slane %v5717, 0
        %5719 = vxpose.xlu0.b32.start [1/16] %v5393, 128
        %5720 = vxpose.xlu0.b32.cont [2/16] %v5499, 128
        %5721 = vxpose.xlu0.b32.cont [3/16] %v5605, 128
        %5722 = vxpose.xlu0.b32.cont [4/16] %v5711, 128
        %5723 = vxpose.xlu0.b32.cont [5/16] 0.0, 128
        %5724 = vxpose.xlu0.b32.cont [6/16] 0.0, 128
        %5725 = vxpose.xlu0.b32.cont [7/16] 0.0, 128
        %5726 = vxpose.xlu0.b32.cont [8/16] 0.0, 128
        %5727 = vxpose.xlu0.b32.cont [9/16] 0.0, 128
        %5728 = vxpose.xlu0.b32.cont [10/16] 0.0, 128
        %5729 = vxpose.xlu0.b32.cont [11/16] 0.0, 128
        %5730 = vxpose.xlu0.b32.cont [12/16] 0.0, 128
        %5731 = vxpose.xlu0.b32.cont [13/16] 0.0, 128
        %5732 = vxpose.xlu0.b32.cont [14/16] 0.0, 128
        %5733 = vxpose.xlu0.b32.cont [15/16] 0.0, 128
        %5734 = vxpose.xlu0.b32.end [16/16] 0.0, 128
        %v5735 = vpop.trf.xlu0
        %v5736 = vpop.trf.xlu0
        %v5737 = vpop.trf.xlu0
        %v5738 = vpop.trf.xlu0
        %v5739 = vpop.trf.xlu0
        %v5740 = vpop.trf.xlu0
        %v5741 = vpop.trf.xlu0
        %v5742 = vpop.trf.xlu0
        %v5743 = vpop.trf.xlu0
        %v5744 = vpop.trf.xlu0
        %v5745 = vpop.trf.xlu0
        %v5746 = vpop.trf.xlu0
        %v5747 = vpop.trf.xlu0
        %v5748 = vpop.trf.xlu0
        %v5749 = vpop.trf.xlu0
        %v5750 = vpop.trf.xlu0
        %v5752 = vsel %vm440, %v5735, 0
        %5754 = vmatpush.msra.mxu0 0.0
        %5755 = vmatpush.msra.mxu0 0.0
        %5756 = vmatpush.msra.mxu0 0.0
        %5757 = vmatpush.msra.mxu0 0.0
        %5758 = vmatpush.msra.mxu0 0.0
        %5759 = vmatpush.msra.mxu0 0.0
        %5760 = vmatpush.msra.mxu0 0.0
        %5761 = vmatpush.msra.mxu0 0.0
        %5762 = vmatpush.msra.mxu0 0.0
        %5763 = vmatpush.msra.mxu0 0.0
        %5764 = vmatpush.msra.mxu0 0.0
        %5765 = vmatpush.msra.mxu0 0.0
        %5766 = vmatpush.msra.mxu0 %v5716
        %5767 = vmatpush.msra.mxu0 %v5715
        %5768 = vmatpush.msra.mxu0 %v5714
        %5769 = vmatpush.msra.mxu0 %v5713
        %5770 = vmatmul.f32.gmra.mxu0 %v5752
        %v5771 = vpop.f32.mrf.mxu0
        %v5772 = vadd.f32 %v5718, %v5771
        %5773 = vdwg.mxu0
        %v5775 = vrot.slane %v5772, 1
        %v5776 = vrot.slane %v5772, 2
        %v5777 = vrot.slane %v5772, 3
        %v5778 = vrot.slane %v5772, 4
        %v5779 = vrot.slane %v5772, 5
        %v5780 = vrot.slane %v5772, 6
        %v5781 = vrot.slane %v5772, 7
        %v5790 = vadd.f32 %v5127, %v5772
        %v5791 = vadd.f32 %v5128, %v5775
        %v5792 = vadd.f32 %v5129, %v5776
        %v5793 = vadd.f32 %v5130, %v5777
        %v5794 = vadd.f32 %v5131, %v5778
        %v5795 = vadd.f32 %v5132, %v5779
        %v5796 = vadd.f32 %v5133, %v5780
        %v5797 = vadd.f32 %v5134, %v5781
        %v5798 = vld [vmem:[#allocation6 + $0x748] sm:$0x1]
        %v5799 = vld [vmem:[#allocation6 + $0x750] sm:$0x1]
        %v5808 = vrot.slane %v5791, 7
        %v5809 = vsel %vm420, %v5808, %v5790
        %v5810 = vrot.slane %v5792, 6
        %v5811 = vsel %vm423, %v5810, %v5809
        %v5812 = vrot.slane %v5793, 5
        %v5813 = vsel %vm426, %v5812, %v5811
        %v5814 = vrot.slane %v5794, 4
        %v5815 = vsel %vm429, %v5814, %v5813
        %v5816 = vrot.slane %v5795, 3
        %v5817 = vsel %vm432, %v5816, %v5815
        %v5818 = vrot.slane %v5796, 2
        %v5819 = vsel %vm435, %v5818, %v5817
        %v5820 = vrot.slane %v5797, 1
        %v5821 = vsel %vm438, %v5820, %v5819
        %v5823 = vsel %vm440, %v5821, 0.0
        %5824 = vadd.xlane.f32.xlu0 %v5823
        %v5825 = vpop.xlane.xlu0 %5824
        %v5826 = vmul.f32 %v5825, %v1076
        %v5828 = vrot.slane %v5826, 1
        %v5829 = vrot.slane %v5826, 2
        %v5830 = vrot.slane %v5826, 3
        %v5831 = vrot.slane %v5826, 4
        %v5832 = vrot.slane %v5826, 5
        %v5833 = vrot.slane %v5826, 6
        %v5834 = vrot.slane %v5826, 7
        %v5843 = vsub.f32 %v5790, %v5826
        %v5844 = vsub.f32 %v5791, %v5828
        %v5845 = vsub.f32 %v5792, %v5829
        %v5846 = vsub.f32 %v5793, %v5830
        %v5847 = vsub.f32 %v5794, %v5831
        %v5848 = vsub.f32 %v5795, %v5832
        %v5849 = vsub.f32 %v5796, %v5833
        %v5850 = vsub.f32 %v5797, %v5834
        %v5851 = vmul.f32 %v5843, %v5843
        %v5852 = vmul.f32 %v5844, %v5844
        %v5853 = vmul.f32 %v5845, %v5845
        %v5854 = vmul.f32 %v5846, %v5846
        %v5855 = vmul.f32 %v5847, %v5847
        %v5856 = vmul.f32 %v5848, %v5848
        %v5857 = vmul.f32 %v5849, %v5849
        %v5858 = vmul.f32 %v5850, %v5850
        %v5867 = vrot.slane %v5852, 7
        %v5868 = vsel %vm420, %v5867, %v5851
        %v5869 = vrot.slane %v5853, 6
        %v5870 = vsel %vm423, %v5869, %v5868
        %v5871 = vrot.slane %v5854, 5
        %v5872 = vsel %vm426, %v5871, %v5870
        %v5873 = vrot.slane %v5855, 4
        %v5874 = vsel %vm429, %v5873, %v5872
        %v5875 = vrot.slane %v5856, 3
        %v5876 = vsel %vm432, %v5875, %v5874
        %v5877 = vrot.slane %v5857, 2
        %v5878 = vsel %vm435, %v5877, %v5876
        %v5879 = vrot.slane %v5858, 1
        %v5880 = vsel %vm438, %v5879, %v5878
        %v5882 = vsel %vm440, %v5880, 0.0
        %5883 = vadd.xlane.f32.xlu0 %v5882
        %v5884 = vpop.xlane.xlu0 %5883
        %v5885 = vmul.f32 %v5884, %v1076
        %v5886 = vadd.f32 %v5885, 1e-05
        %v5887 = vrsqrt.pop %v5886
        %v5888 = vmul.f32 %v5887, %v5886
        %v5889 = vmul.f32 %v5888, %v5887
        %v5890 = vmul.f32 0.5, %v5889
        %v5891 = vsub.f32 1.5, %v5890
        %v5892 = vmul.f32 %v5887, %v5891
        %vm5893 = vweird.f32 %v5886
        %vm5894 = vweird.f32 %v5887
        %vm5895 = vmor %vm5893, %vm5894
        %v5896 = vsel %vm5895, %v5887, %v5892
        %v5898 = vrot.slane %v5896, 1
        %v5899 = vrot.slane %v5896, 2
        %v5900 = vrot.slane %v5896, 3
        %v5901 = vrot.slane %v5896, 4
        %v5902 = vrot.slane %v5896, 5
        %v5903 = vrot.slane %v5896, 6
        %v5904 = vrot.slane %v5896, 7
        %v5913 = vmul.f32 %v5843, %v5896
        %v5914 = vmul.f32 %v5844, %v5898
        %v5915 = vmul.f32 %v5845, %v5899
        %v5916 = vmul.f32 %v5846, %v5900
        %v5917 = vmul.f32 %v5847, %v5901
        %v5918 = vmul.f32 %v5848, %v5902
        %v5919 = vmul.f32 %v5849, %v5903
        %v5920 = vmul.f32 %v5850, %v5904
        %v5921 = vperm.slane %v5798, 0
        %v5922 = vmul.f32 %v5913, %v5921
        %v5923 = vmul.f32 %v5914, %v5921
        %v5924 = vmul.f32 %v5915, %v5921
        %v5925 = vmul.f32 %v5916, %v5921
        %v5926 = vmul.f32 %v5917, %v5921
        %v5927 = vmul.f32 %v5918, %v5921
        %v5928 = vmul.f32 %v5919, %v5921
        %v5929 = vmul.f32 %v5920, %v5921
        %v5930 = vperm.slane %v5799, 0
        %v5931 = vadd.f32 %v5922, %v5930
        %v5932 = vadd.f32 %v5923, %v5930
        %v5933 = vadd.f32 %v5924, %v5930
        %v5934 = vadd.f32 %v5925, %v5930
        %v5935 = vadd.f32 %v5926, %v5930
        %v5936 = vadd.f32 %v5927, %v5930
        %v5937 = vadd.f32 %v5928, %v5930
        %v5938 = vadd.f32 %v5929, %v5930
        %v5939 = vld [vmem:[#allocation6 + $0x758] sm:$0xff]
        %v5940 = vld [vmem:[#allocation6 + $0x760] sm:$0xff]
        %v5941 = vld [vmem:[#allocation6 + $0x768] sm:$0xff]
        %v5942 = vld [vmem:[#allocation6 + $0x770] sm:$0xff]
        %v5943 = vld [vmem:[#allocation6 + $0x778] sm:$0x1]
        %v5944 = vperm.slane %v5943, 0
        %v5953 = vrot.slane %v5932, 7
        %v5954 = vsel %vm420, %v5953, %v5931
        %v5955 = vrot.slane %v5933, 6
        %v5956 = vsel %vm423, %v5955, %v5954
        %v5957 = vrot.slane %v5934, 5
        %v5958 = vsel %vm426, %v5957, %v5956
        %v5959 = vrot.slane %v5935, 4
        %v5960 = vsel %vm429, %v5959, %v5958
        %v5961 = vrot.slane %v5936, 3
        %v5962 = vsel %vm432, %v5961, %v5960
        %v5963 = vrot.slane %v5937, 2
        %v5964 = vsel %vm435, %v5963, %v5962
        %v5965 = vrot.slane %v5938, 1
        %v5966 = vsel %vm438, %v5965, %v5964
        %v5967 = vsel %vm440, %v5966, 0
        %5969 = vmatpush.msra.mxu0 0.0
        %5970 = vmatpush.msra.mxu0 0.0
        %5971 = vmatpush.msra.mxu0 0.0
        %5972 = vmatpush.msra.mxu0 0.0
        %5973 = vmatpush.msra.mxu0 0.0
        %5974 = vmatpush.msra.mxu0 0.0
        %5975 = vmatpush.msra.mxu0 0.0
        %5976 = vmatpush.msra.mxu0 0.0
        %5977 = vmatpush.msra.mxu0 0.0
        %5978 = vmatpush.msra.mxu0 0.0
        %5979 = vmatpush.msra.mxu0 0.0
        %5980 = vmatpush.msra.mxu0 0.0
        %5981 = vmatpush.msra.mxu0 %v5942
        %5982 = vmatpush.msra.mxu0 %v5941
        %5983 = vmatpush.msra.mxu0 %v5940
        %5984 = vmatpush.msra.mxu0 %v5939
        %5985 = vmatmul.f32.gmra.mxu0 %v5967
        %v5986 = vpop.f32.mrf.mxu0
        %v5987 = vadd.f32 %v5944, %v5986
        %5988 = vdwg.mxu0
        %v5989 = vmax.f32 %v5987, 0.0
        %v5990 = vld [vmem:[#allocation6 + $0x780] sm:$0xff]
        %v5991 = vld [vmem:[#allocation6 + $0x788] sm:$0xff]
        %v5992 = vld [vmem:[#allocation6 + $0x790] sm:$0xff]
        %v5993 = vld [vmem:[#allocation6 + $0x798] sm:$0xff]
        %v5994 = vld [vmem:[#allocation6 + $0x7a0] sm:$0xff]
        %v5995 = vld [vmem:[#allocation6 + $0x7a8] sm:$0xff]
        %v5996 = vld [vmem:[#allocation6 + $0x7b0] sm:$0xff]
        %v5997 = vld [vmem:[#allocation6 + $0x7b8] sm:$0xff]
        %v5998 = vld [vmem:[#allocation6 + $0x7c0] sm:$0x1]
        %v5999 = vperm.slane %v5998, 0
        %v6001 = vsel %vm1251, %v5989, 0
        %6003 = vmatpush.msra.mxu0 0.0
        %6004 = vmatpush.msra.mxu0 0.0
        %6005 = vmatpush.msra.mxu0 0.0
        %6006 = vmatpush.msra.mxu0 0.0
        %6007 = vmatpush.msra.mxu0 0.0
        %6008 = vmatpush.msra.mxu0 0.0
        %6009 = vmatpush.msra.mxu0 0.0
        %6010 = vmatpush.msra.mxu0 0.0
        %6011 = vmatpush.msra.mxu0 %v5997
        %6012 = vmatpush.msra.mxu0 %v5996
        %6013 = vmatpush.msra.mxu0 %v5995
        %6014 = vmatpush.msra.mxu0 %v5994
        %6015 = vmatpush.msra.mxu0 %v5993
        %6016 = vmatpush.msra.mxu0 %v5992
        %6017 = vmatpush.msra.mxu0 %v5991
        %6018 = vmatpush.msra.mxu0 %v5990
        %6019 = vmatmul.f32.gmra.mxu0 %v6001
        %v6020 = vpop.f32.mrf.mxu0
        %v6021 = vadd.f32 %v5999, %v6020
        %6022 = vdwg.mxu0
        %v6024 = vrot.slane %v6021, 1
        %v6025 = vrot.slane %v6021, 2
        %v6026 = vrot.slane %v6021, 3
        %v6027 = vrot.slane %v6021, 4
        %v6028 = vrot.slane %v6021, 5
        %v6029 = vrot.slane %v6021, 6
        %v6030 = vrot.slane %v6021, 7
        %v6039 = vadd.f32 %v5931, %v6021
        %v6040 = vadd.f32 %v5932, %v6024
        %v6041 = vadd.f32 %v5933, %v6025
        %v6042 = vadd.f32 %v5934, %v6026
        %v6043 = vadd.f32 %v5935, %v6027
        %v6044 = vadd.f32 %v5936, %v6028
        %v6045 = vadd.f32 %v5937, %v6029
        %v6046 = vadd.f32 %v5938, %v6030
        %v6047 = vld [vmem:[#allocation6 + $0x7c8] sm:$0x1]
        %v6048 = vld [vmem:[#allocation6 + $0x7d0] sm:$0x1]
        %v6057 = vrot.slane %v6040, 7
        %v6058 = vsel %vm420, %v6057, %v6039
        %v6059 = vrot.slane %v6041, 6
        %v6060 = vsel %vm423, %v6059, %v6058
        %v6061 = vrot.slane %v6042, 5
        %v6062 = vsel %vm426, %v6061, %v6060
        %v6063 = vrot.slane %v6043, 4
        %v6064 = vsel %vm429, %v6063, %v6062
        %v6065 = vrot.slane %v6044, 3
        %v6066 = vsel %vm432, %v6065, %v6064
        %v6067 = vrot.slane %v6045, 2
        %v6068 = vsel %vm435, %v6067, %v6066
        %v6069 = vrot.slane %v6046, 1
        %v6070 = vsel %vm438, %v6069, %v6068
        %v6072 = vsel %vm440, %v6070, 0.0
        %6073 = vadd.xlane.f32.xlu0 %v6072
        %v6074 = vpop.xlane.xlu0 %6073
        %v6075 = vmul.f32 %v6074, %v1076
        %v6077 = vrot.slane %v6075, 1
        %v6078 = vrot.slane %v6075, 2
        %v6079 = vrot.slane %v6075, 3
        %v6080 = vrot.slane %v6075, 4
        %v6081 = vrot.slane %v6075, 5
        %v6082 = vrot.slane %v6075, 6
        %v6083 = vrot.slane %v6075, 7
        %v6092 = vsub.f32 %v6039, %v6075
        %v6093 = vsub.f32 %v6040, %v6077
        %v6094 = vsub.f32 %v6041, %v6078
        %v6095 = vsub.f32 %v6042, %v6079
        %v6096 = vsub.f32 %v6043, %v6080
        %v6097 = vsub.f32 %v6044, %v6081
        %v6098 = vsub.f32 %v6045, %v6082
        %v6099 = vsub.f32 %v6046, %v6083
        %v6100 = vmul.f32 %v6092, %v6092
        %v6101 = vmul.f32 %v6093, %v6093
        %v6102 = vmul.f32 %v6094, %v6094
        %v6103 = vmul.f32 %v6095, %v6095
        %v6104 = vmul.f32 %v6096, %v6096
        %v6105 = vmul.f32 %v6097, %v6097
        %v6106 = vmul.f32 %v6098, %v6098
        %v6107 = vmul.f32 %v6099, %v6099
        %v6116 = vrot.slane %v6101, 7
        %v6117 = vsel %vm420, %v6116, %v6100
        %v6118 = vrot.slane %v6102, 6
        %v6119 = vsel %vm423, %v6118, %v6117
        %v6120 = vrot.slane %v6103, 5
        %v6121 = vsel %vm426, %v6120, %v6119
        %v6122 = vrot.slane %v6104, 4
        %v6123 = vsel %vm429, %v6122, %v6121
        %v6124 = vrot.slane %v6105, 3
        %v6125 = vsel %vm432, %v6124, %v6123
        %v6126 = vrot.slane %v6106, 2
        %v6127 = vsel %vm435, %v6126, %v6125
        %v6128 = vrot.slane %v6107, 1
        %v6129 = vsel %vm438, %v6128, %v6127
        %v6131 = vsel %vm440, %v6129, 0.0
        %6132 = vadd.xlane.f32.xlu0 %v6131
        %v6133 = vpop.xlane.xlu0 %6132
        %v6134 = vmul.f32 %v6133, %v1076
        %v6135 = vadd.f32 %v6134, 1e-05
        %v6136 = vrsqrt.pop %v6135
        %v6137 = vmul.f32 %v6136, %v6135
        %v6138 = vmul.f32 %v6137, %v6136
        %v6139 = vmul.f32 0.5, %v6138
        %v6140 = vsub.f32 1.5, %v6139
        %v6141 = vmul.f32 %v6136, %v6140
        %vm6142 = vweird.f32 %v6135
        %vm6143 = vweird.f32 %v6136
        %vm6144 = vmor %vm6142, %vm6143
        %v6145 = vsel %vm6144, %v6136, %v6141
        %v6147 = vrot.slane %v6145, 1
        %v6148 = vrot.slane %v6145, 2
        %v6149 = vrot.slane %v6145, 3
        %v6150 = vrot.slane %v6145, 4
        %v6151 = vrot.slane %v6145, 5
        %v6152 = vrot.slane %v6145, 6
        %v6153 = vrot.slane %v6145, 7
        %v6162 = vmul.f32 %v6092, %v6145
        %v6163 = vmul.f32 %v6093, %v6147
        %v6164 = vmul.f32 %v6094, %v6148
        %v6165 = vmul.f32 %v6095, %v6149
        %v6166 = vmul.f32 %v6096, %v6150
        %v6167 = vmul.f32 %v6097, %v6151
        %v6168 = vmul.f32 %v6098, %v6152
        %v6169 = vmul.f32 %v6099, %v6153
        %v6170 = vperm.slane %v6047, 0
        %v6171 = vmul.f32 %v6162, %v6170
        %v6172 = vmul.f32 %v6163, %v6170
        %v6173 = vmul.f32 %v6164, %v6170
        %v6174 = vmul.f32 %v6165, %v6170
        %v6175 = vmul.f32 %v6166, %v6170
        %v6176 = vmul.f32 %v6167, %v6170
        %v6177 = vmul.f32 %v6168, %v6170
        %v6178 = vmul.f32 %v6169, %v6170
        %v6179 = vperm.slane %v6048, 0
        %v6180 = vadd.f32 %v6171, %v6179
        %v6181 = vadd.f32 %v6172, %v6179
        %v6182 = vadd.f32 %v6173, %v6179
        %v6183 = vadd.f32 %v6174, %v6179
        %v6184 = vadd.f32 %v6175, %v6179
        %v6185 = vadd.f32 %v6176, %v6179
        %v6186 = vadd.f32 %v6177, %v6179
        %v6187 = vadd.f32 %v6178, %v6179
        %v6196 = vrot.slane %v6181, 7
        %v6197 = vsel %vm420, %v6196, %v6180
        %v6198 = vrot.slane %v6182, 6
        %v6199 = vsel %vm423, %v6198, %v6197
        %v6200 = vrot.slane %v6183, 5
        %v6201 = vsel %vm426, %v6200, %v6199
        %v6202 = vrot.slane %v6184, 4
        %v6203 = vsel %vm429, %v6202, %v6201
        %v6204 = vrot.slane %v6185, 3
        %v6205 = vsel %vm432, %v6204, %v6203
        %v6206 = vrot.slane %v6186, 2
        %v6207 = vsel %vm435, %v6206, %v6205
        %v6208 = vrot.slane %v6187, 1
        %v6209 = vsel %vm438, %v6208, %v6207
        %6211 = vst.msk [vmem:[%s198] sm:$0xff] %vm440, %v6209
        %p6212 = scmp.lt.s32.totalorder %s16, 1
        %s6213 = scalar_select %p6212, %s16, 1
        %s6214 = smul.addr %s6213, 8
        %s6215 = scalar_lea.vmem %s3, %s6214
        // Predicated region
        $region45: #{forward.1} parent=31 // pred_check
          %p6216 = pneg %p97
        $region46: #{forward.1} parent=31 // pred_check_branch
          %6218 = sbr.rel (%p6216) target = $region48
        $region47: #{forward.1} parent=31 // pred_region
          _
        $region48: #{forward.1} parent=31 // pred_fallthru
          _
      $region32: #{forward.1} parent=5 // pred_fallthru
        _
      %p6219 = scmp.le.s32.totalorder 2, %s11
      // Predicated region
      $region49: #{forward.1} parent=5 // pred_check
        %p6220 = pneg %p6219
      $region50: #{forward.1} parent=5 // pred_check_branch
        %6222 = sbr.rel (%p6220) target = $region52
      $region51: #{forward.1} parent=5 // pred_region
        %s6223 = ssub.s32 %s11, 2
        // Predicated region
        $region53: #{forward.1} parent=51 // pred_check
          %p6224 = pneg %p103
        $region54: #{forward.1} parent=51 // pred_check_branch
          %6226 = sbr.rel (%p6224) target = $region56
        $region55: #{forward.1} parent=51 // pred_region
          %p6227 = scmp.lt.s32.totalorder %s17, 1
          %s6228 = scalar_select %p6227, %s17, 1
          %s6229 = smul.addr %s6228, 8
          %s6230 = scalar_lea.vmem %s3, %s6229
        $region56: #{forward.1} parent=51 // pred_fallthru
          _
      $region52: #{forward.1} parent=5 // pred_fallthru
        _
    $region6: #{forward.1} parent=1 // loop_footer
      %s15 = sadd.s32 1, %s11
    $region7: #{forward.1} parent=1 // loop_footer_branch
      %10 = sbr.rel target = $region3
    $region8: #{forward.1} parent=1 // loop_exit
      _
    %6231 = vsyncpa [#allocation3], 1
    %s6232 = scalar_lea.sflag [#allocation3], 1
    %6233 = vsyncpa %s6232, 1
    %6234 = vsyncpa [#allocation5], 1

</llo_original>
